<compile_context>
chip_gen: v7x
topology: tpu7x:2x2x1
jax: 0.10.0
libtpu: 0.0.40
codegen_flags: <defaults>
</compile_context>

<pallas_src>
import functools

import jax
import jax.numpy as jnp
from jax.experimental import pallas as pl
from jax.experimental.pallas import tpu as pltpu

jax.config.update("jax_default_matmul_precision", "highest")

PRELU_ALPHA = 0.25  # PyTorch nn.PReLU() default init


def _prelu(x, alpha=PRELU_ALPHA):
    return jnp.where(x > 0, x, alpha * x)


# -----------------------------------------------------------------------------
# The single fused kernel.
# -----------------------------------------------------------------------------
def _esnet_kernel(xin_ref, w1_ref, b1_ref, w2_ref, b2_ref,
                  wih_ref, whh_ref, bls_ref,
                  wf1_ref, bf1_ref, wf2_ref, bf2_ref, wf3_ref, bf3_ref,
                  o_ref, xl_scr, flat_scr, *, B, C, Tout, H, K):
    """Shapes (for C=4, T=26, B=2):
      xin_ref : (2C, B*T/2)      = (8, 26)   rows = [even-t ch | odd-t ch]
      w1_ref  : (2*C2, 2C)       = (16, 8)   block-diag spatial conv (BN folded)
      b1_ref  : (2*C2, 1)
      w2_ref  : (C4, K*C2)       = (16, 80)  enhanced conv rows in (j,parity,ci)
      b2_ref  : (C4, 1)
      wih_ref : (C4, 8H)         = (16, 128) [fwd i|f|g|o | rev i|f|g|o]
      whh_ref : (H, 8H)          = (16, 128)
      bls_ref : (1, 8H)                      b_ih + b_hh, both directions
      wf*_ref : dense weights pre-transposed; o_ref: (B, num_classes)
      xl_scr  : VMEM (Tout*B, C4)            LSTM-input .view scratch
      flat_scr: VMEM (B, 2*Tout*H)           r_out .view(B, 2*T*H) scratch
    """
    C2 = 2 * C                       # spatial-conv output channels
    C4 = 4 * C                       # enhanced-conv output channels (== H)
    Thalf = xin_ref.shape[1] // B    # T // 2 (batch segments along lanes)

    # ---------------- conv stage: channels-first, batch folded into lanes ----
    # Spatial Conv2dWithConstraint(1, 2C, (C,1)) + BN + PReLU.  Stride-2 of the
    # next conv is pre-folded: rows 0:C2 are even-time outputs, C2:2*C2 odd.
    a1 = _prelu(jnp.dot(w1_ref[...], xin_ref[...],
                        preferred_element_type=jnp.float32) + b1_ref[...])

    # Enhanced Conv2d(2C, 4C, (1,K), stride (1,2)) + BN + PReLU.
    # im2col with contiguous static lane slices only (per-batch lane segments).
    blocks = []
    for j in range(K // 2):
        blocks.append(jnp.concatenate(
            [a1[:, b * Thalf + j: b * Thalf + j + Tout] for b in range(B)],
            axis=1))                                    # (2*C2, B*Tout)
    patches = jnp.concatenate(blocks, axis=0)           # (K*C2, B*Tout)
    a2 = _prelu(jnp.dot(w2_ref[...], patches,
                        preferred_element_type=jnp.float32) + b2_ref[...])
    # a2: (C4, B*Tout) == PyTorch conv output (B, C4, Tout), batch on lanes.

    # ------------- LSTM input: raw .view(Tout, B, C4) of (B, C4, Tout) -------
    # Flat reinterpretation (NOT a transpose) — faithful to the PyTorch model.
    # Assembled with static stores into a VMEM scratch (lane-dense rows).
    for b in range(B):
        for ch in range(C4):
            piece = a2[ch:ch + 1, b * Tout:(b + 1) * Tout]        # (1, Tout)
            p0 = b * C4 * Tout + ch * Tout                        # flat offset
            r0, c0 = p0 // C4, p0 % C4
            if c0 + Tout <= C4:
                xl_scr[r0:r0 + 1, c0:c0 + Tout] = piece
            else:
                n1 = C4 - c0
                xl_scr[r0:r0 + 1, c0:C4] = piece[:, :n1]
                xl_scr[r0 + 1:r0 + 2, 0:Tout - n1] = piece[:, n1:]
    x_lstm = xl_scr[...]                                 # (Tout*B, C4)

    # ------------- bidirectional LSTM, both directions in one recurrence -----
    # One input-projection matmul for the whole sequence, gates lane-packed.
    gx = (jnp.dot(x_lstm, wih_ref[...], preferred_element_type=jnp.float32)
          + bls_ref[...])                                # (Tout*B, 8H)
    whh = whh_ref[...]                                   # (H, 8H)
    h = jnp.zeros((2 * B, H), jnp.float32)               # rows: fwd b0..  rev b0..
    c = jnp.zeros((2 * B, H), jnp.float32)

    for s in range(Tout):                                # fully unrolled (T=9)
        hg = jnp.dot(h, whh, preferred_element_type=jnp.float32)   # (2B, 8H)
        tf, tr = s, Tout - 1 - s                         # fwd time / rev time
        pre_f = gx[B * tf:B * tf + B, 0:4 * H] + hg[0:B, 0:4 * H]
        pre_r = gx[B * tr:B * tr + B, 4 * H:8 * H] + hg[B:2 * B, 4 * H:8 * H]
        pre = jnp.concatenate([pre_f, pre_r], axis=0)    # (2B, 4H)
        i_g = jax.nn.sigmoid(pre[:, 0:H])
        f_g = jax.nn.sigmoid(pre[:, H:2 * H])
        g_g = jnp.tanh(pre[:, 2 * H:3 * H])
        o_g = jax.nn.sigmoid(pre[:, 3 * H:4 * H])
        c = f_g * c + i_g * g_g
        h = o_g * jnp.tanh(c)
        # Scatter directly into r_out.view(B, 2*Tout*H) layout (static offsets).
        for bb in range(B):
            rho = B * tf + bb                            # fwd piece, time tf
            m, col = rho // Tout, (rho % Tout) * 2 * H
            flat_scr[m:m + 1, col:col + H] = h[bb:bb + 1, :]
            rho = B * tr + bb                            # rev piece, time tr
            m, col = rho // Tout, (rho % Tout) * 2 * H + H
            flat_scr[m:m + 1, col:col + H] = h[B + bb:B + bb + 1, :]

    # ------------- dense head: Linear->PReLU->Linear->PReLU->Linear ----------
    flat = flat_scr[...]                                 # (B, 2*Tout*H)
    h1 = _prelu(jnp.dot(flat, wf1_ref[...],
                        preferred_element_type=jnp.float32) + bf1_ref[...])
    h2 = _prelu(jnp.dot(h1, wf2_ref[...],
                        preferred_element_type=jnp.float32) + bf2_ref[...])
    o_ref[...] = (jnp.dot(h2, wf3_ref[...],
                          preferred_element_type=jnp.float32) + bf3_ref[...])


# -----------------------------------------------------------------------------
# Wrapper: one tiny XLA input repack, then the single fused pallas_call.
# -----------------------------------------------------------------------------
def esnet_forward(x, params, dims):
    B = x.shape[0]
    C, T, Tout = dims["C"], dims["T"], dims["Tout"]
    C4, H, K, nc = dims["C4"], dims["H"], dims["K"], dims["num_classes"]
    p = params

    # NCHW (B,1,C,T) -> (2C, B*T/2): rows = [even-time ch 0..C-1 | odd-time],
    # lanes = batch-major half-time.  Folds the enhanced conv's stride-2.
    xc = x[:, 0].astype(jnp.float32)                                  # (B, C, T)
    xpack = jnp.concatenate([xc[:, :, 0::2], xc[:, :, 1::2]], axis=1)  # (B,2C,T/2)
    xin = jnp.transpose(xpack, (1, 0, 2)).reshape(2 * C, B * (T // 2))

    kernel = functools.partial(_esnet_kernel, B=B, C=C, Tout=Tout, H=H, K=K)
    vmem = pl.BlockSpec(memory_space=pltpu.MemorySpace.VMEM)
    return pl.pallas_call(
        kernel,
        out_shape=jax.ShapeDtypeStruct((B, nc), jnp.float32),
        in_specs=[vmem] * 14,
        out_specs=vmem,
        scratch_shapes=[
            pltpu.VMEM((Tout * B, C4), jnp.float32),      # LSTM-input .view
            pltpu.VMEM((B, 2 * Tout * H), jnp.float32),   # r_out flat .view
        ],
    )(xin, p["w1blk"], p["b1col"], p["w2rows"], p["b2col"],
      p["wih"], p["whh"], p["b_lstm"],
      p["wfc1t"], p["bfc1"], p["wfc2t"], p["bfc2"], p["wfc3t"], p["bfc3"])


# -----------------------------------------------------------------------------
# Deterministic synthetic parameters: raw (for the reference) + packed (kernel).
# -----------------------------------------------------------------------------
def make_params(key, C, T, num_classes):
    assert T % 2 == 0, "time-pair packing assumes an even number of samples"
    C2, C4 = 2 * C, 4 * C
    K, S = 10, 2
    Tout = (T - K) // S + 1
    H = C4
    fcUnit = C4 * 1 * Tout * 2
    D1, D2 = fcUnit // 10, (fcUnit // 10) // 5
    eps = 1e-5

    keys = jax.random.split(key, 26)
    n = lambda i, shape, s=0.1: s * jax.random.normal(keys[i], shape, jnp.float32)

    # spatial block: Conv2dWithConstraint(1, 2C, (C,1), max_norm=1) + BN
    w_sp = n(0, (C2, 1, C, 1))
    norms = jnp.sqrt(jnp.sum(w_sp.reshape(C2, -1) ** 2, axis=1))
    w_sp = w_sp * jnp.where(norms > 1.0, 1.0 / norms, 1.0)[:, None, None, None]
    b_sp = n(1, (C2,))
    g1, be1 = 1.0 + n(2, (C2,)), n(3, (C2,))
    m1 = n(4, (C2,))
    v1 = 1.0 + 0.1 * jax.random.uniform(keys[5], (C2,))
    # enhanced block: Conv2d(2C, 4C, (1,K), stride (1,S)) + BN
    w_en = n(6, (C4, C2, 1, K))
    b_en = n(7, (C4,))
    g2, be2 = 1.0 + n(8, (C4,)), n(9, (C4,))
    m2 = n(10, (C4,))
    v2 = 1.0 + 0.1 * jax.random.uniform(keys[11], (C4,))
    # bidirectional LSTM (input = hidden = 4C), PyTorch gate order [i,f,g,o]
    w_ih_f, w_hh_f = n(12, (4 * H, C4)), n(13, (4 * H, H))
    b_ih_f, b_hh_f = n(14, (4 * H,)), n(15, (4 * H,))
    w_ih_r, w_hh_r = n(16, (4 * H, C4)), n(17, (4 * H, H))
    b_ih_r, b_hh_r = n(18, (4 * H,)), n(19, (4 * H,))
    # dense head
    w_fc1, b_fc1 = n(20, (D1, fcUnit)), n(21, (D1,))
    w_fc2, b_fc2 = n(22, (D2, D1)), n(23, (D2,))
    w_fc3, b_fc3 = n(24, (num_classes, D2)), n(25, (num_classes,))

    raw = dict(w_sp=w_sp, b_sp=b_sp, g1=g1, be1=be1, m1=m1, v1=v1,
               w_en=w_en, b_en=b_en, g2=g2, be2=be2, m2=m2, v2=v2,
               w_ih_f=w_ih_f, w_hh_f=w_hh_f, b_ih_f=b_ih_f, b_hh_f=b_hh_f,
               w_ih_r=w_ih_r, w_hh_r=w_hh_r, b_ih_r=b_ih_r, b_hh_r=b_hh_r,
               w_fc1=w_fc1, b_fc1=b_fc1, w_fc2=w_fc2, b_fc2=b_fc2,
               w_fc3=w_fc3, b_fc3=b_fc3, eps=eps)

    # ---- kernel packing: BN folded, stride folded, gates lane-packed ---------
    s1 = g1 / jnp.sqrt(v1 + eps)
    w1_eff = w_sp[:, 0, :, 0] * s1[:, None]               # (C2, C)
    b1_eff = (b_sp - m1) * s1 + be1
    w1blk = jnp.zeros((2 * C2, 2 * C), jnp.float32)       # block-diag even/odd
    w1blk = w1blk.at[:C2, :C].set(w1_eff).at[C2:, C:].set(w1_eff)
    b1col = jnp.concatenate([b1_eff, b1_eff]).reshape(2 * C2, 1)

    s2 = g2 / jnp.sqrt(v2 + eps)
    w2_eff = w_en[:, :, 0, :] * s2[:, None, None]         # (C4, C2, K)
    b2_eff = (b_en - m2) * s2 + be2
    # im2col row order (j, parity, ci), tap k = 2j + parity
    w2rows = jnp.transpose(w2_eff.reshape(C4, C2, K // 2, 2),
                           (0, 2, 3, 1)).reshape(C4, K * C2)
    b2col = b2_eff.reshape(C4, 1)

    wih = jnp.concatenate([w_ih_f.T, w_ih_r.T], axis=1)   # (C4, 8H)
    whh = jnp.concatenate([w_hh_f.T, w_hh_r.T], axis=1)   # (H, 8H)
    b_lstm = jnp.concatenate([b_ih_f + b_hh_f,
                              b_ih_r + b_hh_r]).reshape(1, 8 * H)

    packed = dict(w1blk=w1blk, b1col=b1col, w2rows=w2rows, b2col=b2col,
                  wih=wih, whh=whh, b_lstm=b_lstm,
                  wfc1t=w_fc1.T, bfc1=b_fc1.reshape(1, D1),
                  wfc2t=w_fc2.T, bfc2=b_fc2.reshape(1, D2),
                  wfc3t=w_fc3.T, bfc3=b_fc3.reshape(1, num_classes))

    dims = dict(C=C, T=T, C2=C2, C4=C4, K=K, S=S, Tout=Tout, H=H,
                fcUnit=fcUnit, D1=D1, D2=D2, num_classes=num_classes)
    return packed, raw, dims


# -----------------------------------------------------------------------------
# Pure-JAX reference mirroring the PyTorch module (eval mode) op-by-op.
# -----------------------------------------------------------------------------
def esnet_reference(x, raw, dims):
    B = x.shape[0]
    C2, C4, K, S, Tout, H = (dims[k] for k in ("C2", "C4", "K", "S", "Tout", "H"))
    eps = raw["eps"]
    xc = x[:, 0].astype(jnp.float32)                                  # (B, C, T)
    # spatial conv + BN + PReLU
    a = jnp.einsum("oc,bct->bot", raw["w_sp"][:, 0, :, 0], xc) \
        + raw["b_sp"][None, :, None]
    a = (a - raw["m1"][None, :, None]) / jnp.sqrt(raw["v1"] + eps)[None, :, None] \
        * raw["g1"][None, :, None] + raw["be1"][None, :, None]
    a = _prelu(a)
    # enhanced conv (1,K) stride (1,S) + BN + PReLU
    out = jnp.zeros((B, C4, Tout), jnp.float32) + raw["b_en"][None, :, None]
    for k in range(K):
        xs = a[:, :, k:k + S * (Tout - 1) + 1:S]                      # (B,C2,Tout)
        out = out + jnp.einsum("oi,bit->bot", raw["w_en"][:, :, 0, k], xs)
    out = (out - raw["m2"][None, :, None]) / jnp.sqrt(raw["v2"] + eps)[None, :, None] \
        * raw["g2"][None, :, None] + raw["be2"][None, :, None]
    out = _prelu(out)                                                 # (B,C4,Tout)
    # LSTM block: raw .view reinterpretations + bidirectional LSTM
    x_seq = out.reshape(Tout, B, C4)                                  # raw .view

    def run_dir(w_ih, w_hh, b_ih, b_hh, reverse):
        h = jnp.zeros((B, H), jnp.float32)
        c = jnp.zeros((B, H), jnp.float32)
        outs = [None] * Tout
        order = range(Tout - 1, -1, -1) if reverse else range(Tout)
        for t in order:
            g = x_seq[t] @ w_ih.T + b_ih + h @ w_hh.T + b_hh
            i = jax.nn.sigmoid(g[:, 0:H])
            f = jax.nn.sigmoid(g[:, H:2 * H])
            gg = jnp.tanh(g[:, 2 * H:3 * H])
            o = jax.nn.sigmoid(g[:, 3 * H:4 * H])
            c = f * c + i * gg
            h = o * jnp.tanh(c)
            outs[t] = h
        return jnp.stack(outs, axis=0)                                # (Tout,B,H)

    hf = run_dir(raw["w_ih_f"], raw["w_hh_f"], raw["b_ih_f"], raw["b_hh_f"], False)
    hr = run_dir(raw["w_ih_r"], raw["w_hh_r"], raw["b_ih_r"], raw["b_hh_r"], True)
    r_out = jnp.concatenate([hf, hr], axis=-1)                        # (Tout,B,2H)
    flat = r_out.reshape(B, 2 * Tout * H)                             # raw .view
    h1 = _prelu(flat @ raw["w_fc1"].T + raw["b_fc1"])
    h2 = _prelu(h1 @ raw["w_fc2"].T + raw["b_fc2"])
    return h2 @ raw["w_fc3"].T + raw["b_fc3"]


# -----------------------------------------------------------------------------
if __name__ == "__main__":
    # ESNet-consistent small shapes: num_channels=4, T=26, num_classes=3, B=2.
    num_channels, T, num_classes, B = 4, 26, 3, 2

    key = jax.random.PRNGKey(0)
    pkey, xkey = jax.random.split(key)
    packed, raw, dims = make_params(pkey, num_channels, T, num_classes)

    x = jax.random.normal(xkey, (B, 1, num_channels, T), jnp.float32)  # NCHW

    fwd = jax.jit(lambda xx: esnet_forward(xx, packed, dims))
    out = jax.block_until_ready(fwd(x))

    assert out.shape == (B, num_classes), out.shape
    assert bool(jnp.all(jnp.isfinite(out)))

    ref = esnet_reference(x, raw, dims)
    assert jnp.allclose(out, ref, atol=3e-2, rtol=3e-2), (out, ref)

    print("KERNEL_OK")
</pallas_src>

<mosaic_0001>
module attributes {stable_mosaic.version = 11 : i64} {
  func.func @_esnet_kernel(%arg0: memref<8x26xf32, #tpu.memory_space<vmem>>, %arg1: memref<16x8xf32, #tpu.memory_space<vmem>>, %arg2: memref<16x1xf32, #tpu.memory_space<vmem>>, %arg3: memref<16x80xf32, #tpu.memory_space<vmem>>, %arg4: memref<16x1xf32, #tpu.memory_space<vmem>>, %arg5: memref<16x128xf32, #tpu.memory_space<vmem>>, %arg6: memref<16x128xf32, #tpu.memory_space<vmem>>, %arg7: memref<1x128xf32, #tpu.memory_space<vmem>>, %arg8: memref<288x28xf32, #tpu.memory_space<vmem>>, %arg9: memref<1x28xf32, #tpu.memory_space<vmem>>, %arg10: memref<28x5xf32, #tpu.memory_space<vmem>>, %arg11: memref<1x5xf32, #tpu.memory_space<vmem>>, %arg12: memref<5x3xf32, #tpu.memory_space<vmem>>, %arg13: memref<1x3xf32, #tpu.memory_space<vmem>>, %arg14: memref<2x3xf32, #tpu.memory_space<vmem>>, %arg15: memref<18x16xf32, #tpu.memory_space<vmem>>, %arg16: memref<2x288xf32, #tpu.memory_space<vmem>>) attributes {dimension_semantics = [], scalar_prefetch = 0 : i64, scratch_operands = 2 : i64, tpu.core_type = #tpu.core_type<tc>} {
    %c0 = arith.constant 0 : index
    %c0_0 = arith.constant 0 : index
    %0 = vector.load %arg1[%c0, %c0_0] : memref<16x8xf32, #tpu.memory_space<vmem>>, vector<16x8xf32>
    %c0_1 = arith.constant 0 : index
    %c0_2 = arith.constant 0 : index
    %1 = vector.load %arg0[%c0_1, %c0_2] : memref<8x26xf32, #tpu.memory_space<vmem>>, vector<8x26xf32>
    %cst = arith.constant dense<0.000000e+00> : vector<16x26xf32>
    %2 = tpu.matmul %0, %1, %cst {dimension_numbers = #tpu.dot_dimension_numbers<[1], [0], [0], [1], [0, 0, 1, 1], [], []>, precision = #tpu.contract_precision<fp32>} : vector<16x8xf32>, vector<8x26xf32>, vector<16x26xf32> -> vector<16x26xf32>
    %c0_3 = arith.constant 0 : index
    %c0_4 = arith.constant 0 : index
    %3 = vector.load %arg2[%c0_3, %c0_4] : memref<16x1xf32, #tpu.memory_space<vmem>>, vector<16x1xf32>
    %4 = vector.broadcast %3 : vector<16x1xf32> to vector<16x26xf32>
    %5 = arith.addf %2, %4 : vector<16x26xf32>
    %cst_5 = arith.constant 0.000000e+00 : f32
    %6 = vector.broadcast %cst_5 : f32 to vector<16x26xf32>
    %7 = arith.cmpf ogt, %5, %6 : vector<16x26xf32>
    %cst_6 = arith.constant 2.500000e-01 : f32
    %8 = vector.broadcast %cst_6 : f32 to vector<16x26xf32>
    %9 = arith.mulf %8, %5 : vector<16x26xf32>
    %10 = arith.select %7, %5, %9 : vector<16x26xi1>, vector<16x26xf32>
    %11 = vector.extract_strided_slice %10 {offsets = [0, 0], sizes = [16, 9], strides = [1, 1]} : vector<16x26xf32> to vector<16x9xf32>
    %12 = vector.extract_strided_slice %10 {offsets = [0, 13], sizes = [16, 9], strides = [1, 1]} : vector<16x26xf32> to vector<16x9xf32>
    %13 = tpu.concatenate %11, %12 in 1 : vector<16x9xf32>, vector<16x9xf32> -> vector<16x18xf32>
    %14 = vector.extract_strided_slice %10 {offsets = [0, 1], sizes = [16, 9], strides = [1, 1]} : vector<16x26xf32> to vector<16x9xf32>
    %15 = vector.extract_strided_slice %10 {offsets = [0, 14], sizes = [16, 9], strides = [1, 1]} : vector<16x26xf32> to vector<16x9xf32>
    %16 = tpu.concatenate %14, %15 in 1 : vector<16x9xf32>, vector<16x9xf32> -> vector<16x18xf32>
    %17 = vector.extract_strided_slice %10 {offsets = [0, 2], sizes = [16, 9], strides = [1, 1]} : vector<16x26xf32> to vector<16x9xf32>
    %18 = vector.extract_strided_slice %10 {offsets = [0, 15], sizes = [16, 9], strides = [1, 1]} : vector<16x26xf32> to vector<16x9xf32>
    %19 = tpu.concatenate %17, %18 in 1 : vector<16x9xf32>, vector<16x9xf32> -> vector<16x18xf32>
    %20 = vector.extract_strided_slice %10 {offsets = [0, 3], sizes = [16, 9], strides = [1, 1]} : vector<16x26xf32> to vector<16x9xf32>
    %21 = vector.extract_strided_slice %10 {offsets = [0, 16], sizes = [16, 9], strides = [1, 1]} : vector<16x26xf32> to vector<16x9xf32>
    %22 = tpu.concatenate %20, %21 in 1 : vector<16x9xf32>, vector<16x9xf32> -> vector<16x18xf32>
    %23 = vector.extract_strided_slice %10 {offsets = [0, 4], sizes = [16, 9], strides = [1, 1]} : vector<16x26xf32> to vector<16x9xf32>
    %24 = vector.extract_strided_slice %10 {offsets = [0, 17], sizes = [16, 9], strides = [1, 1]} : vector<16x26xf32> to vector<16x9xf32>
    %25 = tpu.concatenate %23, %24 in 1 : vector<16x9xf32>, vector<16x9xf32> -> vector<16x18xf32>
    %26 = tpu.concatenate %13, %16, %19, %22, %25 in 0 : vector<16x18xf32>, vector<16x18xf32>, vector<16x18xf32>, vector<16x18xf32>, vector<16x18xf32> -> vector<80x18xf32>
    %c0_7 = arith.constant 0 : index
    %c0_8 = arith.constant 0 : index
    %27 = vector.load %arg3[%c0_7, %c0_8] : memref<16x80xf32, #tpu.memory_space<vmem>>, vector<16x80xf32>
    %cst_9 = arith.constant dense<0.000000e+00> : vector<16x18xf32>
    %28 = tpu.matmul %27, %26, %cst_9 {dimension_numbers = #tpu.dot_dimension_numbers<[1], [0], [0], [1], [0, 0, 1, 1], [], []>, precision = #tpu.contract_precision<fp32>} : vector<16x80xf32>, vector<80x18xf32>, vector<16x18xf32> -> vector<16x18xf32>
    %c0_10 = arith.constant 0 : index
    %c0_11 = arith.constant 0 : index
    %29 = vector.load %arg4[%c0_10, %c0_11] : memref<16x1xf32, #tpu.memory_space<vmem>>, vector<16x1xf32>
    %30 = vector.broadcast %29 : vector<16x1xf32> to vector<16x18xf32>
    %31 = arith.addf %28, %30 : vector<16x18xf32>
    %cst_12 = arith.constant 0.000000e+00 : f32
    %32 = vector.broadcast %cst_12 : f32 to vector<16x18xf32>
    %33 = arith.cmpf ogt, %31, %32 : vector<16x18xf32>
    %cst_13 = arith.constant 2.500000e-01 : f32
    %34 = vector.broadcast %cst_13 : f32 to vector<16x18xf32>
    %35 = arith.mulf %34, %31 : vector<16x18xf32>
    %36 = arith.select %33, %31, %35 : vector<16x18xi1>, vector<16x18xf32>
    %37 = vector.extract_strided_slice %36 {offsets = [0, 0], sizes = [1, 9], strides = [1, 1]} : vector<16x18xf32> to vector<1x9xf32>
    %c0_14 = arith.constant 0 : index
    %c0_15 = arith.constant 0 : index
    %38 = vector.load %arg15[%c0_14, %c0_15] : memref<18x16xf32, #tpu.memory_space<vmem>>, vector<1x9xf32>
    tpu.vector_store %arg15[%c0_14, %c0_15], %37 {strides = array<i32>} : memref<18x16xf32, #tpu.memory_space<vmem>>, vector<1x9xf32>,
    %39 = vector.extract_strided_slice %36 {offsets = [1, 0], sizes = [1, 9], strides = [1, 1]} : vector<16x18xf32> to vector<1x9xf32>
    %40 = vector.extract_strided_slice %39 {offsets = [0, 0], sizes = [1, 7], strides = [1, 1]} : vector<1x9xf32> to vector<1x7xf32>
    %c0_16 = arith.constant 0 : index
    %c9 = arith.constant 9 : index
    %41 = vector.load %arg15[%c0_16, %c9] : memref<18x16xf32, #tpu.memory_space<vmem>>, vector<1x7xf32>
    tpu.vector_store %arg15[%c0_16, %c9], %40 {strides = array<i32>} : memref<18x16xf32, #tpu.memory_space<vmem>>, vector<1x7xf32>,
    %42 = vector.extract_strided_slice %39 {offsets = [0, 7], sizes = [1, 2], strides = [1, 1]} : vector<1x9xf32> to vector<1x2xf32>
    %c1 = arith.constant 1 : index
    %c0_17 = arith.constant 0 : index
    %43 = vector.load %arg15[%c1, %c0_17] : memref<18x16xf32, #tpu.memory_space<vmem>>, vector<1x2xf32>
    tpu.vector_store %arg15[%c1, %c0_17], %42 {strides = array<i32>} : memref<18x16xf32, #tpu.memory_space<vmem>>, vector<1x2xf32>,
    %44 = vector.extract_strided_slice %36 {offsets = [2, 0], sizes = [1, 9], strides = [1, 1]} : vector<16x18xf32> to vector<1x9xf32>
    %c1_18 = arith.constant 1 : index
    %c2 = arith.constant 2 : index
    %45 = vector.load %arg15[%c1_18, %c2] : memref<18x16xf32, #tpu.memory_space<vmem>>, vector<1x9xf32>
    tpu.vector_store %arg15[%c1_18, %c2], %44 {strides = array<i32>} : memref<18x16xf32, #tpu.memory_space<vmem>>, vector<1x9xf32>,
    %46 = vector.extract_strided_slice %36 {offsets = [3, 0], sizes = [1, 9], strides = [1, 1]} : vector<16x18xf32> to vector<1x9xf32>
    %47 = vector.extract_strided_slice %46 {offsets = [0, 0], sizes = [1, 5], strides = [1, 1]} : vector<1x9xf32> to vector<1x5xf32>
    %c1_19 = arith.constant 1 : index
    %c11 = arith.constant 11 : index
    %48 = vector.load %arg15[%c1_19, %c11] : memref<18x16xf32, #tpu.memory_space<vmem>>, vector<1x5xf32>
    tpu.vector_store %arg15[%c1_19, %c11], %47 {strides = array<i32>} : memref<18x16xf32, #tpu.memory_space<vmem>>, vector<1x5xf32>,
    %49 = vector.extract_strided_slice %46 {offsets = [0, 5], sizes = [1, 4], strides = [1, 1]} : vector<1x9xf32> to vector<1x4xf32>
    %c2_20 = arith.constant 2 : index
    %c0_21 = arith.constant 0 : index
    %50 = vector.load %arg15[%c2_20, %c0_21] : memref<18x16xf32, #tpu.memory_space<vmem>>, vector<1x4xf32>
    tpu.vector_store %arg15[%c2_20, %c0_21], %49 {strides = array<i32>} : memref<18x16xf32, #tpu.memory_space<vmem>>, vector<1x4xf32>,
    %51 = vector.extract_strided_slice %36 {offsets = [4, 0], sizes = [1, 9], strides = [1, 1]} : vector<16x18xf32> to vector<1x9xf32>
    %c2_22 = arith.constant 2 : index
    %c4 = arith.constant 4 : index
    %52 = vector.load %arg15[%c2_22, %c4] : memref<18x16xf32, #tpu.memory_space<vmem>>, vector<1x9xf32>
    tpu.vector_store %arg15[%c2_22, %c4], %51 {strides = array<i32>} : memref<18x16xf32, #tpu.memory_space<vmem>>, vector<1x9xf32>,
    %53 = vector.extract_strided_slice %36 {offsets = [5, 0], sizes = [1, 9], strides = [1, 1]} : vector<16x18xf32> to vector<1x9xf32>
    %54 = vector.extract_strided_slice %53 {offsets = [0, 0], sizes = [1, 3], strides = [1, 1]} : vector<1x9xf32> to vector<1x3xf32>
    %c2_23 = arith.constant 2 : index
    %c13 = arith.constant 13 : index
    %55 = vector.load %arg15[%c2_23, %c13] : memref<18x16xf32, #tpu.memory_space<vmem>>, vector<1x3xf32>
    tpu.vector_store %arg15[%c2_23, %c13], %54 {strides = array<i32>} : memref<18x16xf32, #tpu.memory_space<vmem>>, vector<1x3xf32>,
    %56 = vector.extract_strided_slice %53 {offsets = [0, 3], sizes = [1, 6], strides = [1, 1]} : vector<1x9xf32> to vector<1x6xf32>
    %c3 = arith.constant 3 : index
    %c0_24 = arith.constant 0 : index
    %57 = vector.load %arg15[%c3, %c0_24] : memref<18x16xf32, #tpu.memory_space<vmem>>, vector<1x6xf32>
    tpu.vector_store %arg15[%c3, %c0_24], %56 {strides = array<i32>} : memref<18x16xf32, #tpu.memory_space<vmem>>, vector<1x6xf32>,
    %58 = vector.extract_strided_slice %36 {offsets = [6, 0], sizes = [1, 9], strides = [1, 1]} : vector<16x18xf32> to vector<1x9xf32>
    %c3_25 = arith.constant 3 : index
    %c6 = arith.constant 6 : index
    %59 = vector.load %arg15[%c3_25, %c6] : memref<18x16xf32, #tpu.memory_space<vmem>>, vector<1x9xf32>
    tpu.vector_store %arg15[%c3_25, %c6], %58 {strides = array<i32>} : memref<18x16xf32, #tpu.memory_space<vmem>>, vector<1x9xf32>,
    %60 = vector.extract_strided_slice %36 {offsets = [7, 0], sizes = [1, 9], strides = [1, 1]} : vector<16x18xf32> to vector<1x9xf32>
    %61 = vector.extract_strided_slice %60 {offsets = [0, 0], sizes = [1, 1], strides = [1, 1]} : vector<1x9xf32> to vector<1x1xf32>
    %c3_26 = arith.constant 3 : index
    %c15 = arith.constant 15 : index
    %62 = vector.load %arg15[%c3_26, %c15] : memref<18x16xf32, #tpu.memory_space<vmem>>, vector<1x1xf32>
    tpu.vector_store %arg15[%c3_26, %c15], %61 {strides = array<i32>} : memref<18x16xf32, #tpu.memory_space<vmem>>, vector<1x1xf32>,
    %63 = vector.extract_strided_slice %60 {offsets = [0, 1], sizes = [1, 8], strides = [1, 1]} : vector<1x9xf32> to vector<1x8xf32>
    %c4_27 = arith.constant 4 : index
    %c0_28 = arith.constant 0 : index
    %64 = vector.load %arg15[%c4_27, %c0_28] : memref<18x16xf32, #tpu.memory_space<vmem>>, vector<1x8xf32>
    tpu.vector_store %arg15[%c4_27, %c0_28], %63 {strides = array<i32>} : memref<18x16xf32, #tpu.memory_space<vmem>>, vector<1x8xf32>,
    %65 = vector.extract_strided_slice %36 {offsets = [8, 0], sizes = [1, 9], strides = [1, 1]} : vector<16x18xf32> to vector<1x9xf32>
    %66 = vector.extract_strided_slice %65 {offsets = [0, 0], sizes = [1, 8], strides = [1, 1]} : vector<1x9xf32> to vector<1x8xf32>
    %c4_29 = arith.constant 4 : index
    %c8 = arith.constant 8 : index
    %67 = vector.load %arg15[%c4_29, %c8] : memref<18x16xf32, #tpu.memory_space<vmem>>, vector<1x8xf32>
    tpu.vector_store %arg15[%c4_29, %c8], %66 {strides = array<i32>} : memref<18x16xf32, #tpu.memory_space<vmem>>, vector<1x8xf32>,
    %68 = vector.extract_strided_slice %65 {offsets = [0, 8], sizes = [1, 1], strides = [1, 1]} : vector<1x9xf32> to vector<1x1xf32>
    %c5 = arith.constant 5 : index
    %c0_30 = arith.constant 0 : index
    %69 = vector.load %arg15[%c5, %c0_30] : memref<18x16xf32, #tpu.memory_space<vmem>>, vector<1x1xf32>
    tpu.vector_store %arg15[%c5, %c0_30], %68 {strides = array<i32>} : memref<18x16xf32, #tpu.memory_space<vmem>>, vector<1x1xf32>,
    %70 = vector.extract_strided_slice %36 {offsets = [9, 0], sizes = [1, 9], strides = [1, 1]} : vector<16x18xf32> to vector<1x9xf32>
    %c5_31 = arith.constant 5 : index
    %c1_32 = arith.constant 1 : index
    %71 = vector.load %arg15[%c5_31, %c1_32] : memref<18x16xf32, #tpu.memory_space<vmem>>, vector<1x9xf32>
    tpu.vector_store %arg15[%c5_31, %c1_32], %70 {strides = array<i32>} : memref<18x16xf32, #tpu.memory_space<vmem>>, vector<1x9xf32>,
    %72 = vector.extract_strided_slice %36 {offsets = [10, 0], sizes = [1, 9], strides = [1, 1]} : vector<16x18xf32> to vector<1x9xf32>
    %73 = vector.extract_strided_slice %72 {offsets = [0, 0], sizes = [1, 6], strides = [1, 1]} : vector<1x9xf32> to vector<1x6xf32>
    %c5_33 = arith.constant 5 : index
    %c10 = arith.constant 10 : index
    %74 = vector.load %arg15[%c5_33, %c10] : memref<18x16xf32, #tpu.memory_space<vmem>>, vector<1x6xf32>
    tpu.vector_store %arg15[%c5_33, %c10], %73 {strides = array<i32>} : memref<18x16xf32, #tpu.memory_space<vmem>>, vector<1x6xf32>,
    %75 = vector.extract_strided_slice %72 {offsets = [0, 6], sizes = [1, 3], strides = [1, 1]} : vector<1x9xf32> to vector<1x3xf32>
    %c6_34 = arith.constant 6 : index
    %c0_35 = arith.constant 0 : index
    %76 = vector.load %arg15[%c6_34, %c0_35] : memref<18x16xf32, #tpu.memory_space<vmem>>, vector<1x3xf32>
    tpu.vector_store %arg15[%c6_34, %c0_35], %75 {strides = array<i32>} : memref<18x16xf32, #tpu.memory_space<vmem>>, vector<1x3xf32>,
    %77 = vector.extract_strided_slice %36 {offsets = [11, 0], sizes = [1, 9], strides = [1, 1]} : vector<16x18xf32> to vector<1x9xf32>
    %c6_36 = arith.constant 6 : index
    %c3_37 = arith.constant 3 : index
    %78 = vector.load %arg15[%c6_36, %c3_37] : memref<18x16xf32, #tpu.memory_space<vmem>>, vector<1x9xf32>
    tpu.vector_store %arg15[%c6_36, %c3_37], %77 {strides = array<i32>} : memref<18x16xf32, #tpu.memory_space<vmem>>, vector<1x9xf32>,
    %79 = vector.extract_strided_slice %36 {offsets = [12, 0], sizes = [1, 9], strides = [1, 1]} : vector<16x18xf32> to vector<1x9xf32>
    %80 = vector.extract_strided_slice %79 {offsets = [0, 0], sizes = [1, 4], strides = [1, 1]} : vector<1x9xf32> to vector<1x4xf32>
    %c6_38 = arith.constant 6 : index
    %c12 = arith.constant 12 : index
    %81 = vector.load %arg15[%c6_38, %c12] : memref<18x16xf32, #tpu.memory_space<vmem>>, vector<1x4xf32>
    tpu.vector_store %arg15[%c6_38, %c12], %80 {strides = array<i32>} : memref<18x16xf32, #tpu.memory_space<vmem>>, vector<1x4xf32>,
    %82 = vector.extract_strided_slice %79 {offsets = [0, 4], sizes = [1, 5], strides = [1, 1]} : vector<1x9xf32> to vector<1x5xf32>
    %c7 = arith.constant 7 : index
    %c0_39 = arith.constant 0 : index
    %83 = vector.load %arg15[%c7, %c0_39] : memref<18x16xf32, #tpu.memory_space<vmem>>, vector<1x5xf32>
    tpu.vector_store %arg15[%c7, %c0_39], %82 {strides = array<i32>} : memref<18x16xf32, #tpu.memory_space<vmem>>, vector<1x5xf32>,
    %84 = vector.extract_strided_slice %36 {offsets = [13, 0], sizes = [1, 9], strides = [1, 1]} : vector<16x18xf32> to vector<1x9xf32>
    %c7_40 = arith.constant 7 : index
    %c5_41 = arith.constant 5 : index
    %85 = vector.load %arg15[%c7_40, %c5_41] : memref<18x16xf32, #tpu.memory_space<vmem>>, vector<1x9xf32>
    tpu.vector_store %arg15[%c7_40, %c5_41], %84 {strides = array<i32>} : memref<18x16xf32, #tpu.memory_space<vmem>>, vector<1x9xf32>,
    %86 = vector.extract_strided_slice %36 {offsets = [14, 0], sizes = [1, 9], strides = [1, 1]} : vector<16x18xf32> to vector<1x9xf32>
    %87 = vector.extract_strided_slice %86 {offsets = [0, 0], sizes = [1, 2], strides = [1, 1]} : vector<1x9xf32> to vector<1x2xf32>
    %c7_42 = arith.constant 7 : index
    %c14 = arith.constant 14 : index
    %88 = vector.load %arg15[%c7_42, %c14] : memref<18x16xf32, #tpu.memory_space<vmem>>, vector<1x2xf32>
    tpu.vector_store %arg15[%c7_42, %c14], %87 {strides = array<i32>} : memref<18x16xf32, #tpu.memory_space<vmem>>, vector<1x2xf32>,
    %89 = vector.extract_strided_slice %86 {offsets = [0, 2], sizes = [1, 7], strides = [1, 1]} : vector<1x9xf32> to vector<1x7xf32>
    %c8_43 = arith.constant 8 : index
    %c0_44 = arith.constant 0 : index
    %90 = vector.load %arg15[%c8_43, %c0_44] : memref<18x16xf32, #tpu.memory_space<vmem>>, vector<1x7xf32>
    tpu.vector_store %arg15[%c8_43, %c0_44], %89 {strides = array<i32>} : memref<18x16xf32, #tpu.memory_space<vmem>>, vector<1x7xf32>,
    %91 = vector.extract_strided_slice %36 {offsets = [15, 0], sizes = [1, 9], strides = [1, 1]} : vector<16x18xf32> to vector<1x9xf32>
    %c8_45 = arith.constant 8 : index
    %c7_46 = arith.constant 7 : index
    %92 = vector.load %arg15[%c8_45, %c7_46] : memref<18x16xf32, #tpu.memory_space<vmem>>, vector<1x9xf32>
    tpu.vector_store %arg15[%c8_45, %c7_46], %91 {strides = array<i32>} : memref<18x16xf32, #tpu.memory_space<vmem>>, vector<1x9xf32>,
    %93 = vector.extract_strided_slice %36 {offsets = [0, 9], sizes = [1, 9], strides = [1, 1]} : vector<16x18xf32> to vector<1x9xf32>
    %c9_47 = arith.constant 9 : index
    %c0_48 = arith.constant 0 : index
    %94 = vector.load %arg15[%c9_47, %c0_48] : memref<18x16xf32, #tpu.memory_space<vmem>>, vector<1x9xf32>
    tpu.vector_store %arg15[%c9_47, %c0_48], %93 {strides = array<i32>} : memref<18x16xf32, #tpu.memory_space<vmem>>, vector<1x9xf32>,
    %95 = vector.extract_strided_slice %36 {offsets = [1, 9], sizes = [1, 9], strides = [1, 1]} : vector<16x18xf32> to vector<1x9xf32>
    %96 = vector.extract_strided_slice %95 {offsets = [0, 0], sizes = [1, 7], strides = [1, 1]} : vector<1x9xf32> to vector<1x7xf32>
    %c9_49 = arith.constant 9 : index
    %c9_50 = arith.constant 9 : index
    %97 = vector.load %arg15[%c9_49, %c9_50] : memref<18x16xf32, #tpu.memory_space<vmem>>, vector<1x7xf32>
    tpu.vector_store %arg15[%c9_49, %c9_50], %96 {strides = array<i32>} : memref<18x16xf32, #tpu.memory_space<vmem>>, vector<1x7xf32>,
    %98 = vector.extract_strided_slice %95 {offsets = [0, 7], sizes = [1, 2], strides = [1, 1]} : vector<1x9xf32> to vector<1x2xf32>
    %c10_51 = arith.constant 10 : index
    %c0_52 = arith.constant 0 : index
    %99 = vector.load %arg15[%c10_51, %c0_52] : memref<18x16xf32, #tpu.memory_space<vmem>>, vector<1x2xf32>
    tpu.vector_store %arg15[%c10_51, %c0_52], %98 {strides = array<i32>} : memref<18x16xf32, #tpu.memory_space<vmem>>, vector<1x2xf32>,
    %100 = vector.extract_strided_slice %36 {offsets = [2, 9], sizes = [1, 9], strides = [1, 1]} : vector<16x18xf32> to vector<1x9xf32>
    %c10_53 = arith.constant 10 : index
    %c2_54 = arith.constant 2 : index
    %101 = vector.load %arg15[%c10_53, %c2_54] : memref<18x16xf32, #tpu.memory_space<vmem>>, vector<1x9xf32>
    tpu.vector_store %arg15[%c10_53, %c2_54], %100 {strides = array<i32>} : memref<18x16xf32, #tpu.memory_space<vmem>>, vector<1x9xf32>,
    %102 = vector.extract_strided_slice %36 {offsets = [3, 9], sizes = [1, 9], strides = [1, 1]} : vector<16x18xf32> to vector<1x9xf32>
    %103 = vector.extract_strided_slice %102 {offsets = [0, 0], sizes = [1, 5], strides = [1, 1]} : vector<1x9xf32> to vector<1x5xf32>
    %c10_55 = arith.constant 10 : index
    %c11_56 = arith.constant 11 : index
    %104 = vector.load %arg15[%c10_55, %c11_56] : memref<18x16xf32, #tpu.memory_space<vmem>>, vector<1x5xf32>
    tpu.vector_store %arg15[%c10_55, %c11_56], %103 {strides = array<i32>} : memref<18x16xf32, #tpu.memory_space<vmem>>, vector<1x5xf32>,
    %105 = vector.extract_strided_slice %102 {offsets = [0, 5], sizes = [1, 4], strides = [1, 1]} : vector<1x9xf32> to vector<1x4xf32>
    %c11_57 = arith.constant 11 : index
    %c0_58 = arith.constant 0 : index
    %106 = vector.load %arg15[%c11_57, %c0_58] : memref<18x16xf32, #tpu.memory_space<vmem>>, vector<1x4xf32>
    tpu.vector_store %arg15[%c11_57, %c0_58], %105 {strides = array<i32>} : memref<18x16xf32, #tpu.memory_space<vmem>>, vector<1x4xf32>,
    %107 = vector.extract_strided_slice %36 {offsets = [4, 9], sizes = [1, 9], strides = [1, 1]} : vector<16x18xf32> to vector<1x9xf32>
    %c11_59 = arith.constant 11 : index
    %c4_60 = arith.constant 4 : index
    %108 = vector.load %arg15[%c11_59, %c4_60] : memref<18x16xf32, #tpu.memory_space<vmem>>, vector<1x9xf32>
    tpu.vector_store %arg15[%c11_59, %c4_60], %107 {strides = array<i32>} : memref<18x16xf32, #tpu.memory_space<vmem>>, vector<1x9xf32>,
    %109 = vector.extract_strided_slice %36 {offsets = [5, 9], sizes = [1, 9], strides = [1, 1]} : vector<16x18xf32> to vector<1x9xf32>
    %110 = vector.extract_strided_slice %109 {offsets = [0, 0], sizes = [1, 3], strides = [1, 1]} : vector<1x9xf32> to vector<1x3xf32>
    %c11_61 = arith.constant 11 : index
    %c13_62 = arith.constant 13 : index
    %111 = vector.load %arg15[%c11_61, %c13_62] : memref<18x16xf32, #tpu.memory_space<vmem>>, vector<1x3xf32>
    tpu.vector_store %arg15[%c11_61, %c13_62], %110 {strides = array<i32>} : memref<18x16xf32, #tpu.memory_space<vmem>>, vector<1x3xf32>,
    %112 = vector.extract_strided_slice %109 {offsets = [0, 3], sizes = [1, 6], strides = [1, 1]} : vector<1x9xf32> to vector<1x6xf32>
    %c12_63 = arith.constant 12 : index
    %c0_64 = arith.constant 0 : index
    %113 = vector.load %arg15[%c12_63, %c0_64] : memref<18x16xf32, #tpu.memory_space<vmem>>, vector<1x6xf32>
    tpu.vector_store %arg15[%c12_63, %c0_64], %112 {strides = array<i32>} : memref<18x16xf32, #tpu.memory_space<vmem>>, vector<1x6xf32>,
    %114 = vector.extract_strided_slice %36 {offsets = [6, 9], sizes = [1, 9], strides = [1, 1]} : vector<16x18xf32> to vector<1x9xf32>
    %c12_65 = arith.constant 12 : index
    %c6_66 = arith.constant 6 : index
    %115 = vector.load %arg15[%c12_65, %c6_66] : memref<18x16xf32, #tpu.memory_space<vmem>>, vector<1x9xf32>
    tpu.vector_store %arg15[%c12_65, %c6_66], %114 {strides = array<i32>} : memref<18x16xf32, #tpu.memory_space<vmem>>, vector<1x9xf32>,
    %116 = vector.extract_strided_slice %36 {offsets = [7, 9], sizes = [1, 9], strides = [1, 1]} : vector<16x18xf32> to vector<1x9xf32>
    %117 = vector.extract_strided_slice %116 {offsets = [0, 0], sizes = [1, 1], strides = [1, 1]} : vector<1x9xf32> to vector<1x1xf32>
    %c12_67 = arith.constant 12 : index
    %c15_68 = arith.constant 15 : index
    %118 = vector.load %arg15[%c12_67, %c15_68] : memref<18x16xf32, #tpu.memory_space<vmem>>, vector<1x1xf32>
    tpu.vector_store %arg15[%c12_67, %c15_68], %117 {strides = array<i32>} : memref<18x16xf32, #tpu.memory_space<vmem>>, vector<1x1xf32>,
    %119 = vector.extract_strided_slice %116 {offsets = [0, 1], sizes = [1, 8], strides = [1, 1]} : vector<1x9xf32> to vector<1x8xf32>
    %c13_69 = arith.constant 13 : index
    %c0_70 = arith.constant 0 : index
    %120 = vector.load %arg15[%c13_69, %c0_70] : memref<18x16xf32, #tpu.memory_space<vmem>>, vector<1x8xf32>
    tpu.vector_store %arg15[%c13_69, %c0_70], %119 {strides = array<i32>} : memref<18x16xf32, #tpu.memory_space<vmem>>, vector<1x8xf32>,
    %121 = vector.extract_strided_slice %36 {offsets = [8, 9], sizes = [1, 9], strides = [1, 1]} : vector<16x18xf32> to vector<1x9xf32>
    %122 = vector.extract_strided_slice %121 {offsets = [0, 0], sizes = [1, 8], strides = [1, 1]} : vector<1x9xf32> to vector<1x8xf32>
    %c13_71 = arith.constant 13 : index
    %c8_72 = arith.constant 8 : index
    %123 = vector.load %arg15[%c13_71, %c8_72] : memref<18x16xf32, #tpu.memory_space<vmem>>, vector<1x8xf32>
    tpu.vector_store %arg15[%c13_71, %c8_72], %122 {strides = array<i32>} : memref<18x16xf32, #tpu.memory_space<vmem>>, vector<1x8xf32>,
    %124 = vector.extract_strided_slice %121 {offsets = [0, 8], sizes = [1, 1], strides = [1, 1]} : vector<1x9xf32> to vector<1x1xf32>
    %c14_73 = arith.constant 14 : index
    %c0_74 = arith.constant 0 : index
    %125 = vector.load %arg15[%c14_73, %c0_74] : memref<18x16xf32, #tpu.memory_space<vmem>>, vector<1x1xf32>
    tpu.vector_store %arg15[%c14_73, %c0_74], %124 {strides = array<i32>} : memref<18x16xf32, #tpu.memory_space<vmem>>, vector<1x1xf32>,
    %126 = vector.extract_strided_slice %36 {offsets = [9, 9], sizes = [1, 9], strides = [1, 1]} : vector<16x18xf32> to vector<1x9xf32>
    %c14_75 = arith.constant 14 : index
    %c1_76 = arith.constant 1 : index
    %127 = vector.load %arg15[%c14_75, %c1_76] : memref<18x16xf32, #tpu.memory_space<vmem>>, vector<1x9xf32>
    tpu.vector_store %arg15[%c14_75, %c1_76], %126 {strides = array<i32>} : memref<18x16xf32, #tpu.memory_space<vmem>>, vector<1x9xf32>,
    %128 = vector.extract_strided_slice %36 {offsets = [10, 9], sizes = [1, 9], strides = [1, 1]} : vector<16x18xf32> to vector<1x9xf32>
    %129 = vector.extract_strided_slice %128 {offsets = [0, 0], sizes = [1, 6], strides = [1, 1]} : vector<1x9xf32> to vector<1x6xf32>
    %c14_77 = arith.constant 14 : index
    %c10_78 = arith.constant 10 : index
    %130 = vector.load %arg15[%c14_77, %c10_78] : memref<18x16xf32, #tpu.memory_space<vmem>>, vector<1x6xf32>
    tpu.vector_store %arg15[%c14_77, %c10_78], %129 {strides = array<i32>} : memref<18x16xf32, #tpu.memory_space<vmem>>, vector<1x6xf32>,
    %131 = vector.extract_strided_slice %128 {offsets = [0, 6], sizes = [1, 3], strides = [1, 1]} : vector<1x9xf32> to vector<1x3xf32>
    %c15_79 = arith.constant 15 : index
    %c0_80 = arith.constant 0 : index
    %132 = vector.load %arg15[%c15_79, %c0_80] : memref<18x16xf32, #tpu.memory_space<vmem>>, vector<1x3xf32>
    tpu.vector_store %arg15[%c15_79, %c0_80], %131 {strides = array<i32>} : memref<18x16xf32, #tpu.memory_space<vmem>>, vector<1x3xf32>,
    %133 = vector.extract_strided_slice %36 {offsets = [11, 9], sizes = [1, 9], strides = [1, 1]} : vector<16x18xf32> to vector<1x9xf32>
    %c15_81 = arith.constant 15 : index
    %c3_82 = arith.constant 3 : index
    %134 = vector.load %arg15[%c15_81, %c3_82] : memref<18x16xf32, #tpu.memory_space<vmem>>, vector<1x9xf32>
    tpu.vector_store %arg15[%c15_81, %c3_82], %133 {strides = array<i32>} : memref<18x16xf32, #tpu.memory_space<vmem>>, vector<1x9xf32>,
    %135 = vector.extract_strided_slice %36 {offsets = [12, 9], sizes = [1, 9], strides = [1, 1]} : vector<16x18xf32> to vector<1x9xf32>
    %136 = vector.extract_strided_slice %135 {offsets = [0, 0], sizes = [1, 4], strides = [1, 1]} : vector<1x9xf32> to vector<1x4xf32>
    %c15_83 = arith.constant 15 : index
    %c12_84 = arith.constant 12 : index
    %137 = vector.load %arg15[%c15_83, %c12_84] : memref<18x16xf32, #tpu.memory_space<vmem>>, vector<1x4xf32>
    tpu.vector_store %arg15[%c15_83, %c12_84], %136 {strides = array<i32>} : memref<18x16xf32, #tpu.memory_space<vmem>>, vector<1x4xf32>,
    %138 = vector.extract_strided_slice %135 {offsets = [0, 4], sizes = [1, 5], strides = [1, 1]} : vector<1x9xf32> to vector<1x5xf32>
    %c16 = arith.constant 16 : index
    %c0_85 = arith.constant 0 : index
    %139 = vector.load %arg15[%c16, %c0_85] : memref<18x16xf32, #tpu.memory_space<vmem>>, vector<1x5xf32>
    tpu.vector_store %arg15[%c16, %c0_85], %138 {strides = array<i32>} : memref<18x16xf32, #tpu.memory_space<vmem>>, vector<1x5xf32>,
    %140 = vector.extract_strided_slice %36 {offsets = [13, 9], sizes = [1, 9], strides = [1, 1]} : vector<16x18xf32> to vector<1x9xf32>
    %c16_86 = arith.constant 16 : index
    %c5_87 = arith.constant 5 : index
    %141 = vector.load %arg15[%c16_86, %c5_87] : memref<18x16xf32, #tpu.memory_space<vmem>>, vector<1x9xf32>
    tpu.vector_store %arg15[%c16_86, %c5_87], %140 {strides = array<i32>} : memref<18x16xf32, #tpu.memory_space<vmem>>, vector<1x9xf32>,
    %142 = vector.extract_strided_slice %36 {offsets = [14, 9], sizes = [1, 9], strides = [1, 1]} : vector<16x18xf32> to vector<1x9xf32>
    %143 = vector.extract_strided_slice %142 {offsets = [0, 0], sizes = [1, 2], strides = [1, 1]} : vector<1x9xf32> to vector<1x2xf32>
    %c16_88 = arith.constant 16 : index
    %c14_89 = arith.constant 14 : index
    %144 = vector.load %arg15[%c16_88, %c14_89] : memref<18x16xf32, #tpu.memory_space<vmem>>, vector<1x2xf32>
    tpu.vector_store %arg15[%c16_88, %c14_89], %143 {strides = array<i32>} : memref<18x16xf32, #tpu.memory_space<vmem>>, vector<1x2xf32>,
    %145 = vector.extract_strided_slice %142 {offsets = [0, 2], sizes = [1, 7], strides = [1, 1]} : vector<1x9xf32> to vector<1x7xf32>
    %c17 = arith.constant 17 : index
    %c0_90 = arith.constant 0 : index
    %146 = vector.load %arg15[%c17, %c0_90] : memref<18x16xf32, #tpu.memory_space<vmem>>, vector<1x7xf32>
    tpu.vector_store %arg15[%c17, %c0_90], %145 {strides = array<i32>} : memref<18x16xf32, #tpu.memory_space<vmem>>, vector<1x7xf32>,
    %147 = vector.extract_strided_slice %36 {offsets = [15, 9], sizes = [1, 9], strides = [1, 1]} : vector<16x18xf32> to vector<1x9xf32>
    %c17_91 = arith.constant 17 : index
    %c7_92 = arith.constant 7 : index
    %148 = vector.load %arg15[%c17_91, %c7_92] : memref<18x16xf32, #tpu.memory_space<vmem>>, vector<1x9xf32>
    tpu.vector_store %arg15[%c17_91, %c7_92], %147 {strides = array<i32>} : memref<18x16xf32, #tpu.memory_space<vmem>>, vector<1x9xf32>,
    %c0_93 = arith.constant 0 : index
    %c0_94 = arith.constant 0 : index
    %149 = vector.load %arg15[%c0_93, %c0_94] : memref<18x16xf32, #tpu.memory_space<vmem>>, vector<18x16xf32>
    %c0_95 = arith.constant 0 : index
    %c0_96 = arith.constant 0 : index
    %150 = vector.load %arg5[%c0_95, %c0_96] : memref<16x128xf32, #tpu.memory_space<vmem>>, vector<16x128xf32>
    %cst_97 = arith.constant dense<0.000000e+00> : vector<18x128xf32>
    %151 = tpu.matmul %149, %150, %cst_97 {dimension_numbers = #tpu.dot_dimension_numbers<[1], [0], [0], [1], [0, 0, 1, 1], [], []>, precision = #tpu.contract_precision<fp32>} : vector<18x16xf32>, vector<16x128xf32>, vector<18x128xf32> -> vector<18x128xf32>
    %c0_98 = arith.constant 0 : index
    %c0_99 = arith.constant 0 : index
    %152 = vector.load %arg7[%c0_98, %c0_99] : memref<1x128xf32, #tpu.memory_space<vmem>>, vector<1x128xf32>
    %153 = vector.broadcast %152 : vector<1x128xf32> to vector<18x128xf32>
    %154 = arith.addf %151, %153 : vector<18x128xf32>
    %c0_100 = arith.constant 0 : index
    %c0_101 = arith.constant 0 : index
    %155 = vector.load %arg6[%c0_100, %c0_101] : memref<16x128xf32, #tpu.memory_space<vmem>>, vector<16x128xf32>
    %cst_102 = arith.constant 0.000000e+00 : f32
    %156 = vector.broadcast %cst_102 : f32 to vector<4x16xf32>
    %cst_103 = arith.constant 0.000000e+00 : f32
    %157 = vector.broadcast %cst_103 : f32 to vector<4x16xf32>
    %cst_104 = arith.constant dense<0.000000e+00> : vector<4x128xf32>
    %158 = tpu.matmul %156, %155, %cst_104 {dimension_numbers = #tpu.dot_dimension_numbers<[1], [0], [0], [1], [0, 0, 1, 1], [], []>, precision = #tpu.contract_precision<fp32>} : vector<4x16xf32>, vector<16x128xf32>, vector<4x128xf32> -> vector<4x128xf32>
    %159 = vector.extract_strided_slice %154 {offsets = [0, 0], sizes = [2, 64], strides = [1, 1]} : vector<18x128xf32> to vector<2x64xf32>
    %160 = vector.extract_strided_slice %158 {offsets = [0, 0], sizes = [2, 64], strides = [1, 1]} : vector<4x128xf32> to vector<2x64xf32>
    %161 = arith.addf %159, %160 : vector<2x64xf32>
    %162 = vector.extract_strided_slice %154 {offsets = [16, 64], sizes = [2, 64], strides = [1, 1]} : vector<18x128xf32> to vector<2x64xf32>
    %163 = vector.extract_strided_slice %158 {offsets = [2, 64], sizes = [2, 64], strides = [1, 1]} : vector<4x128xf32> to vector<2x64xf32>
    %164 = arith.addf %162, %163 : vector<2x64xf32>
    %165 = tpu.concatenate %161, %164 in 0 : vector<2x64xf32>, vector<2x64xf32> -> vector<4x64xf32>
    %166 = vector.extract_strided_slice %165 {offsets = [0, 0], sizes = [4, 16], strides = [1, 1]} : vector<4x64xf32> to vector<4x16xf32>
    %167 = arith.negf %166 : vector<4x16xf32>
    %168 = math.exp %167 : vector<4x16xf32>
    %cst_105 = arith.constant 1.000000e+00 : f32
    %169 = vector.broadcast %cst_105 : f32 to vector<4x16xf32>
    %170 = arith.addf %169, %168 : vector<4x16xf32>
    %171 = arith.divf %169, %170 : vector<4x16xf32>
    %172 = vector.extract_strided_slice %165 {offsets = [0, 16], sizes = [4, 16], strides = [1, 1]} : vector<4x64xf32> to vector<4x16xf32>
    %173 = arith.negf %172 : vector<4x16xf32>
    %174 = math.exp %173 : vector<4x16xf32>
    %cst_106 = arith.constant 1.000000e+00 : f32
    %175 = vector.broadcast %cst_106 : f32 to vector<4x16xf32>
    %176 = arith.addf %175, %174 : vector<4x16xf32>
    %177 = arith.divf %175, %176 : vector<4x16xf32>
    %178 = vector.extract_strided_slice %165 {offsets = [0, 32], sizes = [4, 16], strides = [1, 1]} : vector<4x64xf32> to vector<4x16xf32>
    %179 = math.tanh %178 : vector<4x16xf32>
    %180 = vector.extract_strided_slice %165 {offsets = [0, 48], sizes = [4, 16], strides = [1, 1]} : vector<4x64xf32> to vector<4x16xf32>
    %181 = arith.negf %180 : vector<4x16xf32>
    %182 = math.exp %181 : vector<4x16xf32>
    %cst_107 = arith.constant 1.000000e+00 : f32
    %183 = vector.broadcast %cst_107 : f32 to vector<4x16xf32>
    %184 = arith.addf %183, %182 : vector<4x16xf32>
    %185 = arith.divf %183, %184 : vector<4x16xf32>
    %186 = arith.mulf %177, %157 : vector<4x16xf32>
    %187 = arith.mulf %171, %179 : vector<4x16xf32>
    %188 = arith.addf %186, %187 : vector<4x16xf32>
    %189 = math.tanh %188 : vector<4x16xf32>
    %190 = arith.mulf %185, %189 : vector<4x16xf32>
    %191 = vector.extract_strided_slice %190 {offsets = [0, 0], sizes = [1, 16], strides = [1, 1]} : vector<4x16xf32> to vector<1x16xf32>
    %c0_108 = arith.constant 0 : index
    %c0_109 = arith.constant 0 : index
    %192 = vector.load %arg16[%c0_108, %c0_109] : memref<2x288xf32, #tpu.memory_space<vmem>>, vector<1x16xf32>
    tpu.vector_store %arg16[%c0_108, %c0_109], %191 {strides = array<i32>} : memref<2x288xf32, #tpu.memory_space<vmem>>, vector<1x16xf32>,
    %193 = vector.extract_strided_slice %190 {offsets = [2, 0], sizes = [1, 16], strides = [1, 1]} : vector<4x16xf32> to vector<1x16xf32>
    %c1_110 = arith.constant 1 : index
    %c240 = arith.constant 240 : index
    %194 = vector.load %arg16[%c1_110, %c240] : memref<2x288xf32, #tpu.memory_space<vmem>>, vector<1x16xf32>
    tpu.vector_store %arg16[%c1_110, %c240], %193 {strides = array<i32>} : memref<2x288xf32, #tpu.memory_space<vmem>>, vector<1x16xf32>,
    %195 = vector.extract_strided_slice %190 {offsets = [1, 0], sizes = [1, 16], strides = [1, 1]} : vector<4x16xf32> to vector<1x16xf32>
    %c0_111 = arith.constant 0 : index
    %c32 = arith.constant 32 : index
    %196 = vector.load %arg16[%c0_111, %c32] : memref<2x288xf32, #tpu.memory_space<vmem>>, vector<1x16xf32>
    tpu.vector_store %arg16[%c0_111, %c32], %195 {strides = array<i32>} : memref<2x288xf32, #tpu.memory_space<vmem>>, vector<1x16xf32>,
    %197 = vector.extract_strided_slice %190 {offsets = [3, 0], sizes = [1, 16], strides = [1, 1]} : vector<4x16xf32> to vector<1x16xf32>
    %c1_112 = arith.constant 1 : index
    %c272 = arith.constant 272 : index
    %198 = vector.load %arg16[%c1_112, %c272] : memref<2x288xf32, #tpu.memory_space<vmem>>, vector<1x16xf32>
    tpu.vector_store %arg16[%c1_112, %c272], %197 {strides = array<i32>} : memref<2x288xf32, #tpu.memory_space<vmem>>, vector<1x16xf32>,
    %cst_113 = arith.constant dense<0.000000e+00> : vector<4x128xf32>
    %199 = tpu.matmul %190, %155, %cst_113 {dimension_numbers = #tpu.dot_dimension_numbers<[1], [0], [0], [1], [0, 0, 1, 1], [], []>, precision = #tpu.contract_precision<fp32>} : vector<4x16xf32>, vector<16x128xf32>, vector<4x128xf32> -> vector<4x128xf32>
    %200 = vector.extract_strided_slice %154 {offsets = [2, 0], sizes = [2, 64], strides = [1, 1]} : vector<18x128xf32> to vector<2x64xf32>
    %201 = vector.extract_strided_slice %199 {offsets = [0, 0], sizes = [2, 64], strides = [1, 1]} : vector<4x128xf32> to vector<2x64xf32>
    %202 = arith.addf %200, %201 : vector<2x64xf32>
    %203 = vector.extract_strided_slice %154 {offsets = [14, 64], sizes = [2, 64], strides = [1, 1]} : vector<18x128xf32> to vector<2x64xf32>
    %204 = vector.extract_strided_slice %199 {offsets = [2, 64], sizes = [2, 64], strides = [1, 1]} : vector<4x128xf32> to vector<2x64xf32>
    %205 = arith.addf %203, %204 : vector<2x64xf32>
    %206 = tpu.concatenate %202, %205 in 0 : vector<2x64xf32>, vector<2x64xf32> -> vector<4x64xf32>
    %207 = vector.extract_strided_slice %206 {offsets = [0, 0], sizes = [4, 16], strides = [1, 1]} : vector<4x64xf32> to vector<4x16xf32>
    %208 = arith.negf %207 : vector<4x16xf32>
    %209 = math.exp %208 : vector<4x16xf32>
    %cst_114 = arith.constant 1.000000e+00 : f32
    %210 = vector.broadcast %cst_114 : f32 to vector<4x16xf32>
    %211 = arith.addf %210, %209 : vector<4x16xf32>
    %212 = arith.divf %210, %211 : vector<4x16xf32>
    %213 = vector.extract_strided_slice %206 {offsets = [0, 16], sizes = [4, 16], strides = [1, 1]} : vector<4x64xf32> to vector<4x16xf32>
    %214 = arith.negf %213 : vector<4x16xf32>
    %215 = math.exp %214 : vector<4x16xf32>
    %cst_115 = arith.constant 1.000000e+00 : f32
    %216 = vector.broadcast %cst_115 : f32 to vector<4x16xf32>
    %217 = arith.addf %216, %215 : vector<4x16xf32>
    %218 = arith.divf %216, %217 : vector<4x16xf32>
    %219 = vector.extract_strided_slice %206 {offsets = [0, 32], sizes = [4, 16], strides = [1, 1]} : vector<4x64xf32> to vector<4x16xf32>
    %220 = math.tanh %219 : vector<4x16xf32>
    %221 = vector.extract_strided_slice %206 {offsets = [0, 48], sizes = [4, 16], strides = [1, 1]} : vector<4x64xf32> to vector<4x16xf32>
    %222 = arith.negf %221 : vector<4x16xf32>
    %223 = math.exp %222 : vector<4x16xf32>
    %cst_116 = arith.constant 1.000000e+00 : f32
    %224 = vector.broadcast %cst_116 : f32 to vector<4x16xf32>
    %225 = arith.addf %224, %223 : vector<4x16xf32>
    %226 = arith.divf %224, %225 : vector<4x16xf32>
    %227 = arith.mulf %218, %188 : vector<4x16xf32>
    %228 = arith.mulf %212, %220 : vector<4x16xf32>
    %229 = arith.addf %227, %228 : vector<4x16xf32>
    %230 = math.tanh %229 : vector<4x16xf32>
    %231 = arith.mulf %226, %230 : vector<4x16xf32>
    %232 = vector.extract_strided_slice %231 {offsets = [0, 0], sizes = [1, 16], strides = [1, 1]} : vector<4x16xf32> to vector<1x16xf32>
    %c0_117 = arith.constant 0 : index
    %c64 = arith.constant 64 : index
    %233 = vector.load %arg16[%c0_117, %c64] : memref<2x288xf32, #tpu.memory_space<vmem>>, vector<1x16xf32>
    tpu.vector_store %arg16[%c0_117, %c64], %232 {strides = array<i32>} : memref<2x288xf32, #tpu.memory_space<vmem>>, vector<1x16xf32>,
    %234 = vector.extract_strided_slice %231 {offsets = [2, 0], sizes = [1, 16], strides = [1, 1]} : vector<4x16xf32> to vector<1x16xf32>
    %c1_118 = arith.constant 1 : index
    %c176 = arith.constant 176 : index
    %235 = vector.load %arg16[%c1_118, %c176] : memref<2x288xf32, #tpu.memory_space<vmem>>, vector<1x16xf32>
    tpu.vector_store %arg16[%c1_118, %c176], %234 {strides = array<i32>} : memref<2x288xf32, #tpu.memory_space<vmem>>, vector<1x16xf32>,
    %236 = vector.extract_strided_slice %231 {offsets = [1, 0], sizes = [1, 16], strides = [1, 1]} : vector<4x16xf32> to vector<1x16xf32>
    %c0_119 = arith.constant 0 : index
    %c96 = arith.constant 96 : index
    %237 = vector.load %arg16[%c0_119, %c96] : memref<2x288xf32, #tpu.memory_space<vmem>>, vector<1x16xf32>
    tpu.vector_store %arg16[%c0_119, %c96], %236 {strides = array<i32>} : memref<2x288xf32, #tpu.memory_space<vmem>>, vector<1x16xf32>,
    %238 = vector.extract_strided_slice %231 {offsets = [3, 0], sizes = [1, 16], strides = [1, 1]} : vector<4x16xf32> to vector<1x16xf32>
    %c1_120 = arith.constant 1 : index
    %c208 = arith.constant 208 : index
    %239 = vector.load %arg16[%c1_120, %c208] : memref<2x288xf32, #tpu.memory_space<vmem>>, vector<1x16xf32>
    tpu.vector_store %arg16[%c1_120, %c208], %238 {strides = array<i32>} : memref<2x288xf32, #tpu.memory_space<vmem>>, vector<1x16xf32>,
    %cst_121 = arith.constant dense<0.000000e+00> : vector<4x128xf32>
    %240 = tpu.matmul %231, %155, %cst_121 {dimension_numbers = #tpu.dot_dimension_numbers<[1], [0], [0], [1], [0, 0, 1, 1], [], []>, precision = #tpu.contract_precision<fp32>} : vector<4x16xf32>, vector<16x128xf32>, vector<4x128xf32> -> vector<4x128xf32>
    %241 = vector.extract_strided_slice %154 {offsets = [4, 0], sizes = [2, 64], strides = [1, 1]} : vector<18x128xf32> to vector<2x64xf32>
    %242 = vector.extract_strided_slice %240 {offsets = [0, 0], sizes = [2, 64], strides = [1, 1]} : vector<4x128xf32> to vector<2x64xf32>
    %243 = arith.addf %241, %242 : vector<2x64xf32>
    %244 = vector.extract_strided_slice %154 {offsets = [12, 64], sizes = [2, 64], strides = [1, 1]} : vector<18x128xf32> to vector<2x64xf32>
    %245 = vector.extract_strided_slice %240 {offsets = [2, 64], sizes = [2, 64], strides = [1, 1]} : vector<4x128xf32> to vector<2x64xf32>
    %246 = arith.addf %244, %245 : vector<2x64xf32>
    %247 = tpu.concatenate %243, %246 in 0 : vector<2x64xf32>, vector<2x64xf32> -> vector<4x64xf32>
    %248 = vector.extract_strided_slice %247 {offsets = [0, 0], sizes = [4, 16], strides = [1, 1]} : vector<4x64xf32> to vector<4x16xf32>
    %249 = arith.negf %248 : vector<4x16xf32>
    %250 = math.exp %249 : vector<4x16xf32>
    %cst_122 = arith.constant 1.000000e+00 : f32
    %251 = vector.broadcast %cst_122 : f32 to vector<4x16xf32>
    %252 = arith.addf %251, %250 : vector<4x16xf32>
    %253 = arith.divf %251, %252 : vector<4x16xf32>
    %254 = vector.extract_strided_slice %247 {offsets = [0, 16], sizes = [4, 16], strides = [1, 1]} : vector<4x64xf32> to vector<4x16xf32>
    %255 = arith.negf %254 : vector<4x16xf32>
    %256 = math.exp %255 : vector<4x16xf32>
    %cst_123 = arith.constant 1.000000e+00 : f32
    %257 = vector.broadcast %cst_123 : f32 to vector<4x16xf32>
    %258 = arith.addf %257, %256 : vector<4x16xf32>
    %259 = arith.divf %257, %258 : vector<4x16xf32>
    %260 = vector.extract_strided_slice %247 {offsets = [0, 32], sizes = [4, 16], strides = [1, 1]} : vector<4x64xf32> to vector<4x16xf32>
    %261 = math.tanh %260 : vector<4x16xf32>
    %262 = vector.extract_strided_slice %247 {offsets = [0, 48], sizes = [4, 16], strides = [1, 1]} : vector<4x64xf32> to vector<4x16xf32>
    %263 = arith.negf %262 : vector<4x16xf32>
    %264 = math.exp %263 : vector<4x16xf32>
    %cst_124 = arith.constant 1.000000e+00 : f32
    %265 = vector.broadcast %cst_124 : f32 to vector<4x16xf32>
    %266 = arith.addf %265, %264 : vector<4x16xf32>
    %267 = arith.divf %265, %266 : vector<4x16xf32>
    %268 = arith.mulf %259, %229 : vector<4x16xf32>
    %269 = arith.mulf %253, %261 : vector<4x16xf32>
    %270 = arith.addf %268, %269 : vector<4x16xf32>
    %271 = math.tanh %270 : vector<4x16xf32>
    %272 = arith.mulf %267, %271 : vector<4x16xf32>
    %273 = vector.extract_strided_slice %272 {offsets = [0, 0], sizes = [1, 16], strides = [1, 1]} : vector<4x16xf32> to vector<1x16xf32>
    %c0_125 = arith.constant 0 : index
    %c128 = arith.constant 128 : index
    %274 = vector.load %arg16[%c0_125, %c128] : memref<2x288xf32, #tpu.memory_space<vmem>>, vector<1x16xf32>
    tpu.vector_store %arg16[%c0_125, %c128], %273 {strides = array<i32>} : memref<2x288xf32, #tpu.memory_space<vmem>>, vector<1x16xf32>,
    %275 = vector.extract_strided_slice %272 {offsets = [2, 0], sizes = [1, 16], strides = [1, 1]} : vector<4x16xf32> to vector<1x16xf32>
    %c1_126 = arith.constant 1 : index
    %c112 = arith.constant 112 : index
    %276 = vector.load %arg16[%c1_126, %c112] : memref<2x288xf32, #tpu.memory_space<vmem>>, vector<1x16xf32>
    tpu.vector_store %arg16[%c1_126, %c112], %275 {strides = array<i32>} : memref<2x288xf32, #tpu.memory_space<vmem>>, vector<1x16xf32>,
    %277 = vector.extract_strided_slice %272 {offsets = [1, 0], sizes = [1, 16], strides = [1, 1]} : vector<4x16xf32> to vector<1x16xf32>
    %c0_127 = arith.constant 0 : index
    %c160 = arith.constant 160 : index
    %278 = vector.load %arg16[%c0_127, %c160] : memref<2x288xf32, #tpu.memory_space<vmem>>, vector<1x16xf32>
    tpu.vector_store %arg16[%c0_127, %c160], %277 {strides = array<i32>} : memref<2x288xf32, #tpu.memory_space<vmem>>, vector<1x16xf32>,
    %279 = vector.extract_strided_slice %272 {offsets = [3, 0], sizes = [1, 16], strides = [1, 1]} : vector<4x16xf32> to vector<1x16xf32>
    %c1_128 = arith.constant 1 : index
    %c144 = arith.constant 144 : index
    %280 = vector.load %arg16[%c1_128, %c144] : memref<2x288xf32, #tpu.memory_space<vmem>>, vector<1x16xf32>
    tpu.vector_store %arg16[%c1_128, %c144], %279 {strides = array<i32>} : memref<2x288xf32, #tpu.memory_space<vmem>>, vector<1x16xf32>,
    %cst_129 = arith.constant dense<0.000000e+00> : vector<4x128xf32>
    %281 = tpu.matmul %272, %155, %cst_129 {dimension_numbers = #tpu.dot_dimension_numbers<[1], [0], [0], [1], [0, 0, 1, 1], [], []>, precision = #tpu.contract_precision<fp32>} : vector<4x16xf32>, vector<16x128xf32>, vector<4x128xf32> -> vector<4x128xf32>
    %282 = vector.extract_strided_slice %154 {offsets = [6, 0], sizes = [2, 64], strides = [1, 1]} : vector<18x128xf32> to vector<2x64xf32>
    %283 = vector.extract_strided_slice %281 {offsets = [0, 0], sizes = [2, 64], strides = [1, 1]} : vector<4x128xf32> to vector<2x64xf32>
    %284 = arith.addf %282, %283 : vector<2x64xf32>
    %285 = vector.extract_strided_slice %154 {offsets = [10, 64], sizes = [2, 64], strides = [1, 1]} : vector<18x128xf32> to vector<2x64xf32>
    %286 = vector.extract_strided_slice %281 {offsets = [2, 64], sizes = [2, 64], strides = [1, 1]} : vector<4x128xf32> to vector<2x64xf32>
    %287 = arith.addf %285, %286 : vector<2x64xf32>
    %288 = tpu.concatenate %284, %287 in 0 : vector<2x64xf32>, vector<2x64xf32> -> vector<4x64xf32>
    %289 = vector.extract_strided_slice %288 {offsets = [0, 0], sizes = [4, 16], strides = [1, 1]} : vector<4x64xf32> to vector<4x16xf32>
    %290 = arith.negf %289 : vector<4x16xf32>
    %291 = math.exp %290 : vector<4x16xf32>
    %cst_130 = arith.constant 1.000000e+00 : f32
    %292 = vector.broadcast %cst_130 : f32 to vector<4x16xf32>
    %293 = arith.addf %292, %291 : vector<4x16xf32>
    %294 = arith.divf %292, %293 : vector<4x16xf32>
    %295 = vector.extract_strided_slice %288 {offsets = [0, 16], sizes = [4, 16], strides = [1, 1]} : vector<4x64xf32> to vector<4x16xf32>
    %296 = arith.negf %295 : vector<4x16xf32>
    %297 = math.exp %296 : vector<4x16xf32>
    %cst_131 = arith.constant 1.000000e+00 : f32
    %298 = vector.broadcast %cst_131 : f32 to vector<4x16xf32>
    %299 = arith.addf %298, %297 : vector<4x16xf32>
    %300 = arith.divf %298, %299 : vector<4x16xf32>
    %301 = vector.extract_strided_slice %288 {offsets = [0, 32], sizes = [4, 16], strides = [1, 1]} : vector<4x64xf32> to vector<4x16xf32>
    %302 = math.tanh %301 : vector<4x16xf32>
    %303 = vector.extract_strided_slice %288 {offsets = [0, 48], sizes = [4, 16], strides = [1, 1]} : vector<4x64xf32> to vector<4x16xf32>
    %304 = arith.negf %303 : vector<4x16xf32>
    %305 = math.exp %304 : vector<4x16xf32>
    %cst_132 = arith.constant 1.000000e+00 : f32
    %306 = vector.broadcast %cst_132 : f32 to vector<4x16xf32>
    %307 = arith.addf %306, %305 : vector<4x16xf32>
    %308 = arith.divf %306, %307 : vector<4x16xf32>
    %309 = arith.mulf %300, %270 : vector<4x16xf32>
    %310 = arith.mulf %294, %302 : vector<4x16xf32>
    %311 = arith.addf %309, %310 : vector<4x16xf32>
    %312 = math.tanh %311 : vector<4x16xf32>
    %313 = arith.mulf %308, %312 : vector<4x16xf32>
    %314 = vector.extract_strided_slice %313 {offsets = [0, 0], sizes = [1, 16], strides = [1, 1]} : vector<4x16xf32> to vector<1x16xf32>
    %c0_133 = arith.constant 0 : index
    %c192 = arith.constant 192 : index
    %315 = vector.load %arg16[%c0_133, %c192] : memref<2x288xf32, #tpu.memory_space<vmem>>, vector<1x16xf32>
    tpu.vector_store %arg16[%c0_133, %c192], %314 {strides = array<i32>} : memref<2x288xf32, #tpu.memory_space<vmem>>, vector<1x16xf32>,
    %316 = vector.extract_strided_slice %313 {offsets = [2, 0], sizes = [1, 16], strides = [1, 1]} : vector<4x16xf32> to vector<1x16xf32>
    %c1_134 = arith.constant 1 : index
    %c48 = arith.constant 48 : index
    %317 = vector.load %arg16[%c1_134, %c48] : memref<2x288xf32, #tpu.memory_space<vmem>>, vector<1x16xf32>
    tpu.vector_store %arg16[%c1_134, %c48], %316 {strides = array<i32>} : memref<2x288xf32, #tpu.memory_space<vmem>>, vector<1x16xf32>,
    %318 = vector.extract_strided_slice %313 {offsets = [1, 0], sizes = [1, 16], strides = [1, 1]} : vector<4x16xf32> to vector<1x16xf32>
    %c0_135 = arith.constant 0 : index
    %c224 = arith.constant 224 : index
    %319 = vector.load %arg16[%c0_135, %c224] : memref<2x288xf32, #tpu.memory_space<vmem>>, vector<1x16xf32>
    tpu.vector_store %arg16[%c0_135, %c224], %318 {strides = array<i32>} : memref<2x288xf32, #tpu.memory_space<vmem>>, vector<1x16xf32>,
    %320 = vector.extract_strided_slice %313 {offsets = [3, 0], sizes = [1, 16], strides = [1, 1]} : vector<4x16xf32> to vector<1x16xf32>
    %c1_136 = arith.constant 1 : index
    %c80 = arith.constant 80 : index
    %321 = vector.load %arg16[%c1_136, %c80] : memref<2x288xf32, #tpu.memory_space<vmem>>, vector<1x16xf32>
    tpu.vector_store %arg16[%c1_136, %c80], %320 {strides = array<i32>} : memref<2x288xf32, #tpu.memory_space<vmem>>, vector<1x16xf32>,
    %cst_137 = arith.constant dense<0.000000e+00> : vector<4x128xf32>
    %322 = tpu.matmul %313, %155, %cst_137 {dimension_numbers = #tpu.dot_dimension_numbers<[1], [0], [0], [1], [0, 0, 1, 1], [], []>, precision = #tpu.contract_precision<fp32>} : vector<4x16xf32>, vector<16x128xf32>, vector<4x128xf32> -> vector<4x128xf32>
    %323 = vector.extract_strided_slice %154 {offsets = [8, 0], sizes = [2, 64], strides = [1, 1]} : vector<18x128xf32> to vector<2x64xf32>
    %324 = vector.extract_strided_slice %322 {offsets = [0, 0], sizes = [2, 64], strides = [1, 1]} : vector<4x128xf32> to vector<2x64xf32>
    %325 = arith.addf %323, %324 : vector<2x64xf32>
    %326 = vector.extract_strided_slice %154 {offsets = [8, 64], sizes = [2, 64], strides = [1, 1]} : vector<18x128xf32> to vector<2x64xf32>
    %327 = vector.extract_strided_slice %322 {offsets = [2, 64], sizes = [2, 64], strides = [1, 1]} : vector<4x128xf32> to vector<2x64xf32>
    %328 = arith.addf %326, %327 : vector<2x64xf32>
    %329 = tpu.concatenate %325, %328 in 0 : vector<2x64xf32>, vector<2x64xf32> -> vector<4x64xf32>
    %330 = vector.extract_strided_slice %329 {offsets = [0, 0], sizes = [4, 16], strides = [1, 1]} : vector<4x64xf32> to vector<4x16xf32>
    %331 = arith.negf %330 : vector<4x16xf32>
    %332 = math.exp %331 : vector<4x16xf32>
    %cst_138 = arith.constant 1.000000e+00 : f32
    %333 = vector.broadcast %cst_138 : f32 to vector<4x16xf32>
    %334 = arith.addf %333, %332 : vector<4x16xf32>
    %335 = arith.divf %333, %334 : vector<4x16xf32>
    %336 = vector.extract_strided_slice %329 {offsets = [0, 16], sizes = [4, 16], strides = [1, 1]} : vector<4x64xf32> to vector<4x16xf32>
    %337 = arith.negf %336 : vector<4x16xf32>
    %338 = math.exp %337 : vector<4x16xf32>
    %cst_139 = arith.constant 1.000000e+00 : f32
    %339 = vector.broadcast %cst_139 : f32 to vector<4x16xf32>
    %340 = arith.addf %339, %338 : vector<4x16xf32>
    %341 = arith.divf %339, %340 : vector<4x16xf32>
    %342 = vector.extract_strided_slice %329 {offsets = [0, 32], sizes = [4, 16], strides = [1, 1]} : vector<4x64xf32> to vector<4x16xf32>
    %343 = math.tanh %342 : vector<4x16xf32>
    %344 = vector.extract_strided_slice %329 {offsets = [0, 48], sizes = [4, 16], strides = [1, 1]} : vector<4x64xf32> to vector<4x16xf32>
    %345 = arith.negf %344 : vector<4x16xf32>
    %346 = math.exp %345 : vector<4x16xf32>
    %cst_140 = arith.constant 1.000000e+00 : f32
    %347 = vector.broadcast %cst_140 : f32 to vector<4x16xf32>
    %348 = arith.addf %347, %346 : vector<4x16xf32>
    %349 = arith.divf %347, %348 : vector<4x16xf32>
    %350 = arith.mulf %341, %311 : vector<4x16xf32>
    %351 = arith.mulf %335, %343 : vector<4x16xf32>
    %352 = arith.addf %350, %351 : vector<4x16xf32>
    %353 = math.tanh %352 : vector<4x16xf32>
    %354 = arith.mulf %349, %353 : vector<4x16xf32>
    %355 = vector.extract_strided_slice %354 {offsets = [0, 0], sizes = [1, 16], strides = [1, 1]} : vector<4x16xf32> to vector<1x16xf32>
    %c0_141 = arith.constant 0 : index
    %c256 = arith.constant 256 : index
    %356 = vector.load %arg16[%c0_141, %c256] : memref<2x288xf32, #tpu.memory_space<vmem>>, vector<1x16xf32>
    tpu.vector_store %arg16[%c0_141, %c256], %355 {strides = array<i32>} : memref<2x288xf32, #tpu.memory_space<vmem>>, vector<1x16xf32>,
    %357 = vector.extract_strided_slice %354 {offsets = [2, 0], sizes = [1, 16], strides = [1, 1]} : vector<4x16xf32> to vector<1x16xf32>
    %c0_142 = arith.constant 0 : index
    %c272_143 = arith.constant 272 : index
    %358 = vector.load %arg16[%c0_142, %c272_143] : memref<2x288xf32, #tpu.memory_space<vmem>>, vector<1x16xf32>
    tpu.vector_store %arg16[%c0_142, %c272_143], %357 {strides = array<i32>} : memref<2x288xf32, #tpu.memory_space<vmem>>, vector<1x16xf32>,
    %359 = vector.extract_strided_slice %354 {offsets = [1, 0], sizes = [1, 16], strides = [1, 1]} : vector<4x16xf32> to vector<1x16xf32>
    %c1_144 = arith.constant 1 : index
    %c0_145 = arith.constant 0 : index
    %360 = vector.load %arg16[%c1_144, %c0_145] : memref<2x288xf32, #tpu.memory_space<vmem>>, vector<1x16xf32>
    tpu.vector_store %arg16[%c1_144, %c0_145], %359 {strides = array<i32>} : memref<2x288xf32, #tpu.memory_space<vmem>>, vector<1x16xf32>,
    %361 = vector.extract_strided_slice %354 {offsets = [3, 0], sizes = [1, 16], strides = [1, 1]} : vector<4x16xf32> to vector<1x16xf32>
    %c1_146 = arith.constant 1 : index
    %c16_147 = arith.constant 16 : index
    %362 = vector.load %arg16[%c1_146, %c16_147] : memref<2x288xf32, #tpu.memory_space<vmem>>, vector<1x16xf32>
    tpu.vector_store %arg16[%c1_146, %c16_147], %361 {strides = array<i32>} : memref<2x288xf32, #tpu.memory_space<vmem>>, vector<1x16xf32>,
    %cst_148 = arith.constant dense<0.000000e+00> : vector<4x128xf32>
    %363 = tpu.matmul %354, %155, %cst_148 {dimension_numbers = #tpu.dot_dimension_numbers<[1], [0], [0], [1], [0, 0, 1, 1], [], []>, precision = #tpu.contract_precision<fp32>} : vector<4x16xf32>, vector<16x128xf32>, vector<4x128xf32> -> vector<4x128xf32>
    %364 = vector.extract_strided_slice %154 {offsets = [10, 0], sizes = [2, 64], strides = [1, 1]} : vector<18x128xf32> to vector<2x64xf32>
    %365 = vector.extract_strided_slice %363 {offsets = [0, 0], sizes = [2, 64], strides = [1, 1]} : vector<4x128xf32> to vector<2x64xf32>
    %366 = arith.addf %364, %365 : vector<2x64xf32>
    %367 = vector.extract_strided_slice %154 {offsets = [6, 64], sizes = [2, 64], strides = [1, 1]} : vector<18x128xf32> to vector<2x64xf32>
    %368 = vector.extract_strided_slice %363 {offsets = [2, 64], sizes = [2, 64], strides = [1, 1]} : vector<4x128xf32> to vector<2x64xf32>
    %369 = arith.addf %367, %368 : vector<2x64xf32>
    %370 = tpu.concatenate %366, %369 in 0 : vector<2x64xf32>, vector<2x64xf32> -> vector<4x64xf32>
    %371 = vector.extract_strided_slice %370 {offsets = [0, 0], sizes = [4, 16], strides = [1, 1]} : vector<4x64xf32> to vector<4x16xf32>
    %372 = arith.negf %371 : vector<4x16xf32>
    %373 = math.exp %372 : vector<4x16xf32>
    %cst_149 = arith.constant 1.000000e+00 : f32
    %374 = vector.broadcast %cst_149 : f32 to vector<4x16xf32>
    %375 = arith.addf %374, %373 : vector<4x16xf32>
    %376 = arith.divf %374, %375 : vector<4x16xf32>
    %377 = vector.extract_strided_slice %370 {offsets = [0, 16], sizes = [4, 16], strides = [1, 1]} : vector<4x64xf32> to vector<4x16xf32>
    %378 = arith.negf %377 : vector<4x16xf32>
    %379 = math.exp %378 : vector<4x16xf32>
    %cst_150 = arith.constant 1.000000e+00 : f32
    %380 = vector.broadcast %cst_150 : f32 to vector<4x16xf32>
    %381 = arith.addf %380, %379 : vector<4x16xf32>
    %382 = arith.divf %380, %381 : vector<4x16xf32>
    %383 = vector.extract_strided_slice %370 {offsets = [0, 32], sizes = [4, 16], strides = [1, 1]} : vector<4x64xf32> to vector<4x16xf32>
    %384 = math.tanh %383 : vector<4x16xf32>
    %385 = vector.extract_strided_slice %370 {offsets = [0, 48], sizes = [4, 16], strides = [1, 1]} : vector<4x64xf32> to vector<4x16xf32>
    %386 = arith.negf %385 : vector<4x16xf32>
    %387 = math.exp %386 : vector<4x16xf32>
    %cst_151 = arith.constant 1.000000e+00 : f32
    %388 = vector.broadcast %cst_151 : f32 to vector<4x16xf32>
    %389 = arith.addf %388, %387 : vector<4x16xf32>
    %390 = arith.divf %388, %389 : vector<4x16xf32>
    %391 = arith.mulf %382, %352 : vector<4x16xf32>
    %392 = arith.mulf %376, %384 : vector<4x16xf32>
    %393 = arith.addf %391, %392 : vector<4x16xf32>
    %394 = math.tanh %393 : vector<4x16xf32>
    %395 = arith.mulf %390, %394 : vector<4x16xf32>
    %396 = vector.extract_strided_slice %395 {offsets = [0, 0], sizes = [1, 16], strides = [1, 1]} : vector<4x16xf32> to vector<1x16xf32>
    %c1_152 = arith.constant 1 : index
    %c32_153 = arith.constant 32 : index
    %397 = vector.load %arg16[%c1_152, %c32_153] : memref<2x288xf32, #tpu.memory_space<vmem>>, vector<1x16xf32>
    tpu.vector_store %arg16[%c1_152, %c32_153], %396 {strides = array<i32>} : memref<2x288xf32, #tpu.memory_space<vmem>>, vector<1x16xf32>,
    %398 = vector.extract_strided_slice %395 {offsets = [2, 0], sizes = [1, 16], strides = [1, 1]} : vector<4x16xf32> to vector<1x16xf32>
    %c0_154 = arith.constant 0 : index
    %c208_155 = arith.constant 208 : index
    %399 = vector.load %arg16[%c0_154, %c208_155] : memref<2x288xf32, #tpu.memory_space<vmem>>, vector<1x16xf32>
    tpu.vector_store %arg16[%c0_154, %c208_155], %398 {strides = array<i32>} : memref<2x288xf32, #tpu.memory_space<vmem>>, vector<1x16xf32>,
    %400 = vector.extract_strided_slice %395 {offsets = [1, 0], sizes = [1, 16], strides = [1, 1]} : vector<4x16xf32> to vector<1x16xf32>
    %c1_156 = arith.constant 1 : index
    %c64_157 = arith.constant 64 : index
    %401 = vector.load %arg16[%c1_156, %c64_157] : memref<2x288xf32, #tpu.memory_space<vmem>>, vector<1x16xf32>
    tpu.vector_store %arg16[%c1_156, %c64_157], %400 {strides = array<i32>} : memref<2x288xf32, #tpu.memory_space<vmem>>, vector<1x16xf32>,
    %402 = vector.extract_strided_slice %395 {offsets = [3, 0], sizes = [1, 16], strides = [1, 1]} : vector<4x16xf32> to vector<1x16xf32>
    %c0_158 = arith.constant 0 : index
    %c240_159 = arith.constant 240 : index
    %403 = vector.load %arg16[%c0_158, %c240_159] : memref<2x288xf32, #tpu.memory_space<vmem>>, vector<1x16xf32>
    tpu.vector_store %arg16[%c0_158, %c240_159], %402 {strides = array<i32>} : memref<2x288xf32, #tpu.memory_space<vmem>>, vector<1x16xf32>,
    %cst_160 = arith.constant dense<0.000000e+00> : vector<4x128xf32>
    %404 = tpu.matmul %395, %155, %cst_160 {dimension_numbers = #tpu.dot_dimension_numbers<[1], [0], [0], [1], [0, 0, 1, 1], [], []>, precision = #tpu.contract_precision<fp32>} : vector<4x16xf32>, vector<16x128xf32>, vector<4x128xf32> -> vector<4x128xf32>
    %405 = vector.extract_strided_slice %154 {offsets = [12, 0], sizes = [2, 64], strides = [1, 1]} : vector<18x128xf32> to vector<2x64xf32>
    %406 = vector.extract_strided_slice %404 {offsets = [0, 0], sizes = [2, 64], strides = [1, 1]} : vector<4x128xf32> to vector<2x64xf32>
    %407 = arith.addf %405, %406 : vector<2x64xf32>
    %408 = vector.extract_strided_slice %154 {offsets = [4, 64], sizes = [2, 64], strides = [1, 1]} : vector<18x128xf32> to vector<2x64xf32>
    %409 = vector.extract_strided_slice %404 {offsets = [2, 64], sizes = [2, 64], strides = [1, 1]} : vector<4x128xf32> to vector<2x64xf32>
    %410 = arith.addf %408, %409 : vector<2x64xf32>
    %411 = tpu.concatenate %407, %410 in 0 : vector<2x64xf32>, vector<2x64xf32> -> vector<4x64xf32>
    %412 = vector.extract_strided_slice %411 {offsets = [0, 0], sizes = [4, 16], strides = [1, 1]} : vector<4x64xf32> to vector<4x16xf32>
    %413 = arith.negf %412 : vector<4x16xf32>
    %414 = math.exp %413 : vector<4x16xf32>
    %cst_161 = arith.constant 1.000000e+00 : f32
    %415 = vector.broadcast %cst_161 : f32 to vector<4x16xf32>
    %416 = arith.addf %415, %414 : vector<4x16xf32>
    %417 = arith.divf %415, %416 : vector<4x16xf32>
    %418 = vector.extract_strided_slice %411 {offsets = [0, 16], sizes = [4, 16], strides = [1, 1]} : vector<4x64xf32> to vector<4x16xf32>
    %419 = arith.negf %418 : vector<4x16xf32>
    %420 = math.exp %419 : vector<4x16xf32>
    %cst_162 = arith.constant 1.000000e+00 : f32
    %421 = vector.broadcast %cst_162 : f32 to vector<4x16xf32>
    %422 = arith.addf %421, %420 : vector<4x16xf32>
    %423 = arith.divf %421, %422 : vector<4x16xf32>
    %424 = vector.extract_strided_slice %411 {offsets = [0, 32], sizes = [4, 16], strides = [1, 1]} : vector<4x64xf32> to vector<4x16xf32>
    %425 = math.tanh %424 : vector<4x16xf32>
    %426 = vector.extract_strided_slice %411 {offsets = [0, 48], sizes = [4, 16], strides = [1, 1]} : vector<4x64xf32> to vector<4x16xf32>
    %427 = arith.negf %426 : vector<4x16xf32>
    %428 = math.exp %427 : vector<4x16xf32>
    %cst_163 = arith.constant 1.000000e+00 : f32
    %429 = vector.broadcast %cst_163 : f32 to vector<4x16xf32>
    %430 = arith.addf %429, %428 : vector<4x16xf32>
    %431 = arith.divf %429, %430 : vector<4x16xf32>
    %432 = arith.mulf %423, %393 : vector<4x16xf32>
    %433 = arith.mulf %417, %425 : vector<4x16xf32>
    %434 = arith.addf %432, %433 : vector<4x16xf32>
    %435 = math.tanh %434 : vector<4x16xf32>
    %436 = arith.mulf %431, %435 : vector<4x16xf32>
    %437 = vector.extract_strided_slice %436 {offsets = [0, 0], sizes = [1, 16], strides = [1, 1]} : vector<4x16xf32> to vector<1x16xf32>
    %c1_164 = arith.constant 1 : index
    %c96_165 = arith.constant 96 : index
    %438 = vector.load %arg16[%c1_164, %c96_165] : memref<2x288xf32, #tpu.memory_space<vmem>>, vector<1x16xf32>
    tpu.vector_store %arg16[%c1_164, %c96_165], %437 {strides = array<i32>} : memref<2x288xf32, #tpu.memory_space<vmem>>, vector<1x16xf32>,
    %439 = vector.extract_strided_slice %436 {offsets = [2, 0], sizes = [1, 16], strides = [1, 1]} : vector<4x16xf32> to vector<1x16xf32>
    %c0_166 = arith.constant 0 : index
    %c144_167 = arith.constant 144 : index
    %440 = vector.load %arg16[%c0_166, %c144_167] : memref<2x288xf32, #tpu.memory_space<vmem>>, vector<1x16xf32>
    tpu.vector_store %arg16[%c0_166, %c144_167], %439 {strides = array<i32>} : memref<2x288xf32, #tpu.memory_space<vmem>>, vector<1x16xf32>,
    %441 = vector.extract_strided_slice %436 {offsets = [1, 0], sizes = [1, 16], strides = [1, 1]} : vector<4x16xf32> to vector<1x16xf32>
    %c1_168 = arith.constant 1 : index
    %c128_169 = arith.constant 128 : index
    %442 = vector.load %arg16[%c1_168, %c128_169] : memref<2x288xf32, #tpu.memory_space<vmem>>, vector<1x16xf32>
    tpu.vector_store %arg16[%c1_168, %c128_169], %441 {strides = array<i32>} : memref<2x288xf32, #tpu.memory_space<vmem>>, vector<1x16xf32>,
    %443 = vector.extract_strided_slice %436 {offsets = [3, 0], sizes = [1, 16], strides = [1, 1]} : vector<4x16xf32> to vector<1x16xf32>
    %c0_170 = arith.constant 0 : index
    %c176_171 = arith.constant 176 : index
    %444 = vector.load %arg16[%c0_170, %c176_171] : memref<2x288xf32, #tpu.memory_space<vmem>>, vector<1x16xf32>
    tpu.vector_store %arg16[%c0_170, %c176_171], %443 {strides = array<i32>} : memref<2x288xf32, #tpu.memory_space<vmem>>, vector<1x16xf32>,
    %cst_172 = arith.constant dense<0.000000e+00> : vector<4x128xf32>
    %445 = tpu.matmul %436, %155, %cst_172 {dimension_numbers = #tpu.dot_dimension_numbers<[1], [0], [0], [1], [0, 0, 1, 1], [], []>, precision = #tpu.contract_precision<fp32>} : vector<4x16xf32>, vector<16x128xf32>, vector<4x128xf32> -> vector<4x128xf32>
    %446 = vector.extract_strided_slice %154 {offsets = [14, 0], sizes = [2, 64], strides = [1, 1]} : vector<18x128xf32> to vector<2x64xf32>
    %447 = vector.extract_strided_slice %445 {offsets = [0, 0], sizes = [2, 64], strides = [1, 1]} : vector<4x128xf32> to vector<2x64xf32>
    %448 = arith.addf %446, %447 : vector<2x64xf32>
    %449 = vector.extract_strided_slice %154 {offsets = [2, 64], sizes = [2, 64], strides = [1, 1]} : vector<18x128xf32> to vector<2x64xf32>
    %450 = vector.extract_strided_slice %445 {offsets = [2, 64], sizes = [2, 64], strides = [1, 1]} : vector<4x128xf32> to vector<2x64xf32>
    %451 = arith.addf %449, %450 : vector<2x64xf32>
    %452 = tpu.concatenate %448, %451 in 0 : vector<2x64xf32>, vector<2x64xf32> -> vector<4x64xf32>
    %453 = vector.extract_strided_slice %452 {offsets = [0, 0], sizes = [4, 16], strides = [1, 1]} : vector<4x64xf32> to vector<4x16xf32>
    %454 = arith.negf %453 : vector<4x16xf32>
    %455 = math.exp %454 : vector<4x16xf32>
    %cst_173 = arith.constant 1.000000e+00 : f32
    %456 = vector.broadcast %cst_173 : f32 to vector<4x16xf32>
    %457 = arith.addf %456, %455 : vector<4x16xf32>
    %458 = arith.divf %456, %457 : vector<4x16xf32>
    %459 = vector.extract_strided_slice %452 {offsets = [0, 16], sizes = [4, 16], strides = [1, 1]} : vector<4x64xf32> to vector<4x16xf32>
    %460 = arith.negf %459 : vector<4x16xf32>
    %461 = math.exp %460 : vector<4x16xf32>
    %cst_174 = arith.constant 1.000000e+00 : f32
    %462 = vector.broadcast %cst_174 : f32 to vector<4x16xf32>
    %463 = arith.addf %462, %461 : vector<4x16xf32>
    %464 = arith.divf %462, %463 : vector<4x16xf32>
    %465 = vector.extract_strided_slice %452 {offsets = [0, 32], sizes = [4, 16], strides = [1, 1]} : vector<4x64xf32> to vector<4x16xf32>
    %466 = math.tanh %465 : vector<4x16xf32>
    %467 = vector.extract_strided_slice %452 {offsets = [0, 48], sizes = [4, 16], strides = [1, 1]} : vector<4x64xf32> to vector<4x16xf32>
    %468 = arith.negf %467 : vector<4x16xf32>
    %469 = math.exp %468 : vector<4x16xf32>
    %cst_175 = arith.constant 1.000000e+00 : f32
    %470 = vector.broadcast %cst_175 : f32 to vector<4x16xf32>
    %471 = arith.addf %470, %469 : vector<4x16xf32>
    %472 = arith.divf %470, %471 : vector<4x16xf32>
    %473 = arith.mulf %464, %434 : vector<4x16xf32>
    %474 = arith.mulf %458, %466 : vector<4x16xf32>
    %475 = arith.addf %473, %474 : vector<4x16xf32>
    %476 = math.tanh %475 : vector<4x16xf32>
    %477 = arith.mulf %472, %476 : vector<4x16xf32>
    %478 = vector.extract_strided_slice %477 {offsets = [0, 0], sizes = [1, 16], strides = [1, 1]} : vector<4x16xf32> to vector<1x16xf32>
    %c1_176 = arith.constant 1 : index
    %c160_177 = arith.constant 160 : index
    %479 = vector.load %arg16[%c1_176, %c160_177] : memref<2x288xf32, #tpu.memory_space<vmem>>, vector<1x16xf32>
    tpu.vector_store %arg16[%c1_176, %c160_177], %478 {strides = array<i32>} : memref<2x288xf32, #tpu.memory_space<vmem>>, vector<1x16xf32>,
    %480 = vector.extract_strided_slice %477 {offsets = [2, 0], sizes = [1, 16], strides = [1, 1]} : vector<4x16xf32> to vector<1x16xf32>
    %c0_178 = arith.constant 0 : index
    %c80_179 = arith.constant 80 : index
    %481 = vector.load %arg16[%c0_178, %c80_179] : memref<2x288xf32, #tpu.memory_space<vmem>>, vector<1x16xf32>
    tpu.vector_store %arg16[%c0_178, %c80_179], %480 {strides = array<i32>} : memref<2x288xf32, #tpu.memory_space<vmem>>, vector<1x16xf32>,
    %482 = vector.extract_strided_slice %477 {offsets = [1, 0], sizes = [1, 16], strides = [1, 1]} : vector<4x16xf32> to vector<1x16xf32>
    %c1_180 = arith.constant 1 : index
    %c192_181 = arith.constant 192 : index
    %483 = vector.load %arg16[%c1_180, %c192_181] : memref<2x288xf32, #tpu.memory_space<vmem>>, vector<1x16xf32>
    tpu.vector_store %arg16[%c1_180, %c192_181], %482 {strides = array<i32>} : memref<2x288xf32, #tpu.memory_space<vmem>>, vector<1x16xf32>,
    %484 = vector.extract_strided_slice %477 {offsets = [3, 0], sizes = [1, 16], strides = [1, 1]} : vector<4x16xf32> to vector<1x16xf32>
    %c0_182 = arith.constant 0 : index
    %c112_183 = arith.constant 112 : index
    %485 = vector.load %arg16[%c0_182, %c112_183] : memref<2x288xf32, #tpu.memory_space<vmem>>, vector<1x16xf32>
    tpu.vector_store %arg16[%c0_182, %c112_183], %484 {strides = array<i32>} : memref<2x288xf32, #tpu.memory_space<vmem>>, vector<1x16xf32>,
    %cst_184 = arith.constant dense<0.000000e+00> : vector<4x128xf32>
    %486 = tpu.matmul %477, %155, %cst_184 {dimension_numbers = #tpu.dot_dimension_numbers<[1], [0], [0], [1], [0, 0, 1, 1], [], []>, precision = #tpu.contract_precision<fp32>} : vector<4x16xf32>, vector<16x128xf32>, vector<4x128xf32> -> vector<4x128xf32>
    %487 = vector.extract_strided_slice %154 {offsets = [16, 0], sizes = [2, 64], strides = [1, 1]} : vector<18x128xf32> to vector<2x64xf32>
    %488 = vector.extract_strided_slice %486 {offsets = [0, 0], sizes = [2, 64], strides = [1, 1]} : vector<4x128xf32> to vector<2x64xf32>
    %489 = arith.addf %487, %488 : vector<2x64xf32>
    %490 = vector.extract_strided_slice %154 {offsets = [0, 64], sizes = [2, 64], strides = [1, 1]} : vector<18x128xf32> to vector<2x64xf32>
    %491 = vector.extract_strided_slice %486 {offsets = [2, 64], sizes = [2, 64], strides = [1, 1]} : vector<4x128xf32> to vector<2x64xf32>
    %492 = arith.addf %490, %491 : vector<2x64xf32>
    %493 = tpu.concatenate %489, %492 in 0 : vector<2x64xf32>, vector<2x64xf32> -> vector<4x64xf32>
    %494 = vector.extract_strided_slice %493 {offsets = [0, 0], sizes = [4, 16], strides = [1, 1]} : vector<4x64xf32> to vector<4x16xf32>
    %495 = arith.negf %494 : vector<4x16xf32>
    %496 = math.exp %495 : vector<4x16xf32>
    %cst_185 = arith.constant 1.000000e+00 : f32
    %497 = vector.broadcast %cst_185 : f32 to vector<4x16xf32>
    %498 = arith.addf %497, %496 : vector<4x16xf32>
    %499 = arith.divf %497, %498 : vector<4x16xf32>
    %500 = vector.extract_strided_slice %493 {offsets = [0, 16], sizes = [4, 16], strides = [1, 1]} : vector<4x64xf32> to vector<4x16xf32>
    %501 = arith.negf %500 : vector<4x16xf32>
    %502 = math.exp %501 : vector<4x16xf32>
    %cst_186 = arith.constant 1.000000e+00 : f32
    %503 = vector.broadcast %cst_186 : f32 to vector<4x16xf32>
    %504 = arith.addf %503, %502 : vector<4x16xf32>
    %505 = arith.divf %503, %504 : vector<4x16xf32>
    %506 = vector.extract_strided_slice %493 {offsets = [0, 32], sizes = [4, 16], strides = [1, 1]} : vector<4x64xf32> to vector<4x16xf32>
    %507 = math.tanh %506 : vector<4x16xf32>
    %508 = vector.extract_strided_slice %493 {offsets = [0, 48], sizes = [4, 16], strides = [1, 1]} : vector<4x64xf32> to vector<4x16xf32>
    %509 = arith.negf %508 : vector<4x16xf32>
    %510 = math.exp %509 : vector<4x16xf32>
    %cst_187 = arith.constant 1.000000e+00 : f32
    %511 = vector.broadcast %cst_187 : f32 to vector<4x16xf32>
    %512 = arith.addf %511, %510 : vector<4x16xf32>
    %513 = arith.divf %511, %512 : vector<4x16xf32>
    %514 = arith.mulf %505, %475 : vector<4x16xf32>
    %515 = arith.mulf %499, %507 : vector<4x16xf32>
    %516 = arith.addf %514, %515 : vector<4x16xf32>
    %517 = math.tanh %516 : vector<4x16xf32>
    %518 = arith.mulf %513, %517 : vector<4x16xf32>
    %519 = vector.extract_strided_slice %518 {offsets = [0, 0], sizes = [1, 16], strides = [1, 1]} : vector<4x16xf32> to vector<1x16xf32>
    %c1_188 = arith.constant 1 : index
    %c224_189 = arith.constant 224 : index
    %520 = vector.load %arg16[%c1_188, %c224_189] : memref<2x288xf32, #tpu.memory_space<vmem>>, vector<1x16xf32>
    tpu.vector_store %arg16[%c1_188, %c224_189], %519 {strides = array<i32>} : memref<2x288xf32, #tpu.memory_space<vmem>>, vector<1x16xf32>,
    %521 = vector.extract_strided_slice %518 {offsets = [2, 0], sizes = [1, 16], strides = [1, 1]} : vector<4x16xf32> to vector<1x16xf32>
    %c0_190 = arith.constant 0 : index
    %c16_191 = arith.constant 16 : index
    %522 = vector.load %arg16[%c0_190, %c16_191] : memref<2x288xf32, #tpu.memory_space<vmem>>, vector<1x16xf32>
    tpu.vector_store %arg16[%c0_190, %c16_191], %521 {strides = array<i32>} : memref<2x288xf32, #tpu.memory_space<vmem>>, vector<1x16xf32>,
    %523 = vector.extract_strided_slice %518 {offsets = [1, 0], sizes = [1, 16], strides = [1, 1]} : vector<4x16xf32> to vector<1x16xf32>
    %c1_192 = arith.constant 1 : index
    %c256_193 = arith.constant 256 : index
    %524 = vector.load %arg16[%c1_192, %c256_193] : memref<2x288xf32, #tpu.memory_space<vmem>>, vector<1x16xf32>
    tpu.vector_store %arg16[%c1_192, %c256_193], %523 {strides = array<i32>} : memref<2x288xf32, #tpu.memory_space<vmem>>, vector<1x16xf32>,
    %525 = vector.extract_strided_slice %518 {offsets = [3, 0], sizes = [1, 16], strides = [1, 1]} : vector<4x16xf32> to vector<1x16xf32>
    %c0_194 = arith.constant 0 : index
    %c48_195 = arith.constant 48 : index
    %526 = vector.load %arg16[%c0_194, %c48_195] : memref<2x288xf32, #tpu.memory_space<vmem>>, vector<1x16xf32>
    tpu.vector_store %arg16[%c0_194, %c48_195], %525 {strides = array<i32>} : memref<2x288xf32, #tpu.memory_space<vmem>>, vector<1x16xf32>,
    %c0_196 = arith.constant 0 : index
    %c0_197 = arith.constant 0 : index
    %527 = vector.load %arg16[%c0_196, %c0_197] : memref<2x288xf32, #tpu.memory_space<vmem>>, vector<2x288xf32>
    %c0_198 = arith.constant 0 : index
    %c0_199 = arith.constant 0 : index
    %528 = vector.load %arg8[%c0_198, %c0_199] : memref<288x28xf32, #tpu.memory_space<vmem>>, vector<288x28xf32>
    %cst_200 = arith.constant dense<0.000000e+00> : vector<2x28xf32>
    %529 = tpu.matmul %527, %528, %cst_200 {dimension_numbers = #tpu.dot_dimension_numbers<[1], [0], [0], [1], [0, 0, 1, 1], [], []>, precision = #tpu.contract_precision<fp32>} : vector<2x288xf32>, vector<288x28xf32>, vector<2x28xf32> -> vector<2x28xf32>
    %c0_201 = arith.constant 0 : index
    %c0_202 = arith.constant 0 : index
    %530 = vector.load %arg9[%c0_201, %c0_202] : memref<1x28xf32, #tpu.memory_space<vmem>>, vector<1x28xf32>
    %531 = vector.broadcast %530 : vector<1x28xf32> to vector<2x28xf32>
    %532 = arith.addf %529, %531 : vector<2x28xf32>
    %cst_203 = arith.constant 0.000000e+00 : f32
    %533 = vector.broadcast %cst_203 : f32 to vector<2x28xf32>
    %534 = arith.cmpf ogt, %532, %533 : vector<2x28xf32>
    %cst_204 = arith.constant 2.500000e-01 : f32
    %535 = vector.broadcast %cst_204 : f32 to vector<2x28xf32>
    %536 = arith.mulf %535, %532 : vector<2x28xf32>
    %537 = arith.select %534, %532, %536 : vector<2x28xi1>, vector<2x28xf32>
    %c0_205 = arith.constant 0 : index
    %c0_206 = arith.constant 0 : index
    %538 = vector.load %arg10[%c0_205, %c0_206] : memref<28x5xf32, #tpu.memory_space<vmem>>, vector<28x5xf32>
    %cst_207 = arith.constant dense<0.000000e+00> : vector<2x5xf32>
    %539 = tpu.matmul %537, %538, %cst_207 {dimension_numbers = #tpu.dot_dimension_numbers<[1], [0], [0], [1], [0, 0, 1, 1], [], []>, precision = #tpu.contract_precision<fp32>} : vector<2x28xf32>, vector<28x5xf32>, vector<2x5xf32> -> vector<2x5xf32>
    %c0_208 = arith.constant 0 : index
    %c0_209 = arith.constant 0 : index
    %540 = vector.load %arg11[%c0_208, %c0_209] : memref<1x5xf32, #tpu.memory_space<vmem>>, vector<1x5xf32>
    %541 = vector.broadcast %540 : vector<1x5xf32> to vector<2x5xf32>
    %542 = arith.addf %539, %541 : vector<2x5xf32>
    %cst_210 = arith.constant 0.000000e+00 : f32
    %543 = vector.broadcast %cst_210 : f32 to vector<2x5xf32>
    %544 = arith.cmpf ogt, %542, %543 : vector<2x5xf32>
    %cst_211 = arith.constant 2.500000e-01 : f32
    %545 = vector.broadcast %cst_211 : f32 to vector<2x5xf32>
    %546 = arith.mulf %545, %542 : vector<2x5xf32>
    %547 = arith.select %544, %542, %546 : vector<2x5xi1>, vector<2x5xf32>
    %c0_212 = arith.constant 0 : index
    %c0_213 = arith.constant 0 : index
    %548 = vector.load %arg12[%c0_212, %c0_213] : memref<5x3xf32, #tpu.memory_space<vmem>>, vector<5x3xf32>
    %cst_214 = arith.constant dense<0.000000e+00> : vector<2x3xf32>
    %549 = tpu.matmul %547, %548, %cst_214 {dimension_numbers = #tpu.dot_dimension_numbers<[1], [0], [0], [1], [0, 0, 1, 1], [], []>, precision = #tpu.contract_precision<fp32>} : vector<2x5xf32>, vector<5x3xf32>, vector<2x3xf32> -> vector<2x3xf32>
    %c0_215 = arith.constant 0 : index
    %c0_216 = arith.constant 0 : index
    %550 = vector.load %arg13[%c0_215, %c0_216] : memref<1x3xf32, #tpu.memory_space<vmem>>, vector<1x3xf32>
    %551 = vector.broadcast %550 : vector<1x3xf32> to vector<2x3xf32>
    %552 = arith.addf %549, %551 : vector<2x3xf32>
    %c0_217 = arith.constant 0 : index
    %c0_218 = arith.constant 0 : index
    %553 = vector.load %arg14[%c0_217, %c0_218] : memref<2x3xf32, #tpu.memory_space<vmem>>, vector<2x3xf32>
    tpu.vector_store %arg14[%c0_217, %c0_218], %552 {strides = array<i32>} : memref<2x3xf32, #tpu.memory_space<vmem>>, vector<2x3xf32>,
    return
  }
}

</mosaic_0001>

<llo_original>
// kernel: _lambda_.1
$region0: #{_lambda_.1}
  #allocation0 [shape = 'u32[]', space=smem, size = 0x4, offset = 0x4, fixed_abs, tag = 'smem constant byte address 0x4 - core index']
  #allocation1 [shape = 'u32[144,128]{1,0:T(1,128)}', space=vmem, size = 0x12000, scoped, tag = 'internal scratch']
  #allocation2 [shape = 'f32[18,16]{1,0:T(8,128)}', space=vmem, size = 0x3000, scoped, tag = 'scratch operand']
  #allocation3 [shape = 'f32[2,288]{1,0:T(2,128)}', space=vmem, size = 0xc00, scoped, tag = 'scratch operand']
  %s0 = inlined_call_operand.vmem [shape: f32[8,26], index: 0, kind: input, shape index: {}]
  %s1 = inlined_call_operand.hbm [shape: f32[16,8], index: 1, kind: input, shape index: {}]
  %s2 = inlined_call_operand.vmem [shape: f32[16,1], index: 2, kind: input, shape index: {}]
  %s3 = inlined_call_operand.vmem [shape: f32[16,80], index: 3, kind: input, shape index: {}]
  %s4 = inlined_call_operand.vmem [shape: f32[16,1], index: 4, kind: input, shape index: {}]
  %s5 = inlined_call_operand.vmem [shape: f32[16,128], index: 5, kind: input, shape index: {}]
  %s6 = inlined_call_operand.vmem [shape: f32[16,128], index: 6, kind: input, shape index: {}]
  %s7 = inlined_call_operand.vmem [shape: f32[1,128], index: 7, kind: input, shape index: {}]
  %s8 = inlined_call_operand.hbm [shape: f32[288,28], index: 8, kind: input, shape index: {}]
  %s9 = inlined_call_operand.vmem [shape: f32[1,28], index: 9, kind: input, shape index: {}]
  %s10 = inlined_call_operand.vmem [shape: f32[28,5], index: 10, kind: input, shape index: {}]
  %s11 = inlined_call_operand.vmem [shape: f32[1,5], index: 11, kind: input, shape index: {}]
  %s12 = inlined_call_operand.vmem [shape: f32[5,3], index: 12, kind: input, shape index: {}]
  %s13 = inlined_call_operand.vmem [shape: f32[1,3], index: 13, kind: input, shape index: {}]
  %s14 = inlined_call_operand.hbm [shape: f32[2,3], index: 14, kind: output, shape index: {}]
  %s15 = sld [smem:[#allocation0]]
  $region74: #{_lambda_.1} parent=0
    _
  %s17 = ssub.s32 1, %s15
  %s18 = scalar_select 0, %s17, %s15
  $region1: #{_lambda_.1} parent=0
    #allocation4 [shape = 'u8[8192]{0}', space=vmem, size = 0x2000, scoped, tag = 'input window, operand 1, single buffered']
    #allocation5 [shape = 's32[1]{0}', space=sflag, size = 0x4, scoped, tag = 'scoped memory for _lambda_.1']
    #allocation6 [shape = 's32[1]{0}', space=sflag, size = 0x4, scoped, tag = 'scoped memory for _lambda_.1']
    #allocation7 [shape = 'u8[147456]{0}', space=vmem, size = 0x24000, scoped, tag = 'input window, operand 8, single buffered']
    #allocation8 [shape = 's32[1]{0}', space=sflag, size = 0x4, scoped, tag = 'scoped memory for _lambda_.1']
    #allocation9 [shape = 'u8[1024]{0}', space=vmem, size = 0x400, scoped, tag = 'output window, operand 0, single buffered']
    %19 = vsyncpa [#allocation5], 0
    %20 = vsyncpa [#allocation8], 0
    %21 = vsyncpa [#allocation6], 0
    // Predicated region
    $region2: #{_lambda_.1} parent=1 // pred_check
      _
    $region3: #{_lambda_.1} parent=1 // pred_check_branch
      %23 = sbr.rel (0) target = $region5
    $region4: #{_lambda_.1} parent=1 // pred_region
      _
    $region5: #{_lambda_.1} parent=1 // pred_fallthru
      _
    // Predicated region
    $region6: #{_lambda_.1} parent=1 // pred_check
      _
    $region7: #{_lambda_.1} parent=1 // pred_check_branch
      %25 = sbr.rel (0) target = $region9
    $region8: #{_lambda_.1} parent=1 // pred_region
      %s27 = ssub.s32 256, 256
      %28 = vsyncadd [#allocation5], %s27
      %s29 = sshll.u32 [#allocation4], 4
      %s30 = int_to_ptr.vmem [resolvable:$true] %s29
      %35 = dma.hbm_to_vmem [thread:$0]  %s1, 256, %s30, [#allocation5], 128, 128, 8
    $region9: #{_lambda_.1} parent=1 // pred_fallthru
      _
    // Predicated region
    $region10: #{_lambda_.1} parent=1 // pred_check
      _
    $region11: #{_lambda_.1} parent=1 // pred_check_branch
      %37 = sbr.rel (0) target = $region13
    $region12: #{_lambda_.1} parent=1 // pred_region
      _
    $region13: #{_lambda_.1} parent=1 // pred_fallthru
      _
    // Predicated region
    $region14: #{_lambda_.1} parent=1 // pred_check
      _
    $region15: #{_lambda_.1} parent=1 // pred_check_branch
      %39 = sbr.rel (0) target = $region17
    $region16: #{_lambda_.1} parent=1 // pred_region
      _
    $region17: #{_lambda_.1} parent=1 // pred_fallthru
      _
    // Predicated region
    $region18: #{_lambda_.1} parent=1 // pred_check
      _
    $region19: #{_lambda_.1} parent=1 // pred_check_branch
      %41 = sbr.rel (0) target = $region21
    $region20: #{_lambda_.1} parent=1 // pred_region
      _
    $region21: #{_lambda_.1} parent=1 // pred_fallthru
      _
    // Predicated region
    $region22: #{_lambda_.1} parent=1 // pred_check
      _
    $region23: #{_lambda_.1} parent=1 // pred_check_branch
      %43 = sbr.rel (0) target = $region25
    $region24: #{_lambda_.1} parent=1 // pred_region
      _
    $region25: #{_lambda_.1} parent=1 // pred_fallthru
      _
    // Predicated region
    $region26: #{_lambda_.1} parent=1 // pred_check
      _
    $region27: #{_lambda_.1} parent=1 // pred_check_branch
      %45 = sbr.rel (0) target = $region29
    $region28: #{_lambda_.1} parent=1 // pred_region
      _
    $region29: #{_lambda_.1} parent=1 // pred_fallthru
      _
    // Predicated region
    $region30: #{_lambda_.1} parent=1 // pred_check
      _
    $region31: #{_lambda_.1} parent=1 // pred_check_branch
      %47 = sbr.rel (0) target = $region33
    $region32: #{_lambda_.1} parent=1 // pred_region
      _
    $region33: #{_lambda_.1} parent=1 // pred_fallthru
      _
    // Predicated region
    $region34: #{_lambda_.1} parent=1 // pred_check
      _
    $region35: #{_lambda_.1} parent=1 // pred_check_branch
      %49 = sbr.rel (0) target = $region37
    $region36: #{_lambda_.1} parent=1 // pred_region
      %s51 = ssub.s32 4608, 4608
      %52 = vsyncadd [#allocation8], %s51
      %s53 = sshll.u32 [#allocation7], 4
      %s54 = int_to_ptr.vmem [resolvable:$true] %s53
      %59 = dma.hbm_to_vmem [thread:$0]  %s8, 4608, %s54, [#allocation8], 128, 128, 8
    $region37: #{_lambda_.1} parent=1 // pred_fallthru
      _
    // Predicated region
    $region38: #{_lambda_.1} parent=1 // pred_check
      _
    $region39: #{_lambda_.1} parent=1 // pred_check_branch
      %61 = sbr.rel (0) target = $region41
    $region40: #{_lambda_.1} parent=1 // pred_region
      _
    $region41: #{_lambda_.1} parent=1 // pred_fallthru
      _
    // Predicated region
    $region42: #{_lambda_.1} parent=1 // pred_check
      _
    $region43: #{_lambda_.1} parent=1 // pred_check_branch
      %63 = sbr.rel (0) target = $region45
    $region44: #{_lambda_.1} parent=1 // pred_region
      _
    $region45: #{_lambda_.1} parent=1 // pred_fallthru
      _
    // Predicated region
    $region46: #{_lambda_.1} parent=1 // pred_check
      _
    $region47: #{_lambda_.1} parent=1 // pred_check_branch
      %65 = sbr.rel (0) target = $region49
    $region48: #{_lambda_.1} parent=1 // pred_region
      _
    $region49: #{_lambda_.1} parent=1 // pred_fallthru
      _
    // Predicated region
    $region50: #{_lambda_.1} parent=1 // pred_check
      _
    $region51: #{_lambda_.1} parent=1 // pred_check_branch
      %67 = sbr.rel (0) target = $region53
    $region52: #{_lambda_.1} parent=1 // pred_region
      _
    $region53: #{_lambda_.1} parent=1 // pred_fallthru
      _
    // Predicated region
    $region54: #{_lambda_.1} parent=1 // pred_check
      _
    $region55: #{_lambda_.1} parent=1 // pred_check_branch
      %69 = sbr.rel (0) target = $region57
    $region56: #{_lambda_.1} parent=1 // pred_region
      _
    $region57: #{_lambda_.1} parent=1 // pred_fallthru
      _
    // Predicated region
    $region58: #{_lambda_.1} parent=1 // pred_check
      _
    $region59: #{_lambda_.1} parent=1 // pred_check_branch
      %71 = sbr.rel (0) target = $region61
    $region60: #{_lambda_.1} parent=1 // pred_region
      %72 = dma.done [#allocation5], 256
    $region61: #{_lambda_.1} parent=1 // pred_fallthru
      _
    // Predicated region
    $region62: #{_lambda_.1} parent=1 // pred_check
      _
    $region63: #{_lambda_.1} parent=1 // pred_check_branch
      %74 = sbr.rel (0) target = $region65
    $region64: #{_lambda_.1} parent=1 // pred_region
      %75 = dma.done [#allocation8], 4608
    $region65: #{_lambda_.1} parent=1 // pred_fallthru
      _
    %v76 = vld [vmem:[#allocation4] sm:$0xff]
    %v77 = vld [vmem:[#allocation4 + $0x8] sm:$0xff]
    %v78 = vld [vmem:[%s0] sm:$0xff]
    %v79 = vld [vmem:[%s2] sm:$0xff]
    %v80 = vld [vmem:[%s2 + $0x8] sm:$0xff]
    %82 = vset.pattern.permute.xlu0 0
    %83 = vperm.xlu0 %82, %v79
    %v84 = vpop.permute.xlu0 %83
    %87 = vset.pattern.permute.xlu0 0
    %88 = vperm.xlu0 %87, %v80
    %v89 = vpop.permute.xlu0 %88
    %vm91 = vcmask 64512
    %v93 = vsel %vm91, %v76, 0
    %v96 = vsel %vm91, %v77, 0
    %98 = vmatprep.subr.mxu0 0.0
    %v99 = vand.u32 %v78, 4294901760
    %100 = vmatpush1.msra.mxu0 %v99
    %101 = vmatprep.subr.mxu0 0.0
    %102 = vmatpush1.msra.mxu0 0.0
    %103 = vmatprep.subr.mxu0 0.0
    %104 = vmatpush1.msra.mxu0 0.0
    %105 = vmatprep.subr.mxu0 0.0
    %106 = vmatpush1.msra.mxu0 0.0
    %107 = vmatprep.subr.mxu0 0.0
    %108 = vmatpush1.msra.mxu0 0.0
    %109 = vmatprep.subr.mxu0 0.0
    %110 = vmatpush1.msra.mxu0 0.0
    %111 = vmatprep.subr.mxu0 0.0
    %112 = vmatpush1.msra.mxu0 0.0
    %113 = vmatprep.subr.mxu0 0.0
    %114 = vmatpush1.msra.mxu0 0.0
    %115 = vmatprep.subr.mxu0 0.0
    %116 = vmatpush1.msra.mxu0 0.0
    %117 = vmatprep.subr.mxu0 0.0
    %118 = vmatpush1.msra.mxu0 0.0
    %119 = vmatprep.subr.mxu0 0.0
    %120 = vmatpush1.msra.mxu0 0.0
    %121 = vmatprep.subr.mxu0 0.0
    %122 = vmatpush1.msra.mxu0 0.0
    %123 = vmatprep.subr.mxu0 0.0
    %124 = vmatpush1.msra.mxu0 0.0
    %125 = vmatprep.subr.mxu0 0.0
    %126 = vmatpush1.msra.mxu0 0.0
    %127 = vmatprep.subr.mxu0 0.0
    %128 = vmatpush1.msra.mxu0 0.0
    %129 = vmatprep.subr.mxu0 0.0
    %130 = vmatpush1.msra.mxu0 0.0
    %131 = vmatprep.subr.mxu0 0.0
    %132 = vmatpush1.msra.mxu0 0.0
    %133 = vmatprep.subr.mxu0 0.0
    %134 = vmatpush1.msra.mxu0 0.0
    %135 = vmatprep.subr.mxu0 0.0
    %136 = vmatpush1.msra.mxu0 0.0
    %137 = vmatprep.subr.mxu0 0.0
    %138 = vmatpush1.msra.mxu0 0.0
    %139 = vmatprep.subr.mxu0 0.0
    %140 = vmatpush1.msra.mxu0 0.0
    %141 = vmatprep.subr.mxu0 0.0
    %142 = vmatpush1.msra.mxu0 0.0
    %143 = vmatprep.subr.mxu0 0.0
    %144 = vmatpush1.msra.mxu0 0.0
    %145 = vmatprep.subr.mxu0 0.0
    %146 = vmatpush1.msra.mxu0 0.0
    %147 = vmatprep.subr.mxu0 0.0
    %148 = vmatpush1.msra.mxu0 0.0
    %149 = vmatprep.subr.mxu0 0.0
    %150 = vmatpush1.msra.mxu0 0.0
    %151 = vmatprep.subr.mxu0 0.0
    %152 = vmatpush1.msra.mxu0 0.0
    %153 = vmatprep.subr.mxu0 0.0
    %154 = vmatpush1.msra.mxu0 0.0
    %155 = vmatprep.subr.mxu0 0.0
    %156 = vmatpush1.msra.mxu0 0.0
    %157 = vmatprep.subr.mxu0 0.0
    %158 = vmatpush1.msra.mxu0 0.0
    %159 = vmatprep.subr.mxu0 0.0
    %160 = vmatpush1.msra.mxu0 0.0
    %161 = vmatprep.subr.mxu0 0.0
    %162 = vmatpush1.msra.mxu0 0.0
    %163 = vmatprep.mubr.f32.mxu0 0.0
    %v164 = vand.u32 %v93, 4294901760
    %v165 = vsub.f32 %v93, %v164
    %v166 = vand.u32 %v165, 4294901760
    %v167 = vsub.f32 %v165, %v166
    %v168 = vand.u32 %v167, 4294901760
    %169 = vmatmul.mubr.f32.gmra.mrb[0].mxu0 %v168
    %v170 = vpop.f32.mrb[0].mxu0
    %v171 = vadd.f32 %v84, %v170
    %v172 = vpop.f32.mrb[0].mxu0
    %173 = vmatprep.mubr.f32.mxu0 0.0
    %v174 = vand.u32 %v96, 4294901760
    %v175 = vsub.f32 %v96, %v174
    %v176 = vand.u32 %v175, 4294901760
    %v177 = vsub.f32 %v175, %v176
    %v178 = vand.u32 %v177, 4294901760
    %179 = vmatmul.mubr.f32.gmra.mrb[0].mxu0 %v178
    %v180 = vpop.f32.mrb[0].mxu0
    %v181 = vadd.f32 %v89, %v180
    %v182 = vpop.f32.mrb[0].mxu0
    %183 = vdwg.mxu0
    %184 = vmatprep.subr.mxu0 0.0
    %v185 = vand.u32 %v78, 4294901760
    %v186 = vsub.f32 %v78, %v185
    %v187 = vand.u32 %v186, 4294901760
    %v188 = vsub.f32 %v186, %v187
    %v189 = vand.u32 %v188, 4294901760
    %190 = vmatpush1.msra.mxu0 %v189
    %191 = vmatprep.subr.mxu0 0.0
    %192 = vmatpush1.msra.mxu0 0.0
    %193 = vmatprep.subr.mxu0 0.0
    %194 = vmatpush1.msra.mxu0 0.0
    %195 = vmatprep.subr.mxu0 0.0
    %196 = vmatpush1.msra.mxu0 0.0
    %197 = vmatprep.subr.mxu0 0.0
    %198 = vmatpush1.msra.mxu0 0.0
    %199 = vmatprep.subr.mxu0 0.0
    %200 = vmatpush1.msra.mxu0 0.0
    %201 = vmatprep.subr.mxu0 0.0
    %202 = vmatpush1.msra.mxu0 0.0
    %203 = vmatprep.subr.mxu0 0.0
    %204 = vmatpush1.msra.mxu0 0.0
    %205 = vmatprep.subr.mxu0 0.0
    %206 = vmatpush1.msra.mxu0 0.0
    %207 = vmatprep.subr.mxu0 0.0
    %208 = vmatpush1.msra.mxu0 0.0
    %209 = vmatprep.subr.mxu0 0.0
    %210 = vmatpush1.msra.mxu0 0.0
    %211 = vmatprep.subr.mxu0 0.0
    %212 = vmatpush1.msra.mxu0 0.0
    %213 = vmatprep.subr.mxu0 0.0
    %214 = vmatpush1.msra.mxu0 0.0
    %215 = vmatprep.subr.mxu0 0.0
    %216 = vmatpush1.msra.mxu0 0.0
    %217 = vmatprep.subr.mxu0 0.0
    %218 = vmatpush1.msra.mxu0 0.0
    %219 = vmatprep.subr.mxu0 0.0
    %220 = vmatpush1.msra.mxu0 0.0
    %221 = vmatprep.subr.mxu0 0.0
    %222 = vmatpush1.msra.mxu0 0.0
    %223 = vmatprep.subr.mxu0 0.0
    %224 = vmatpush1.msra.mxu0 0.0
    %225 = vmatprep.subr.mxu0 0.0
    %226 = vmatpush1.msra.mxu0 0.0
    %227 = vmatprep.subr.mxu0 0.0
    %228 = vmatpush1.msra.mxu0 0.0
    %229 = vmatprep.subr.mxu0 0.0
    %230 = vmatpush1.msra.mxu0 0.0
    %231 = vmatprep.subr.mxu0 0.0
    %232 = vmatpush1.msra.mxu0 0.0
    %233 = vmatprep.subr.mxu0 0.0
    %234 = vmatpush1.msra.mxu0 0.0
    %235 = vmatprep.subr.mxu0 0.0
    %236 = vmatpush1.msra.mxu0 0.0
    %237 = vmatprep.subr.mxu0 0.0
    %238 = vmatpush1.msra.mxu0 0.0
    %239 = vmatprep.subr.mxu0 0.0
    %240 = vmatpush1.msra.mxu0 0.0
    %241 = vmatprep.subr.mxu0 0.0
    %242 = vmatpush1.msra.mxu0 0.0
    %243 = vmatprep.subr.mxu0 0.0
    %244 = vmatpush1.msra.mxu0 0.0
    %245 = vmatprep.subr.mxu0 0.0
    %246 = vmatpush1.msra.mxu0 0.0
    %247 = vmatprep.subr.mxu0 0.0
    %248 = vmatpush1.msra.mxu0 0.0
    %249 = vmatprep.subr.mxu0 0.0
    %250 = vmatpush1.msra.mxu0 0.0
    %251 = vmatprep.subr.mxu0 0.0
    %252 = vmatpush1.msra.mxu0 0.0
    %253 = vmatprep.mubr.f32.mxu0 0.0
    %v254 = vand.u32 %v93, 4294901760
    %255 = vmatmul.mubr.f32.gmra.mrb[0].mxu0 %v254
    %v256 = vpop.f32.mrb[0].mxu0
    %v257 = vadd.f32 %v171, %v256
    %v258 = vpop.f32.mrb[0].mxu0
    %259 = vmatprep.mubr.f32.mxu0 0.0
    %v260 = vand.u32 %v96, 4294901760
    %261 = vmatmul.mubr.f32.gmra.mrb[0].mxu0 %v260
    %v262 = vpop.f32.mrb[0].mxu0
    %v263 = vadd.f32 %v181, %v262
    %v264 = vpop.f32.mrb[0].mxu0
    %265 = vdwg.mxu0
    %266 = vmatprep.subr.mxu0 0.0
    %v267 = vand.u32 %v78, 4294901760
    %v268 = vsub.f32 %v78, %v267
    %269 = vmatpush1.msra.mxu0 %v268
    %270 = vmatprep.subr.mxu0 0.0
    %271 = vmatpush1.msra.mxu0 0.0
    %272 = vmatprep.subr.mxu0 0.0
    %273 = vmatpush1.msra.mxu0 0.0
    %274 = vmatprep.subr.mxu0 0.0
    %275 = vmatpush1.msra.mxu0 0.0
    %276 = vmatprep.subr.mxu0 0.0
    %277 = vmatpush1.msra.mxu0 0.0
    %278 = vmatprep.subr.mxu0 0.0
    %279 = vmatpush1.msra.mxu0 0.0
    %280 = vmatprep.subr.mxu0 0.0
    %281 = vmatpush1.msra.mxu0 0.0
    %282 = vmatprep.subr.mxu0 0.0
    %283 = vmatpush1.msra.mxu0 0.0
    %284 = vmatprep.subr.mxu0 0.0
    %285 = vmatpush1.msra.mxu0 0.0
    %286 = vmatprep.subr.mxu0 0.0
    %287 = vmatpush1.msra.mxu0 0.0
    %288 = vmatprep.subr.mxu0 0.0
    %289 = vmatpush1.msra.mxu0 0.0
    %290 = vmatprep.subr.mxu0 0.0
    %291 = vmatpush1.msra.mxu0 0.0
    %292 = vmatprep.subr.mxu0 0.0
    %293 = vmatpush1.msra.mxu0 0.0
    %294 = vmatprep.subr.mxu0 0.0
    %295 = vmatpush1.msra.mxu0 0.0
    %296 = vmatprep.subr.mxu0 0.0
    %297 = vmatpush1.msra.mxu0 0.0
    %298 = vmatprep.subr.mxu0 0.0
    %299 = vmatpush1.msra.mxu0 0.0
    %300 = vmatprep.subr.mxu0 0.0
    %301 = vmatpush1.msra.mxu0 0.0
    %302 = vmatprep.subr.mxu0 0.0
    %303 = vmatpush1.msra.mxu0 0.0
    %304 = vmatprep.subr.mxu0 0.0
    %305 = vmatpush1.msra.mxu0 0.0
    %306 = vmatprep.subr.mxu0 0.0
    %307 = vmatpush1.msra.mxu0 0.0
    %308 = vmatprep.subr.mxu0 0.0
    %309 = vmatpush1.msra.mxu0 0.0
    %310 = vmatprep.subr.mxu0 0.0
    %311 = vmatpush1.msra.mxu0 0.0
    %312 = vmatprep.subr.mxu0 0.0
    %313 = vmatpush1.msra.mxu0 0.0
    %314 = vmatprep.subr.mxu0 0.0
    %315 = vmatpush1.msra.mxu0 0.0
    %316 = vmatprep.subr.mxu0 0.0
    %317 = vmatpush1.msra.mxu0 0.0
    %318 = vmatprep.subr.mxu0 0.0
    %319 = vmatpush1.msra.mxu0 0.0
    %320 = vmatprep.subr.mxu0 0.0
    %321 = vmatpush1.msra.mxu0 0.0
    %322 = vmatprep.subr.mxu0 0.0
    %323 = vmatpush1.msra.mxu0 0.0
    %324 = vmatprep.subr.mxu0 0.0
    %325 = vmatpush1.msra.mxu0 0.0
    %326 = vmatprep.subr.mxu0 0.0
    %327 = vmatpush1.msra.mxu0 0.0
    %328 = vmatprep.subr.mxu0 0.0
    %329 = vmatpush1.msra.mxu0 0.0
    %330 = vmatprep.subr.mxu0 0.0
    %331 = vmatpush1.msra.mxu0 0.0
    %332 = vmatprep.mubr.f32.mxu0 0.0
    %v333 = vand.u32 %v93, 4294901760
    %v334 = vsub.f32 %v93, %v333
    %335 = vmatmul.mubr.f32.gmra.mrb[0].mxu0 %v334
    %v336 = vpop.f32.mrb[0].mxu0
    %v337 = vadd.f32 %v257, %v336
    %v338 = vpop.f32.mrb[0].mxu0
    %339 = vmatprep.mubr.f32.mxu0 0.0
    %v340 = vand.u32 %v96, 4294901760
    %v341 = vsub.f32 %v96, %v340
    %342 = vmatmul.mubr.f32.gmra.mrb[0].mxu0 %v341
    %v343 = vpop.f32.mrb[0].mxu0
    %v344 = vadd.f32 %v263, %v343
    %v345 = vpop.f32.mrb[0].mxu0
    %346 = vdwg.mxu0
    %347 = vmatprep.subr.mxu0 0.0
    %v348 = vand.u32 %v78, 4294901760
    %349 = vmatpush1.msra.mxu0 %v348
    %350 = vmatprep.subr.mxu0 0.0
    %351 = vmatpush1.msra.mxu0 0.0
    %352 = vmatprep.subr.mxu0 0.0
    %353 = vmatpush1.msra.mxu0 0.0
    %354 = vmatprep.subr.mxu0 0.0
    %355 = vmatpush1.msra.mxu0 0.0
    %356 = vmatprep.subr.mxu0 0.0
    %357 = vmatpush1.msra.mxu0 0.0
    %358 = vmatprep.subr.mxu0 0.0
    %359 = vmatpush1.msra.mxu0 0.0
    %360 = vmatprep.subr.mxu0 0.0
    %361 = vmatpush1.msra.mxu0 0.0
    %362 = vmatprep.subr.mxu0 0.0
    %363 = vmatpush1.msra.mxu0 0.0
    %364 = vmatprep.subr.mxu0 0.0
    %365 = vmatpush1.msra.mxu0 0.0
    %366 = vmatprep.subr.mxu0 0.0
    %367 = vmatpush1.msra.mxu0 0.0
    %368 = vmatprep.subr.mxu0 0.0
    %369 = vmatpush1.msra.mxu0 0.0
    %370 = vmatprep.subr.mxu0 0.0
    %371 = vmatpush1.msra.mxu0 0.0
    %372 = vmatprep.subr.mxu0 0.0
    %373 = vmatpush1.msra.mxu0 0.0
    %374 = vmatprep.subr.mxu0 0.0
    %375 = vmatpush1.msra.mxu0 0.0
    %376 = vmatprep.subr.mxu0 0.0
    %377 = vmatpush1.msra.mxu0 0.0
    %378 = vmatprep.subr.mxu0 0.0
    %379 = vmatpush1.msra.mxu0 0.0
    %380 = vmatprep.subr.mxu0 0.0
    %381 = vmatpush1.msra.mxu0 0.0
    %382 = vmatprep.subr.mxu0 0.0
    %383 = vmatpush1.msra.mxu0 0.0
    %384 = vmatprep.subr.mxu0 0.0
    %385 = vmatpush1.msra.mxu0 0.0
    %386 = vmatprep.subr.mxu0 0.0
    %387 = vmatpush1.msra.mxu0 0.0
    %388 = vmatprep.subr.mxu0 0.0
    %389 = vmatpush1.msra.mxu0 0.0
    %390 = vmatprep.subr.mxu0 0.0
    %391 = vmatpush1.msra.mxu0 0.0
    %392 = vmatprep.subr.mxu0 0.0
    %393 = vmatpush1.msra.mxu0 0.0
    %394 = vmatprep.subr.mxu0 0.0
    %395 = vmatpush1.msra.mxu0 0.0
    %396 = vmatprep.subr.mxu0 0.0
    %397 = vmatpush1.msra.mxu0 0.0
    %398 = vmatprep.subr.mxu0 0.0
    %399 = vmatpush1.msra.mxu0 0.0
    %400 = vmatprep.subr.mxu0 0.0
    %401 = vmatpush1.msra.mxu0 0.0
    %402 = vmatprep.subr.mxu0 0.0
    %403 = vmatpush1.msra.mxu0 0.0
    %404 = vmatprep.subr.mxu0 0.0
    %405 = vmatpush1.msra.mxu0 0.0
    %406 = vmatprep.subr.mxu0 0.0
    %407 = vmatpush1.msra.mxu0 0.0
    %408 = vmatprep.subr.mxu0 0.0
    %409 = vmatpush1.msra.mxu0 0.0
    %410 = vmatprep.subr.mxu0 0.0
    %411 = vmatpush1.msra.mxu0 0.0
    %412 = vmatprep.mubr.f32.mxu0 0.0
    %v413 = vand.u32 %v93, 4294901760
    %v414 = vsub.f32 %v93, %v413
    %v415 = vand.u32 %v414, 4294901760
    %416 = vmatmul.mubr.f32.gmra.mrb[0].mxu0 %v415
    %v417 = vpop.f32.mrb[0].mxu0
    %v418 = vadd.f32 %v337, %v417
    %v419 = vpop.f32.mrb[0].mxu0
    %420 = vmatprep.mubr.f32.mxu0 0.0
    %v421 = vand.u32 %v96, 4294901760
    %v422 = vsub.f32 %v96, %v421
    %v423 = vand.u32 %v422, 4294901760
    %424 = vmatmul.mubr.f32.gmra.mrb[0].mxu0 %v423
    %v425 = vpop.f32.mrb[0].mxu0
    %v426 = vadd.f32 %v344, %v425
    %v427 = vpop.f32.mrb[0].mxu0
    %428 = vdwg.mxu0
    %429 = vmatprep.subr.mxu0 0.0
    %v430 = vand.u32 %v78, 4294901760
    %v431 = vsub.f32 %v78, %v430
    %v432 = vand.u32 %v431, 4294901760
    %433 = vmatpush1.msra.mxu0 %v432
    %434 = vmatprep.subr.mxu0 0.0
    %435 = vmatpush1.msra.mxu0 0.0
    %436 = vmatprep.subr.mxu0 0.0
    %437 = vmatpush1.msra.mxu0 0.0
    %438 = vmatprep.subr.mxu0 0.0
    %439 = vmatpush1.msra.mxu0 0.0
    %440 = vmatprep.subr.mxu0 0.0
    %441 = vmatpush1.msra.mxu0 0.0
    %442 = vmatprep.subr.mxu0 0.0
    %443 = vmatpush1.msra.mxu0 0.0
    %444 = vmatprep.subr.mxu0 0.0
    %445 = vmatpush1.msra.mxu0 0.0
    %446 = vmatprep.subr.mxu0 0.0
    %447 = vmatpush1.msra.mxu0 0.0
    %448 = vmatprep.subr.mxu0 0.0
    %449 = vmatpush1.msra.mxu0 0.0
    %450 = vmatprep.subr.mxu0 0.0
    %451 = vmatpush1.msra.mxu0 0.0
    %452 = vmatprep.subr.mxu0 0.0
    %453 = vmatpush1.msra.mxu0 0.0
    %454 = vmatprep.subr.mxu0 0.0
    %455 = vmatpush1.msra.mxu0 0.0
    %456 = vmatprep.subr.mxu0 0.0
    %457 = vmatpush1.msra.mxu0 0.0
    %458 = vmatprep.subr.mxu0 0.0
    %459 = vmatpush1.msra.mxu0 0.0
    %460 = vmatprep.subr.mxu0 0.0
    %461 = vmatpush1.msra.mxu0 0.0
    %462 = vmatprep.subr.mxu0 0.0
    %463 = vmatpush1.msra.mxu0 0.0
    %464 = vmatprep.subr.mxu0 0.0
    %465 = vmatpush1.msra.mxu0 0.0
    %466 = vmatprep.subr.mxu0 0.0
    %467 = vmatpush1.msra.mxu0 0.0
    %468 = vmatprep.subr.mxu0 0.0
    %469 = vmatpush1.msra.mxu0 0.0
    %470 = vmatprep.subr.mxu0 0.0
    %471 = vmatpush1.msra.mxu0 0.0
    %472 = vmatprep.subr.mxu0 0.0
    %473 = vmatpush1.msra.mxu0 0.0
    %474 = vmatprep.subr.mxu0 0.0
    %475 = vmatpush1.msra.mxu0 0.0
    %476 = vmatprep.subr.mxu0 0.0
    %477 = vmatpush1.msra.mxu0 0.0
    %478 = vmatprep.subr.mxu0 0.0
    %479 = vmatpush1.msra.mxu0 0.0
    %480 = vmatprep.subr.mxu0 0.0
    %481 = vmatpush1.msra.mxu0 0.0
    %482 = vmatprep.subr.mxu0 0.0
    %483 = vmatpush1.msra.mxu0 0.0
    %484 = vmatprep.subr.mxu0 0.0
    %485 = vmatpush1.msra.mxu0 0.0
    %486 = vmatprep.subr.mxu0 0.0
    %487 = vmatpush1.msra.mxu0 0.0
    %488 = vmatprep.subr.mxu0 0.0
    %489 = vmatpush1.msra.mxu0 0.0
    %490 = vmatprep.subr.mxu0 0.0
    %491 = vmatpush1.msra.mxu0 0.0
    %492 = vmatprep.subr.mxu0 0.0
    %493 = vmatpush1.msra.mxu0 0.0
    %494 = vmatprep.subr.mxu0 0.0
    %495 = vmatpush1.msra.mxu0 0.0
    %496 = vmatprep.mubr.f32.mxu0 0.0
    %v497 = vand.u32 %v93, 4294901760
    %498 = vmatmul.mubr.f32.gmra.mrb[0].mxu0 %v497
    %v499 = vpop.f32.mrb[0].mxu0
    %v500 = vadd.f32 %v418, %v499
    %v501 = vpop.f32.mrb[0].mxu0
    %502 = vmatprep.mubr.f32.mxu0 0.0
    %v503 = vand.u32 %v96, 4294901760
    %504 = vmatmul.mubr.f32.gmra.mrb[0].mxu0 %v503
    %v505 = vpop.f32.mrb[0].mxu0
    %v506 = vadd.f32 %v426, %v505
    %v507 = vpop.f32.mrb[0].mxu0
    %508 = vdwg.mxu0
    %509 = vmatprep.subr.mxu0 0.0
    %v510 = vand.u32 %v78, 4294901760
    %511 = vmatpush1.msra.mxu0 %v510
    %512 = vmatprep.subr.mxu0 0.0
    %513 = vmatpush1.msra.mxu0 0.0
    %514 = vmatprep.subr.mxu0 0.0
    %515 = vmatpush1.msra.mxu0 0.0
    %516 = vmatprep.subr.mxu0 0.0
    %517 = vmatpush1.msra.mxu0 0.0
    %518 = vmatprep.subr.mxu0 0.0
    %519 = vmatpush1.msra.mxu0 0.0
    %520 = vmatprep.subr.mxu0 0.0
    %521 = vmatpush1.msra.mxu0 0.0
    %522 = vmatprep.subr.mxu0 0.0
    %523 = vmatpush1.msra.mxu0 0.0
    %524 = vmatprep.subr.mxu0 0.0
    %525 = vmatpush1.msra.mxu0 0.0
    %526 = vmatprep.subr.mxu0 0.0
    %527 = vmatpush1.msra.mxu0 0.0
    %528 = vmatprep.subr.mxu0 0.0
    %529 = vmatpush1.msra.mxu0 0.0
    %530 = vmatprep.subr.mxu0 0.0
    %531 = vmatpush1.msra.mxu0 0.0
    %532 = vmatprep.subr.mxu0 0.0
    %533 = vmatpush1.msra.mxu0 0.0
    %534 = vmatprep.subr.mxu0 0.0
    %535 = vmatpush1.msra.mxu0 0.0
    %536 = vmatprep.subr.mxu0 0.0
    %537 = vmatpush1.msra.mxu0 0.0
    %538 = vmatprep.subr.mxu0 0.0
    %539 = vmatpush1.msra.mxu0 0.0
    %540 = vmatprep.subr.mxu0 0.0
    %541 = vmatpush1.msra.mxu0 0.0
    %542 = vmatprep.subr.mxu0 0.0
    %543 = vmatpush1.msra.mxu0 0.0
    %544 = vmatprep.subr.mxu0 0.0
    %545 = vmatpush1.msra.mxu0 0.0
    %546 = vmatprep.subr.mxu0 0.0
    %547 = vmatpush1.msra.mxu0 0.0
    %548 = vmatprep.subr.mxu0 0.0
    %549 = vmatpush1.msra.mxu0 0.0
    %550 = vmatprep.subr.mxu0 0.0
    %551 = vmatpush1.msra.mxu0 0.0
    %552 = vmatprep.subr.mxu0 0.0
    %553 = vmatpush1.msra.mxu0 0.0
    %554 = vmatprep.subr.mxu0 0.0
    %555 = vmatpush1.msra.mxu0 0.0
    %556 = vmatprep.subr.mxu0 0.0
    %557 = vmatpush1.msra.mxu0 0.0
    %558 = vmatprep.subr.mxu0 0.0
    %559 = vmatpush1.msra.mxu0 0.0
    %560 = vmatprep.subr.mxu0 0.0
    %561 = vmatpush1.msra.mxu0 0.0
    %562 = vmatprep.subr.mxu0 0.0
    %563 = vmatpush1.msra.mxu0 0.0
    %564 = vmatprep.subr.mxu0 0.0
    %565 = vmatpush1.msra.mxu0 0.0
    %566 = vmatprep.subr.mxu0 0.0
    %567 = vmatpush1.msra.mxu0 0.0
    %568 = vmatprep.subr.mxu0 0.0
    %569 = vmatpush1.msra.mxu0 0.0
    %570 = vmatprep.subr.mxu0 0.0
    %571 = vmatpush1.msra.mxu0 0.0
    %572 = vmatprep.subr.mxu0 0.0
    %573 = vmatpush1.msra.mxu0 0.0
    %574 = vmatprep.mubr.f32.mxu0 0.0
    %v575 = vand.u32 %v93, 4294901760
    %576 = vmatmul.mubr.f32.gmra.mrb[0].mxu0 %v575
    %v577 = vpop.f32.mrb[0].mxu0
    %v578 = vadd.f32 %v500, %v577
    %v579 = vpop.f32.mrb[0].mxu0
    %580 = vmatprep.mubr.f32.mxu0 0.0
    %v581 = vand.u32 %v96, 4294901760
    %582 = vmatmul.mubr.f32.gmra.mrb[0].mxu0 %v581
    %v583 = vpop.f32.mrb[0].mxu0
    %v584 = vadd.f32 %v506, %v583
    %v585 = vpop.f32.mrb[0].mxu0
    %586 = vdwg.mxu0
    %vm587 = vcmp.gt.f32.partialorder %v578, 0.0
    %vm588 = vcmp.gt.f32.partialorder %v584, 0.0
    %v589 = vmul.f32 %v578, 0.25
    %v590 = vmul.f32 %v584, 0.25
    %v591 = vsel %vm587, %v578, %v589
    %v592 = vsel %vm588, %v584, %v590
    %595 = vrot.lane.b32.xlu0 %v591, 124
    %v596 = vpop.permute.xlu0 %595
    %597 = vrot.lane.b32.xlu0 %v592, 124
    %v598 = vpop.permute.xlu0 %597
    %vm601 = vcmask 72704
    %v602 = vsel %vm601, %v591, %v596
    %v603 = vsel %vm601, %v592, %v598
    %604 = vrot.lane.b32.xlu0 %v591, 127
    %v605 = vpop.permute.xlu0 %604
    %606 = vrot.lane.b32.xlu0 %v592, 127
    %v607 = vpop.permute.xlu0 %606
    %610 = vrot.lane.b32.xlu0 %v591, 123
    %v611 = vpop.permute.xlu0 %610
    %612 = vrot.lane.b32.xlu0 %v592, 123
    %v613 = vpop.permute.xlu0 %612
    %v616 = vsel %vm601, %v605, %v611
    %v617 = vsel %vm601, %v607, %v613
    %618 = vrot.lane.b32.xlu0 %v591, 126
    %v619 = vpop.permute.xlu0 %618
    %620 = vrot.lane.b32.xlu0 %v592, 126
    %v621 = vpop.permute.xlu0 %620
    %624 = vrot.lane.b32.xlu0 %v591, 122
    %v625 = vpop.permute.xlu0 %624
    %626 = vrot.lane.b32.xlu0 %v592, 122
    %v627 = vpop.permute.xlu0 %626
    %v630 = vsel %vm601, %v619, %v625
    %v631 = vsel %vm601, %v621, %v627
    %632 = vrot.lane.b32.xlu0 %v591, 125
    %v633 = vpop.permute.xlu0 %632
    %634 = vrot.lane.b32.xlu0 %v592, 125
    %v635 = vpop.permute.xlu0 %634
    %638 = vrot.lane.b32.xlu0 %v591, 121
    %v639 = vpop.permute.xlu0 %638
    %640 = vrot.lane.b32.xlu0 %v592, 121
    %v641 = vpop.permute.xlu0 %640
    %v644 = vsel %vm601, %v633, %v639
    %v645 = vsel %vm601, %v635, %v641
    %646 = vrot.lane.b32.xlu0 %v591, 120
    %v647 = vpop.permute.xlu0 %646
    %648 = vrot.lane.b32.xlu0 %v592, 120
    %v649 = vpop.permute.xlu0 %648
    %v652 = vsel %vm601, %v596, %v647
    %v653 = vsel %vm601, %v598, %v649
    %v654 = vld [vmem:[%s3] sm:$0xff]
    %v655 = vld [vmem:[%s3 + $0x8] sm:$0xff]
    %v656 = vld [vmem:[%s4] sm:$0xff]
    %v657 = vld [vmem:[%s4 + $0x8] sm:$0xff]
    %659 = vset.pattern.permute.xlu0 0
    %660 = vperm.xlu0 %659, %v656
    %v661 = vpop.permute.xlu0 %660
    %664 = vset.pattern.permute.xlu0 0
    %665 = vperm.xlu0 %664, %v657
    %v666 = vpop.permute.xlu0 %665
    %vm668 = vcmask 654336
    %v670 = vsel %vm668, %v654, 0
    %v673 = vsel %vm668, %v655, 0
    %675 = vmatprep.subr.mxu0 0.0
    %v676 = vand.u32 %v602, 4294901760
    %677 = vmatpush1.msra.mxu0 %v676
    %678 = vmatprep.subr.mxu0 0.0
    %v679 = vand.u32 %v603, 4294901760
    %680 = vmatpush1.msra.mxu0 %v679
    %681 = vmatprep.subr.mxu0 0.0
    %v682 = vand.u32 %v616, 4294901760
    %683 = vmatpush1.msra.mxu0 %v682
    %684 = vmatprep.subr.mxu0 0.0
    %v685 = vand.u32 %v617, 4294901760
    %686 = vmatpush1.msra.mxu0 %v685
    %687 = vmatprep.subr.mxu0 0.0
    %v688 = vand.u32 %v630, 4294901760
    %689 = vmatpush1.msra.mxu0 %v688
    %690 = vmatprep.subr.mxu0 0.0
    %v691 = vand.u32 %v631, 4294901760
    %692 = vmatpush1.msra.mxu0 %v691
    %693 = vmatprep.subr.mxu0 0.0
    %v694 = vand.u32 %v644, 4294901760
    %695 = vmatpush1.msra.mxu0 %v694
    %696 = vmatprep.subr.mxu0 0.0
    %v697 = vand.u32 %v645, 4294901760
    %698 = vmatpush1.msra.mxu0 %v697
    %699 = vmatprep.subr.mxu0 0.0
    %v700 = vand.u32 %v652, 4294901760
    %701 = vmatpush1.msra.mxu0 %v700
    %702 = vmatprep.subr.mxu0 0.0
    %v703 = vand.u32 %v653, 4294901760
    %704 = vmatpush1.msra.mxu0 %v703
    %705 = vmatprep.subr.mxu0 0.0
    %706 = vmatpush1.msra.mxu0 0.0
    %707 = vmatprep.subr.mxu0 0.0
    %708 = vmatpush1.msra.mxu0 0.0
    %709 = vmatprep.subr.mxu0 0.0
    %710 = vmatpush1.msra.mxu0 0.0
    %711 = vmatprep.subr.mxu0 0.0
    %712 = vmatpush1.msra.mxu0 0.0
    %713 = vmatprep.subr.mxu0 0.0
    %714 = vmatpush1.msra.mxu0 0.0
    %715 = vmatprep.subr.mxu0 0.0
    %716 = vmatpush1.msra.mxu0 0.0
    %717 = vmatprep.subr.mxu0 0.0
    %718 = vmatpush1.msra.mxu0 0.0
    %719 = vmatprep.subr.mxu0 0.0
    %720 = vmatpush1.msra.mxu0 0.0
    %721 = vmatprep.subr.mxu0 0.0
    %722 = vmatpush1.msra.mxu0 0.0
    %723 = vmatprep.subr.mxu0 0.0
    %724 = vmatpush1.msra.mxu0 0.0
    %725 = vmatprep.subr.mxu0 0.0
    %726 = vmatpush1.msra.mxu0 0.0
    %727 = vmatprep.subr.mxu0 0.0
    %728 = vmatpush1.msra.mxu0 0.0
    %729 = vmatprep.subr.mxu0 0.0
    %730 = vmatpush1.msra.mxu0 0.0
    %731 = vmatprep.subr.mxu0 0.0
    %732 = vmatpush1.msra.mxu0 0.0
    %733 = vmatprep.subr.mxu0 0.0
    %734 = vmatpush1.msra.mxu0 0.0
    %735 = vmatprep.subr.mxu0 0.0
    %736 = vmatpush1.msra.mxu0 0.0
    %737 = vmatprep.subr.mxu0 0.0
    %738 = vmatpush1.msra.mxu0 0.0
    %739 = vmatprep.subr.mxu0 0.0
    %740 = vmatpush1.msra.mxu0 0.0
    %741 = vmatprep.subr.mxu0 0.0
    %742 = vmatpush1.msra.mxu0 0.0
    %743 = vmatprep.subr.mxu0 0.0
    %744 = vmatpush1.msra.mxu0 0.0
    %745 = vmatprep.subr.mxu0 0.0
    %746 = vmatpush1.msra.mxu0 0.0
    %747 = vmatprep.subr.mxu0 0.0
    %748 = vmatpush1.msra.mxu0 0.0
    %749 = vmatprep.mubr.f32.mxu0 0.0
    %v750 = vand.u32 %v670, 4294901760
    %v751 = vsub.f32 %v670, %v750
    %v752 = vand.u32 %v751, 4294901760
    %v753 = vsub.f32 %v751, %v752
    %v754 = vand.u32 %v753, 4294901760
    %755 = vmatmul.mubr.f32.gmra.mrb[0].mxu0 %v754
    %v756 = vpop.f32.mrb[0].mxu0
    %v757 = vadd.f32 %v661, %v756
    %v758 = vpop.f32.mrb[0].mxu0
    %759 = vmatprep.mubr.f32.mxu0 0.0
    %v760 = vand.u32 %v673, 4294901760
    %v761 = vsub.f32 %v673, %v760
    %v762 = vand.u32 %v761, 4294901760
    %v763 = vsub.f32 %v761, %v762
    %v764 = vand.u32 %v763, 4294901760
    %765 = vmatmul.mubr.f32.gmra.mrb[0].mxu0 %v764
    %v766 = vpop.f32.mrb[0].mxu0
    %v767 = vadd.f32 %v666, %v766
    %v768 = vpop.f32.mrb[0].mxu0
    %769 = vdwg.mxu0
    %770 = vmatprep.subr.mxu0 0.0
    %v771 = vand.u32 %v602, 4294901760
    %v772 = vsub.f32 %v602, %v771
    %v773 = vand.u32 %v772, 4294901760
    %v774 = vsub.f32 %v772, %v773
    %v775 = vand.u32 %v774, 4294901760
    %776 = vmatpush1.msra.mxu0 %v775
    %777 = vmatprep.subr.mxu0 0.0
    %v778 = vand.u32 %v603, 4294901760
    %v779 = vsub.f32 %v603, %v778
    %v780 = vand.u32 %v779, 4294901760
    %v781 = vsub.f32 %v779, %v780
    %v782 = vand.u32 %v781, 4294901760
    %783 = vmatpush1.msra.mxu0 %v782
    %784 = vmatprep.subr.mxu0 0.0
    %v785 = vand.u32 %v616, 4294901760
    %v786 = vsub.f32 %v616, %v785
    %v787 = vand.u32 %v786, 4294901760
    %v788 = vsub.f32 %v786, %v787
    %v789 = vand.u32 %v788, 4294901760
    %790 = vmatpush1.msra.mxu0 %v789
    %791 = vmatprep.subr.mxu0 0.0
    %v792 = vand.u32 %v617, 4294901760
    %v793 = vsub.f32 %v617, %v792
    %v794 = vand.u32 %v793, 4294901760
    %v795 = vsub.f32 %v793, %v794
    %v796 = vand.u32 %v795, 4294901760
    %797 = vmatpush1.msra.mxu0 %v796
    %798 = vmatprep.subr.mxu0 0.0
    %v799 = vand.u32 %v630, 4294901760
    %v800 = vsub.f32 %v630, %v799
    %v801 = vand.u32 %v800, 4294901760
    %v802 = vsub.f32 %v800, %v801
    %v803 = vand.u32 %v802, 4294901760
    %804 = vmatpush1.msra.mxu0 %v803
    %805 = vmatprep.subr.mxu0 0.0
    %v806 = vand.u32 %v631, 4294901760
    %v807 = vsub.f32 %v631, %v806
    %v808 = vand.u32 %v807, 4294901760
    %v809 = vsub.f32 %v807, %v808
    %v810 = vand.u32 %v809, 4294901760
    %811 = vmatpush1.msra.mxu0 %v810
    %812 = vmatprep.subr.mxu0 0.0
    %v813 = vand.u32 %v644, 4294901760
    %v814 = vsub.f32 %v644, %v813
    %v815 = vand.u32 %v814, 4294901760
    %v816 = vsub.f32 %v814, %v815
    %v817 = vand.u32 %v816, 4294901760
    %818 = vmatpush1.msra.mxu0 %v817
    %819 = vmatprep.subr.mxu0 0.0
    %v820 = vand.u32 %v645, 4294901760
    %v821 = vsub.f32 %v645, %v820
    %v822 = vand.u32 %v821, 4294901760
    %v823 = vsub.f32 %v821, %v822
    %v824 = vand.u32 %v823, 4294901760
    %825 = vmatpush1.msra.mxu0 %v824
    %826 = vmatprep.subr.mxu0 0.0
    %v827 = vand.u32 %v652, 4294901760
    %v828 = vsub.f32 %v652, %v827
    %v829 = vand.u32 %v828, 4294901760
    %v830 = vsub.f32 %v828, %v829
    %v831 = vand.u32 %v830, 4294901760
    %832 = vmatpush1.msra.mxu0 %v831
    %833 = vmatprep.subr.mxu0 0.0
    %v834 = vand.u32 %v653, 4294901760
    %v835 = vsub.f32 %v653, %v834
    %v836 = vand.u32 %v835, 4294901760
    %v837 = vsub.f32 %v835, %v836
    %v838 = vand.u32 %v837, 4294901760
    %839 = vmatpush1.msra.mxu0 %v838
    %840 = vmatprep.subr.mxu0 0.0
    %841 = vmatpush1.msra.mxu0 0.0
    %842 = vmatprep.subr.mxu0 0.0
    %843 = vmatpush1.msra.mxu0 0.0
    %844 = vmatprep.subr.mxu0 0.0
    %845 = vmatpush1.msra.mxu0 0.0
    %846 = vmatprep.subr.mxu0 0.0
    %847 = vmatpush1.msra.mxu0 0.0
    %848 = vmatprep.subr.mxu0 0.0
    %849 = vmatpush1.msra.mxu0 0.0
    %850 = vmatprep.subr.mxu0 0.0
    %851 = vmatpush1.msra.mxu0 0.0
    %852 = vmatprep.subr.mxu0 0.0
    %853 = vmatpush1.msra.mxu0 0.0
    %854 = vmatprep.subr.mxu0 0.0
    %855 = vmatpush1.msra.mxu0 0.0
    %856 = vmatprep.subr.mxu0 0.0
    %857 = vmatpush1.msra.mxu0 0.0
    %858 = vmatprep.subr.mxu0 0.0
    %859 = vmatpush1.msra.mxu0 0.0
    %860 = vmatprep.subr.mxu0 0.0
    %861 = vmatpush1.msra.mxu0 0.0
    %862 = vmatprep.subr.mxu0 0.0
    %863 = vmatpush1.msra.mxu0 0.0
    %864 = vmatprep.subr.mxu0 0.0
    %865 = vmatpush1.msra.mxu0 0.0
    %866 = vmatprep.subr.mxu0 0.0
    %867 = vmatpush1.msra.mxu0 0.0
    %868 = vmatprep.subr.mxu0 0.0
    %869 = vmatpush1.msra.mxu0 0.0
    %870 = vmatprep.subr.mxu0 0.0
    %871 = vmatpush1.msra.mxu0 0.0
    %872 = vmatprep.subr.mxu0 0.0
    %873 = vmatpush1.msra.mxu0 0.0
    %874 = vmatprep.subr.mxu0 0.0
    %875 = vmatpush1.msra.mxu0 0.0
    %876 = vmatprep.subr.mxu0 0.0
    %877 = vmatpush1.msra.mxu0 0.0
    %878 = vmatprep.subr.mxu0 0.0
    %879 = vmatpush1.msra.mxu0 0.0
    %880 = vmatprep.subr.mxu0 0.0
    %881 = vmatpush1.msra.mxu0 0.0
    %882 = vmatprep.subr.mxu0 0.0
    %883 = vmatpush1.msra.mxu0 0.0
    %884 = vmatprep.mubr.f32.mxu0 0.0
    %v885 = vand.u32 %v670, 4294901760
    %886 = vmatmul.mubr.f32.gmra.mrb[0].mxu0 %v885
    %v887 = vpop.f32.mrb[0].mxu0
    %v888 = vadd.f32 %v757, %v887
    %v889 = vpop.f32.mrb[0].mxu0
    %890 = vmatprep.mubr.f32.mxu0 0.0
    %v891 = vand.u32 %v673, 4294901760
    %892 = vmatmul.mubr.f32.gmra.mrb[0].mxu0 %v891
    %v893 = vpop.f32.mrb[0].mxu0
    %v894 = vadd.f32 %v767, %v893
    %v895 = vpop.f32.mrb[0].mxu0
    %896 = vdwg.mxu0
    %897 = vmatprep.subr.mxu0 0.0
    %v898 = vand.u32 %v602, 4294901760
    %v899 = vsub.f32 %v602, %v898
    %900 = vmatpush1.msra.mxu0 %v899
    %901 = vmatprep.subr.mxu0 0.0
    %v902 = vand.u32 %v603, 4294901760
    %v903 = vsub.f32 %v603, %v902
    %904 = vmatpush1.msra.mxu0 %v903
    %905 = vmatprep.subr.mxu0 0.0
    %v906 = vand.u32 %v616, 4294901760
    %v907 = vsub.f32 %v616, %v906
    %908 = vmatpush1.msra.mxu0 %v907
    %909 = vmatprep.subr.mxu0 0.0
    %v910 = vand.u32 %v617, 4294901760
    %v911 = vsub.f32 %v617, %v910
    %912 = vmatpush1.msra.mxu0 %v911
    %913 = vmatprep.subr.mxu0 0.0
    %v914 = vand.u32 %v630, 4294901760
    %v915 = vsub.f32 %v630, %v914
    %916 = vmatpush1.msra.mxu0 %v915
    %917 = vmatprep.subr.mxu0 0.0
    %v918 = vand.u32 %v631, 4294901760
    %v919 = vsub.f32 %v631, %v918
    %920 = vmatpush1.msra.mxu0 %v919
    %921 = vmatprep.subr.mxu0 0.0
    %v922 = vand.u32 %v644, 4294901760
    %v923 = vsub.f32 %v644, %v922
    %924 = vmatpush1.msra.mxu0 %v923
    %925 = vmatprep.subr.mxu0 0.0
    %v926 = vand.u32 %v645, 4294901760
    %v927 = vsub.f32 %v645, %v926
    %928 = vmatpush1.msra.mxu0 %v927
    %929 = vmatprep.subr.mxu0 0.0
    %v930 = vand.u32 %v652, 4294901760
    %v931 = vsub.f32 %v652, %v930
    %932 = vmatpush1.msra.mxu0 %v931
    %933 = vmatprep.subr.mxu0 0.0
    %v934 = vand.u32 %v653, 4294901760
    %v935 = vsub.f32 %v653, %v934
    %936 = vmatpush1.msra.mxu0 %v935
    %937 = vmatprep.subr.mxu0 0.0
    %938 = vmatpush1.msra.mxu0 0.0
    %939 = vmatprep.subr.mxu0 0.0
    %940 = vmatpush1.msra.mxu0 0.0
    %941 = vmatprep.subr.mxu0 0.0
    %942 = vmatpush1.msra.mxu0 0.0
    %943 = vmatprep.subr.mxu0 0.0
    %944 = vmatpush1.msra.mxu0 0.0
    %945 = vmatprep.subr.mxu0 0.0
    %946 = vmatpush1.msra.mxu0 0.0
    %947 = vmatprep.subr.mxu0 0.0
    %948 = vmatpush1.msra.mxu0 0.0
    %949 = vmatprep.subr.mxu0 0.0
    %950 = vmatpush1.msra.mxu0 0.0
    %951 = vmatprep.subr.mxu0 0.0
    %952 = vmatpush1.msra.mxu0 0.0
    %953 = vmatprep.subr.mxu0 0.0
    %954 = vmatpush1.msra.mxu0 0.0
    %955 = vmatprep.subr.mxu0 0.0
    %956 = vmatpush1.msra.mxu0 0.0
    %957 = vmatprep.subr.mxu0 0.0
    %958 = vmatpush1.msra.mxu0 0.0
    %959 = vmatprep.subr.mxu0 0.0
    %960 = vmatpush1.msra.mxu0 0.0
    %961 = vmatprep.subr.mxu0 0.0
    %962 = vmatpush1.msra.mxu0 0.0
    %963 = vmatprep.subr.mxu0 0.0
    %964 = vmatpush1.msra.mxu0 0.0
    %965 = vmatprep.subr.mxu0 0.0
    %966 = vmatpush1.msra.mxu0 0.0
    %967 = vmatprep.subr.mxu0 0.0
    %968 = vmatpush1.msra.mxu0 0.0
    %969 = vmatprep.subr.mxu0 0.0
    %970 = vmatpush1.msra.mxu0 0.0
    %971 = vmatprep.subr.mxu0 0.0
    %972 = vmatpush1.msra.mxu0 0.0
    %973 = vmatprep.subr.mxu0 0.0
    %974 = vmatpush1.msra.mxu0 0.0
    %975 = vmatprep.subr.mxu0 0.0
    %976 = vmatpush1.msra.mxu0 0.0
    %977 = vmatprep.subr.mxu0 0.0
    %978 = vmatpush1.msra.mxu0 0.0
    %979 = vmatprep.subr.mxu0 0.0
    %980 = vmatpush1.msra.mxu0 0.0
    %981 = vmatprep.mubr.f32.mxu0 0.0
    %v982 = vand.u32 %v670, 4294901760
    %v983 = vsub.f32 %v670, %v982
    %984 = vmatmul.mubr.f32.gmra.mrb[0].mxu0 %v983
    %v985 = vpop.f32.mrb[0].mxu0
    %v986 = vadd.f32 %v888, %v985
    %v987 = vpop.f32.mrb[0].mxu0
    %988 = vmatprep.mubr.f32.mxu0 0.0
    %v989 = vand.u32 %v673, 4294901760
    %v990 = vsub.f32 %v673, %v989
    %991 = vmatmul.mubr.f32.gmra.mrb[0].mxu0 %v990
    %v992 = vpop.f32.mrb[0].mxu0
    %v993 = vadd.f32 %v894, %v992
    %v994 = vpop.f32.mrb[0].mxu0
    %995 = vdwg.mxu0
    %996 = vmatprep.subr.mxu0 0.0
    %v997 = vand.u32 %v602, 4294901760
    %998 = vmatpush1.msra.mxu0 %v997
    %999 = vmatprep.subr.mxu0 0.0
    %v1000 = vand.u32 %v603, 4294901760
    %1001 = vmatpush1.msra.mxu0 %v1000
    %1002 = vmatprep.subr.mxu0 0.0
    %v1003 = vand.u32 %v616, 4294901760
    %1004 = vmatpush1.msra.mxu0 %v1003
    %1005 = vmatprep.subr.mxu0 0.0
    %v1006 = vand.u32 %v617, 4294901760
    %1007 = vmatpush1.msra.mxu0 %v1006
    %1008 = vmatprep.subr.mxu0 0.0
    %v1009 = vand.u32 %v630, 4294901760
    %1010 = vmatpush1.msra.mxu0 %v1009
    %1011 = vmatprep.subr.mxu0 0.0
    %v1012 = vand.u32 %v631, 4294901760
    %1013 = vmatpush1.msra.mxu0 %v1012
    %1014 = vmatprep.subr.mxu0 0.0
    %v1015 = vand.u32 %v644, 4294901760
    %1016 = vmatpush1.msra.mxu0 %v1015
    %1017 = vmatprep.subr.mxu0 0.0
    %v1018 = vand.u32 %v645, 4294901760
    %1019 = vmatpush1.msra.mxu0 %v1018
    %1020 = vmatprep.subr.mxu0 0.0
    %v1021 = vand.u32 %v652, 4294901760
    %1022 = vmatpush1.msra.mxu0 %v1021
    %1023 = vmatprep.subr.mxu0 0.0
    %v1024 = vand.u32 %v653, 4294901760
    %1025 = vmatpush1.msra.mxu0 %v1024
    %1026 = vmatprep.subr.mxu0 0.0
    %1027 = vmatpush1.msra.mxu0 0.0
    %1028 = vmatprep.subr.mxu0 0.0
    %1029 = vmatpush1.msra.mxu0 0.0
    %1030 = vmatprep.subr.mxu0 0.0
    %1031 = vmatpush1.msra.mxu0 0.0
    %1032 = vmatprep.subr.mxu0 0.0
    %1033 = vmatpush1.msra.mxu0 0.0
    %1034 = vmatprep.subr.mxu0 0.0
    %1035 = vmatpush1.msra.mxu0 0.0
    %1036 = vmatprep.subr.mxu0 0.0
    %1037 = vmatpush1.msra.mxu0 0.0
    %1038 = vmatprep.subr.mxu0 0.0
    %1039 = vmatpush1.msra.mxu0 0.0
    %1040 = vmatprep.subr.mxu0 0.0
    %1041 = vmatpush1.msra.mxu0 0.0
    %1042 = vmatprep.subr.mxu0 0.0
    %1043 = vmatpush1.msra.mxu0 0.0
    %1044 = vmatprep.subr.mxu0 0.0
    %1045 = vmatpush1.msra.mxu0 0.0
    %1046 = vmatprep.subr.mxu0 0.0
    %1047 = vmatpush1.msra.mxu0 0.0
    %1048 = vmatprep.subr.mxu0 0.0
    %1049 = vmatpush1.msra.mxu0 0.0
    %1050 = vmatprep.subr.mxu0 0.0
    %1051 = vmatpush1.msra.mxu0 0.0
    %1052 = vmatprep.subr.mxu0 0.0
    %1053 = vmatpush1.msra.mxu0 0.0
    %1054 = vmatprep.subr.mxu0 0.0
    %1055 = vmatpush1.msra.mxu0 0.0
    %1056 = vmatprep.subr.mxu0 0.0
    %1057 = vmatpush1.msra.mxu0 0.0
    %1058 = vmatprep.subr.mxu0 0.0
    %1059 = vmatpush1.msra.mxu0 0.0
    %1060 = vmatprep.subr.mxu0 0.0
    %1061 = vmatpush1.msra.mxu0 0.0
    %1062 = vmatprep.subr.mxu0 0.0
    %1063 = vmatpush1.msra.mxu0 0.0
    %1064 = vmatprep.subr.mxu0 0.0
    %1065 = vmatpush1.msra.mxu0 0.0
    %1066 = vmatprep.subr.mxu0 0.0
    %1067 = vmatpush1.msra.mxu0 0.0
    %1068 = vmatprep.subr.mxu0 0.0
    %1069 = vmatpush1.msra.mxu0 0.0
    %1070 = vmatprep.mubr.f32.mxu0 0.0
    %v1071 = vand.u32 %v670, 4294901760
    %v1072 = vsub.f32 %v670, %v1071
    %v1073 = vand.u32 %v1072, 4294901760
    %1074 = vmatmul.mubr.f32.gmra.mrb[0].mxu0 %v1073
    %v1075 = vpop.f32.mrb[0].mxu0
    %v1076 = vadd.f32 %v986, %v1075
    %v1077 = vpop.f32.mrb[0].mxu0
    %1078 = vmatprep.mubr.f32.mxu0 0.0
    %v1079 = vand.u32 %v673, 4294901760
    %v1080 = vsub.f32 %v673, %v1079
    %v1081 = vand.u32 %v1080, 4294901760
    %1082 = vmatmul.mubr.f32.gmra.mrb[0].mxu0 %v1081
    %v1083 = vpop.f32.mrb[0].mxu0
    %v1084 = vadd.f32 %v993, %v1083
    %v1085 = vpop.f32.mrb[0].mxu0
    %1086 = vdwg.mxu0
    %1087 = vmatprep.subr.mxu0 0.0
    %v1088 = vand.u32 %v602, 4294901760
    %v1089 = vsub.f32 %v602, %v1088
    %v1090 = vand.u32 %v1089, 4294901760
    %1091 = vmatpush1.msra.mxu0 %v1090
    %1092 = vmatprep.subr.mxu0 0.0
    %v1093 = vand.u32 %v603, 4294901760
    %v1094 = vsub.f32 %v603, %v1093
    %v1095 = vand.u32 %v1094, 4294901760
    %1096 = vmatpush1.msra.mxu0 %v1095
    %1097 = vmatprep.subr.mxu0 0.0
    %v1098 = vand.u32 %v616, 4294901760
    %v1099 = vsub.f32 %v616, %v1098
    %v1100 = vand.u32 %v1099, 4294901760
    %1101 = vmatpush1.msra.mxu0 %v1100
    %1102 = vmatprep.subr.mxu0 0.0
    %v1103 = vand.u32 %v617, 4294901760
    %v1104 = vsub.f32 %v617, %v1103
    %v1105 = vand.u32 %v1104, 4294901760
    %1106 = vmatpush1.msra.mxu0 %v1105
    %1107 = vmatprep.subr.mxu0 0.0
    %v1108 = vand.u32 %v630, 4294901760
    %v1109 = vsub.f32 %v630, %v1108
    %v1110 = vand.u32 %v1109, 4294901760
    %1111 = vmatpush1.msra.mxu0 %v1110
    %1112 = vmatprep.subr.mxu0 0.0
    %v1113 = vand.u32 %v631, 4294901760
    %v1114 = vsub.f32 %v631, %v1113
    %v1115 = vand.u32 %v1114, 4294901760
    %1116 = vmatpush1.msra.mxu0 %v1115
    %1117 = vmatprep.subr.mxu0 0.0
    %v1118 = vand.u32 %v644, 4294901760
    %v1119 = vsub.f32 %v644, %v1118
    %v1120 = vand.u32 %v1119, 4294901760
    %1121 = vmatpush1.msra.mxu0 %v1120
    %1122 = vmatprep.subr.mxu0 0.0
    %v1123 = vand.u32 %v645, 4294901760
    %v1124 = vsub.f32 %v645, %v1123
    %v1125 = vand.u32 %v1124, 4294901760
    %1126 = vmatpush1.msra.mxu0 %v1125
    %1127 = vmatprep.subr.mxu0 0.0
    %v1128 = vand.u32 %v652, 4294901760
    %v1129 = vsub.f32 %v652, %v1128
    %v1130 = vand.u32 %v1129, 4294901760
    %1131 = vmatpush1.msra.mxu0 %v1130
    %1132 = vmatprep.subr.mxu0 0.0
    %v1133 = vand.u32 %v653, 4294901760
    %v1134 = vsub.f32 %v653, %v1133
    %v1135 = vand.u32 %v1134, 4294901760
    %1136 = vmatpush1.msra.mxu0 %v1135
    %1137 = vmatprep.subr.mxu0 0.0
    %1138 = vmatpush1.msra.mxu0 0.0
    %1139 = vmatprep.subr.mxu0 0.0
    %1140 = vmatpush1.msra.mxu0 0.0
    %1141 = vmatprep.subr.mxu0 0.0
    %1142 = vmatpush1.msra.mxu0 0.0
    %1143 = vmatprep.subr.mxu0 0.0
    %1144 = vmatpush1.msra.mxu0 0.0
    %1145 = vmatprep.subr.mxu0 0.0
    %1146 = vmatpush1.msra.mxu0 0.0
    %1147 = vmatprep.subr.mxu0 0.0
    %1148 = vmatpush1.msra.mxu0 0.0
    %1149 = vmatprep.subr.mxu0 0.0
    %1150 = vmatpush1.msra.mxu0 0.0
    %1151 = vmatprep.subr.mxu0 0.0
    %1152 = vmatpush1.msra.mxu0 0.0
    %1153 = vmatprep.subr.mxu0 0.0
    %1154 = vmatpush1.msra.mxu0 0.0
    %1155 = vmatprep.subr.mxu0 0.0
    %1156 = vmatpush1.msra.mxu0 0.0
    %1157 = vmatprep.subr.mxu0 0.0
    %1158 = vmatpush1.msra.mxu0 0.0
    %1159 = vmatprep.subr.mxu0 0.0
    %1160 = vmatpush1.msra.mxu0 0.0
    %1161 = vmatprep.subr.mxu0 0.0
    %1162 = vmatpush1.msra.mxu0 0.0
    %1163 = vmatprep.subr.mxu0 0.0
    %1164 = vmatpush1.msra.mxu0 0.0
    %1165 = vmatprep.subr.mxu0 0.0
    %1166 = vmatpush1.msra.mxu0 0.0
    %1167 = vmatprep.subr.mxu0 0.0
    %1168 = vmatpush1.msra.mxu0 0.0
    %1169 = vmatprep.subr.mxu0 0.0
    %1170 = vmatpush1.msra.mxu0 0.0
    %1171 = vmatprep.subr.mxu0 0.0
    %1172 = vmatpush1.msra.mxu0 0.0
    %1173 = vmatprep.subr.mxu0 0.0
    %1174 = vmatpush1.msra.mxu0 0.0
    %1175 = vmatprep.subr.mxu0 0.0
    %1176 = vmatpush1.msra.mxu0 0.0
    %1177 = vmatprep.subr.mxu0 0.0
    %1178 = vmatpush1.msra.mxu0 0.0
    %1179 = vmatprep.subr.mxu0 0.0
    %1180 = vmatpush1.msra.mxu0 0.0
    %1181 = vmatprep.mubr.f32.mxu0 0.0
    %v1182 = vand.u32 %v670, 4294901760
    %1183 = vmatmul.mubr.f32.gmra.mrb[0].mxu0 %v1182
    %v1184 = vpop.f32.mrb[0].mxu0
    %v1185 = vadd.f32 %v1076, %v1184
    %v1186 = vpop.f32.mrb[0].mxu0
    %1187 = vmatprep.mubr.f32.mxu0 0.0
    %v1188 = vand.u32 %v673, 4294901760
    %1189 = vmatmul.mubr.f32.gmra.mrb[0].mxu0 %v1188
    %v1190 = vpop.f32.mrb[0].mxu0
    %v1191 = vadd.f32 %v1084, %v1190
    %v1192 = vpop.f32.mrb[0].mxu0
    %1193 = vdwg.mxu0
    %1194 = vmatprep.subr.mxu0 0.0
    %v1195 = vand.u32 %v602, 4294901760
    %1196 = vmatpush1.msra.mxu0 %v1195
    %1197 = vmatprep.subr.mxu0 0.0
    %v1198 = vand.u32 %v603, 4294901760
    %1199 = vmatpush1.msra.mxu0 %v1198
    %1200 = vmatprep.subr.mxu0 0.0
    %v1201 = vand.u32 %v616, 4294901760
    %1202 = vmatpush1.msra.mxu0 %v1201
    %1203 = vmatprep.subr.mxu0 0.0
    %v1204 = vand.u32 %v617, 4294901760
    %1205 = vmatpush1.msra.mxu0 %v1204
    %1206 = vmatprep.subr.mxu0 0.0
    %v1207 = vand.u32 %v630, 4294901760
    %1208 = vmatpush1.msra.mxu0 %v1207
    %1209 = vmatprep.subr.mxu0 0.0
    %v1210 = vand.u32 %v631, 4294901760
    %1211 = vmatpush1.msra.mxu0 %v1210
    %1212 = vmatprep.subr.mxu0 0.0
    %v1213 = vand.u32 %v644, 4294901760
    %1214 = vmatpush1.msra.mxu0 %v1213
    %1215 = vmatprep.subr.mxu0 0.0
    %v1216 = vand.u32 %v645, 4294901760
    %1217 = vmatpush1.msra.mxu0 %v1216
    %1218 = vmatprep.subr.mxu0 0.0
    %v1219 = vand.u32 %v652, 4294901760
    %1220 = vmatpush1.msra.mxu0 %v1219
    %1221 = vmatprep.subr.mxu0 0.0
    %v1222 = vand.u32 %v653, 4294901760
    %1223 = vmatpush1.msra.mxu0 %v1222
    %1224 = vmatprep.subr.mxu0 0.0
    %1225 = vmatpush1.msra.mxu0 0.0
    %1226 = vmatprep.subr.mxu0 0.0
    %1227 = vmatpush1.msra.mxu0 0.0
    %1228 = vmatprep.subr.mxu0 0.0
    %1229 = vmatpush1.msra.mxu0 0.0
    %1230 = vmatprep.subr.mxu0 0.0
    %1231 = vmatpush1.msra.mxu0 0.0
    %1232 = vmatprep.subr.mxu0 0.0
    %1233 = vmatpush1.msra.mxu0 0.0
    %1234 = vmatprep.subr.mxu0 0.0
    %1235 = vmatpush1.msra.mxu0 0.0
    %1236 = vmatprep.subr.mxu0 0.0
    %1237 = vmatpush1.msra.mxu0 0.0
    %1238 = vmatprep.subr.mxu0 0.0
    %1239 = vmatpush1.msra.mxu0 0.0
    %1240 = vmatprep.subr.mxu0 0.0
    %1241 = vmatpush1.msra.mxu0 0.0
    %1242 = vmatprep.subr.mxu0 0.0
    %1243 = vmatpush1.msra.mxu0 0.0
    %1244 = vmatprep.subr.mxu0 0.0
    %1245 = vmatpush1.msra.mxu0 0.0
    %1246 = vmatprep.subr.mxu0 0.0
    %1247 = vmatpush1.msra.mxu0 0.0
    %1248 = vmatprep.subr.mxu0 0.0
    %1249 = vmatpush1.msra.mxu0 0.0
    %1250 = vmatprep.subr.mxu0 0.0
    %1251 = vmatpush1.msra.mxu0 0.0
    %1252 = vmatprep.subr.mxu0 0.0
    %1253 = vmatpush1.msra.mxu0 0.0
    %1254 = vmatprep.subr.mxu0 0.0
    %1255 = vmatpush1.msra.mxu0 0.0
    %1256 = vmatprep.subr.mxu0 0.0
    %1257 = vmatpush1.msra.mxu0 0.0
    %1258 = vmatprep.subr.mxu0 0.0
    %1259 = vmatpush1.msra.mxu0 0.0
    %1260 = vmatprep.subr.mxu0 0.0
    %1261 = vmatpush1.msra.mxu0 0.0
    %1262 = vmatprep.subr.mxu0 0.0
    %1263 = vmatpush1.msra.mxu0 0.0
    %1264 = vmatprep.subr.mxu0 0.0
    %1265 = vmatpush1.msra.mxu0 0.0
    %1266 = vmatprep.subr.mxu0 0.0
    %1267 = vmatpush1.msra.mxu0 0.0
    %1268 = vmatprep.mubr.f32.mxu0 0.0
    %v1269 = vand.u32 %v670, 4294901760
    %1270 = vmatmul.mubr.f32.gmra.mrb[0].mxu0 %v1269
    %v1271 = vpop.f32.mrb[0].mxu0
    %v1272 = vadd.f32 %v1185, %v1271
    %v1273 = vpop.f32.mrb[0].mxu0
    %1274 = vmatprep.mubr.f32.mxu0 0.0
    %v1275 = vand.u32 %v673, 4294901760
    %1276 = vmatmul.mubr.f32.gmra.mrb[0].mxu0 %v1275
    %v1277 = vpop.f32.mrb[0].mxu0
    %v1278 = vadd.f32 %v1191, %v1277
    %v1279 = vpop.f32.mrb[0].mxu0
    %1280 = vdwg.mxu0
    %vm1281 = vcmp.gt.f32.partialorder %v1272, 0.0
    %vm1282 = vcmp.gt.f32.partialorder %v1278, 0.0
    %v1283 = vmul.f32 %v1272, 0.25
    %v1284 = vmul.f32 %v1278, 0.25
    %v1285 = vsel %vm1281, %v1272, %v1283
    %v1286 = vsel %vm1282, %v1278, %v1284
    %vm1287 = vcmask 65536
    %1288 = vst.msk [vmem:[#allocation2] sm:$0x1] %vm1287, %v1285
    %1290 = vrot.lane.b32.xlu0 %v1285, 9
    %v1291 = vpop.permute.xlu0 %1290
    %vm1293 = vcmask 123977
    %1294 = vst.msk [vmem:[#allocation2 - $0x1] sm:$0x2] %vm1293, %v1291
    %1295 = vrot.lane.b32.xlu0 %v1285, 121
    %v1296 = vpop.permute.xlu0 %1295
    %vm1298 = vcmask 9217
    %1299 = vst.msk [vmem:[#allocation2] sm:$0x2] %vm1298, %v1296
    %1300 = vrot.lane.b32.xlu0 %v1285, 2
    %v1301 = vpop.permute.xlu0 %1300
    %vm1303 = vcmask 83986
    %1304 = vst.msk [vmem:[#allocation2 - $0x1] sm:$0x4] %vm1303, %v1301
    %1305 = vrot.lane.b32.xlu0 %v1285, 11
    %v1306 = vpop.permute.xlu0 %1305
    %vm1308 = vcmask 126043
    %1309 = vst.msk [vmem:[#allocation2 - $0x2] sm:$0x8] %vm1308, %v1306
    %1310 = vrot.lane.b32.xlu0 %v1285, 123
    %v1311 = vpop.permute.xlu0 %1310
    %vm1313 = vcmask 27651
    %1314 = vst.msk [vmem:[#allocation2 - $0x1] sm:$0x8] %vm1313, %v1311
    %1315 = vrot.lane.b32.xlu0 %v1285, 4
    %v1316 = vpop.permute.xlu0 %1315
    %vm1318 = vcmask 102436
    %1319 = vst.msk [vmem:[#allocation2 - $0x2] sm:$0x10] %vm1318, %v1316
    %1320 = vrot.lane.b32.xlu0 %v1285, 13
    %v1321 = vpop.permute.xlu0 %1320
    %vm1323 = vcmask 128109
    %1324 = vst.msk [vmem:[#allocation2 - $0x3] sm:$0x20] %vm1323, %v1321
    %1325 = vrot.lane.b32.xlu0 %v1285, 125
    %v1326 = vpop.permute.xlu0 %1325
    %vm1328 = vcmask 46085
    %1329 = vst.msk [vmem:[#allocation2 - $0x2] sm:$0x20] %vm1328, %v1326
    %1330 = vrot.lane.b32.xlu0 %v1285, 6
    %v1331 = vpop.permute.xlu0 %1330
    %vm1333 = vcmask 120886
    %1334 = vst.msk [vmem:[#allocation2 - $0x3] sm:$0x40] %vm1333, %v1331
    %1335 = vrot.lane.b32.xlu0 %v1285, 15
    %v1336 = vpop.permute.xlu0 %1335
    %vm1338 = vcmask 130175
    %1339 = vst.msk [vmem:[#allocation2 - $0x4] sm:$0x80] %vm1338, %v1336
    %1340 = vrot.lane.b32.xlu0 %v1285, 127
    %v1341 = vpop.permute.xlu0 %1340
    %vm1343 = vcmask 64519
    %1344 = vst.msk [vmem:[#allocation2 - $0x3] sm:$0x80] %vm1343, %v1341
    %1346 = vrot.lane.b32.xlu0 %v1286, 8
    %v1347 = vpop.permute.xlu0 %1346
    %vm1349 = vcmask 122944
    %1350 = vst.msk [vmem:[#allocation2 + $0x4] sm:$0x1] %vm1349, %v1347
    %1351 = vrot.lane.b32.xlu0 %v1286, 120
    %v1352 = vpop.permute.xlu0 %1351
    %vm1354 = vcmask 0
    %1355 = vst.msk [vmem:[#allocation2 + $0x5] sm:$0x1] %vm1354, %v1352
    %1356 = vrot.lane.b32.xlu0 %v1286, 1
    %v1357 = vpop.permute.xlu0 %1356
    %vm1359 = vcmask 74761
    %1360 = vst.msk [vmem:[#allocation2 + $0x4] sm:$0x2] %vm1359, %v1357
    %1361 = vrot.lane.b32.xlu0 %v1286, 10
    %v1362 = vpop.permute.xlu0 %1361
    %vm1364 = vcmask 125010
    %1365 = vst.msk [vmem:[#allocation2 + $0x3] sm:$0x4] %vm1364, %v1362
    %1366 = vrot.lane.b32.xlu0 %v1286, 122
    %v1367 = vpop.permute.xlu0 %1366
    %vm1369 = vcmask 18434
    %1370 = vst.msk [vmem:[#allocation2 + $0x4] sm:$0x4] %vm1369, %v1367
    %1371 = vrot.lane.b32.xlu0 %v1286, 3
    %v1372 = vpop.permute.xlu0 %1371
    %vm1374 = vcmask 93211
    %1375 = vst.msk [vmem:[#allocation2 + $0x3] sm:$0x8] %vm1374, %v1372
    %1376 = vrot.lane.b32.xlu0 %v1286, 12
    %v1377 = vpop.permute.xlu0 %1376
    %vm1379 = vcmask 127076
    %1380 = vst.msk [vmem:[#allocation2 + $0x2] sm:$0x10] %vm1379, %v1377
    %1381 = vrot.lane.b32.xlu0 %v1286, 124
    %v1382 = vpop.permute.xlu0 %1381
    %vm1384 = vcmask 36868
    %1385 = vst.msk [vmem:[#allocation2 + $0x3] sm:$0x10] %vm1384, %v1382
    %1386 = vrot.lane.b32.xlu0 %v1286, 5
    %v1387 = vpop.permute.xlu0 %1386
    %vm1389 = vcmask 111661
    %1390 = vst.msk [vmem:[#allocation2 + $0x2] sm:$0x20] %vm1389, %v1387
    %1391 = vrot.lane.b32.xlu0 %v1286, 14
    %v1392 = vpop.permute.xlu0 %1391
    %vm1394 = vcmask 129142
    %1395 = vst.msk [vmem:[#allocation2 + $0x1] sm:$0x40] %vm1394, %v1392
    %1396 = vrot.lane.b32.xlu0 %v1286, 126
    %v1397 = vpop.permute.xlu0 %1396
    %vm1399 = vcmask 55302
    %1400 = vst.msk [vmem:[#allocation2 + $0x2] sm:$0x40] %vm1399, %v1397
    %1401 = vrot.lane.b32.xlu0 %v1286, 7
    %v1402 = vpop.permute.xlu0 %1401
    %vm1404 = vcmask 130111
    %1405 = vst.msk [vmem:[#allocation2 + $0x1] sm:$0x80] %vm1404, %v1402
    %1406 = vrot.lane.b32.xlu0 %v1285, 119
    %v1407 = vpop.permute.xlu0 %1406
    %1409 = vst.msk [vmem:[#allocation2 + $0x9] sm:$0x1] %vm1287, %v1407
    %1410 = vst.msk [vmem:[#allocation2 + $0x8] sm:$0x2] %vm1293, %v1285
    %1411 = vrot.lane.b32.xlu0 %v1285, 112
    %v1412 = vpop.permute.xlu0 %1411
    %1414 = vst.msk [vmem:[#allocation2 + $0x9] sm:$0x2] %vm1298, %v1412
    %1415 = vst.msk [vmem:[#allocation2 + $0x8] sm:$0x4] %vm1303, %v1296
    %1416 = vst.msk [vmem:[#allocation2 + $0x7] sm:$0x8] %vm1308, %v1301
    %1417 = vrot.lane.b32.xlu0 %v1285, 114
    %v1418 = vpop.permute.xlu0 %1417
    %1420 = vst.msk [vmem:[#allocation2 + $0x8] sm:$0x8] %vm1313, %v1418
    %1421 = vst.msk [vmem:[#allocation2 + $0x7] sm:$0x10] %vm1318, %v1311
    %1422 = vst.msk [vmem:[#allocation2 + $0x6] sm:$0x20] %vm1323, %v1316
    %1423 = vrot.lane.b32.xlu0 %v1285, 116
    %v1424 = vpop.permute.xlu0 %1423
    %1426 = vst.msk [vmem:[#allocation2 + $0x7] sm:$0x20] %vm1328, %v1424
    %1427 = vst.msk [vmem:[#allocation2 + $0x6] sm:$0x40] %vm1333, %v1326
    %1428 = vst.msk [vmem:[#allocation2 + $0x5] sm:$0x80] %vm1338, %v1331
    %1429 = vrot.lane.b32.xlu0 %v1285, 118
    %v1430 = vpop.permute.xlu0 %1429
    %1432 = vst.msk [vmem:[#allocation2 + $0x6] sm:$0x80] %vm1343, %v1430
    %1433 = vrot.lane.b32.xlu0 %v1286, 127
    %v1434 = vpop.permute.xlu0 %1433
    %1436 = vst.msk [vmem:[#allocation2 + $0xd] sm:$0x1] %vm1349, %v1434
    %1437 = vrot.lane.b32.xlu0 %v1286, 111
    %v1438 = vpop.permute.xlu0 %1437
    %1440 = vst.msk [vmem:[#allocation2 + $0xe] sm:$0x1] %vm1354, %v1438
    %1441 = vst.msk [vmem:[#allocation2 + $0xd] sm:$0x2] %vm1359, %v1352
    %1442 = vst.msk [vmem:[#allocation2 + $0xc] sm:$0x4] %vm1364, %v1357
    %1443 = vrot.lane.b32.xlu0 %v1286, 113
    %v1444 = vpop.permute.xlu0 %1443
    %1446 = vst.msk [vmem:[#allocation2 + $0xd] sm:$0x4] %vm1369, %v1444
    %1447 = vst.msk [vmem:[#allocation2 + $0xc] sm:$0x8] %vm1374, %v1367
    %1448 = vst.msk [vmem:[#allocation2 + $0xb] sm:$0x10] %vm1379, %v1372
    %1449 = vrot.lane.b32.xlu0 %v1286, 115
    %v1450 = vpop.permute.xlu0 %1449
    %1452 = vst.msk [vmem:[#allocation2 + $0xc] sm:$0x10] %vm1384, %v1450
    %1453 = vst.msk [vmem:[#allocation2 + $0xb] sm:$0x20] %vm1389, %v1382
    %1454 = vst.msk [vmem:[#allocation2 + $0xa] sm:$0x40] %vm1394, %v1387
    %1455 = vrot.lane.b32.xlu0 %v1286, 117
    %v1456 = vpop.permute.xlu0 %1455
    %1458 = vst.msk [vmem:[#allocation2 + $0xb] sm:$0x40] %vm1399, %v1456
    %1459 = vst.msk [vmem:[#allocation2 + $0xa] sm:$0x80] %vm1404, %v1397
    %v1460 = vld [vmem:[#allocation2] sm:$0xff]
    %v1461 = vld [vmem:[#allocation2 + $0x8] sm:$0xff]
    %v1462 = vld [vmem:[#allocation2 + $0x10] sm:$0x3]
    %v1463 = vld [vmem:[%s5] sm:$0xff]
    %v1464 = vld [vmem:[%s5 + $0x8] sm:$0xff]
    %v1465 = vld [vmem:[%s7] sm:$0x1]
    %v1467 = vlaneseq
    %v1468 = vshrl.u32 %v1467, 7
    %v1469 = vsub.s32 0, %v1468
    %v1470 = vrot.slane %v1465, %v1469
    %vm1472 = vcmask 130048
    %v1474 = vsel %vm1472, %v1460, 0
    %v1477 = vsel %vm1472, %v1461, 0
    %v1480 = vsel %vm1472, %v1462, 0
    %1482 = vmatprep.subr.mxu0 0.0
    %v1483 = vand.u32 %v1463, 4294901760
    %1484 = vmatpush1.msra.mxu0 %v1483
    %1485 = vmatprep.subr.mxu0 0.0
    %v1486 = vand.u32 %v1464, 4294901760
    %1487 = vmatpush1.msra.mxu0 %v1486
    %1488 = vmatprep.subr.mxu0 0.0
    %1489 = vmatpush1.msra.mxu0 0.0
    %1490 = vmatprep.subr.mxu0 0.0
    %1491 = vmatpush1.msra.mxu0 0.0
    %1492 = vmatprep.subr.mxu0 0.0
    %1493 = vmatpush1.msra.mxu0 0.0
    %1494 = vmatprep.subr.mxu0 0.0
    %1495 = vmatpush1.msra.mxu0 0.0
    %1496 = vmatprep.subr.mxu0 0.0
    %1497 = vmatpush1.msra.mxu0 0.0
    %1498 = vmatprep.subr.mxu0 0.0
    %1499 = vmatpush1.msra.mxu0 0.0
    %1500 = vmatprep.subr.mxu0 0.0
    %1501 = vmatpush1.msra.mxu0 0.0
    %1502 = vmatprep.subr.mxu0 0.0
    %1503 = vmatpush1.msra.mxu0 0.0
    %1504 = vmatprep.subr.mxu0 0.0
    %1505 = vmatpush1.msra.mxu0 0.0
    %1506 = vmatprep.subr.mxu0 0.0
    %1507 = vmatpush1.msra.mxu0 0.0
    %1508 = vmatprep.subr.mxu0 0.0
    %1509 = vmatpush1.msra.mxu0 0.0
    %1510 = vmatprep.subr.mxu0 0.0
    %1511 = vmatpush1.msra.mxu0 0.0
    %1512 = vmatprep.subr.mxu0 0.0
    %1513 = vmatpush1.msra.mxu0 0.0
    %1514 = vmatprep.subr.mxu0 0.0
    %1515 = vmatpush1.msra.mxu0 0.0
    %1516 = vmatprep.subr.mxu0 0.0
    %1517 = vmatpush1.msra.mxu0 0.0
    %1518 = vmatprep.subr.mxu0 0.0
    %1519 = vmatpush1.msra.mxu0 0.0
    %1520 = vmatprep.subr.mxu0 0.0
    %1521 = vmatpush1.msra.mxu0 0.0
    %1522 = vmatprep.subr.mxu0 0.0
    %1523 = vmatpush1.msra.mxu0 0.0
    %1524 = vmatprep.subr.mxu0 0.0
    %1525 = vmatpush1.msra.mxu0 0.0
    %1526 = vmatprep.subr.mxu0 0.0
    %1527 = vmatpush1.msra.mxu0 0.0
    %1528 = vmatprep.subr.mxu0 0.0
    %1529 = vmatpush1.msra.mxu0 0.0
    %1530 = vmatprep.subr.mxu0 0.0
    %1531 = vmatpush1.msra.mxu0 0.0
    %1532 = vmatprep.subr.mxu0 0.0
    %1533 = vmatpush1.msra.mxu0 0.0
    %1534 = vmatprep.subr.mxu0 0.0
    %1535 = vmatpush1.msra.mxu0 0.0
    %1536 = vmatprep.subr.mxu0 0.0
    %1537 = vmatpush1.msra.mxu0 0.0
    %1538 = vmatprep.subr.mxu0 0.0
    %1539 = vmatpush1.msra.mxu0 0.0
    %1540 = vmatprep.subr.mxu0 0.0
    %1541 = vmatpush1.msra.mxu0 0.0
    %1542 = vmatprep.subr.mxu0 0.0
    %1543 = vmatpush1.msra.mxu0 0.0
    %1544 = vmatprep.subr.mxu0 0.0
    %1545 = vmatpush1.msra.mxu0 0.0
    %1546 = vmatprep.subr.mxu0 0.0
    %1547 = vmatpush1.msra.mxu0 0.0
    %1548 = vmatprep.mubr.f32.mxu0 0.0
    %v1549 = vand.u32 %v1474, 4294901760
    %v1550 = vsub.f32 %v1474, %v1549
    %v1551 = vand.u32 %v1550, 4294901760
    %v1552 = vsub.f32 %v1550, %v1551
    %v1553 = vand.u32 %v1552, 4294901760
    %1554 = vmatmul.mubr.f32.gmra.mrb[0].mxu0 %v1553
    %v1555 = vpop.f32.mrb[0].mxu0
    %v1556 = vadd.f32 %v1470, %v1555
    %v1557 = vpop.f32.mrb[0].mxu0
    %1558 = vmatprep.mubr.f32.mxu0 0.0
    %v1559 = vand.u32 %v1477, 4294901760
    %v1560 = vsub.f32 %v1477, %v1559
    %v1561 = vand.u32 %v1560, 4294901760
    %v1562 = vsub.f32 %v1560, %v1561
    %v1563 = vand.u32 %v1562, 4294901760
    %1564 = vmatmul.mubr.f32.gmra.mrb[0].mxu0 %v1563
    %v1565 = vpop.f32.mrb[0].mxu0
    %v1566 = vadd.f32 %v1470, %v1565
    %v1567 = vpop.f32.mrb[0].mxu0
    %1568 = vmatprep.mubr.f32.mxu0 0.0
    %v1569 = vand.u32 %v1480, 4294901760
    %v1570 = vsub.f32 %v1480, %v1569
    %v1571 = vand.u32 %v1570, 4294901760
    %v1572 = vsub.f32 %v1570, %v1571
    %v1573 = vand.u32 %v1572, 4294901760
    %1574 = vmatmul.mubr.f32.gmra.mrb[0].mxu0 %v1573
    %v1575 = vpop.f32.mrb[0].mxu0
    %v1576 = vadd.f32 %v1470, %v1575
    %v1577 = vpop.f32.mrb[0].mxu0
    %1578 = vdwg.mxu0
    %1579 = vmatprep.subr.mxu0 0.0
    %v1580 = vand.u32 %v1463, 4294901760
    %v1581 = vsub.f32 %v1463, %v1580
    %v1582 = vand.u32 %v1581, 4294901760
    %v1583 = vsub.f32 %v1581, %v1582
    %v1584 = vand.u32 %v1583, 4294901760
    %1585 = vmatpush1.msra.mxu0 %v1584
    %1586 = vmatprep.subr.mxu0 0.0
    %v1587 = vand.u32 %v1464, 4294901760
    %v1588 = vsub.f32 %v1464, %v1587
    %v1589 = vand.u32 %v1588, 4294901760
    %v1590 = vsub.f32 %v1588, %v1589
    %v1591 = vand.u32 %v1590, 4294901760
    %1592 = vmatpush1.msra.mxu0 %v1591
    %1593 = vmatprep.subr.mxu0 0.0
    %1594 = vmatpush1.msra.mxu0 0.0
    %1595 = vmatprep.subr.mxu0 0.0
    %1596 = vmatpush1.msra.mxu0 0.0
    %1597 = vmatprep.subr.mxu0 0.0
    %1598 = vmatpush1.msra.mxu0 0.0
    %1599 = vmatprep.subr.mxu0 0.0
    %1600 = vmatpush1.msra.mxu0 0.0
    %1601 = vmatprep.subr.mxu0 0.0
    %1602 = vmatpush1.msra.mxu0 0.0
    %1603 = vmatprep.subr.mxu0 0.0
    %1604 = vmatpush1.msra.mxu0 0.0
    %1605 = vmatprep.subr.mxu0 0.0
    %1606 = vmatpush1.msra.mxu0 0.0
    %1607 = vmatprep.subr.mxu0 0.0
    %1608 = vmatpush1.msra.mxu0 0.0
    %1609 = vmatprep.subr.mxu0 0.0
    %1610 = vmatpush1.msra.mxu0 0.0
    %1611 = vmatprep.subr.mxu0 0.0
    %1612 = vmatpush1.msra.mxu0 0.0
    %1613 = vmatprep.subr.mxu0 0.0
    %1614 = vmatpush1.msra.mxu0 0.0
    %1615 = vmatprep.subr.mxu0 0.0
    %1616 = vmatpush1.msra.mxu0 0.0
    %1617 = vmatprep.subr.mxu0 0.0
    %1618 = vmatpush1.msra.mxu0 0.0
    %1619 = vmatprep.subr.mxu0 0.0
    %1620 = vmatpush1.msra.mxu0 0.0
    %1621 = vmatprep.subr.mxu0 0.0
    %1622 = vmatpush1.msra.mxu0 0.0
    %1623 = vmatprep.subr.mxu0 0.0
    %1624 = vmatpush1.msra.mxu0 0.0
    %1625 = vmatprep.subr.mxu0 0.0
    %1626 = vmatpush1.msra.mxu0 0.0
    %1627 = vmatprep.subr.mxu0 0.0
    %1628 = vmatpush1.msra.mxu0 0.0
    %1629 = vmatprep.subr.mxu0 0.0
    %1630 = vmatpush1.msra.mxu0 0.0
    %1631 = vmatprep.subr.mxu0 0.0
    %1632 = vmatpush1.msra.mxu0 0.0
    %1633 = vmatprep.subr.mxu0 0.0
    %1634 = vmatpush1.msra.mxu0 0.0
    %1635 = vmatprep.subr.mxu0 0.0
    %1636 = vmatpush1.msra.mxu0 0.0
    %1637 = vmatprep.subr.mxu0 0.0
    %1638 = vmatpush1.msra.mxu0 0.0
    %1639 = vmatprep.subr.mxu0 0.0
    %1640 = vmatpush1.msra.mxu0 0.0
    %1641 = vmatprep.subr.mxu0 0.0
    %1642 = vmatpush1.msra.mxu0 0.0
    %1643 = vmatprep.subr.mxu0 0.0
    %1644 = vmatpush1.msra.mxu0 0.0
    %1645 = vmatprep.subr.mxu0 0.0
    %1646 = vmatpush1.msra.mxu0 0.0
    %1647 = vmatprep.subr.mxu0 0.0
    %1648 = vmatpush1.msra.mxu0 0.0
    %1649 = vmatprep.subr.mxu0 0.0
    %1650 = vmatpush1.msra.mxu0 0.0
    %1651 = vmatprep.subr.mxu0 0.0
    %1652 = vmatpush1.msra.mxu0 0.0
    %1653 = vmatprep.mubr.f32.mxu0 0.0
    %v1654 = vand.u32 %v1474, 4294901760
    %1655 = vmatmul.mubr.f32.gmra.mrb[0].mxu0 %v1654
    %v1656 = vpop.f32.mrb[0].mxu0
    %v1657 = vadd.f32 %v1556, %v1656
    %v1658 = vpop.f32.mrb[0].mxu0
    %1659 = vmatprep.mubr.f32.mxu0 0.0
    %v1660 = vand.u32 %v1477, 4294901760
    %1661 = vmatmul.mubr.f32.gmra.mrb[0].mxu0 %v1660
    %v1662 = vpop.f32.mrb[0].mxu0
    %v1663 = vadd.f32 %v1566, %v1662
    %v1664 = vpop.f32.mrb[0].mxu0
    %1665 = vmatprep.mubr.f32.mxu0 0.0
    %v1666 = vand.u32 %v1480, 4294901760
    %1667 = vmatmul.mubr.f32.gmra.mrb[0].mxu0 %v1666
    %v1668 = vpop.f32.mrb[0].mxu0
    %v1669 = vadd.f32 %v1576, %v1668
    %v1670 = vpop.f32.mrb[0].mxu0
    %1671 = vdwg.mxu0
    %1672 = vmatprep.subr.mxu0 0.0
    %v1673 = vand.u32 %v1463, 4294901760
    %v1674 = vsub.f32 %v1463, %v1673
    %1675 = vmatpush1.msra.mxu0 %v1674
    %1676 = vmatprep.subr.mxu0 0.0
    %v1677 = vand.u32 %v1464, 4294901760
    %v1678 = vsub.f32 %v1464, %v1677
    %1679 = vmatpush1.msra.mxu0 %v1678
    %1680 = vmatprep.subr.mxu0 0.0
    %1681 = vmatpush1.msra.mxu0 0.0
    %1682 = vmatprep.subr.mxu0 0.0
    %1683 = vmatpush1.msra.mxu0 0.0
    %1684 = vmatprep.subr.mxu0 0.0
    %1685 = vmatpush1.msra.mxu0 0.0
    %1686 = vmatprep.subr.mxu0 0.0
    %1687 = vmatpush1.msra.mxu0 0.0
    %1688 = vmatprep.subr.mxu0 0.0
    %1689 = vmatpush1.msra.mxu0 0.0
    %1690 = vmatprep.subr.mxu0 0.0
    %1691 = vmatpush1.msra.mxu0 0.0
    %1692 = vmatprep.subr.mxu0 0.0
    %1693 = vmatpush1.msra.mxu0 0.0
    %1694 = vmatprep.subr.mxu0 0.0
    %1695 = vmatpush1.msra.mxu0 0.0
    %1696 = vmatprep.subr.mxu0 0.0
    %1697 = vmatpush1.msra.mxu0 0.0
    %1698 = vmatprep.subr.mxu0 0.0
    %1699 = vmatpush1.msra.mxu0 0.0
    %1700 = vmatprep.subr.mxu0 0.0
    %1701 = vmatpush1.msra.mxu0 0.0
    %1702 = vmatprep.subr.mxu0 0.0
    %1703 = vmatpush1.msra.mxu0 0.0
    %1704 = vmatprep.subr.mxu0 0.0
    %1705 = vmatpush1.msra.mxu0 0.0
    %1706 = vmatprep.subr.mxu0 0.0
    %1707 = vmatpush1.msra.mxu0 0.0
    %1708 = vmatprep.subr.mxu0 0.0
    %1709 = vmatpush1.msra.mxu0 0.0
    %1710 = vmatprep.subr.mxu0 0.0
    %1711 = vmatpush1.msra.mxu0 0.0
    %1712 = vmatprep.subr.mxu0 0.0
    %1713 = vmatpush1.msra.mxu0 0.0
    %1714 = vmatprep.subr.mxu0 0.0
    %1715 = vmatpush1.msra.mxu0 0.0
    %1716 = vmatprep.subr.mxu0 0.0
    %1717 = vmatpush1.msra.mxu0 0.0
    %1718 = vmatprep.subr.mxu0 0.0
    %1719 = vmatpush1.msra.mxu0 0.0
    %1720 = vmatprep.subr.mxu0 0.0
    %1721 = vmatpush1.msra.mxu0 0.0
    %1722 = vmatprep.subr.mxu0 0.0
    %1723 = vmatpush1.msra.mxu0 0.0
    %1724 = vmatprep.subr.mxu0 0.0
    %1725 = vmatpush1.msra.mxu0 0.0
    %1726 = vmatprep.subr.mxu0 0.0
    %1727 = vmatpush1.msra.mxu0 0.0
    %1728 = vmatprep.subr.mxu0 0.0
    %1729 = vmatpush1.msra.mxu0 0.0
    %1730 = vmatprep.subr.mxu0 0.0
    %1731 = vmatpush1.msra.mxu0 0.0
    %1732 = vmatprep.subr.mxu0 0.0
    %1733 = vmatpush1.msra.mxu0 0.0
    %1734 = vmatprep.subr.mxu0 0.0
    %1735 = vmatpush1.msra.mxu0 0.0
    %1736 = vmatprep.subr.mxu0 0.0
    %1737 = vmatpush1.msra.mxu0 0.0
    %1738 = vmatprep.subr.mxu0 0.0
    %1739 = vmatpush1.msra.mxu0 0.0
    %1740 = vmatprep.mubr.f32.mxu0 0.0
    %v1741 = vand.u32 %v1474, 4294901760
    %v1742 = vsub.f32 %v1474, %v1741
    %1743 = vmatmul.mubr.f32.gmra.mrb[0].mxu0 %v1742
    %v1744 = vpop.f32.mrb[0].mxu0
    %v1745 = vadd.f32 %v1657, %v1744
    %v1746 = vpop.f32.mrb[0].mxu0
    %1747 = vmatprep.mubr.f32.mxu0 0.0
    %v1748 = vand.u32 %v1477, 4294901760
    %v1749 = vsub.f32 %v1477, %v1748
    %1750 = vmatmul.mubr.f32.gmra.mrb[0].mxu0 %v1749
    %v1751 = vpop.f32.mrb[0].mxu0
    %v1752 = vadd.f32 %v1663, %v1751
    %v1753 = vpop.f32.mrb[0].mxu0
    %1754 = vmatprep.mubr.f32.mxu0 0.0
    %v1755 = vand.u32 %v1480, 4294901760
    %v1756 = vsub.f32 %v1480, %v1755
    %1757 = vmatmul.mubr.f32.gmra.mrb[0].mxu0 %v1756
    %v1758 = vpop.f32.mrb[0].mxu0
    %v1759 = vadd.f32 %v1669, %v1758
    %v1760 = vpop.f32.mrb[0].mxu0
    %1761 = vdwg.mxu0
    %1762 = vmatprep.subr.mxu0 0.0
    %v1763 = vand.u32 %v1463, 4294901760
    %1764 = vmatpush1.msra.mxu0 %v1763
    %1765 = vmatprep.subr.mxu0 0.0
    %v1766 = vand.u32 %v1464, 4294901760
    %1767 = vmatpush1.msra.mxu0 %v1766
    %1768 = vmatprep.subr.mxu0 0.0
    %1769 = vmatpush1.msra.mxu0 0.0
    %1770 = vmatprep.subr.mxu0 0.0
    %1771 = vmatpush1.msra.mxu0 0.0
    %1772 = vmatprep.subr.mxu0 0.0
    %1773 = vmatpush1.msra.mxu0 0.0
    %1774 = vmatprep.subr.mxu0 0.0
    %1775 = vmatpush1.msra.mxu0 0.0
    %1776 = vmatprep.subr.mxu0 0.0
    %1777 = vmatpush1.msra.mxu0 0.0
    %1778 = vmatprep.subr.mxu0 0.0
    %1779 = vmatpush1.msra.mxu0 0.0
    %1780 = vmatprep.subr.mxu0 0.0
    %1781 = vmatpush1.msra.mxu0 0.0
    %1782 = vmatprep.subr.mxu0 0.0
    %1783 = vmatpush1.msra.mxu0 0.0
    %1784 = vmatprep.subr.mxu0 0.0
    %1785 = vmatpush1.msra.mxu0 0.0
    %1786 = vmatprep.subr.mxu0 0.0
    %1787 = vmatpush1.msra.mxu0 0.0
    %1788 = vmatprep.subr.mxu0 0.0
    %1789 = vmatpush1.msra.mxu0 0.0
    %1790 = vmatprep.subr.mxu0 0.0
    %1791 = vmatpush1.msra.mxu0 0.0
    %1792 = vmatprep.subr.mxu0 0.0
    %1793 = vmatpush1.msra.mxu0 0.0
    %1794 = vmatprep.subr.mxu0 0.0
    %1795 = vmatpush1.msra.mxu0 0.0
    %1796 = vmatprep.subr.mxu0 0.0
    %1797 = vmatpush1.msra.mxu0 0.0
    %1798 = vmatprep.subr.mxu0 0.0
    %1799 = vmatpush1.msra.mxu0 0.0
    %1800 = vmatprep.subr.mxu0 0.0
    %1801 = vmatpush1.msra.mxu0 0.0
    %1802 = vmatprep.subr.mxu0 0.0
    %1803 = vmatpush1.msra.mxu0 0.0
    %1804 = vmatprep.subr.mxu0 0.0
    %1805 = vmatpush1.msra.mxu0 0.0
    %1806 = vmatprep.subr.mxu0 0.0
    %1807 = vmatpush1.msra.mxu0 0.0
    %1808 = vmatprep.subr.mxu0 0.0
    %1809 = vmatpush1.msra.mxu0 0.0
    %1810 = vmatprep.subr.mxu0 0.0
    %1811 = vmatpush1.msra.mxu0 0.0
    %1812 = vmatprep.subr.mxu0 0.0
    %1813 = vmatpush1.msra.mxu0 0.0
    %1814 = vmatprep.subr.mxu0 0.0
    %1815 = vmatpush1.msra.mxu0 0.0
    %1816 = vmatprep.subr.mxu0 0.0
    %1817 = vmatpush1.msra.mxu0 0.0
    %1818 = vmatprep.subr.mxu0 0.0
    %1819 = vmatpush1.msra.mxu0 0.0
    %1820 = vmatprep.subr.mxu0 0.0
    %1821 = vmatpush1.msra.mxu0 0.0
    %1822 = vmatprep.subr.mxu0 0.0
    %1823 = vmatpush1.msra.mxu0 0.0
    %1824 = vmatprep.subr.mxu0 0.0
    %1825 = vmatpush1.msra.mxu0 0.0
    %1826 = vmatprep.subr.mxu0 0.0
    %1827 = vmatpush1.msra.mxu0 0.0
    %1828 = vmatprep.mubr.f32.mxu0 0.0
    %v1829 = vand.u32 %v1474, 4294901760
    %v1830 = vsub.f32 %v1474, %v1829
    %v1831 = vand.u32 %v1830, 4294901760
    %1832 = vmatmul.mubr.f32.gmra.mrb[0].mxu0 %v1831
    %v1833 = vpop.f32.mrb[0].mxu0
    %v1834 = vadd.f32 %v1745, %v1833
    %v1835 = vpop.f32.mrb[0].mxu0
    %1836 = vmatprep.mubr.f32.mxu0 0.0
    %v1837 = vand.u32 %v1477, 4294901760
    %v1838 = vsub.f32 %v1477, %v1837
    %v1839 = vand.u32 %v1838, 4294901760
    %1840 = vmatmul.mubr.f32.gmra.mrb[0].mxu0 %v1839
    %v1841 = vpop.f32.mrb[0].mxu0
    %v1842 = vadd.f32 %v1752, %v1841
    %v1843 = vpop.f32.mrb[0].mxu0
    %1844 = vmatprep.mubr.f32.mxu0 0.0
    %v1845 = vand.u32 %v1480, 4294901760
    %v1846 = vsub.f32 %v1480, %v1845
    %v1847 = vand.u32 %v1846, 4294901760
    %1848 = vmatmul.mubr.f32.gmra.mrb[0].mxu0 %v1847
    %v1849 = vpop.f32.mrb[0].mxu0
    %v1850 = vadd.f32 %v1759, %v1849
    %v1851 = vpop.f32.mrb[0].mxu0
    %1852 = vdwg.mxu0
    %1853 = vmatprep.subr.mxu0 0.0
    %v1854 = vand.u32 %v1463, 4294901760
    %v1855 = vsub.f32 %v1463, %v1854
    %v1856 = vand.u32 %v1855, 4294901760
    %1857 = vmatpush1.msra.mxu0 %v1856
    %1858 = vmatprep.subr.mxu0 0.0
    %v1859 = vand.u32 %v1464, 4294901760
    %v1860 = vsub.f32 %v1464, %v1859
    %v1861 = vand.u32 %v1860, 4294901760
    %1862 = vmatpush1.msra.mxu0 %v1861
    %1863 = vmatprep.subr.mxu0 0.0
    %1864 = vmatpush1.msra.mxu0 0.0
    %1865 = vmatprep.subr.mxu0 0.0
    %1866 = vmatpush1.msra.mxu0 0.0
    %1867 = vmatprep.subr.mxu0 0.0
    %1868 = vmatpush1.msra.mxu0 0.0
    %1869 = vmatprep.subr.mxu0 0.0
    %1870 = vmatpush1.msra.mxu0 0.0
    %1871 = vmatprep.subr.mxu0 0.0
    %1872 = vmatpush1.msra.mxu0 0.0
    %1873 = vmatprep.subr.mxu0 0.0
    %1874 = vmatpush1.msra.mxu0 0.0
    %1875 = vmatprep.subr.mxu0 0.0
    %1876 = vmatpush1.msra.mxu0 0.0
    %1877 = vmatprep.subr.mxu0 0.0
    %1878 = vmatpush1.msra.mxu0 0.0
    %1879 = vmatprep.subr.mxu0 0.0
    %1880 = vmatpush1.msra.mxu0 0.0
    %1881 = vmatprep.subr.mxu0 0.0
    %1882 = vmatpush1.msra.mxu0 0.0
    %1883 = vmatprep.subr.mxu0 0.0
    %1884 = vmatpush1.msra.mxu0 0.0
    %1885 = vmatprep.subr.mxu0 0.0
    %1886 = vmatpush1.msra.mxu0 0.0
    %1887 = vmatprep.subr.mxu0 0.0
    %1888 = vmatpush1.msra.mxu0 0.0
    %1889 = vmatprep.subr.mxu0 0.0
    %1890 = vmatpush1.msra.mxu0 0.0
    %1891 = vmatprep.subr.mxu0 0.0
    %1892 = vmatpush1.msra.mxu0 0.0
    %1893 = vmatprep.subr.mxu0 0.0
    %1894 = vmatpush1.msra.mxu0 0.0
    %1895 = vmatprep.subr.mxu0 0.0
    %1896 = vmatpush1.msra.mxu0 0.0
    %1897 = vmatprep.subr.mxu0 0.0
    %1898 = vmatpush1.msra.mxu0 0.0
    %1899 = vmatprep.subr.mxu0 0.0
    %1900 = vmatpush1.msra.mxu0 0.0
    %1901 = vmatprep.subr.mxu0 0.0
    %1902 = vmatpush1.msra.mxu0 0.0
    %1903 = vmatprep.subr.mxu0 0.0
    %1904 = vmatpush1.msra.mxu0 0.0
    %1905 = vmatprep.subr.mxu0 0.0
    %1906 = vmatpush1.msra.mxu0 0.0
    %1907 = vmatprep.subr.mxu0 0.0
    %1908 = vmatpush1.msra.mxu0 0.0
    %1909 = vmatprep.subr.mxu0 0.0
    %1910 = vmatpush1.msra.mxu0 0.0
    %1911 = vmatprep.subr.mxu0 0.0
    %1912 = vmatpush1.msra.mxu0 0.0
    %1913 = vmatprep.subr.mxu0 0.0
    %1914 = vmatpush1.msra.mxu0 0.0
    %1915 = vmatprep.subr.mxu0 0.0
    %1916 = vmatpush1.msra.mxu0 0.0
    %1917 = vmatprep.subr.mxu0 0.0
    %1918 = vmatpush1.msra.mxu0 0.0
    %1919 = vmatprep.subr.mxu0 0.0
    %1920 = vmatpush1.msra.mxu0 0.0
    %1921 = vmatprep.subr.mxu0 0.0
    %1922 = vmatpush1.msra.mxu0 0.0
    %1923 = vmatprep.mubr.f32.mxu0 0.0
    %v1924 = vand.u32 %v1474, 4294901760
    %1925 = vmatmul.mubr.f32.gmra.mrb[0].mxu0 %v1924
    %v1926 = vpop.f32.mrb[0].mxu0
    %v1927 = vadd.f32 %v1834, %v1926
    %v1928 = vpop.f32.mrb[0].mxu0
    %1929 = vmatprep.mubr.f32.mxu0 0.0
    %v1930 = vand.u32 %v1477, 4294901760
    %1931 = vmatmul.mubr.f32.gmra.mrb[0].mxu0 %v1930
    %v1932 = vpop.f32.mrb[0].mxu0
    %v1933 = vadd.f32 %v1842, %v1932
    %v1934 = vpop.f32.mrb[0].mxu0
    %1935 = vmatprep.mubr.f32.mxu0 0.0
    %v1936 = vand.u32 %v1480, 4294901760
    %1937 = vmatmul.mubr.f32.gmra.mrb[0].mxu0 %v1936
    %v1938 = vpop.f32.mrb[0].mxu0
    %v1939 = vadd.f32 %v1850, %v1938
    %v1940 = vpop.f32.mrb[0].mxu0
    %1941 = vdwg.mxu0
    %1942 = vmatprep.subr.mxu0 0.0
    %v1943 = vand.u32 %v1463, 4294901760
    %1944 = vmatpush1.msra.mxu0 %v1943
    %1945 = vmatprep.subr.mxu0 0.0
    %v1946 = vand.u32 %v1464, 4294901760
    %1947 = vmatpush1.msra.mxu0 %v1946
    %1948 = vmatprep.subr.mxu0 0.0
    %1949 = vmatpush1.msra.mxu0 0.0
    %1950 = vmatprep.subr.mxu0 0.0
    %1951 = vmatpush1.msra.mxu0 0.0
    %1952 = vmatprep.subr.mxu0 0.0
    %1953 = vmatpush1.msra.mxu0 0.0
    %1954 = vmatprep.subr.mxu0 0.0
    %1955 = vmatpush1.msra.mxu0 0.0
    %1956 = vmatprep.subr.mxu0 0.0
    %1957 = vmatpush1.msra.mxu0 0.0
    %1958 = vmatprep.subr.mxu0 0.0
    %1959 = vmatpush1.msra.mxu0 0.0
    %1960 = vmatprep.subr.mxu0 0.0
    %1961 = vmatpush1.msra.mxu0 0.0
    %1962 = vmatprep.subr.mxu0 0.0
    %1963 = vmatpush1.msra.mxu0 0.0
    %1964 = vmatprep.subr.mxu0 0.0
    %1965 = vmatpush1.msra.mxu0 0.0
    %1966 = vmatprep.subr.mxu0 0.0
    %1967 = vmatpush1.msra.mxu0 0.0
    %1968 = vmatprep.subr.mxu0 0.0
    %1969 = vmatpush1.msra.mxu0 0.0
    %1970 = vmatprep.subr.mxu0 0.0
    %1971 = vmatpush1.msra.mxu0 0.0
    %1972 = vmatprep.subr.mxu0 0.0
    %1973 = vmatpush1.msra.mxu0 0.0
    %1974 = vmatprep.subr.mxu0 0.0
    %1975 = vmatpush1.msra.mxu0 0.0
    %1976 = vmatprep.subr.mxu0 0.0
    %1977 = vmatpush1.msra.mxu0 0.0
    %1978 = vmatprep.subr.mxu0 0.0
    %1979 = vmatpush1.msra.mxu0 0.0
    %1980 = vmatprep.subr.mxu0 0.0
    %1981 = vmatpush1.msra.mxu0 0.0
    %1982 = vmatprep.subr.mxu0 0.0
    %1983 = vmatpush1.msra.mxu0 0.0
    %1984 = vmatprep.subr.mxu0 0.0
    %1985 = vmatpush1.msra.mxu0 0.0
    %1986 = vmatprep.subr.mxu0 0.0
    %1987 = vmatpush1.msra.mxu0 0.0
    %1988 = vmatprep.subr.mxu0 0.0
    %1989 = vmatpush1.msra.mxu0 0.0
    %1990 = vmatprep.subr.mxu0 0.0
    %1991 = vmatpush1.msra.mxu0 0.0
    %1992 = vmatprep.subr.mxu0 0.0
    %1993 = vmatpush1.msra.mxu0 0.0
    %1994 = vmatprep.subr.mxu0 0.0
    %1995 = vmatpush1.msra.mxu0 0.0
    %1996 = vmatprep.subr.mxu0 0.0
    %1997 = vmatpush1.msra.mxu0 0.0
    %1998 = vmatprep.subr.mxu0 0.0
    %1999 = vmatpush1.msra.mxu0 0.0
    %2000 = vmatprep.subr.mxu0 0.0
    %2001 = vmatpush1.msra.mxu0 0.0
    %2002 = vmatprep.subr.mxu0 0.0
    %2003 = vmatpush1.msra.mxu0 0.0
    %2004 = vmatprep.subr.mxu0 0.0
    %2005 = vmatpush1.msra.mxu0 0.0
    %2006 = vmatprep.subr.mxu0 0.0
    %2007 = vmatpush1.msra.mxu0 0.0
    %2008 = vmatprep.mubr.f32.mxu0 0.0
    %v2009 = vand.u32 %v1474, 4294901760
    %2010 = vmatmul.mubr.f32.gmra.mrb[0].mxu0 %v2009
    %v2011 = vpop.f32.mrb[0].mxu0
    %v2012 = vadd.f32 %v1927, %v2011
    %v2013 = vpop.f32.mrb[0].mxu0
    %2014 = vmatprep.mubr.f32.mxu0 0.0
    %v2015 = vand.u32 %v1477, 4294901760
    %2016 = vmatmul.mubr.f32.gmra.mrb[0].mxu0 %v2015
    %v2017 = vpop.f32.mrb[0].mxu0
    %v2018 = vadd.f32 %v1933, %v2017
    %v2019 = vpop.f32.mrb[0].mxu0
    %2020 = vmatprep.mubr.f32.mxu0 0.0
    %v2021 = vand.u32 %v1480, 4294901760
    %2022 = vmatmul.mubr.f32.gmra.mrb[0].mxu0 %v2021
    %v2023 = vpop.f32.mrb[0].mxu0
    %v2024 = vadd.f32 %v1939, %v2023
    %v2025 = vpop.f32.mrb[0].mxu0
    %2026 = vdwg.mxu0
    %v2027 = vld [vmem:[%s6] sm:$0xff]
    %v2028 = vld [vmem:[%s6 + $0x8] sm:$0xff]
    %v2030 = vsel %vm1472, 0.0, 0
    %2032 = vmatprep.subr.mxu0 0.0
    %v2033 = vand.u32 %v2027, 4294901760
    %2034 = vmatpush1.msra.mxu0 %v2033
    %2035 = vmatprep.subr.mxu0 0.0
    %v2036 = vand.u32 %v2028, 4294901760
    %2037 = vmatpush1.msra.mxu0 %v2036
    %2038 = vmatprep.subr.mxu0 0.0
    %2039 = vmatpush1.msra.mxu0 0.0
    %2040 = vmatprep.subr.mxu0 0.0
    %2041 = vmatpush1.msra.mxu0 0.0
    %2042 = vmatprep.subr.mxu0 0.0
    %2043 = vmatpush1.msra.mxu0 0.0
    %2044 = vmatprep.subr.mxu0 0.0
    %2045 = vmatpush1.msra.mxu0 0.0
    %2046 = vmatprep.subr.mxu0 0.0
    %2047 = vmatpush1.msra.mxu0 0.0
    %2048 = vmatprep.subr.mxu0 0.0
    %2049 = vmatpush1.msra.mxu0 0.0
    %2050 = vmatprep.subr.mxu0 0.0
    %2051 = vmatpush1.msra.mxu0 0.0
    %2052 = vmatprep.subr.mxu0 0.0
    %2053 = vmatpush1.msra.mxu0 0.0
    %2054 = vmatprep.subr.mxu0 0.0
    %2055 = vmatpush1.msra.mxu0 0.0
    %2056 = vmatprep.subr.mxu0 0.0
    %2057 = vmatpush1.msra.mxu0 0.0
    %2058 = vmatprep.subr.mxu0 0.0
    %2059 = vmatpush1.msra.mxu0 0.0
    %2060 = vmatprep.subr.mxu0 0.0
    %2061 = vmatpush1.msra.mxu0 0.0
    %2062 = vmatprep.subr.mxu0 0.0
    %2063 = vmatpush1.msra.mxu0 0.0
    %2064 = vmatprep.subr.mxu0 0.0
    %2065 = vmatpush1.msra.mxu0 0.0
    %2066 = vmatprep.subr.mxu0 0.0
    %2067 = vmatpush1.msra.mxu0 0.0
    %2068 = vmatprep.subr.mxu0 0.0
    %2069 = vmatpush1.msra.mxu0 0.0
    %2070 = vmatprep.subr.mxu0 0.0
    %2071 = vmatpush1.msra.mxu0 0.0
    %2072 = vmatprep.subr.mxu0 0.0
    %2073 = vmatpush1.msra.mxu0 0.0
    %2074 = vmatprep.subr.mxu0 0.0
    %2075 = vmatpush1.msra.mxu0 0.0
    %2076 = vmatprep.subr.mxu0 0.0
    %2077 = vmatpush1.msra.mxu0 0.0
    %2078 = vmatprep.subr.mxu0 0.0
    %2079 = vmatpush1.msra.mxu0 0.0
    %2080 = vmatprep.subr.mxu0 0.0
    %2081 = vmatpush1.msra.mxu0 0.0
    %2082 = vmatprep.subr.mxu0 0.0
    %2083 = vmatpush1.msra.mxu0 0.0
    %2084 = vmatprep.subr.mxu0 0.0
    %2085 = vmatpush1.msra.mxu0 0.0
    %2086 = vmatprep.subr.mxu0 0.0
    %2087 = vmatpush1.msra.mxu0 0.0
    %2088 = vmatprep.subr.mxu0 0.0
    %2089 = vmatpush1.msra.mxu0 0.0
    %2090 = vmatprep.subr.mxu0 0.0
    %2091 = vmatpush1.msra.mxu0 0.0
    %2092 = vmatprep.subr.mxu0 0.0
    %2093 = vmatpush1.msra.mxu0 0.0
    %2094 = vmatprep.subr.mxu0 0.0
    %2095 = vmatpush1.msra.mxu0 0.0
    %2096 = vmatprep.subr.mxu0 0.0
    %2097 = vmatpush1.msra.mxu0 0.0
    %2098 = vmatprep.mubr.f32.mxu0 0.0
    %v2099 = vand.u32 %v2030, 4294901760
    %v2100 = vsub.f32 %v2030, %v2099
    %v2101 = vand.u32 %v2100, 4294901760
    %v2102 = vsub.f32 %v2100, %v2101
    %v2103 = vand.u32 %v2102, 4294901760
    %2104 = vmatmul.mubr.f32.gmra.mrb[0].mxu0 %v2103
    %v2105 = vpop.f32.mrb[0].mxu0
    %v2106 = vadd.f32 0.0, %v2105
    %v2107 = vpop.f32.mrb[0].mxu0
    %2108 = vdwg.mxu0
    %2109 = vmatprep.subr.mxu0 0.0
    %v2110 = vand.u32 %v2027, 4294901760
    %v2111 = vsub.f32 %v2027, %v2110
    %v2112 = vand.u32 %v2111, 4294901760
    %v2113 = vsub.f32 %v2111, %v2112
    %v2114 = vand.u32 %v2113, 4294901760
    %2115 = vmatpush1.msra.mxu0 %v2114
    %2116 = vmatprep.subr.mxu0 0.0
    %v2117 = vand.u32 %v2028, 4294901760
    %v2118 = vsub.f32 %v2028, %v2117
    %v2119 = vand.u32 %v2118, 4294901760
    %v2120 = vsub.f32 %v2118, %v2119
    %v2121 = vand.u32 %v2120, 4294901760
    %2122 = vmatpush1.msra.mxu0 %v2121
    %2123 = vmatprep.subr.mxu0 0.0
    %2124 = vmatpush1.msra.mxu0 0.0
    %2125 = vmatprep.subr.mxu0 0.0
    %2126 = vmatpush1.msra.mxu0 0.0
    %2127 = vmatprep.subr.mxu0 0.0
    %2128 = vmatpush1.msra.mxu0 0.0
    %2129 = vmatprep.subr.mxu0 0.0
    %2130 = vmatpush1.msra.mxu0 0.0
    %2131 = vmatprep.subr.mxu0 0.0
    %2132 = vmatpush1.msra.mxu0 0.0
    %2133 = vmatprep.subr.mxu0 0.0
    %2134 = vmatpush1.msra.mxu0 0.0
    %2135 = vmatprep.subr.mxu0 0.0
    %2136 = vmatpush1.msra.mxu0 0.0
    %2137 = vmatprep.subr.mxu0 0.0
    %2138 = vmatpush1.msra.mxu0 0.0
    %2139 = vmatprep.subr.mxu0 0.0
    %2140 = vmatpush1.msra.mxu0 0.0
    %2141 = vmatprep.subr.mxu0 0.0
    %2142 = vmatpush1.msra.mxu0 0.0
    %2143 = vmatprep.subr.mxu0 0.0
    %2144 = vmatpush1.msra.mxu0 0.0
    %2145 = vmatprep.subr.mxu0 0.0
    %2146 = vmatpush1.msra.mxu0 0.0
    %2147 = vmatprep.subr.mxu0 0.0
    %2148 = vmatpush1.msra.mxu0 0.0
    %2149 = vmatprep.subr.mxu0 0.0
    %2150 = vmatpush1.msra.mxu0 0.0
    %2151 = vmatprep.subr.mxu0 0.0
    %2152 = vmatpush1.msra.mxu0 0.0
    %2153 = vmatprep.subr.mxu0 0.0
    %2154 = vmatpush1.msra.mxu0 0.0
    %2155 = vmatprep.subr.mxu0 0.0
    %2156 = vmatpush1.msra.mxu0 0.0
    %2157 = vmatprep.subr.mxu0 0.0
    %2158 = vmatpush1.msra.mxu0 0.0
    %2159 = vmatprep.subr.mxu0 0.0
    %2160 = vmatpush1.msra.mxu0 0.0
    %2161 = vmatprep.subr.mxu0 0.0
    %2162 = vmatpush1.msra.mxu0 0.0
    %2163 = vmatprep.subr.mxu0 0.0
    %2164 = vmatpush1.msra.mxu0 0.0
    %2165 = vmatprep.subr.mxu0 0.0
    %2166 = vmatpush1.msra.mxu0 0.0
    %2167 = vmatprep.subr.mxu0 0.0
    %2168 = vmatpush1.msra.mxu0 0.0
    %2169 = vmatprep.subr.mxu0 0.0
    %2170 = vmatpush1.msra.mxu0 0.0
    %2171 = vmatprep.subr.mxu0 0.0
    %2172 = vmatpush1.msra.mxu0 0.0
    %2173 = vmatprep.subr.mxu0 0.0
    %2174 = vmatpush1.msra.mxu0 0.0
    %2175 = vmatprep.subr.mxu0 0.0
    %2176 = vmatpush1.msra.mxu0 0.0
    %2177 = vmatprep.subr.mxu0 0.0
    %2178 = vmatpush1.msra.mxu0 0.0
    %2179 = vmatprep.subr.mxu0 0.0
    %2180 = vmatpush1.msra.mxu0 0.0
    %2181 = vmatprep.subr.mxu0 0.0
    %2182 = vmatpush1.msra.mxu0 0.0
    %2183 = vmatprep.mubr.f32.mxu0 0.0
    %v2184 = vand.u32 %v2030, 4294901760
    %2185 = vmatmul.mubr.f32.gmra.mrb[0].mxu0 %v2184
    %v2186 = vpop.f32.mrb[0].mxu0
    %v2187 = vadd.f32 %v2106, %v2186
    %v2188 = vpop.f32.mrb[0].mxu0
    %2189 = vdwg.mxu0
    %2190 = vmatprep.subr.mxu0 0.0
    %v2191 = vand.u32 %v2027, 4294901760
    %v2192 = vsub.f32 %v2027, %v2191
    %2193 = vmatpush1.msra.mxu0 %v2192
    %2194 = vmatprep.subr.mxu0 0.0
    %v2195 = vand.u32 %v2028, 4294901760
    %v2196 = vsub.f32 %v2028, %v2195
    %2197 = vmatpush1.msra.mxu0 %v2196
    %2198 = vmatprep.subr.mxu0 0.0
    %2199 = vmatpush1.msra.mxu0 0.0
    %2200 = vmatprep.subr.mxu0 0.0
    %2201 = vmatpush1.msra.mxu0 0.0
    %2202 = vmatprep.subr.mxu0 0.0
    %2203 = vmatpush1.msra.mxu0 0.0
    %2204 = vmatprep.subr.mxu0 0.0
    %2205 = vmatpush1.msra.mxu0 0.0
    %2206 = vmatprep.subr.mxu0 0.0
    %2207 = vmatpush1.msra.mxu0 0.0
    %2208 = vmatprep.subr.mxu0 0.0
    %2209 = vmatpush1.msra.mxu0 0.0
    %2210 = vmatprep.subr.mxu0 0.0
    %2211 = vmatpush1.msra.mxu0 0.0
    %2212 = vmatprep.subr.mxu0 0.0
    %2213 = vmatpush1.msra.mxu0 0.0
    %2214 = vmatprep.subr.mxu0 0.0
    %2215 = vmatpush1.msra.mxu0 0.0
    %2216 = vmatprep.subr.mxu0 0.0
    %2217 = vmatpush1.msra.mxu0 0.0
    %2218 = vmatprep.subr.mxu0 0.0
    %2219 = vmatpush1.msra.mxu0 0.0
    %2220 = vmatprep.subr.mxu0 0.0
    %2221 = vmatpush1.msra.mxu0 0.0
    %2222 = vmatprep.subr.mxu0 0.0
    %2223 = vmatpush1.msra.mxu0 0.0
    %2224 = vmatprep.subr.mxu0 0.0
    %2225 = vmatpush1.msra.mxu0 0.0
    %2226 = vmatprep.subr.mxu0 0.0
    %2227 = vmatpush1.msra.mxu0 0.0
    %2228 = vmatprep.subr.mxu0 0.0
    %2229 = vmatpush1.msra.mxu0 0.0
    %2230 = vmatprep.subr.mxu0 0.0
    %2231 = vmatpush1.msra.mxu0 0.0
    %2232 = vmatprep.subr.mxu0 0.0
    %2233 = vmatpush1.msra.mxu0 0.0
    %2234 = vmatprep.subr.mxu0 0.0
    %2235 = vmatpush1.msra.mxu0 0.0
    %2236 = vmatprep.subr.mxu0 0.0
    %2237 = vmatpush1.msra.mxu0 0.0
    %2238 = vmatprep.subr.mxu0 0.0
    %2239 = vmatpush1.msra.mxu0 0.0
    %2240 = vmatprep.subr.mxu0 0.0
    %2241 = vmatpush1.msra.mxu0 0.0
    %2242 = vmatprep.subr.mxu0 0.0
    %2243 = vmatpush1.msra.mxu0 0.0
    %2244 = vmatprep.subr.mxu0 0.0
    %2245 = vmatpush1.msra.mxu0 0.0
    %2246 = vmatprep.subr.mxu0 0.0
    %2247 = vmatpush1.msra.mxu0 0.0
    %2248 = vmatprep.subr.mxu0 0.0
    %2249 = vmatpush1.msra.mxu0 0.0
    %2250 = vmatprep.subr.mxu0 0.0
    %2251 = vmatpush1.msra.mxu0 0.0
    %2252 = vmatprep.subr.mxu0 0.0
    %2253 = vmatpush1.msra.mxu0 0.0
    %2254 = vmatprep.subr.mxu0 0.0
    %2255 = vmatpush1.msra.mxu0 0.0
    %2256 = vmatprep.subr.mxu0 0.0
    %2257 = vmatpush1.msra.mxu0 0.0
    %2258 = vmatprep.mubr.f32.mxu0 0.0
    %v2259 = vand.u32 %v2030, 4294901760
    %v2260 = vsub.f32 %v2030, %v2259
    %2261 = vmatmul.mubr.f32.gmra.mrb[0].mxu0 %v2260
    %v2262 = vpop.f32.mrb[0].mxu0
    %v2263 = vadd.f32 %v2187, %v2262
    %v2264 = vpop.f32.mrb[0].mxu0
    %2265 = vdwg.mxu0
    %2266 = vmatprep.subr.mxu0 0.0
    %v2267 = vand.u32 %v2027, 4294901760
    %2268 = vmatpush1.msra.mxu0 %v2267
    %2269 = vmatprep.subr.mxu0 0.0
    %v2270 = vand.u32 %v2028, 4294901760
    %2271 = vmatpush1.msra.mxu0 %v2270
    %2272 = vmatprep.subr.mxu0 0.0
    %2273 = vmatpush1.msra.mxu0 0.0
    %2274 = vmatprep.subr.mxu0 0.0
    %2275 = vmatpush1.msra.mxu0 0.0
    %2276 = vmatprep.subr.mxu0 0.0
    %2277 = vmatpush1.msra.mxu0 0.0
    %2278 = vmatprep.subr.mxu0 0.0
    %2279 = vmatpush1.msra.mxu0 0.0
    %2280 = vmatprep.subr.mxu0 0.0
    %2281 = vmatpush1.msra.mxu0 0.0
    %2282 = vmatprep.subr.mxu0 0.0
    %2283 = vmatpush1.msra.mxu0 0.0
    %2284 = vmatprep.subr.mxu0 0.0
    %2285 = vmatpush1.msra.mxu0 0.0
    %2286 = vmatprep.subr.mxu0 0.0
    %2287 = vmatpush1.msra.mxu0 0.0
    %2288 = vmatprep.subr.mxu0 0.0
    %2289 = vmatpush1.msra.mxu0 0.0
    %2290 = vmatprep.subr.mxu0 0.0
    %2291 = vmatpush1.msra.mxu0 0.0
    %2292 = vmatprep.subr.mxu0 0.0
    %2293 = vmatpush1.msra.mxu0 0.0
    %2294 = vmatprep.subr.mxu0 0.0
    %2295 = vmatpush1.msra.mxu0 0.0
    %2296 = vmatprep.subr.mxu0 0.0
    %2297 = vmatpush1.msra.mxu0 0.0
    %2298 = vmatprep.subr.mxu0 0.0
    %2299 = vmatpush1.msra.mxu0 0.0
    %2300 = vmatprep.subr.mxu0 0.0
    %2301 = vmatpush1.msra.mxu0 0.0
    %2302 = vmatprep.subr.mxu0 0.0
    %2303 = vmatpush1.msra.mxu0 0.0
    %2304 = vmatprep.subr.mxu0 0.0
    %2305 = vmatpush1.msra.mxu0 0.0
    %2306 = vmatprep.subr.mxu0 0.0
    %2307 = vmatpush1.msra.mxu0 0.0
    %2308 = vmatprep.subr.mxu0 0.0
    %2309 = vmatpush1.msra.mxu0 0.0
    %2310 = vmatprep.subr.mxu0 0.0
    %2311 = vmatpush1.msra.mxu0 0.0
    %2312 = vmatprep.subr.mxu0 0.0
    %2313 = vmatpush1.msra.mxu0 0.0
    %2314 = vmatprep.subr.mxu0 0.0
    %2315 = vmatpush1.msra.mxu0 0.0
    %2316 = vmatprep.subr.mxu0 0.0
    %2317 = vmatpush1.msra.mxu0 0.0
    %2318 = vmatprep.subr.mxu0 0.0
    %2319 = vmatpush1.msra.mxu0 0.0
    %2320 = vmatprep.subr.mxu0 0.0
    %2321 = vmatpush1.msra.mxu0 0.0
    %2322 = vmatprep.subr.mxu0 0.0
    %2323 = vmatpush1.msra.mxu0 0.0
    %2324 = vmatprep.subr.mxu0 0.0
    %2325 = vmatpush1.msra.mxu0 0.0
    %2326 = vmatprep.subr.mxu0 0.0
    %2327 = vmatpush1.msra.mxu0 0.0
    %2328 = vmatprep.subr.mxu0 0.0
    %2329 = vmatpush1.msra.mxu0 0.0
    %2330 = vmatprep.subr.mxu0 0.0
    %2331 = vmatpush1.msra.mxu0 0.0
    %2332 = vmatprep.mubr.f32.mxu0 0.0
    %v2333 = vand.u32 %v2030, 4294901760
    %v2334 = vsub.f32 %v2030, %v2333
    %v2335 = vand.u32 %v2334, 4294901760
    %2336 = vmatmul.mubr.f32.gmra.mrb[0].mxu0 %v2335
    %v2337 = vpop.f32.mrb[0].mxu0
    %v2338 = vadd.f32 %v2263, %v2337
    %v2339 = vpop.f32.mrb[0].mxu0
    %2340 = vdwg.mxu0
    %2341 = vmatprep.subr.mxu0 0.0
    %v2342 = vand.u32 %v2027, 4294901760
    %v2343 = vsub.f32 %v2027, %v2342
    %v2344 = vand.u32 %v2343, 4294901760
    %2345 = vmatpush1.msra.mxu0 %v2344
    %2346 = vmatprep.subr.mxu0 0.0
    %v2347 = vand.u32 %v2028, 4294901760
    %v2348 = vsub.f32 %v2028, %v2347
    %v2349 = vand.u32 %v2348, 4294901760
    %2350 = vmatpush1.msra.mxu0 %v2349
    %2351 = vmatprep.subr.mxu0 0.0
    %2352 = vmatpush1.msra.mxu0 0.0
    %2353 = vmatprep.subr.mxu0 0.0
    %2354 = vmatpush1.msra.mxu0 0.0
    %2355 = vmatprep.subr.mxu0 0.0
    %2356 = vmatpush1.msra.mxu0 0.0
    %2357 = vmatprep.subr.mxu0 0.0
    %2358 = vmatpush1.msra.mxu0 0.0
    %2359 = vmatprep.subr.mxu0 0.0
    %2360 = vmatpush1.msra.mxu0 0.0
    %2361 = vmatprep.subr.mxu0 0.0
    %2362 = vmatpush1.msra.mxu0 0.0
    %2363 = vmatprep.subr.mxu0 0.0
    %2364 = vmatpush1.msra.mxu0 0.0
    %2365 = vmatprep.subr.mxu0 0.0
    %2366 = vmatpush1.msra.mxu0 0.0
    %2367 = vmatprep.subr.mxu0 0.0
    %2368 = vmatpush1.msra.mxu0 0.0
    %2369 = vmatprep.subr.mxu0 0.0
    %2370 = vmatpush1.msra.mxu0 0.0
    %2371 = vmatprep.subr.mxu0 0.0
    %2372 = vmatpush1.msra.mxu0 0.0
    %2373 = vmatprep.subr.mxu0 0.0
    %2374 = vmatpush1.msra.mxu0 0.0
    %2375 = vmatprep.subr.mxu0 0.0
    %2376 = vmatpush1.msra.mxu0 0.0
    %2377 = vmatprep.subr.mxu0 0.0
    %2378 = vmatpush1.msra.mxu0 0.0
    %2379 = vmatprep.subr.mxu0 0.0
    %2380 = vmatpush1.msra.mxu0 0.0
    %2381 = vmatprep.subr.mxu0 0.0
    %2382 = vmatpush1.msra.mxu0 0.0
    %2383 = vmatprep.subr.mxu0 0.0
    %2384 = vmatpush1.msra.mxu0 0.0
    %2385 = vmatprep.subr.mxu0 0.0
    %2386 = vmatpush1.msra.mxu0 0.0
    %2387 = vmatprep.subr.mxu0 0.0
    %2388 = vmatpush1.msra.mxu0 0.0
    %2389 = vmatprep.subr.mxu0 0.0
    %2390 = vmatpush1.msra.mxu0 0.0
    %2391 = vmatprep.subr.mxu0 0.0
    %2392 = vmatpush1.msra.mxu0 0.0
    %2393 = vmatprep.subr.mxu0 0.0
    %2394 = vmatpush1.msra.mxu0 0.0
    %2395 = vmatprep.subr.mxu0 0.0
    %2396 = vmatpush1.msra.mxu0 0.0
    %2397 = vmatprep.subr.mxu0 0.0
    %2398 = vmatpush1.msra.mxu0 0.0
    %2399 = vmatprep.subr.mxu0 0.0
    %2400 = vmatpush1.msra.mxu0 0.0
    %2401 = vmatprep.subr.mxu0 0.0
    %2402 = vmatpush1.msra.mxu0 0.0
    %2403 = vmatprep.subr.mxu0 0.0
    %2404 = vmatpush1.msra.mxu0 0.0
    %2405 = vmatprep.subr.mxu0 0.0
    %2406 = vmatpush1.msra.mxu0 0.0
    %2407 = vmatprep.subr.mxu0 0.0
    %2408 = vmatpush1.msra.mxu0 0.0
    %2409 = vmatprep.subr.mxu0 0.0
    %2410 = vmatpush1.msra.mxu0 0.0
    %2411 = vmatprep.mubr.f32.mxu0 0.0
    %v2412 = vand.u32 %v2030, 4294901760
    %2413 = vmatmul.mubr.f32.gmra.mrb[0].mxu0 %v2412
    %v2414 = vpop.f32.mrb[0].mxu0
    %v2415 = vadd.f32 %v2338, %v2414
    %v2416 = vpop.f32.mrb[0].mxu0
    %2417 = vdwg.mxu0
    %2418 = vmatprep.subr.mxu0 0.0
    %v2419 = vand.u32 %v2027, 4294901760
    %2420 = vmatpush1.msra.mxu0 %v2419
    %2421 = vmatprep.subr.mxu0 0.0
    %v2422 = vand.u32 %v2028, 4294901760
    %2423 = vmatpush1.msra.mxu0 %v2422
    %2424 = vmatprep.subr.mxu0 0.0
    %2425 = vmatpush1.msra.mxu0 0.0
    %2426 = vmatprep.subr.mxu0 0.0
    %2427 = vmatpush1.msra.mxu0 0.0
    %2428 = vmatprep.subr.mxu0 0.0
    %2429 = vmatpush1.msra.mxu0 0.0
    %2430 = vmatprep.subr.mxu0 0.0
    %2431 = vmatpush1.msra.mxu0 0.0
    %2432 = vmatprep.subr.mxu0 0.0
    %2433 = vmatpush1.msra.mxu0 0.0
    %2434 = vmatprep.subr.mxu0 0.0
    %2435 = vmatpush1.msra.mxu0 0.0
    %2436 = vmatprep.subr.mxu0 0.0
    %2437 = vmatpush1.msra.mxu0 0.0
    %2438 = vmatprep.subr.mxu0 0.0
    %2439 = vmatpush1.msra.mxu0 0.0
    %2440 = vmatprep.subr.mxu0 0.0
    %2441 = vmatpush1.msra.mxu0 0.0
    %2442 = vmatprep.subr.mxu0 0.0
    %2443 = vmatpush1.msra.mxu0 0.0
    %2444 = vmatprep.subr.mxu0 0.0
    %2445 = vmatpush1.msra.mxu0 0.0
    %2446 = vmatprep.subr.mxu0 0.0
    %2447 = vmatpush1.msra.mxu0 0.0
    %2448 = vmatprep.subr.mxu0 0.0
    %2449 = vmatpush1.msra.mxu0 0.0
    %2450 = vmatprep.subr.mxu0 0.0
    %2451 = vmatpush1.msra.mxu0 0.0
    %2452 = vmatprep.subr.mxu0 0.0
    %2453 = vmatpush1.msra.mxu0 0.0
    %2454 = vmatprep.subr.mxu0 0.0
    %2455 = vmatpush1.msra.mxu0 0.0
    %2456 = vmatprep.subr.mxu0 0.0
    %2457 = vmatpush1.msra.mxu0 0.0
    %2458 = vmatprep.subr.mxu0 0.0
    %2459 = vmatpush1.msra.mxu0 0.0
    %2460 = vmatprep.subr.mxu0 0.0
    %2461 = vmatpush1.msra.mxu0 0.0
    %2462 = vmatprep.subr.mxu0 0.0
    %2463 = vmatpush1.msra.mxu0 0.0
    %2464 = vmatprep.subr.mxu0 0.0
    %2465 = vmatpush1.msra.mxu0 0.0
    %2466 = vmatprep.subr.mxu0 0.0
    %2467 = vmatpush1.msra.mxu0 0.0
    %2468 = vmatprep.subr.mxu0 0.0
    %2469 = vmatpush1.msra.mxu0 0.0
    %2470 = vmatprep.subr.mxu0 0.0
    %2471 = vmatpush1.msra.mxu0 0.0
    %2472 = vmatprep.subr.mxu0 0.0
    %2473 = vmatpush1.msra.mxu0 0.0
    %2474 = vmatprep.subr.mxu0 0.0
    %2475 = vmatpush1.msra.mxu0 0.0
    %2476 = vmatprep.subr.mxu0 0.0
    %2477 = vmatpush1.msra.mxu0 0.0
    %2478 = vmatprep.subr.mxu0 0.0
    %2479 = vmatpush1.msra.mxu0 0.0
    %2480 = vmatprep.subr.mxu0 0.0
    %2481 = vmatpush1.msra.mxu0 0.0
    %2482 = vmatprep.subr.mxu0 0.0
    %2483 = vmatpush1.msra.mxu0 0.0
    %2484 = vmatprep.mubr.f32.mxu0 0.0
    %v2485 = vand.u32 %v2030, 4294901760
    %2486 = vmatmul.mubr.f32.gmra.mrb[0].mxu0 %v2485
    %v2487 = vpop.f32.mrb[0].mxu0
    %v2488 = vadd.f32 %v2415, %v2487
    %v2489 = vpop.f32.mrb[0].mxu0
    %2490 = vdwg.mxu0
    %v2491 = vadd.f32 %v2012, %v2488
    %v2493 = vrot.slane %v2488, 2
    %v2495 = vadd.f32 %v2024, %v2493
    %v2497 = vrot.slane %v2495, 6
    %2498 = vrot.lane.b32.xlu0 %v2497, 64
    %v2499 = vpop.permute.xlu0 %2498
    %vm2501 = vcmask 1041408
    %v2502 = vsel %vm2501, %v2491, %v2499
    %v2503 = vxor.u32 %v2502, 2147483648
    %v2504 = vmul.f32 %v2503, 1.442695
    %v2505 = vpow.pop %v2504
    %v2506 = vadd.f32 %v2505, 1.0
    %v2507 = vrcp.pop %v2506
    %v2508 = vmul.f32 1.0, %v2507
    %v2509 = vtanh.pop %v2502
    %v2510 = vmul.f32 %v2508, 0.0
    %2512 = vrot.lane.b32.xlu0 %v2509, 96
    %v2513 = vpop.permute.xlu0 %2512
    %v2515 = vmul.f32 %v2508, %v2513
    %2517 = vrot.lane.b32.xlu0 %v2515, 16
    %v2518 = vpop.permute.xlu0 %2517
    %v2520 = vadd.f32 %v2510, %v2518
    %v2521 = vtanh.pop %v2520
    %2523 = vrot.lane.b32.xlu0 %v2521, 32
    %v2524 = vpop.permute.xlu0 %2523
    %v2526 = vmul.f32 %v2508, %v2524
    %v2529 = vunpack.c.l.s4 1983009808
    %v2530 = vunpack.c.0.s8 %v2529
    %v2531 = vlaneseq
    %v2532 = vshrl.u32 %v2531, 7
    %v2533 = vsub.s32 %v2530, %v2532
    %v2534 = vrot.slane %v2526, %v2533
    %2535 = vrot.lane.b32.xlu0 %v2534, 80
    %v2536 = vpop.permute.xlu0 %2535
    %vm2538 = vcmask 122880
    %2539 = vst.msk [vmem:[#allocation3] sm:$0x1] %vm2538, %v2536
    %v2540 = vcombine.high %v2534, %v2534
    %2541 = vrot.lane.b32.xlu0 %v2540, 64
    %v2542 = vpop.permute.xlu0 %2541
    %vm2544 = vcmask 1041280
    %2545 = vst.msk [vmem:[#allocation3 + $0x3] sm:$0x1] %vm2544, %v2542
    %v2546 = vrot.slane %v2534, 7
    %v2547 = vrot.slane %v2546, 2
    %2548 = vrot.lane.b32.xlu0 %v2547, 112
    %v2549 = vpop.permute.xlu0 %2548
    %vm2551 = vcmask 385280
    %2552 = vst.msk [vmem:[#allocation3] sm:$0x1] %vm2551, %v2549
    %v2553 = vrot.slane %v2540, 7
    %v2554 = vrot.slane %v2553, 2
    %2555 = vrot.lane.b32.xlu0 %v2554, 96
    %v2556 = vpop.permute.xlu0 %2555
    %vm2558 = vcmask 254080
    %2559 = vst.msk [vmem:[#allocation3 + $0x5] sm:$0x1] %vm2558, %v2556
    %2560 = vrot.lane.b32.xlu0 %v2526, 80
    %v2561 = vpop.permute.xlu0 %2560
    %v2562 = vsel %vm1472, %v2561, 0
    %2564 = vmatprep.subr.mxu0 0.0
    %v2565 = vand.u32 %v2027, 4294901760
    %2566 = vmatpush1.msra.mxu0 %v2565
    %2567 = vmatprep.subr.mxu0 0.0
    %v2568 = vand.u32 %v2028, 4294901760
    %2569 = vmatpush1.msra.mxu0 %v2568
    %2570 = vmatprep.subr.mxu0 0.0
    %2571 = vmatpush1.msra.mxu0 0.0
    %2572 = vmatprep.subr.mxu0 0.0
    %2573 = vmatpush1.msra.mxu0 0.0
    %2574 = vmatprep.subr.mxu0 0.0
    %2575 = vmatpush1.msra.mxu0 0.0
    %2576 = vmatprep.subr.mxu0 0.0
    %2577 = vmatpush1.msra.mxu0 0.0
    %2578 = vmatprep.subr.mxu0 0.0
    %2579 = vmatpush1.msra.mxu0 0.0
    %2580 = vmatprep.subr.mxu0 0.0
    %2581 = vmatpush1.msra.mxu0 0.0
    %2582 = vmatprep.subr.mxu0 0.0
    %2583 = vmatpush1.msra.mxu0 0.0
    %2584 = vmatprep.subr.mxu0 0.0
    %2585 = vmatpush1.msra.mxu0 0.0
    %2586 = vmatprep.subr.mxu0 0.0
    %2587 = vmatpush1.msra.mxu0 0.0
    %2588 = vmatprep.subr.mxu0 0.0
    %2589 = vmatpush1.msra.mxu0 0.0
    %2590 = vmatprep.subr.mxu0 0.0
    %2591 = vmatpush1.msra.mxu0 0.0
    %2592 = vmatprep.subr.mxu0 0.0
    %2593 = vmatpush1.msra.mxu0 0.0
    %2594 = vmatprep.subr.mxu0 0.0
    %2595 = vmatpush1.msra.mxu0 0.0
    %2596 = vmatprep.subr.mxu0 0.0
    %2597 = vmatpush1.msra.mxu0 0.0
    %2598 = vmatprep.subr.mxu0 0.0
    %2599 = vmatpush1.msra.mxu0 0.0
    %2600 = vmatprep.subr.mxu0 0.0
    %2601 = vmatpush1.msra.mxu0 0.0
    %2602 = vmatprep.subr.mxu0 0.0
    %2603 = vmatpush1.msra.mxu0 0.0
    %2604 = vmatprep.subr.mxu0 0.0
    %2605 = vmatpush1.msra.mxu0 0.0
    %2606 = vmatprep.subr.mxu0 0.0
    %2607 = vmatpush1.msra.mxu0 0.0
    %2608 = vmatprep.subr.mxu0 0.0
    %2609 = vmatpush1.msra.mxu0 0.0
    %2610 = vmatprep.subr.mxu0 0.0
    %2611 = vmatpush1.msra.mxu0 0.0
    %2612 = vmatprep.subr.mxu0 0.0
    %2613 = vmatpush1.msra.mxu0 0.0
    %2614 = vmatprep.subr.mxu0 0.0
    %2615 = vmatpush1.msra.mxu0 0.0
    %2616 = vmatprep.subr.mxu0 0.0
    %2617 = vmatpush1.msra.mxu0 0.0
    %2618 = vmatprep.subr.mxu0 0.0
    %2619 = vmatpush1.msra.mxu0 0.0
    %2620 = vmatprep.subr.mxu0 0.0
    %2621 = vmatpush1.msra.mxu0 0.0
    %2622 = vmatprep.subr.mxu0 0.0
    %2623 = vmatpush1.msra.mxu0 0.0
    %2624 = vmatprep.subr.mxu0 0.0
    %2625 = vmatpush1.msra.mxu0 0.0
    %2626 = vmatprep.subr.mxu0 0.0
    %2627 = vmatpush1.msra.mxu0 0.0
    %2628 = vmatprep.subr.mxu0 0.0
    %2629 = vmatpush1.msra.mxu0 0.0
    %2630 = vmatprep.mubr.f32.mxu0 0.0
    %v2631 = vand.u32 %v2562, 4294901760
    %v2632 = vsub.f32 %v2562, %v2631
    %v2633 = vand.u32 %v2632, 4294901760
    %v2634 = vsub.f32 %v2632, %v2633
    %v2635 = vand.u32 %v2634, 4294901760
    %2636 = vmatmul.mubr.f32.gmra.mrb[0].mxu0 %v2635
    %v2637 = vpop.f32.mrb[0].mxu0
    %v2638 = vadd.f32 0.0, %v2637
    %v2639 = vpop.f32.mrb[0].mxu0
    %2640 = vdwg.mxu0
    %2641 = vmatprep.subr.mxu0 0.0
    %v2642 = vand.u32 %v2027, 4294901760
    %v2643 = vsub.f32 %v2027, %v2642
    %v2644 = vand.u32 %v2643, 4294901760
    %v2645 = vsub.f32 %v2643, %v2644
    %v2646 = vand.u32 %v2645, 4294901760
    %2647 = vmatpush1.msra.mxu0 %v2646
    %2648 = vmatprep.subr.mxu0 0.0
    %v2649 = vand.u32 %v2028, 4294901760
    %v2650 = vsub.f32 %v2028, %v2649
    %v2651 = vand.u32 %v2650, 4294901760
    %v2652 = vsub.f32 %v2650, %v2651
    %v2653 = vand.u32 %v2652, 4294901760
    %2654 = vmatpush1.msra.mxu0 %v2653
    %2655 = vmatprep.subr.mxu0 0.0
    %2656 = vmatpush1.msra.mxu0 0.0
    %2657 = vmatprep.subr.mxu0 0.0
    %2658 = vmatpush1.msra.mxu0 0.0
    %2659 = vmatprep.subr.mxu0 0.0
    %2660 = vmatpush1.msra.mxu0 0.0
    %2661 = vmatprep.subr.mxu0 0.0
    %2662 = vmatpush1.msra.mxu0 0.0
    %2663 = vmatprep.subr.mxu0 0.0
    %2664 = vmatpush1.msra.mxu0 0.0
    %2665 = vmatprep.subr.mxu0 0.0
    %2666 = vmatpush1.msra.mxu0 0.0
    %2667 = vmatprep.subr.mxu0 0.0
    %2668 = vmatpush1.msra.mxu0 0.0
    %2669 = vmatprep.subr.mxu0 0.0
    %2670 = vmatpush1.msra.mxu0 0.0
    %2671 = vmatprep.subr.mxu0 0.0
    %2672 = vmatpush1.msra.mxu0 0.0
    %2673 = vmatprep.subr.mxu0 0.0
    %2674 = vmatpush1.msra.mxu0 0.0
    %2675 = vmatprep.subr.mxu0 0.0
    %2676 = vmatpush1.msra.mxu0 0.0
    %2677 = vmatprep.subr.mxu0 0.0
    %2678 = vmatpush1.msra.mxu0 0.0
    %2679 = vmatprep.subr.mxu0 0.0
    %2680 = vmatpush1.msra.mxu0 0.0
    %2681 = vmatprep.subr.mxu0 0.0
    %2682 = vmatpush1.msra.mxu0 0.0
    %2683 = vmatprep.subr.mxu0 0.0
    %2684 = vmatpush1.msra.mxu0 0.0
    %2685 = vmatprep.subr.mxu0 0.0
    %2686 = vmatpush1.msra.mxu0 0.0
    %2687 = vmatprep.subr.mxu0 0.0
    %2688 = vmatpush1.msra.mxu0 0.0
    %2689 = vmatprep.subr.mxu0 0.0
    %2690 = vmatpush1.msra.mxu0 0.0
    %2691 = vmatprep.subr.mxu0 0.0
    %2692 = vmatpush1.msra.mxu0 0.0
    %2693 = vmatprep.subr.mxu0 0.0
    %2694 = vmatpush1.msra.mxu0 0.0
    %2695 = vmatprep.subr.mxu0 0.0
    %2696 = vmatpush1.msra.mxu0 0.0
    %2697 = vmatprep.subr.mxu0 0.0
    %2698 = vmatpush1.msra.mxu0 0.0
    %2699 = vmatprep.subr.mxu0 0.0
    %2700 = vmatpush1.msra.mxu0 0.0
    %2701 = vmatprep.subr.mxu0 0.0
    %2702 = vmatpush1.msra.mxu0 0.0
    %2703 = vmatprep.subr.mxu0 0.0
    %2704 = vmatpush1.msra.mxu0 0.0
    %2705 = vmatprep.subr.mxu0 0.0
    %2706 = vmatpush1.msra.mxu0 0.0
    %2707 = vmatprep.subr.mxu0 0.0
    %2708 = vmatpush1.msra.mxu0 0.0
    %2709 = vmatprep.subr.mxu0 0.0
    %2710 = vmatpush1.msra.mxu0 0.0
    %2711 = vmatprep.subr.mxu0 0.0
    %2712 = vmatpush1.msra.mxu0 0.0
    %2713 = vmatprep.subr.mxu0 0.0
    %2714 = vmatpush1.msra.mxu0 0.0
    %2715 = vmatprep.mubr.f32.mxu0 0.0
    %v2716 = vand.u32 %v2562, 4294901760
    %2717 = vmatmul.mubr.f32.gmra.mrb[0].mxu0 %v2716
    %v2718 = vpop.f32.mrb[0].mxu0
    %v2719 = vadd.f32 %v2638, %v2718
    %v2720 = vpop.f32.mrb[0].mxu0
    %2721 = vdwg.mxu0
    %2722 = vmatprep.subr.mxu0 0.0
    %v2723 = vand.u32 %v2027, 4294901760
    %v2724 = vsub.f32 %v2027, %v2723
    %2725 = vmatpush1.msra.mxu0 %v2724
    %2726 = vmatprep.subr.mxu0 0.0
    %v2727 = vand.u32 %v2028, 4294901760
    %v2728 = vsub.f32 %v2028, %v2727
    %2729 = vmatpush1.msra.mxu0 %v2728
    %2730 = vmatprep.subr.mxu0 0.0
    %2731 = vmatpush1.msra.mxu0 0.0
    %2732 = vmatprep.subr.mxu0 0.0
    %2733 = vmatpush1.msra.mxu0 0.0
    %2734 = vmatprep.subr.mxu0 0.0
    %2735 = vmatpush1.msra.mxu0 0.0
    %2736 = vmatprep.subr.mxu0 0.0
    %2737 = vmatpush1.msra.mxu0 0.0
    %2738 = vmatprep.subr.mxu0 0.0
    %2739 = vmatpush1.msra.mxu0 0.0
    %2740 = vmatprep.subr.mxu0 0.0
    %2741 = vmatpush1.msra.mxu0 0.0
    %2742 = vmatprep.subr.mxu0 0.0
    %2743 = vmatpush1.msra.mxu0 0.0
    %2744 = vmatprep.subr.mxu0 0.0
    %2745 = vmatpush1.msra.mxu0 0.0
    %2746 = vmatprep.subr.mxu0 0.0
    %2747 = vmatpush1.msra.mxu0 0.0
    %2748 = vmatprep.subr.mxu0 0.0
    %2749 = vmatpush1.msra.mxu0 0.0
    %2750 = vmatprep.subr.mxu0 0.0
    %2751 = vmatpush1.msra.mxu0 0.0
    %2752 = vmatprep.subr.mxu0 0.0
    %2753 = vmatpush1.msra.mxu0 0.0
    %2754 = vmatprep.subr.mxu0 0.0
    %2755 = vmatpush1.msra.mxu0 0.0
    %2756 = vmatprep.subr.mxu0 0.0
    %2757 = vmatpush1.msra.mxu0 0.0
    %2758 = vmatprep.subr.mxu0 0.0
    %2759 = vmatpush1.msra.mxu0 0.0
    %2760 = vmatprep.subr.mxu0 0.0
    %2761 = vmatpush1.msra.mxu0 0.0
    %2762 = vmatprep.subr.mxu0 0.0
    %2763 = vmatpush1.msra.mxu0 0.0
    %2764 = vmatprep.subr.mxu0 0.0
    %2765 = vmatpush1.msra.mxu0 0.0
    %2766 = vmatprep.subr.mxu0 0.0
    %2767 = vmatpush1.msra.mxu0 0.0
    %2768 = vmatprep.subr.mxu0 0.0
    %2769 = vmatpush1.msra.mxu0 0.0
    %2770 = vmatprep.subr.mxu0 0.0
    %2771 = vmatpush1.msra.mxu0 0.0
    %2772 = vmatprep.subr.mxu0 0.0
    %2773 = vmatpush1.msra.mxu0 0.0
    %2774 = vmatprep.subr.mxu0 0.0
    %2775 = vmatpush1.msra.mxu0 0.0
    %2776 = vmatprep.subr.mxu0 0.0
    %2777 = vmatpush1.msra.mxu0 0.0
    %2778 = vmatprep.subr.mxu0 0.0
    %2779 = vmatpush1.msra.mxu0 0.0
    %2780 = vmatprep.subr.mxu0 0.0
    %2781 = vmatpush1.msra.mxu0 0.0
    %2782 = vmatprep.subr.mxu0 0.0
    %2783 = vmatpush1.msra.mxu0 0.0
    %2784 = vmatprep.subr.mxu0 0.0
    %2785 = vmatpush1.msra.mxu0 0.0
    %2786 = vmatprep.subr.mxu0 0.0
    %2787 = vmatpush1.msra.mxu0 0.0
    %2788 = vmatprep.subr.mxu0 0.0
    %2789 = vmatpush1.msra.mxu0 0.0
    %2790 = vmatprep.mubr.f32.mxu0 0.0
    %v2791 = vand.u32 %v2562, 4294901760
    %v2792 = vsub.f32 %v2562, %v2791
    %2793 = vmatmul.mubr.f32.gmra.mrb[0].mxu0 %v2792
    %v2794 = vpop.f32.mrb[0].mxu0
    %v2795 = vadd.f32 %v2719, %v2794
    %v2796 = vpop.f32.mrb[0].mxu0
    %2797 = vdwg.mxu0
    %2798 = vmatprep.subr.mxu0 0.0
    %v2799 = vand.u32 %v2027, 4294901760
    %2800 = vmatpush1.msra.mxu0 %v2799
    %2801 = vmatprep.subr.mxu0 0.0
    %v2802 = vand.u32 %v2028, 4294901760
    %2803 = vmatpush1.msra.mxu0 %v2802
    %2804 = vmatprep.subr.mxu0 0.0
    %2805 = vmatpush1.msra.mxu0 0.0
    %2806 = vmatprep.subr.mxu0 0.0
    %2807 = vmatpush1.msra.mxu0 0.0
    %2808 = vmatprep.subr.mxu0 0.0
    %2809 = vmatpush1.msra.mxu0 0.0
    %2810 = vmatprep.subr.mxu0 0.0
    %2811 = vmatpush1.msra.mxu0 0.0
    %2812 = vmatprep.subr.mxu0 0.0
    %2813 = vmatpush1.msra.mxu0 0.0
    %2814 = vmatprep.subr.mxu0 0.0
    %2815 = vmatpush1.msra.mxu0 0.0
    %2816 = vmatprep.subr.mxu0 0.0
    %2817 = vmatpush1.msra.mxu0 0.0
    %2818 = vmatprep.subr.mxu0 0.0
    %2819 = vmatpush1.msra.mxu0 0.0
    %2820 = vmatprep.subr.mxu0 0.0
    %2821 = vmatpush1.msra.mxu0 0.0
    %2822 = vmatprep.subr.mxu0 0.0
    %2823 = vmatpush1.msra.mxu0 0.0
    %2824 = vmatprep.subr.mxu0 0.0
    %2825 = vmatpush1.msra.mxu0 0.0
    %2826 = vmatprep.subr.mxu0 0.0
    %2827 = vmatpush1.msra.mxu0 0.0
    %2828 = vmatprep.subr.mxu0 0.0
    %2829 = vmatpush1.msra.mxu0 0.0
    %2830 = vmatprep.subr.mxu0 0.0
    %2831 = vmatpush1.msra.mxu0 0.0
    %2832 = vmatprep.subr.mxu0 0.0
    %2833 = vmatpush1.msra.mxu0 0.0
    %2834 = vmatprep.subr.mxu0 0.0
    %2835 = vmatpush1.msra.mxu0 0.0
    %2836 = vmatprep.subr.mxu0 0.0
    %2837 = vmatpush1.msra.mxu0 0.0
    %2838 = vmatprep.subr.mxu0 0.0
    %2839 = vmatpush1.msra.mxu0 0.0
    %2840 = vmatprep.subr.mxu0 0.0
    %2841 = vmatpush1.msra.mxu0 0.0
    %2842 = vmatprep.subr.mxu0 0.0
    %2843 = vmatpush1.msra.mxu0 0.0
    %2844 = vmatprep.subr.mxu0 0.0
    %2845 = vmatpush1.msra.mxu0 0.0
    %2846 = vmatprep.subr.mxu0 0.0
    %2847 = vmatpush1.msra.mxu0 0.0
    %2848 = vmatprep.subr.mxu0 0.0
    %2849 = vmatpush1.msra.mxu0 0.0
    %2850 = vmatprep.subr.mxu0 0.0
    %2851 = vmatpush1.msra.mxu0 0.0
    %2852 = vmatprep.subr.mxu0 0.0
    %2853 = vmatpush1.msra.mxu0 0.0
    %2854 = vmatprep.subr.mxu0 0.0
    %2855 = vmatpush1.msra.mxu0 0.0
    %2856 = vmatprep.subr.mxu0 0.0
    %2857 = vmatpush1.msra.mxu0 0.0
    %2858 = vmatprep.subr.mxu0 0.0
    %2859 = vmatpush1.msra.mxu0 0.0
    %2860 = vmatprep.subr.mxu0 0.0
    %2861 = vmatpush1.msra.mxu0 0.0
    %2862 = vmatprep.subr.mxu0 0.0
    %2863 = vmatpush1.msra.mxu0 0.0
    %2864 = vmatprep.mubr.f32.mxu0 0.0
    %v2865 = vand.u32 %v2562, 4294901760
    %v2866 = vsub.f32 %v2562, %v2865
    %v2867 = vand.u32 %v2866, 4294901760
    %2868 = vmatmul.mubr.f32.gmra.mrb[0].mxu0 %v2867
    %v2869 = vpop.f32.mrb[0].mxu0
    %v2870 = vadd.f32 %v2795, %v2869
    %v2871 = vpop.f32.mrb[0].mxu0
    %2872 = vdwg.mxu0
    %2873 = vmatprep.subr.mxu0 0.0
    %v2874 = vand.u32 %v2027, 4294901760
    %v2875 = vsub.f32 %v2027, %v2874
    %v2876 = vand.u32 %v2875, 4294901760
    %2877 = vmatpush1.msra.mxu0 %v2876
    %2878 = vmatprep.subr.mxu0 0.0
    %v2879 = vand.u32 %v2028, 4294901760
    %v2880 = vsub.f32 %v2028, %v2879
    %v2881 = vand.u32 %v2880, 4294901760
    %2882 = vmatpush1.msra.mxu0 %v2881
    %2883 = vmatprep.subr.mxu0 0.0
    %2884 = vmatpush1.msra.mxu0 0.0
    %2885 = vmatprep.subr.mxu0 0.0
    %2886 = vmatpush1.msra.mxu0 0.0
    %2887 = vmatprep.subr.mxu0 0.0
    %2888 = vmatpush1.msra.mxu0 0.0
    %2889 = vmatprep.subr.mxu0 0.0
    %2890 = vmatpush1.msra.mxu0 0.0
    %2891 = vmatprep.subr.mxu0 0.0
    %2892 = vmatpush1.msra.mxu0 0.0
    %2893 = vmatprep.subr.mxu0 0.0
    %2894 = vmatpush1.msra.mxu0 0.0
    %2895 = vmatprep.subr.mxu0 0.0
    %2896 = vmatpush1.msra.mxu0 0.0
    %2897 = vmatprep.subr.mxu0 0.0
    %2898 = vmatpush1.msra.mxu0 0.0
    %2899 = vmatprep.subr.mxu0 0.0
    %2900 = vmatpush1.msra.mxu0 0.0
    %2901 = vmatprep.subr.mxu0 0.0
    %2902 = vmatpush1.msra.mxu0 0.0
    %2903 = vmatprep.subr.mxu0 0.0
    %2904 = vmatpush1.msra.mxu0 0.0
    %2905 = vmatprep.subr.mxu0 0.0
    %2906 = vmatpush1.msra.mxu0 0.0
    %2907 = vmatprep.subr.mxu0 0.0
    %2908 = vmatpush1.msra.mxu0 0.0
    %2909 = vmatprep.subr.mxu0 0.0
    %2910 = vmatpush1.msra.mxu0 0.0
    %2911 = vmatprep.subr.mxu0 0.0
    %2912 = vmatpush1.msra.mxu0 0.0
    %2913 = vmatprep.subr.mxu0 0.0
    %2914 = vmatpush1.msra.mxu0 0.0
    %2915 = vmatprep.subr.mxu0 0.0
    %2916 = vmatpush1.msra.mxu0 0.0
    %2917 = vmatprep.subr.mxu0 0.0
    %2918 = vmatpush1.msra.mxu0 0.0
    %2919 = vmatprep.subr.mxu0 0.0
    %2920 = vmatpush1.msra.mxu0 0.0
    %2921 = vmatprep.subr.mxu0 0.0
    %2922 = vmatpush1.msra.mxu0 0.0
    %2923 = vmatprep.subr.mxu0 0.0
    %2924 = vmatpush1.msra.mxu0 0.0
    %2925 = vmatprep.subr.mxu0 0.0
    %2926 = vmatpush1.msra.mxu0 0.0
    %2927 = vmatprep.subr.mxu0 0.0
    %2928 = vmatpush1.msra.mxu0 0.0
    %2929 = vmatprep.subr.mxu0 0.0
    %2930 = vmatpush1.msra.mxu0 0.0
    %2931 = vmatprep.subr.mxu0 0.0
    %2932 = vmatpush1.msra.mxu0 0.0
    %2933 = vmatprep.subr.mxu0 0.0
    %2934 = vmatpush1.msra.mxu0 0.0
    %2935 = vmatprep.subr.mxu0 0.0
    %2936 = vmatpush1.msra.mxu0 0.0
    %2937 = vmatprep.subr.mxu0 0.0
    %2938 = vmatpush1.msra.mxu0 0.0
    %2939 = vmatprep.subr.mxu0 0.0
    %2940 = vmatpush1.msra.mxu0 0.0
    %2941 = vmatprep.subr.mxu0 0.0
    %2942 = vmatpush1.msra.mxu0 0.0
    %2943 = vmatprep.mubr.f32.mxu0 0.0
    %v2944 = vand.u32 %v2562, 4294901760
    %2945 = vmatmul.mubr.f32.gmra.mrb[0].mxu0 %v2944
    %v2946 = vpop.f32.mrb[0].mxu0
    %v2947 = vadd.f32 %v2870, %v2946
    %v2948 = vpop.f32.mrb[0].mxu0
    %2949 = vdwg.mxu0
    %2950 = vmatprep.subr.mxu0 0.0
    %v2951 = vand.u32 %v2027, 4294901760
    %2952 = vmatpush1.msra.mxu0 %v2951
    %2953 = vmatprep.subr.mxu0 0.0
    %v2954 = vand.u32 %v2028, 4294901760
    %2955 = vmatpush1.msra.mxu0 %v2954
    %2956 = vmatprep.subr.mxu0 0.0
    %2957 = vmatpush1.msra.mxu0 0.0
    %2958 = vmatprep.subr.mxu0 0.0
    %2959 = vmatpush1.msra.mxu0 0.0
    %2960 = vmatprep.subr.mxu0 0.0
    %2961 = vmatpush1.msra.mxu0 0.0
    %2962 = vmatprep.subr.mxu0 0.0
    %2963 = vmatpush1.msra.mxu0 0.0
    %2964 = vmatprep.subr.mxu0 0.0
    %2965 = vmatpush1.msra.mxu0 0.0
    %2966 = vmatprep.subr.mxu0 0.0
    %2967 = vmatpush1.msra.mxu0 0.0
    %2968 = vmatprep.subr.mxu0 0.0
    %2969 = vmatpush1.msra.mxu0 0.0
    %2970 = vmatprep.subr.mxu0 0.0
    %2971 = vmatpush1.msra.mxu0 0.0
    %2972 = vmatprep.subr.mxu0 0.0
    %2973 = vmatpush1.msra.mxu0 0.0
    %2974 = vmatprep.subr.mxu0 0.0
    %2975 = vmatpush1.msra.mxu0 0.0
    %2976 = vmatprep.subr.mxu0 0.0
    %2977 = vmatpush1.msra.mxu0 0.0
    %2978 = vmatprep.subr.mxu0 0.0
    %2979 = vmatpush1.msra.mxu0 0.0
    %2980 = vmatprep.subr.mxu0 0.0
    %2981 = vmatpush1.msra.mxu0 0.0
    %2982 = vmatprep.subr.mxu0 0.0
    %2983 = vmatpush1.msra.mxu0 0.0
    %2984 = vmatprep.subr.mxu0 0.0
    %2985 = vmatpush1.msra.mxu0 0.0
    %2986 = vmatprep.subr.mxu0 0.0
    %2987 = vmatpush1.msra.mxu0 0.0
    %2988 = vmatprep.subr.mxu0 0.0
    %2989 = vmatpush1.msra.mxu0 0.0
    %2990 = vmatprep.subr.mxu0 0.0
    %2991 = vmatpush1.msra.mxu0 0.0
    %2992 = vmatprep.subr.mxu0 0.0
    %2993 = vmatpush1.msra.mxu0 0.0
    %2994 = vmatprep.subr.mxu0 0.0
    %2995 = vmatpush1.msra.mxu0 0.0
    %2996 = vmatprep.subr.mxu0 0.0
    %2997 = vmatpush1.msra.mxu0 0.0
    %2998 = vmatprep.subr.mxu0 0.0
    %2999 = vmatpush1.msra.mxu0 0.0
    %3000 = vmatprep.subr.mxu0 0.0
    %3001 = vmatpush1.msra.mxu0 0.0
    %3002 = vmatprep.subr.mxu0 0.0
    %3003 = vmatpush1.msra.mxu0 0.0
    %3004 = vmatprep.subr.mxu0 0.0
    %3005 = vmatpush1.msra.mxu0 0.0
    %3006 = vmatprep.subr.mxu0 0.0
    %3007 = vmatpush1.msra.mxu0 0.0
    %3008 = vmatprep.subr.mxu0 0.0
    %3009 = vmatpush1.msra.mxu0 0.0
    %3010 = vmatprep.subr.mxu0 0.0
    %3011 = vmatpush1.msra.mxu0 0.0
    %3012 = vmatprep.subr.mxu0 0.0
    %3013 = vmatpush1.msra.mxu0 0.0
    %3014 = vmatprep.subr.mxu0 0.0
    %3015 = vmatpush1.msra.mxu0 0.0
    %3016 = vmatprep.mubr.f32.mxu0 0.0
    %v3017 = vand.u32 %v2562, 4294901760
    %3018 = vmatmul.mubr.f32.gmra.mrb[0].mxu0 %v3017
    %v3019 = vpop.f32.mrb[0].mxu0
    %v3020 = vadd.f32 %v2947, %v3019
    %v3021 = vpop.f32.mrb[0].mxu0
    %3022 = vdwg.mxu0
    %v3024 = vrot.slane %v3020, 6
    %v3026 = vadd.f32 %v2012, %v3024
    %v3027 = vrot.slane %v3020, 4
    %v3029 = vadd.f32 %v2018, %v3027
    %v3031 = vrot.slane %v3026, 2
    %v3034 = vrot.slane %v3029, 4
    %3035 = vrot.lane.b32.xlu0 %v3034, 64
    %v3036 = vpop.permute.xlu0 %3035
    %v3038 = vsel %vm2501, %v3031, %v3036
    %v3039 = vxor.u32 %v3038, 2147483648
    %v3040 = vmul.f32 %v3039, 1.442695
    %v3041 = vpow.pop %v3040
    %v3042 = vadd.f32 %v3041, 1.0
    %v3043 = vrcp.pop %v3042
    %v3044 = vmul.f32 1.0, %v3043
    %v3045 = vtanh.pop %v3038
    %v3046 = vmul.f32 %v3044, %v2520
    %3048 = vrot.lane.b32.xlu0 %v3045, 96
    %v3049 = vpop.permute.xlu0 %3048
    %v3051 = vmul.f32 %v3044, %v3049
    %3053 = vrot.lane.b32.xlu0 %v3051, 16
    %v3054 = vpop.permute.xlu0 %3053
    %v3056 = vadd.f32 %v3046, %v3054
    %v3057 = vtanh.pop %v3056
    %3059 = vrot.lane.b32.xlu0 %v3057, 32
    %v3060 = vpop.permute.xlu0 %3059
    %v3062 = vmul.f32 %v3044, %v3060
    %v3065 = vunpack.c.l.s4 1983009808
    %v3066 = vunpack.c.0.s8 %v3065
    %v3067 = vlaneseq
    %v3068 = vshrl.u32 %v3067, 7
    %v3069 = vsub.s32 %v3066, %v3068
    %v3070 = vrot.slane %v3062, %v3069
    %3071 = vrot.lane.b32.xlu0 %v3070, 16
    %v3072 = vpop.permute.xlu0 %3071
    %vm3074 = vcmask 647680
    %3075 = vst.msk [vmem:[#allocation3] sm:$0x1] %vm3074, %v3072
    %v3076 = vcombine.high %v3070, %v3070
    %vm3078 = vcmask 516480
    %3079 = vst.msk [vmem:[#allocation3 + $0x3] sm:$0x1] %vm3078, %v3076
    %v3080 = vrot.slane %v3070, 7
    %v3081 = vrot.slane %v3080, 2
    %3082 = vrot.lane.b32.xlu0 %v3081, 48
    %v3083 = vpop.permute.xlu0 %3082
    %vm3085 = vcmask 910080
    %3086 = vst.msk [vmem:[#allocation3] sm:$0x1] %vm3085, %v3083
    %v3087 = vrot.slane %v3076, 7
    %v3088 = vrot.slane %v3087, 2
    %3089 = vrot.lane.b32.xlu0 %v3088, 32
    %v3090 = vpop.permute.xlu0 %3089
    %vm3092 = vcmask 778880
    %3093 = vst.msk [vmem:[#allocation3 + $0x3] sm:$0x1] %vm3092, %v3090
    %3094 = vrot.lane.b32.xlu0 %v3062, 80
    %v3095 = vpop.permute.xlu0 %3094
    %v3096 = vsel %vm1472, %v3095, 0
    %3098 = vmatprep.subr.mxu0 0.0
    %v3099 = vand.u32 %v2027, 4294901760
    %3100 = vmatpush1.msra.mxu0 %v3099
    %3101 = vmatprep.subr.mxu0 0.0
    %v3102 = vand.u32 %v2028, 4294901760
    %3103 = vmatpush1.msra.mxu0 %v3102
    %3104 = vmatprep.subr.mxu0 0.0
    %3105 = vmatpush1.msra.mxu0 0.0
    %3106 = vmatprep.subr.mxu0 0.0
    %3107 = vmatpush1.msra.mxu0 0.0
    %3108 = vmatprep.subr.mxu0 0.0
    %3109 = vmatpush1.msra.mxu0 0.0
    %3110 = vmatprep.subr.mxu0 0.0
    %3111 = vmatpush1.msra.mxu0 0.0
    %3112 = vmatprep.subr.mxu0 0.0
    %3113 = vmatpush1.msra.mxu0 0.0
    %3114 = vmatprep.subr.mxu0 0.0
    %3115 = vmatpush1.msra.mxu0 0.0
    %3116 = vmatprep.subr.mxu0 0.0
    %3117 = vmatpush1.msra.mxu0 0.0
    %3118 = vmatprep.subr.mxu0 0.0
    %3119 = vmatpush1.msra.mxu0 0.0
    %3120 = vmatprep.subr.mxu0 0.0
    %3121 = vmatpush1.msra.mxu0 0.0
    %3122 = vmatprep.subr.mxu0 0.0
    %3123 = vmatpush1.msra.mxu0 0.0
    %3124 = vmatprep.subr.mxu0 0.0
    %3125 = vmatpush1.msra.mxu0 0.0
    %3126 = vmatprep.subr.mxu0 0.0
    %3127 = vmatpush1.msra.mxu0 0.0
    %3128 = vmatprep.subr.mxu0 0.0
    %3129 = vmatpush1.msra.mxu0 0.0
    %3130 = vmatprep.subr.mxu0 0.0
    %3131 = vmatpush1.msra.mxu0 0.0
    %3132 = vmatprep.subr.mxu0 0.0
    %3133 = vmatpush1.msra.mxu0 0.0
    %3134 = vmatprep.subr.mxu0 0.0
    %3135 = vmatpush1.msra.mxu0 0.0
    %3136 = vmatprep.subr.mxu0 0.0
    %3137 = vmatpush1.msra.mxu0 0.0
    %3138 = vmatprep.subr.mxu0 0.0
    %3139 = vmatpush1.msra.mxu0 0.0
    %3140 = vmatprep.subr.mxu0 0.0
    %3141 = vmatpush1.msra.mxu0 0.0
    %3142 = vmatprep.subr.mxu0 0.0
    %3143 = vmatpush1.msra.mxu0 0.0
    %3144 = vmatprep.subr.mxu0 0.0
    %3145 = vmatpush1.msra.mxu0 0.0
    %3146 = vmatprep.subr.mxu0 0.0
    %3147 = vmatpush1.msra.mxu0 0.0
    %3148 = vmatprep.subr.mxu0 0.0
    %3149 = vmatpush1.msra.mxu0 0.0
    %3150 = vmatprep.subr.mxu0 0.0
    %3151 = vmatpush1.msra.mxu0 0.0
    %3152 = vmatprep.subr.mxu0 0.0
    %3153 = vmatpush1.msra.mxu0 0.0
    %3154 = vmatprep.subr.mxu0 0.0
    %3155 = vmatpush1.msra.mxu0 0.0
    %3156 = vmatprep.subr.mxu0 0.0
    %3157 = vmatpush1.msra.mxu0 0.0
    %3158 = vmatprep.subr.mxu0 0.0
    %3159 = vmatpush1.msra.mxu0 0.0
    %3160 = vmatprep.subr.mxu0 0.0
    %3161 = vmatpush1.msra.mxu0 0.0
    %3162 = vmatprep.subr.mxu0 0.0
    %3163 = vmatpush1.msra.mxu0 0.0
    %3164 = vmatprep.mubr.f32.mxu0 0.0
    %v3165 = vand.u32 %v3096, 4294901760
    %v3166 = vsub.f32 %v3096, %v3165
    %v3167 = vand.u32 %v3166, 4294901760
    %v3168 = vsub.f32 %v3166, %v3167
    %v3169 = vand.u32 %v3168, 4294901760
    %3170 = vmatmul.mubr.f32.gmra.mrb[0].mxu0 %v3169
    %v3171 = vpop.f32.mrb[0].mxu0
    %v3172 = vadd.f32 0.0, %v3171
    %v3173 = vpop.f32.mrb[0].mxu0
    %3174 = vdwg.mxu0
    %3175 = vmatprep.subr.mxu0 0.0
    %v3176 = vand.u32 %v2027, 4294901760
    %v3177 = vsub.f32 %v2027, %v3176
    %v3178 = vand.u32 %v3177, 4294901760
    %v3179 = vsub.f32 %v3177, %v3178
    %v3180 = vand.u32 %v3179, 4294901760
    %3181 = vmatpush1.msra.mxu0 %v3180
    %3182 = vmatprep.subr.mxu0 0.0
    %v3183 = vand.u32 %v2028, 4294901760
    %v3184 = vsub.f32 %v2028, %v3183
    %v3185 = vand.u32 %v3184, 4294901760
    %v3186 = vsub.f32 %v3184, %v3185
    %v3187 = vand.u32 %v3186, 4294901760
    %3188 = vmatpush1.msra.mxu0 %v3187
    %3189 = vmatprep.subr.mxu0 0.0
    %3190 = vmatpush1.msra.mxu0 0.0
    %3191 = vmatprep.subr.mxu0 0.0
    %3192 = vmatpush1.msra.mxu0 0.0
    %3193 = vmatprep.subr.mxu0 0.0
    %3194 = vmatpush1.msra.mxu0 0.0
    %3195 = vmatprep.subr.mxu0 0.0
    %3196 = vmatpush1.msra.mxu0 0.0
    %3197 = vmatprep.subr.mxu0 0.0
    %3198 = vmatpush1.msra.mxu0 0.0
    %3199 = vmatprep.subr.mxu0 0.0
    %3200 = vmatpush1.msra.mxu0 0.0
    %3201 = vmatprep.subr.mxu0 0.0
    %3202 = vmatpush1.msra.mxu0 0.0
    %3203 = vmatprep.subr.mxu0 0.0
    %3204 = vmatpush1.msra.mxu0 0.0
    %3205 = vmatprep.subr.mxu0 0.0
    %3206 = vmatpush1.msra.mxu0 0.0
    %3207 = vmatprep.subr.mxu0 0.0
    %3208 = vmatpush1.msra.mxu0 0.0
    %3209 = vmatprep.subr.mxu0 0.0
    %3210 = vmatpush1.msra.mxu0 0.0
    %3211 = vmatprep.subr.mxu0 0.0
    %3212 = vmatpush1.msra.mxu0 0.0
    %3213 = vmatprep.subr.mxu0 0.0
    %3214 = vmatpush1.msra.mxu0 0.0
    %3215 = vmatprep.subr.mxu0 0.0
    %3216 = vmatpush1.msra.mxu0 0.0
    %3217 = vmatprep.subr.mxu0 0.0
    %3218 = vmatpush1.msra.mxu0 0.0
    %3219 = vmatprep.subr.mxu0 0.0
    %3220 = vmatpush1.msra.mxu0 0.0
    %3221 = vmatprep.subr.mxu0 0.0
    %3222 = vmatpush1.msra.mxu0 0.0
    %3223 = vmatprep.subr.mxu0 0.0
    %3224 = vmatpush1.msra.mxu0 0.0
    %3225 = vmatprep.subr.mxu0 0.0
    %3226 = vmatpush1.msra.mxu0 0.0
    %3227 = vmatprep.subr.mxu0 0.0
    %3228 = vmatpush1.msra.mxu0 0.0
    %3229 = vmatprep.subr.mxu0 0.0
    %3230 = vmatpush1.msra.mxu0 0.0
    %3231 = vmatprep.subr.mxu0 0.0
    %3232 = vmatpush1.msra.mxu0 0.0
    %3233 = vmatprep.subr.mxu0 0.0
    %3234 = vmatpush1.msra.mxu0 0.0
    %3235 = vmatprep.subr.mxu0 0.0
    %3236 = vmatpush1.msra.mxu0 0.0
    %3237 = vmatprep.subr.mxu0 0.0
    %3238 = vmatpush1.msra.mxu0 0.0
    %3239 = vmatprep.subr.mxu0 0.0
    %3240 = vmatpush1.msra.mxu0 0.0
    %3241 = vmatprep.subr.mxu0 0.0
    %3242 = vmatpush1.msra.mxu0 0.0
    %3243 = vmatprep.subr.mxu0 0.0
    %3244 = vmatpush1.msra.mxu0 0.0
    %3245 = vmatprep.subr.mxu0 0.0
    %3246 = vmatpush1.msra.mxu0 0.0
    %3247 = vmatprep.subr.mxu0 0.0
    %3248 = vmatpush1.msra.mxu0 0.0
    %3249 = vmatprep.mubr.f32.mxu0 0.0
    %v3250 = vand.u32 %v3096, 4294901760
    %3251 = vmatmul.mubr.f32.gmra.mrb[0].mxu0 %v3250
    %v3252 = vpop.f32.mrb[0].mxu0
    %v3253 = vadd.f32 %v3172, %v3252
    %v3254 = vpop.f32.mrb[0].mxu0
    %3255 = vdwg.mxu0
    %3256 = vmatprep.subr.mxu0 0.0
    %v3257 = vand.u32 %v2027, 4294901760
    %v3258 = vsub.f32 %v2027, %v3257
    %3259 = vmatpush1.msra.mxu0 %v3258
    %3260 = vmatprep.subr.mxu0 0.0
    %v3261 = vand.u32 %v2028, 4294901760
    %v3262 = vsub.f32 %v2028, %v3261
    %3263 = vmatpush1.msra.mxu0 %v3262
    %3264 = vmatprep.subr.mxu0 0.0
    %3265 = vmatpush1.msra.mxu0 0.0
    %3266 = vmatprep.subr.mxu0 0.0
    %3267 = vmatpush1.msra.mxu0 0.0
    %3268 = vmatprep.subr.mxu0 0.0
    %3269 = vmatpush1.msra.mxu0 0.0
    %3270 = vmatprep.subr.mxu0 0.0
    %3271 = vmatpush1.msra.mxu0 0.0
    %3272 = vmatprep.subr.mxu0 0.0
    %3273 = vmatpush1.msra.mxu0 0.0
    %3274 = vmatprep.subr.mxu0 0.0
    %3275 = vmatpush1.msra.mxu0 0.0
    %3276 = vmatprep.subr.mxu0 0.0
    %3277 = vmatpush1.msra.mxu0 0.0
    %3278 = vmatprep.subr.mxu0 0.0
    %3279 = vmatpush1.msra.mxu0 0.0
    %3280 = vmatprep.subr.mxu0 0.0
    %3281 = vmatpush1.msra.mxu0 0.0
    %3282 = vmatprep.subr.mxu0 0.0
    %3283 = vmatpush1.msra.mxu0 0.0
    %3284 = vmatprep.subr.mxu0 0.0
    %3285 = vmatpush1.msra.mxu0 0.0
    %3286 = vmatprep.subr.mxu0 0.0
    %3287 = vmatpush1.msra.mxu0 0.0
    %3288 = vmatprep.subr.mxu0 0.0
    %3289 = vmatpush1.msra.mxu0 0.0
    %3290 = vmatprep.subr.mxu0 0.0
    %3291 = vmatpush1.msra.mxu0 0.0
    %3292 = vmatprep.subr.mxu0 0.0
    %3293 = vmatpush1.msra.mxu0 0.0
    %3294 = vmatprep.subr.mxu0 0.0
    %3295 = vmatpush1.msra.mxu0 0.0
    %3296 = vmatprep.subr.mxu0 0.0
    %3297 = vmatpush1.msra.mxu0 0.0
    %3298 = vmatprep.subr.mxu0 0.0
    %3299 = vmatpush1.msra.mxu0 0.0
    %3300 = vmatprep.subr.mxu0 0.0
    %3301 = vmatpush1.msra.mxu0 0.0
    %3302 = vmatprep.subr.mxu0 0.0
    %3303 = vmatpush1.msra.mxu0 0.0
    %3304 = vmatprep.subr.mxu0 0.0
    %3305 = vmatpush1.msra.mxu0 0.0
    %3306 = vmatprep.subr.mxu0 0.0
    %3307 = vmatpush1.msra.mxu0 0.0
    %3308 = vmatprep.subr.mxu0 0.0
    %3309 = vmatpush1.msra.mxu0 0.0
    %3310 = vmatprep.subr.mxu0 0.0
    %3311 = vmatpush1.msra.mxu0 0.0
    %3312 = vmatprep.subr.mxu0 0.0
    %3313 = vmatpush1.msra.mxu0 0.0
    %3314 = vmatprep.subr.mxu0 0.0
    %3315 = vmatpush1.msra.mxu0 0.0
    %3316 = vmatprep.subr.mxu0 0.0
    %3317 = vmatpush1.msra.mxu0 0.0
    %3318 = vmatprep.subr.mxu0 0.0
    %3319 = vmatpush1.msra.mxu0 0.0
    %3320 = vmatprep.subr.mxu0 0.0
    %3321 = vmatpush1.msra.mxu0 0.0
    %3322 = vmatprep.subr.mxu0 0.0
    %3323 = vmatpush1.msra.mxu0 0.0
    %3324 = vmatprep.mubr.f32.mxu0 0.0
    %v3325 = vand.u32 %v3096, 4294901760
    %v3326 = vsub.f32 %v3096, %v3325
    %3327 = vmatmul.mubr.f32.gmra.mrb[0].mxu0 %v3326
    %v3328 = vpop.f32.mrb[0].mxu0
    %v3329 = vadd.f32 %v3253, %v3328
    %v3330 = vpop.f32.mrb[0].mxu0
    %3331 = vdwg.mxu0
    %3332 = vmatprep.subr.mxu0 0.0
    %v3333 = vand.u32 %v2027, 4294901760
    %3334 = vmatpush1.msra.mxu0 %v3333
    %3335 = vmatprep.subr.mxu0 0.0
    %v3336 = vand.u32 %v2028, 4294901760
    %3337 = vmatpush1.msra.mxu0 %v3336
    %3338 = vmatprep.subr.mxu0 0.0
    %3339 = vmatpush1.msra.mxu0 0.0
    %3340 = vmatprep.subr.mxu0 0.0
    %3341 = vmatpush1.msra.mxu0 0.0
    %3342 = vmatprep.subr.mxu0 0.0
    %3343 = vmatpush1.msra.mxu0 0.0
    %3344 = vmatprep.subr.mxu0 0.0
    %3345 = vmatpush1.msra.mxu0 0.0
    %3346 = vmatprep.subr.mxu0 0.0
    %3347 = vmatpush1.msra.mxu0 0.0
    %3348 = vmatprep.subr.mxu0 0.0
    %3349 = vmatpush1.msra.mxu0 0.0
    %3350 = vmatprep.subr.mxu0 0.0
    %3351 = vmatpush1.msra.mxu0 0.0
    %3352 = vmatprep.subr.mxu0 0.0
    %3353 = vmatpush1.msra.mxu0 0.0
    %3354 = vmatprep.subr.mxu0 0.0
    %3355 = vmatpush1.msra.mxu0 0.0
    %3356 = vmatprep.subr.mxu0 0.0
    %3357 = vmatpush1.msra.mxu0 0.0
    %3358 = vmatprep.subr.mxu0 0.0
    %3359 = vmatpush1.msra.mxu0 0.0
    %3360 = vmatprep.subr.mxu0 0.0
    %3361 = vmatpush1.msra.mxu0 0.0
    %3362 = vmatprep.subr.mxu0 0.0
    %3363 = vmatpush1.msra.mxu0 0.0
    %3364 = vmatprep.subr.mxu0 0.0
    %3365 = vmatpush1.msra.mxu0 0.0
    %3366 = vmatprep.subr.mxu0 0.0
    %3367 = vmatpush1.msra.mxu0 0.0
    %3368 = vmatprep.subr.mxu0 0.0
    %3369 = vmatpush1.msra.mxu0 0.0
    %3370 = vmatprep.subr.mxu0 0.0
    %3371 = vmatpush1.msra.mxu0 0.0
    %3372 = vmatprep.subr.mxu0 0.0
    %3373 = vmatpush1.msra.mxu0 0.0
    %3374 = vmatprep.subr.mxu0 0.0
    %3375 = vmatpush1.msra.mxu0 0.0
    %3376 = vmatprep.subr.mxu0 0.0
    %3377 = vmatpush1.msra.mxu0 0.0
    %3378 = vmatprep.subr.mxu0 0.0
    %3379 = vmatpush1.msra.mxu0 0.0
    %3380 = vmatprep.subr.mxu0 0.0
    %3381 = vmatpush1.msra.mxu0 0.0
    %3382 = vmatprep.subr.mxu0 0.0
    %3383 = vmatpush1.msra.mxu0 0.0
    %3384 = vmatprep.subr.mxu0 0.0
    %3385 = vmatpush1.msra.mxu0 0.0
    %3386 = vmatprep.subr.mxu0 0.0
    %3387 = vmatpush1.msra.mxu0 0.0
    %3388 = vmatprep.subr.mxu0 0.0
    %3389 = vmatpush1.msra.mxu0 0.0
    %3390 = vmatprep.subr.mxu0 0.0
    %3391 = vmatpush1.msra.mxu0 0.0
    %3392 = vmatprep.subr.mxu0 0.0
    %3393 = vmatpush1.msra.mxu0 0.0
    %3394 = vmatprep.subr.mxu0 0.0
    %3395 = vmatpush1.msra.mxu0 0.0
    %3396 = vmatprep.subr.mxu0 0.0
    %3397 = vmatpush1.msra.mxu0 0.0
    %3398 = vmatprep.mubr.f32.mxu0 0.0
    %v3399 = vand.u32 %v3096, 4294901760
    %v3400 = vsub.f32 %v3096, %v3399
    %v3401 = vand.u32 %v3400, 4294901760
    %3402 = vmatmul.mubr.f32.gmra.mrb[0].mxu0 %v3401
    %v3403 = vpop.f32.mrb[0].mxu0
    %v3404 = vadd.f32 %v3329, %v3403
    %v3405 = vpop.f32.mrb[0].mxu0
    %3406 = vdwg.mxu0
    %3407 = vmatprep.subr.mxu0 0.0
    %v3408 = vand.u32 %v2027, 4294901760
    %v3409 = vsub.f32 %v2027, %v3408
    %v3410 = vand.u32 %v3409, 4294901760
    %3411 = vmatpush1.msra.mxu0 %v3410
    %3412 = vmatprep.subr.mxu0 0.0
    %v3413 = vand.u32 %v2028, 4294901760
    %v3414 = vsub.f32 %v2028, %v3413
    %v3415 = vand.u32 %v3414, 4294901760
    %3416 = vmatpush1.msra.mxu0 %v3415
    %3417 = vmatprep.subr.mxu0 0.0
    %3418 = vmatpush1.msra.mxu0 0.0
    %3419 = vmatprep.subr.mxu0 0.0
    %3420 = vmatpush1.msra.mxu0 0.0
    %3421 = vmatprep.subr.mxu0 0.0
    %3422 = vmatpush1.msra.mxu0 0.0
    %3423 = vmatprep.subr.mxu0 0.0
    %3424 = vmatpush1.msra.mxu0 0.0
    %3425 = vmatprep.subr.mxu0 0.0
    %3426 = vmatpush1.msra.mxu0 0.0
    %3427 = vmatprep.subr.mxu0 0.0
    %3428 = vmatpush1.msra.mxu0 0.0
    %3429 = vmatprep.subr.mxu0 0.0
    %3430 = vmatpush1.msra.mxu0 0.0
    %3431 = vmatprep.subr.mxu0 0.0
    %3432 = vmatpush1.msra.mxu0 0.0
    %3433 = vmatprep.subr.mxu0 0.0
    %3434 = vmatpush1.msra.mxu0 0.0
    %3435 = vmatprep.subr.mxu0 0.0
    %3436 = vmatpush1.msra.mxu0 0.0
    %3437 = vmatprep.subr.mxu0 0.0
    %3438 = vmatpush1.msra.mxu0 0.0
    %3439 = vmatprep.subr.mxu0 0.0
    %3440 = vmatpush1.msra.mxu0 0.0
    %3441 = vmatprep.subr.mxu0 0.0
    %3442 = vmatpush1.msra.mxu0 0.0
    %3443 = vmatprep.subr.mxu0 0.0
    %3444 = vmatpush1.msra.mxu0 0.0
    %3445 = vmatprep.subr.mxu0 0.0
    %3446 = vmatpush1.msra.mxu0 0.0
    %3447 = vmatprep.subr.mxu0 0.0
    %3448 = vmatpush1.msra.mxu0 0.0
    %3449 = vmatprep.subr.mxu0 0.0
    %3450 = vmatpush1.msra.mxu0 0.0
    %3451 = vmatprep.subr.mxu0 0.0
    %3452 = vmatpush1.msra.mxu0 0.0
    %3453 = vmatprep.subr.mxu0 0.0
    %3454 = vmatpush1.msra.mxu0 0.0
    %3455 = vmatprep.subr.mxu0 0.0
    %3456 = vmatpush1.msra.mxu0 0.0
    %3457 = vmatprep.subr.mxu0 0.0
    %3458 = vmatpush1.msra.mxu0 0.0
    %3459 = vmatprep.subr.mxu0 0.0
    %3460 = vmatpush1.msra.mxu0 0.0
    %3461 = vmatprep.subr.mxu0 0.0
    %3462 = vmatpush1.msra.mxu0 0.0
    %3463 = vmatprep.subr.mxu0 0.0
    %3464 = vmatpush1.msra.mxu0 0.0
    %3465 = vmatprep.subr.mxu0 0.0
    %3466 = vmatpush1.msra.mxu0 0.0
    %3467 = vmatprep.subr.mxu0 0.0
    %3468 = vmatpush1.msra.mxu0 0.0
    %3469 = vmatprep.subr.mxu0 0.0
    %3470 = vmatpush1.msra.mxu0 0.0
    %3471 = vmatprep.subr.mxu0 0.0
    %3472 = vmatpush1.msra.mxu0 0.0
    %3473 = vmatprep.subr.mxu0 0.0
    %3474 = vmatpush1.msra.mxu0 0.0
    %3475 = vmatprep.subr.mxu0 0.0
    %3476 = vmatpush1.msra.mxu0 0.0
    %3477 = vmatprep.mubr.f32.mxu0 0.0
    %v3478 = vand.u32 %v3096, 4294901760
    %3479 = vmatmul.mubr.f32.gmra.mrb[0].mxu0 %v3478
    %v3480 = vpop.f32.mrb[0].mxu0
    %v3481 = vadd.f32 %v3404, %v3480
    %v3482 = vpop.f32.mrb[0].mxu0
    %3483 = vdwg.mxu0
    %3484 = vmatprep.subr.mxu0 0.0
    %v3485 = vand.u32 %v2027, 4294901760
    %3486 = vmatpush1.msra.mxu0 %v3485
    %3487 = vmatprep.subr.mxu0 0.0
    %v3488 = vand.u32 %v2028, 4294901760
    %3489 = vmatpush1.msra.mxu0 %v3488
    %3490 = vmatprep.subr.mxu0 0.0
    %3491 = vmatpush1.msra.mxu0 0.0
    %3492 = vmatprep.subr.mxu0 0.0
    %3493 = vmatpush1.msra.mxu0 0.0
    %3494 = vmatprep.subr.mxu0 0.0
    %3495 = vmatpush1.msra.mxu0 0.0
    %3496 = vmatprep.subr.mxu0 0.0
    %3497 = vmatpush1.msra.mxu0 0.0
    %3498 = vmatprep.subr.mxu0 0.0
    %3499 = vmatpush1.msra.mxu0 0.0
    %3500 = vmatprep.subr.mxu0 0.0
    %3501 = vmatpush1.msra.mxu0 0.0
    %3502 = vmatprep.subr.mxu0 0.0
    %3503 = vmatpush1.msra.mxu0 0.0
    %3504 = vmatprep.subr.mxu0 0.0
    %3505 = vmatpush1.msra.mxu0 0.0
    %3506 = vmatprep.subr.mxu0 0.0
    %3507 = vmatpush1.msra.mxu0 0.0
    %3508 = vmatprep.subr.mxu0 0.0
    %3509 = vmatpush1.msra.mxu0 0.0
    %3510 = vmatprep.subr.mxu0 0.0
    %3511 = vmatpush1.msra.mxu0 0.0
    %3512 = vmatprep.subr.mxu0 0.0
    %3513 = vmatpush1.msra.mxu0 0.0
    %3514 = vmatprep.subr.mxu0 0.0
    %3515 = vmatpush1.msra.mxu0 0.0
    %3516 = vmatprep.subr.mxu0 0.0
    %3517 = vmatpush1.msra.mxu0 0.0
    %3518 = vmatprep.subr.mxu0 0.0
    %3519 = vmatpush1.msra.mxu0 0.0
    %3520 = vmatprep.subr.mxu0 0.0
    %3521 = vmatpush1.msra.mxu0 0.0
    %3522 = vmatprep.subr.mxu0 0.0
    %3523 = vmatpush1.msra.mxu0 0.0
    %3524 = vmatprep.subr.mxu0 0.0
    %3525 = vmatpush1.msra.mxu0 0.0
    %3526 = vmatprep.subr.mxu0 0.0
    %3527 = vmatpush1.msra.mxu0 0.0
    %3528 = vmatprep.subr.mxu0 0.0
    %3529 = vmatpush1.msra.mxu0 0.0
    %3530 = vmatprep.subr.mxu0 0.0
    %3531 = vmatpush1.msra.mxu0 0.0
    %3532 = vmatprep.subr.mxu0 0.0
    %3533 = vmatpush1.msra.mxu0 0.0
    %3534 = vmatprep.subr.mxu0 0.0
    %3535 = vmatpush1.msra.mxu0 0.0
    %3536 = vmatprep.subr.mxu0 0.0
    %3537 = vmatpush1.msra.mxu0 0.0
    %3538 = vmatprep.subr.mxu0 0.0
    %3539 = vmatpush1.msra.mxu0 0.0
    %3540 = vmatprep.subr.mxu0 0.0
    %3541 = vmatpush1.msra.mxu0 0.0
    %3542 = vmatprep.subr.mxu0 0.0
    %3543 = vmatpush1.msra.mxu0 0.0
    %3544 = vmatprep.subr.mxu0 0.0
    %3545 = vmatpush1.msra.mxu0 0.0
    %3546 = vmatprep.subr.mxu0 0.0
    %3547 = vmatpush1.msra.mxu0 0.0
    %3548 = vmatprep.subr.mxu0 0.0
    %3549 = vmatpush1.msra.mxu0 0.0
    %3550 = vmatprep.mubr.f32.mxu0 0.0
    %v3551 = vand.u32 %v3096, 4294901760
    %3552 = vmatmul.mubr.f32.gmra.mrb[0].mxu0 %v3551
    %v3553 = vpop.f32.mrb[0].mxu0
    %v3554 = vadd.f32 %v3481, %v3553
    %v3555 = vpop.f32.mrb[0].mxu0
    %3556 = vdwg.mxu0
    %v3558 = vrot.slane %v3554, 4
    %v3560 = vadd.f32 %v2012, %v3558
    %v3561 = vrot.slane %v3554, 6
    %v3563 = vadd.f32 %v2018, %v3561
    %v3565 = vrot.slane %v3560, 4
    %v3568 = vrot.slane %v3563, 2
    %3569 = vrot.lane.b32.xlu0 %v3568, 64
    %v3570 = vpop.permute.xlu0 %3569
    %v3572 = vsel %vm2501, %v3565, %v3570
    %v3573 = vxor.u32 %v3572, 2147483648
    %v3574 = vmul.f32 %v3573, 1.442695
    %v3575 = vpow.pop %v3574
    %v3576 = vadd.f32 %v3575, 1.0
    %v3577 = vrcp.pop %v3576
    %v3578 = vmul.f32 1.0, %v3577
    %v3579 = vtanh.pop %v3572
    %v3580 = vmul.f32 %v3578, %v3056
    %3582 = vrot.lane.b32.xlu0 %v3579, 96
    %v3583 = vpop.permute.xlu0 %3582
    %v3585 = vmul.f32 %v3578, %v3583
    %3587 = vrot.lane.b32.xlu0 %v3585, 16
    %v3588 = vpop.permute.xlu0 %3587
    %v3590 = vadd.f32 %v3580, %v3588
    %v3591 = vtanh.pop %v3590
    %3593 = vrot.lane.b32.xlu0 %v3591, 32
    %v3594 = vpop.permute.xlu0 %3593
    %v3596 = vmul.f32 %v3578, %v3594
    %v3599 = vunpack.c.l.s4 1983009808
    %v3600 = vunpack.c.0.s8 %v3599
    %v3601 = vlaneseq
    %v3602 = vshrl.u32 %v3601, 7
    %v3603 = vsub.s32 %v3600, %v3602
    %v3604 = vrot.slane %v3596, %v3603
    %3605 = vrot.lane.b32.xlu0 %v3604, 80
    %v3606 = vpop.permute.xlu0 %3605
    %3608 = vst.msk [vmem:[#allocation3 + $0x2] sm:$0x1] %vm2538, %v3606
    %v3609 = vcombine.high %v3604, %v3604
    %3610 = vrot.lane.b32.xlu0 %v3609, 64
    %v3611 = vpop.permute.xlu0 %3610
    %3613 = vst.msk [vmem:[#allocation3 + $0x1] sm:$0x1] %vm2544, %v3611
    %v3614 = vrot.slane %v3604, 7
    %v3615 = vrot.slane %v3614, 2
    %3616 = vrot.lane.b32.xlu0 %v3615, 112
    %v3617 = vpop.permute.xlu0 %3616
    %3619 = vst.msk [vmem:[#allocation3 + $0x2] sm:$0x1] %vm2551, %v3617
    %v3620 = vrot.slane %v3609, 7
    %v3621 = vrot.slane %v3620, 2
    %3622 = vrot.lane.b32.xlu0 %v3621, 96
    %v3623 = vpop.permute.xlu0 %3622
    %3625 = vst.msk [vmem:[#allocation3 + $0x3] sm:$0x1] %vm2558, %v3623
    %3626 = vrot.lane.b32.xlu0 %v3596, 80
    %v3627 = vpop.permute.xlu0 %3626
    %v3628 = vsel %vm1472, %v3627, 0
    %3630 = vmatprep.subr.mxu0 0.0
    %v3631 = vand.u32 %v2027, 4294901760
    %3632 = vmatpush1.msra.mxu0 %v3631
    %3633 = vmatprep.subr.mxu0 0.0
    %v3634 = vand.u32 %v2028, 4294901760
    %3635 = vmatpush1.msra.mxu0 %v3634
    %3636 = vmatprep.subr.mxu0 0.0
    %3637 = vmatpush1.msra.mxu0 0.0
    %3638 = vmatprep.subr.mxu0 0.0
    %3639 = vmatpush1.msra.mxu0 0.0
    %3640 = vmatprep.subr.mxu0 0.0
    %3641 = vmatpush1.msra.mxu0 0.0
    %3642 = vmatprep.subr.mxu0 0.0
    %3643 = vmatpush1.msra.mxu0 0.0
    %3644 = vmatprep.subr.mxu0 0.0
    %3645 = vmatpush1.msra.mxu0 0.0
    %3646 = vmatprep.subr.mxu0 0.0
    %3647 = vmatpush1.msra.mxu0 0.0
    %3648 = vmatprep.subr.mxu0 0.0
    %3649 = vmatpush1.msra.mxu0 0.0
    %3650 = vmatprep.subr.mxu0 0.0
    %3651 = vmatpush1.msra.mxu0 0.0
    %3652 = vmatprep.subr.mxu0 0.0
    %3653 = vmatpush1.msra.mxu0 0.0
    %3654 = vmatprep.subr.mxu0 0.0
    %3655 = vmatpush1.msra.mxu0 0.0
    %3656 = vmatprep.subr.mxu0 0.0
    %3657 = vmatpush1.msra.mxu0 0.0
    %3658 = vmatprep.subr.mxu0 0.0
    %3659 = vmatpush1.msra.mxu0 0.0
    %3660 = vmatprep.subr.mxu0 0.0
    %3661 = vmatpush1.msra.mxu0 0.0
    %3662 = vmatprep.subr.mxu0 0.0
    %3663 = vmatpush1.msra.mxu0 0.0
    %3664 = vmatprep.subr.mxu0 0.0
    %3665 = vmatpush1.msra.mxu0 0.0
    %3666 = vmatprep.subr.mxu0 0.0
    %3667 = vmatpush1.msra.mxu0 0.0
    %3668 = vmatprep.subr.mxu0 0.0
    %3669 = vmatpush1.msra.mxu0 0.0
    %3670 = vmatprep.subr.mxu0 0.0
    %3671 = vmatpush1.msra.mxu0 0.0
    %3672 = vmatprep.subr.mxu0 0.0
    %3673 = vmatpush1.msra.mxu0 0.0
    %3674 = vmatprep.subr.mxu0 0.0
    %3675 = vmatpush1.msra.mxu0 0.0
    %3676 = vmatprep.subr.mxu0 0.0
    %3677 = vmatpush1.msra.mxu0 0.0
    %3678 = vmatprep.subr.mxu0 0.0
    %3679 = vmatpush1.msra.mxu0 0.0
    %3680 = vmatprep.subr.mxu0 0.0
    %3681 = vmatpush1.msra.mxu0 0.0
    %3682 = vmatprep.subr.mxu0 0.0
    %3683 = vmatpush1.msra.mxu0 0.0
    %3684 = vmatprep.subr.mxu0 0.0
    %3685 = vmatpush1.msra.mxu0 0.0
    %3686 = vmatprep.subr.mxu0 0.0
    %3687 = vmatpush1.msra.mxu0 0.0
    %3688 = vmatprep.subr.mxu0 0.0
    %3689 = vmatpush1.msra.mxu0 0.0
    %3690 = vmatprep.subr.mxu0 0.0
    %3691 = vmatpush1.msra.mxu0 0.0
    %3692 = vmatprep.subr.mxu0 0.0
    %3693 = vmatpush1.msra.mxu0 0.0
    %3694 = vmatprep.subr.mxu0 0.0
    %3695 = vmatpush1.msra.mxu0 0.0
    %3696 = vmatprep.mubr.f32.mxu0 0.0
    %v3697 = vand.u32 %v3628, 4294901760
    %v3698 = vsub.f32 %v3628, %v3697
    %v3699 = vand.u32 %v3698, 4294901760
    %v3700 = vsub.f32 %v3698, %v3699
    %v3701 = vand.u32 %v3700, 4294901760
    %3702 = vmatmul.mubr.f32.gmra.mrb[0].mxu0 %v3701
    %v3703 = vpop.f32.mrb[0].mxu0
    %v3704 = vadd.f32 0.0, %v3703
    %v3705 = vpop.f32.mrb[0].mxu0
    %3706 = vdwg.mxu0
    %3707 = vmatprep.subr.mxu0 0.0
    %v3708 = vand.u32 %v2027, 4294901760
    %v3709 = vsub.f32 %v2027, %v3708
    %v3710 = vand.u32 %v3709, 4294901760
    %v3711 = vsub.f32 %v3709, %v3710
    %v3712 = vand.u32 %v3711, 4294901760
    %3713 = vmatpush1.msra.mxu0 %v3712
    %3714 = vmatprep.subr.mxu0 0.0
    %v3715 = vand.u32 %v2028, 4294901760
    %v3716 = vsub.f32 %v2028, %v3715
    %v3717 = vand.u32 %v3716, 4294901760
    %v3718 = vsub.f32 %v3716, %v3717
    %v3719 = vand.u32 %v3718, 4294901760
    %3720 = vmatpush1.msra.mxu0 %v3719
    %3721 = vmatprep.subr.mxu0 0.0
    %3722 = vmatpush1.msra.mxu0 0.0
    %3723 = vmatprep.subr.mxu0 0.0
    %3724 = vmatpush1.msra.mxu0 0.0
    %3725 = vmatprep.subr.mxu0 0.0
    %3726 = vmatpush1.msra.mxu0 0.0
    %3727 = vmatprep.subr.mxu0 0.0
    %3728 = vmatpush1.msra.mxu0 0.0
    %3729 = vmatprep.subr.mxu0 0.0
    %3730 = vmatpush1.msra.mxu0 0.0
    %3731 = vmatprep.subr.mxu0 0.0
    %3732 = vmatpush1.msra.mxu0 0.0
    %3733 = vmatprep.subr.mxu0 0.0
    %3734 = vmatpush1.msra.mxu0 0.0
    %3735 = vmatprep.subr.mxu0 0.0
    %3736 = vmatpush1.msra.mxu0 0.0
    %3737 = vmatprep.subr.mxu0 0.0
    %3738 = vmatpush1.msra.mxu0 0.0
    %3739 = vmatprep.subr.mxu0 0.0
    %3740 = vmatpush1.msra.mxu0 0.0
    %3741 = vmatprep.subr.mxu0 0.0
    %3742 = vmatpush1.msra.mxu0 0.0
    %3743 = vmatprep.subr.mxu0 0.0
    %3744 = vmatpush1.msra.mxu0 0.0
    %3745 = vmatprep.subr.mxu0 0.0
    %3746 = vmatpush1.msra.mxu0 0.0
    %3747 = vmatprep.subr.mxu0 0.0
    %3748 = vmatpush1.msra.mxu0 0.0
    %3749 = vmatprep.subr.mxu0 0.0
    %3750 = vmatpush1.msra.mxu0 0.0
    %3751 = vmatprep.subr.mxu0 0.0
    %3752 = vmatpush1.msra.mxu0 0.0
    %3753 = vmatprep.subr.mxu0 0.0
    %3754 = vmatpush1.msra.mxu0 0.0
    %3755 = vmatprep.subr.mxu0 0.0
    %3756 = vmatpush1.msra.mxu0 0.0
    %3757 = vmatprep.subr.mxu0 0.0
    %3758 = vmatpush1.msra.mxu0 0.0
    %3759 = vmatprep.subr.mxu0 0.0
    %3760 = vmatpush1.msra.mxu0 0.0
    %3761 = vmatprep.subr.mxu0 0.0
    %3762 = vmatpush1.msra.mxu0 0.0
    %3763 = vmatprep.subr.mxu0 0.0
    %3764 = vmatpush1.msra.mxu0 0.0
    %3765 = vmatprep.subr.mxu0 0.0
    %3766 = vmatpush1.msra.mxu0 0.0
    %3767 = vmatprep.subr.mxu0 0.0
    %3768 = vmatpush1.msra.mxu0 0.0
    %3769 = vmatprep.subr.mxu0 0.0
    %3770 = vmatpush1.msra.mxu0 0.0
    %3771 = vmatprep.subr.mxu0 0.0
    %3772 = vmatpush1.msra.mxu0 0.0
    %3773 = vmatprep.subr.mxu0 0.0
    %3774 = vmatpush1.msra.mxu0 0.0
    %3775 = vmatprep.subr.mxu0 0.0
    %3776 = vmatpush1.msra.mxu0 0.0
    %3777 = vmatprep.subr.mxu0 0.0
    %3778 = vmatpush1.msra.mxu0 0.0
    %3779 = vmatprep.subr.mxu0 0.0
    %3780 = vmatpush1.msra.mxu0 0.0
    %3781 = vmatprep.mubr.f32.mxu0 0.0
    %v3782 = vand.u32 %v3628, 4294901760
    %3783 = vmatmul.mubr.f32.gmra.mrb[0].mxu0 %v3782
    %v3784 = vpop.f32.mrb[0].mxu0
    %v3785 = vadd.f32 %v3704, %v3784
    %v3786 = vpop.f32.mrb[0].mxu0
    %3787 = vdwg.mxu0
    %3788 = vmatprep.subr.mxu0 0.0
    %v3789 = vand.u32 %v2027, 4294901760
    %v3790 = vsub.f32 %v2027, %v3789
    %3791 = vmatpush1.msra.mxu0 %v3790
    %3792 = vmatprep.subr.mxu0 0.0
    %v3793 = vand.u32 %v2028, 4294901760
    %v3794 = vsub.f32 %v2028, %v3793
    %3795 = vmatpush1.msra.mxu0 %v3794
    %3796 = vmatprep.subr.mxu0 0.0
    %3797 = vmatpush1.msra.mxu0 0.0
    %3798 = vmatprep.subr.mxu0 0.0
    %3799 = vmatpush1.msra.mxu0 0.0
    %3800 = vmatprep.subr.mxu0 0.0
    %3801 = vmatpush1.msra.mxu0 0.0
    %3802 = vmatprep.subr.mxu0 0.0
    %3803 = vmatpush1.msra.mxu0 0.0
    %3804 = vmatprep.subr.mxu0 0.0
    %3805 = vmatpush1.msra.mxu0 0.0
    %3806 = vmatprep.subr.mxu0 0.0
    %3807 = vmatpush1.msra.mxu0 0.0
    %3808 = vmatprep.subr.mxu0 0.0
    %3809 = vmatpush1.msra.mxu0 0.0
    %3810 = vmatprep.subr.mxu0 0.0
    %3811 = vmatpush1.msra.mxu0 0.0
    %3812 = vmatprep.subr.mxu0 0.0
    %3813 = vmatpush1.msra.mxu0 0.0
    %3814 = vmatprep.subr.mxu0 0.0
    %3815 = vmatpush1.msra.mxu0 0.0
    %3816 = vmatprep.subr.mxu0 0.0
    %3817 = vmatpush1.msra.mxu0 0.0
    %3818 = vmatprep.subr.mxu0 0.0
    %3819 = vmatpush1.msra.mxu0 0.0
    %3820 = vmatprep.subr.mxu0 0.0
    %3821 = vmatpush1.msra.mxu0 0.0
    %3822 = vmatprep.subr.mxu0 0.0
    %3823 = vmatpush1.msra.mxu0 0.0
    %3824 = vmatprep.subr.mxu0 0.0
    %3825 = vmatpush1.msra.mxu0 0.0
    %3826 = vmatprep.subr.mxu0 0.0
    %3827 = vmatpush1.msra.mxu0 0.0
    %3828 = vmatprep.subr.mxu0 0.0
    %3829 = vmatpush1.msra.mxu0 0.0
    %3830 = vmatprep.subr.mxu0 0.0
    %3831 = vmatpush1.msra.mxu0 0.0
    %3832 = vmatprep.subr.mxu0 0.0
    %3833 = vmatpush1.msra.mxu0 0.0
    %3834 = vmatprep.subr.mxu0 0.0
    %3835 = vmatpush1.msra.mxu0 0.0
    %3836 = vmatprep.subr.mxu0 0.0
    %3837 = vmatpush1.msra.mxu0 0.0
    %3838 = vmatprep.subr.mxu0 0.0
    %3839 = vmatpush1.msra.mxu0 0.0
    %3840 = vmatprep.subr.mxu0 0.0
    %3841 = vmatpush1.msra.mxu0 0.0
    %3842 = vmatprep.subr.mxu0 0.0
    %3843 = vmatpush1.msra.mxu0 0.0
    %3844 = vmatprep.subr.mxu0 0.0
    %3845 = vmatpush1.msra.mxu0 0.0
    %3846 = vmatprep.subr.mxu0 0.0
    %3847 = vmatpush1.msra.mxu0 0.0
    %3848 = vmatprep.subr.mxu0 0.0
    %3849 = vmatpush1.msra.mxu0 0.0
    %3850 = vmatprep.subr.mxu0 0.0
    %3851 = vmatpush1.msra.mxu0 0.0
    %3852 = vmatprep.subr.mxu0 0.0
    %3853 = vmatpush1.msra.mxu0 0.0
    %3854 = vmatprep.subr.mxu0 0.0
    %3855 = vmatpush1.msra.mxu0 0.0
    %3856 = vmatprep.mubr.f32.mxu0 0.0
    %v3857 = vand.u32 %v3628, 4294901760
    %v3858 = vsub.f32 %v3628, %v3857
    %3859 = vmatmul.mubr.f32.gmra.mrb[0].mxu0 %v3858
    %v3860 = vpop.f32.mrb[0].mxu0
    %v3861 = vadd.f32 %v3785, %v3860
    %v3862 = vpop.f32.mrb[0].mxu0
    %3863 = vdwg.mxu0
    %3864 = vmatprep.subr.mxu0 0.0
    %v3865 = vand.u32 %v2027, 4294901760
    %3866 = vmatpush1.msra.mxu0 %v3865
    %3867 = vmatprep.subr.mxu0 0.0
    %v3868 = vand.u32 %v2028, 4294901760
    %3869 = vmatpush1.msra.mxu0 %v3868
    %3870 = vmatprep.subr.mxu0 0.0
    %3871 = vmatpush1.msra.mxu0 0.0
    %3872 = vmatprep.subr.mxu0 0.0
    %3873 = vmatpush1.msra.mxu0 0.0
    %3874 = vmatprep.subr.mxu0 0.0
    %3875 = vmatpush1.msra.mxu0 0.0
    %3876 = vmatprep.subr.mxu0 0.0
    %3877 = vmatpush1.msra.mxu0 0.0
    %3878 = vmatprep.subr.mxu0 0.0
    %3879 = vmatpush1.msra.mxu0 0.0
    %3880 = vmatprep.subr.mxu0 0.0
    %3881 = vmatpush1.msra.mxu0 0.0
    %3882 = vmatprep.subr.mxu0 0.0
    %3883 = vmatpush1.msra.mxu0 0.0
    %3884 = vmatprep.subr.mxu0 0.0
    %3885 = vmatpush1.msra.mxu0 0.0
    %3886 = vmatprep.subr.mxu0 0.0
    %3887 = vmatpush1.msra.mxu0 0.0
    %3888 = vmatprep.subr.mxu0 0.0
    %3889 = vmatpush1.msra.mxu0 0.0
    %3890 = vmatprep.subr.mxu0 0.0
    %3891 = vmatpush1.msra.mxu0 0.0
    %3892 = vmatprep.subr.mxu0 0.0
    %3893 = vmatpush1.msra.mxu0 0.0
    %3894 = vmatprep.subr.mxu0 0.0
    %3895 = vmatpush1.msra.mxu0 0.0
    %3896 = vmatprep.subr.mxu0 0.0
    %3897 = vmatpush1.msra.mxu0 0.0
    %3898 = vmatprep.subr.mxu0 0.0
    %3899 = vmatpush1.msra.mxu0 0.0
    %3900 = vmatprep.subr.mxu0 0.0
    %3901 = vmatpush1.msra.mxu0 0.0
    %3902 = vmatprep.subr.mxu0 0.0
    %3903 = vmatpush1.msra.mxu0 0.0
    %3904 = vmatprep.subr.mxu0 0.0
    %3905 = vmatpush1.msra.mxu0 0.0
    %3906 = vmatprep.subr.mxu0 0.0
    %3907 = vmatpush1.msra.mxu0 0.0
    %3908 = vmatprep.subr.mxu0 0.0
    %3909 = vmatpush1.msra.mxu0 0.0
    %3910 = vmatprep.subr.mxu0 0.0
    %3911 = vmatpush1.msra.mxu0 0.0
    %3912 = vmatprep.subr.mxu0 0.0
    %3913 = vmatpush1.msra.mxu0 0.0
    %3914 = vmatprep.subr.mxu0 0.0
    %3915 = vmatpush1.msra.mxu0 0.0
    %3916 = vmatprep.subr.mxu0 0.0
    %3917 = vmatpush1.msra.mxu0 0.0
    %3918 = vmatprep.subr.mxu0 0.0
    %3919 = vmatpush1.msra.mxu0 0.0
    %3920 = vmatprep.subr.mxu0 0.0
    %3921 = vmatpush1.msra.mxu0 0.0
    %3922 = vmatprep.subr.mxu0 0.0
    %3923 = vmatpush1.msra.mxu0 0.0
    %3924 = vmatprep.subr.mxu0 0.0
    %3925 = vmatpush1.msra.mxu0 0.0
    %3926 = vmatprep.subr.mxu0 0.0
    %3927 = vmatpush1.msra.mxu0 0.0
    %3928 = vmatprep.subr.mxu0 0.0
    %3929 = vmatpush1.msra.mxu0 0.0
    %3930 = vmatprep.mubr.f32.mxu0 0.0
    %v3931 = vand.u32 %v3628, 4294901760
    %v3932 = vsub.f32 %v3628, %v3931
    %v3933 = vand.u32 %v3932, 4294901760
    %3934 = vmatmul.mubr.f32.gmra.mrb[0].mxu0 %v3933
    %v3935 = vpop.f32.mrb[0].mxu0
    %v3936 = vadd.f32 %v3861, %v3935
    %v3937 = vpop.f32.mrb[0].mxu0
    %3938 = vdwg.mxu0
    %3939 = vmatprep.subr.mxu0 0.0
    %v3940 = vand.u32 %v2027, 4294901760
    %v3941 = vsub.f32 %v2027, %v3940
    %v3942 = vand.u32 %v3941, 4294901760
    %3943 = vmatpush1.msra.mxu0 %v3942
    %3944 = vmatprep.subr.mxu0 0.0
    %v3945 = vand.u32 %v2028, 4294901760
    %v3946 = vsub.f32 %v2028, %v3945
    %v3947 = vand.u32 %v3946, 4294901760
    %3948 = vmatpush1.msra.mxu0 %v3947
    %3949 = vmatprep.subr.mxu0 0.0
    %3950 = vmatpush1.msra.mxu0 0.0
    %3951 = vmatprep.subr.mxu0 0.0
    %3952 = vmatpush1.msra.mxu0 0.0
    %3953 = vmatprep.subr.mxu0 0.0
    %3954 = vmatpush1.msra.mxu0 0.0
    %3955 = vmatprep.subr.mxu0 0.0
    %3956 = vmatpush1.msra.mxu0 0.0
    %3957 = vmatprep.subr.mxu0 0.0
    %3958 = vmatpush1.msra.mxu0 0.0
    %3959 = vmatprep.subr.mxu0 0.0
    %3960 = vmatpush1.msra.mxu0 0.0
    %3961 = vmatprep.subr.mxu0 0.0
    %3962 = vmatpush1.msra.mxu0 0.0
    %3963 = vmatprep.subr.mxu0 0.0
    %3964 = vmatpush1.msra.mxu0 0.0
    %3965 = vmatprep.subr.mxu0 0.0
    %3966 = vmatpush1.msra.mxu0 0.0
    %3967 = vmatprep.subr.mxu0 0.0
    %3968 = vmatpush1.msra.mxu0 0.0
    %3969 = vmatprep.subr.mxu0 0.0
    %3970 = vmatpush1.msra.mxu0 0.0
    %3971 = vmatprep.subr.mxu0 0.0
    %3972 = vmatpush1.msra.mxu0 0.0
    %3973 = vmatprep.subr.mxu0 0.0
    %3974 = vmatpush1.msra.mxu0 0.0
    %3975 = vmatprep.subr.mxu0 0.0
    %3976 = vmatpush1.msra.mxu0 0.0
    %3977 = vmatprep.subr.mxu0 0.0
    %3978 = vmatpush1.msra.mxu0 0.0
    %3979 = vmatprep.subr.mxu0 0.0
    %3980 = vmatpush1.msra.mxu0 0.0
    %3981 = vmatprep.subr.mxu0 0.0
    %3982 = vmatpush1.msra.mxu0 0.0
    %3983 = vmatprep.subr.mxu0 0.0
    %3984 = vmatpush1.msra.mxu0 0.0
    %3985 = vmatprep.subr.mxu0 0.0
    %3986 = vmatpush1.msra.mxu0 0.0
    %3987 = vmatprep.subr.mxu0 0.0
    %3988 = vmatpush1.msra.mxu0 0.0
    %3989 = vmatprep.subr.mxu0 0.0
    %3990 = vmatpush1.msra.mxu0 0.0
    %3991 = vmatprep.subr.mxu0 0.0
    %3992 = vmatpush1.msra.mxu0 0.0
    %3993 = vmatprep.subr.mxu0 0.0
    %3994 = vmatpush1.msra.mxu0 0.0
    %3995 = vmatprep.subr.mxu0 0.0
    %3996 = vmatpush1.msra.mxu0 0.0
    %3997 = vmatprep.subr.mxu0 0.0
    %3998 = vmatpush1.msra.mxu0 0.0
    %3999 = vmatprep.subr.mxu0 0.0
    %4000 = vmatpush1.msra.mxu0 0.0
    %4001 = vmatprep.subr.mxu0 0.0
    %4002 = vmatpush1.msra.mxu0 0.0
    %4003 = vmatprep.subr.mxu0 0.0
    %4004 = vmatpush1.msra.mxu0 0.0
    %4005 = vmatprep.subr.mxu0 0.0
    %4006 = vmatpush1.msra.mxu0 0.0
    %4007 = vmatprep.subr.mxu0 0.0
    %4008 = vmatpush1.msra.mxu0 0.0
    %4009 = vmatprep.mubr.f32.mxu0 0.0
    %v4010 = vand.u32 %v3628, 4294901760
    %4011 = vmatmul.mubr.f32.gmra.mrb[0].mxu0 %v4010
    %v4012 = vpop.f32.mrb[0].mxu0
    %v4013 = vadd.f32 %v3936, %v4012
    %v4014 = vpop.f32.mrb[0].mxu0
    %4015 = vdwg.mxu0
    %4016 = vmatprep.subr.mxu0 0.0
    %v4017 = vand.u32 %v2027, 4294901760
    %4018 = vmatpush1.msra.mxu0 %v4017
    %4019 = vmatprep.subr.mxu0 0.0
    %v4020 = vand.u32 %v2028, 4294901760
    %4021 = vmatpush1.msra.mxu0 %v4020
    %4022 = vmatprep.subr.mxu0 0.0
    %4023 = vmatpush1.msra.mxu0 0.0
    %4024 = vmatprep.subr.mxu0 0.0
    %4025 = vmatpush1.msra.mxu0 0.0
    %4026 = vmatprep.subr.mxu0 0.0
    %4027 = vmatpush1.msra.mxu0 0.0
    %4028 = vmatprep.subr.mxu0 0.0
    %4029 = vmatpush1.msra.mxu0 0.0
    %4030 = vmatprep.subr.mxu0 0.0
    %4031 = vmatpush1.msra.mxu0 0.0
    %4032 = vmatprep.subr.mxu0 0.0
    %4033 = vmatpush1.msra.mxu0 0.0
    %4034 = vmatprep.subr.mxu0 0.0
    %4035 = vmatpush1.msra.mxu0 0.0
    %4036 = vmatprep.subr.mxu0 0.0
    %4037 = vmatpush1.msra.mxu0 0.0
    %4038 = vmatprep.subr.mxu0 0.0
    %4039 = vmatpush1.msra.mxu0 0.0
    %4040 = vmatprep.subr.mxu0 0.0
    %4041 = vmatpush1.msra.mxu0 0.0
    %4042 = vmatprep.subr.mxu0 0.0
    %4043 = vmatpush1.msra.mxu0 0.0
    %4044 = vmatprep.subr.mxu0 0.0
    %4045 = vmatpush1.msra.mxu0 0.0
    %4046 = vmatprep.subr.mxu0 0.0
    %4047 = vmatpush1.msra.mxu0 0.0
    %4048 = vmatprep.subr.mxu0 0.0
    %4049 = vmatpush1.msra.mxu0 0.0
    %4050 = vmatprep.subr.mxu0 0.0
    %4051 = vmatpush1.msra.mxu0 0.0
    %4052 = vmatprep.subr.mxu0 0.0
    %4053 = vmatpush1.msra.mxu0 0.0
    %4054 = vmatprep.subr.mxu0 0.0
    %4055 = vmatpush1.msra.mxu0 0.0
    %4056 = vmatprep.subr.mxu0 0.0
    %4057 = vmatpush1.msra.mxu0 0.0
    %4058 = vmatprep.subr.mxu0 0.0
    %4059 = vmatpush1.msra.mxu0 0.0
    %4060 = vmatprep.subr.mxu0 0.0
    %4061 = vmatpush1.msra.mxu0 0.0
    %4062 = vmatprep.subr.mxu0 0.0
    %4063 = vmatpush1.msra.mxu0 0.0
    %4064 = vmatprep.subr.mxu0 0.0
    %4065 = vmatpush1.msra.mxu0 0.0
    %4066 = vmatprep.subr.mxu0 0.0
    %4067 = vmatpush1.msra.mxu0 0.0
    %4068 = vmatprep.subr.mxu0 0.0
    %4069 = vmatpush1.msra.mxu0 0.0
    %4070 = vmatprep.subr.mxu0 0.0
    %4071 = vmatpush1.msra.mxu0 0.0
    %4072 = vmatprep.subr.mxu0 0.0
    %4073 = vmatpush1.msra.mxu0 0.0
    %4074 = vmatprep.subr.mxu0 0.0
    %4075 = vmatpush1.msra.mxu0 0.0
    %4076 = vmatprep.subr.mxu0 0.0
    %4077 = vmatpush1.msra.mxu0 0.0
    %4078 = vmatprep.subr.mxu0 0.0
    %4079 = vmatpush1.msra.mxu0 0.0
    %4080 = vmatprep.subr.mxu0 0.0
    %4081 = vmatpush1.msra.mxu0 0.0
    %4082 = vmatprep.mubr.f32.mxu0 0.0
    %v4083 = vand.u32 %v3628, 4294901760
    %4084 = vmatmul.mubr.f32.gmra.mrb[0].mxu0 %v4083
    %v4085 = vpop.f32.mrb[0].mxu0
    %v4086 = vadd.f32 %v4013, %v4085
    %v4087 = vpop.f32.mrb[0].mxu0
    %4088 = vdwg.mxu0
    %v4090 = vrot.slane %v4086, 2
    %v4092 = vadd.f32 %v2012, %v4090
    %v4093 = vadd.f32 %v2018, %v4086
    %v4095 = vrot.slane %v4092, 6
    %4098 = vrot.lane.b32.xlu0 %v4093, 64
    %v4099 = vpop.permute.xlu0 %4098
    %v4101 = vsel %vm2501, %v4095, %v4099
    %v4102 = vxor.u32 %v4101, 2147483648
    %v4103 = vmul.f32 %v4102, 1.442695
    %v4104 = vpow.pop %v4103
    %v4105 = vadd.f32 %v4104, 1.0
    %v4106 = vrcp.pop %v4105
    %v4107 = vmul.f32 1.0, %v4106
    %v4108 = vtanh.pop %v4101
    %v4109 = vmul.f32 %v4107, %v3590
    %4111 = vrot.lane.b32.xlu0 %v4108, 96
    %v4112 = vpop.permute.xlu0 %4111
    %v4114 = vmul.f32 %v4107, %v4112
    %4116 = vrot.lane.b32.xlu0 %v4114, 16
    %v4117 = vpop.permute.xlu0 %4116
    %v4119 = vadd.f32 %v4109, %v4117
    %v4120 = vtanh.pop %v4119
    %4122 = vrot.lane.b32.xlu0 %v4120, 32
    %v4123 = vpop.permute.xlu0 %4122
    %v4125 = vmul.f32 %v4107, %v4123
    %v4128 = vunpack.c.l.s4 1983009808
    %v4129 = vunpack.c.0.s8 %v4128
    %v4130 = vlaneseq
    %v4131 = vshrl.u32 %v4130, 7
    %v4132 = vsub.s32 %v4129, %v4131
    %v4133 = vrot.slane %v4125, %v4132
    %4134 = vrot.lane.b32.xlu0 %v4133, 16
    %v4135 = vpop.permute.xlu0 %4134
    %4137 = vst.msk [vmem:[#allocation3 + $0x2] sm:$0x1] %vm3074, %v4135
    %v4138 = vcombine.high %v4133, %v4133
    %4140 = vst.msk [vmem:[#allocation3 + $0x1] sm:$0x1] %vm3078, %v4138
    %v4141 = vrot.slane %v4133, 7
    %v4142 = vrot.slane %v4141, 2
    %4143 = vrot.lane.b32.xlu0 %v4142, 48
    %v4144 = vpop.permute.xlu0 %4143
    %4146 = vst.msk [vmem:[#allocation3 + $0x2] sm:$0x1] %vm3085, %v4144
    %v4147 = vrot.slane %v4138, 7
    %v4148 = vrot.slane %v4147, 2
    %4149 = vrot.lane.b32.xlu0 %v4148, 32
    %v4150 = vpop.permute.xlu0 %4149
    %4152 = vst.msk [vmem:[#allocation3 + $0x1] sm:$0x1] %vm3092, %v4150
    %4153 = vrot.lane.b32.xlu0 %v4125, 80
    %v4154 = vpop.permute.xlu0 %4153
    %v4155 = vsel %vm1472, %v4154, 0
    %4157 = vmatprep.subr.mxu0 0.0
    %v4158 = vand.u32 %v2027, 4294901760
    %4159 = vmatpush1.msra.mxu0 %v4158
    %4160 = vmatprep.subr.mxu0 0.0
    %v4161 = vand.u32 %v2028, 4294901760
    %4162 = vmatpush1.msra.mxu0 %v4161
    %4163 = vmatprep.subr.mxu0 0.0
    %4164 = vmatpush1.msra.mxu0 0.0
    %4165 = vmatprep.subr.mxu0 0.0
    %4166 = vmatpush1.msra.mxu0 0.0
    %4167 = vmatprep.subr.mxu0 0.0
    %4168 = vmatpush1.msra.mxu0 0.0
    %4169 = vmatprep.subr.mxu0 0.0
    %4170 = vmatpush1.msra.mxu0 0.0
    %4171 = vmatprep.subr.mxu0 0.0
    %4172 = vmatpush1.msra.mxu0 0.0
    %4173 = vmatprep.subr.mxu0 0.0
    %4174 = vmatpush1.msra.mxu0 0.0
    %4175 = vmatprep.subr.mxu0 0.0
    %4176 = vmatpush1.msra.mxu0 0.0
    %4177 = vmatprep.subr.mxu0 0.0
    %4178 = vmatpush1.msra.mxu0 0.0
    %4179 = vmatprep.subr.mxu0 0.0
    %4180 = vmatpush1.msra.mxu0 0.0
    %4181 = vmatprep.subr.mxu0 0.0
    %4182 = vmatpush1.msra.mxu0 0.0
    %4183 = vmatprep.subr.mxu0 0.0
    %4184 = vmatpush1.msra.mxu0 0.0
    %4185 = vmatprep.subr.mxu0 0.0
    %4186 = vmatpush1.msra.mxu0 0.0
    %4187 = vmatprep.subr.mxu0 0.0
    %4188 = vmatpush1.msra.mxu0 0.0
    %4189 = vmatprep.subr.mxu0 0.0
    %4190 = vmatpush1.msra.mxu0 0.0
    %4191 = vmatprep.subr.mxu0 0.0
    %4192 = vmatpush1.msra.mxu0 0.0
    %4193 = vmatprep.subr.mxu0 0.0
    %4194 = vmatpush1.msra.mxu0 0.0
    %4195 = vmatprep.subr.mxu0 0.0
    %4196 = vmatpush1.msra.mxu0 0.0
    %4197 = vmatprep.subr.mxu0 0.0
    %4198 = vmatpush1.msra.mxu0 0.0
    %4199 = vmatprep.subr.mxu0 0.0
    %4200 = vmatpush1.msra.mxu0 0.0
    %4201 = vmatprep.subr.mxu0 0.0
    %4202 = vmatpush1.msra.mxu0 0.0
    %4203 = vmatprep.subr.mxu0 0.0
    %4204 = vmatpush1.msra.mxu0 0.0
    %4205 = vmatprep.subr.mxu0 0.0
    %4206 = vmatpush1.msra.mxu0 0.0
    %4207 = vmatprep.subr.mxu0 0.0
    %4208 = vmatpush1.msra.mxu0 0.0
    %4209 = vmatprep.subr.mxu0 0.0
    %4210 = vmatpush1.msra.mxu0 0.0
    %4211 = vmatprep.subr.mxu0 0.0
    %4212 = vmatpush1.msra.mxu0 0.0
    %4213 = vmatprep.subr.mxu0 0.0
    %4214 = vmatpush1.msra.mxu0 0.0
    %4215 = vmatprep.subr.mxu0 0.0
    %4216 = vmatpush1.msra.mxu0 0.0
    %4217 = vmatprep.subr.mxu0 0.0
    %4218 = vmatpush1.msra.mxu0 0.0
    %4219 = vmatprep.subr.mxu0 0.0
    %4220 = vmatpush1.msra.mxu0 0.0
    %4221 = vmatprep.subr.mxu0 0.0
    %4222 = vmatpush1.msra.mxu0 0.0
    %4223 = vmatprep.mubr.f32.mxu0 0.0
    %v4224 = vand.u32 %v4155, 4294901760
    %v4225 = vsub.f32 %v4155, %v4224
    %v4226 = vand.u32 %v4225, 4294901760
    %v4227 = vsub.f32 %v4225, %v4226
    %v4228 = vand.u32 %v4227, 4294901760
    %4229 = vmatmul.mubr.f32.gmra.mrb[0].mxu0 %v4228
    %v4230 = vpop.f32.mrb[0].mxu0
    %v4231 = vadd.f32 0.0, %v4230
    %v4232 = vpop.f32.mrb[0].mxu0
    %4233 = vdwg.mxu0
    %4234 = vmatprep.subr.mxu0 0.0
    %v4235 = vand.u32 %v2027, 4294901760
    %v4236 = vsub.f32 %v2027, %v4235
    %v4237 = vand.u32 %v4236, 4294901760
    %v4238 = vsub.f32 %v4236, %v4237
    %v4239 = vand.u32 %v4238, 4294901760
    %4240 = vmatpush1.msra.mxu0 %v4239
    %4241 = vmatprep.subr.mxu0 0.0
    %v4242 = vand.u32 %v2028, 4294901760
    %v4243 = vsub.f32 %v2028, %v4242
    %v4244 = vand.u32 %v4243, 4294901760
    %v4245 = vsub.f32 %v4243, %v4244
    %v4246 = vand.u32 %v4245, 4294901760
    %4247 = vmatpush1.msra.mxu0 %v4246
    %4248 = vmatprep.subr.mxu0 0.0
    %4249 = vmatpush1.msra.mxu0 0.0
    %4250 = vmatprep.subr.mxu0 0.0
    %4251 = vmatpush1.msra.mxu0 0.0
    %4252 = vmatprep.subr.mxu0 0.0
    %4253 = vmatpush1.msra.mxu0 0.0
    %4254 = vmatprep.subr.mxu0 0.0
    %4255 = vmatpush1.msra.mxu0 0.0
    %4256 = vmatprep.subr.mxu0 0.0
    %4257 = vmatpush1.msra.mxu0 0.0
    %4258 = vmatprep.subr.mxu0 0.0
    %4259 = vmatpush1.msra.mxu0 0.0
    %4260 = vmatprep.subr.mxu0 0.0
    %4261 = vmatpush1.msra.mxu0 0.0
    %4262 = vmatprep.subr.mxu0 0.0
    %4263 = vmatpush1.msra.mxu0 0.0
    %4264 = vmatprep.subr.mxu0 0.0
    %4265 = vmatpush1.msra.mxu0 0.0
    %4266 = vmatprep.subr.mxu0 0.0
    %4267 = vmatpush1.msra.mxu0 0.0
    %4268 = vmatprep.subr.mxu0 0.0
    %4269 = vmatpush1.msra.mxu0 0.0
    %4270 = vmatprep.subr.mxu0 0.0
    %4271 = vmatpush1.msra.mxu0 0.0
    %4272 = vmatprep.subr.mxu0 0.0
    %4273 = vmatpush1.msra.mxu0 0.0
    %4274 = vmatprep.subr.mxu0 0.0
    %4275 = vmatpush1.msra.mxu0 0.0
    %4276 = vmatprep.subr.mxu0 0.0
    %4277 = vmatpush1.msra.mxu0 0.0
    %4278 = vmatprep.subr.mxu0 0.0
    %4279 = vmatpush1.msra.mxu0 0.0
    %4280 = vmatprep.subr.mxu0 0.0
    %4281 = vmatpush1.msra.mxu0 0.0
    %4282 = vmatprep.subr.mxu0 0.0
    %4283 = vmatpush1.msra.mxu0 0.0
    %4284 = vmatprep.subr.mxu0 0.0
    %4285 = vmatpush1.msra.mxu0 0.0
    %4286 = vmatprep.subr.mxu0 0.0
    %4287 = vmatpush1.msra.mxu0 0.0
    %4288 = vmatprep.subr.mxu0 0.0
    %4289 = vmatpush1.msra.mxu0 0.0
    %4290 = vmatprep.subr.mxu0 0.0
    %4291 = vmatpush1.msra.mxu0 0.0
    %4292 = vmatprep.subr.mxu0 0.0
    %4293 = vmatpush1.msra.mxu0 0.0
    %4294 = vmatprep.subr.mxu0 0.0
    %4295 = vmatpush1.msra.mxu0 0.0
    %4296 = vmatprep.subr.mxu0 0.0
    %4297 = vmatpush1.msra.mxu0 0.0
    %4298 = vmatprep.subr.mxu0 0.0
    %4299 = vmatpush1.msra.mxu0 0.0
    %4300 = vmatprep.subr.mxu0 0.0
    %4301 = vmatpush1.msra.mxu0 0.0
    %4302 = vmatprep.subr.mxu0 0.0
    %4303 = vmatpush1.msra.mxu0 0.0
    %4304 = vmatprep.subr.mxu0 0.0
    %4305 = vmatpush1.msra.mxu0 0.0
    %4306 = vmatprep.subr.mxu0 0.0
    %4307 = vmatpush1.msra.mxu0 0.0
    %4308 = vmatprep.mubr.f32.mxu0 0.0
    %v4309 = vand.u32 %v4155, 4294901760
    %4310 = vmatmul.mubr.f32.gmra.mrb[0].mxu0 %v4309
    %v4311 = vpop.f32.mrb[0].mxu0
    %v4312 = vadd.f32 %v4231, %v4311
    %v4313 = vpop.f32.mrb[0].mxu0
    %4314 = vdwg.mxu0
    %4315 = vmatprep.subr.mxu0 0.0
    %v4316 = vand.u32 %v2027, 4294901760
    %v4317 = vsub.f32 %v2027, %v4316
    %4318 = vmatpush1.msra.mxu0 %v4317
    %4319 = vmatprep.subr.mxu0 0.0
    %v4320 = vand.u32 %v2028, 4294901760
    %v4321 = vsub.f32 %v2028, %v4320
    %4322 = vmatpush1.msra.mxu0 %v4321
    %4323 = vmatprep.subr.mxu0 0.0
    %4324 = vmatpush1.msra.mxu0 0.0
    %4325 = vmatprep.subr.mxu0 0.0
    %4326 = vmatpush1.msra.mxu0 0.0
    %4327 = vmatprep.subr.mxu0 0.0
    %4328 = vmatpush1.msra.mxu0 0.0
    %4329 = vmatprep.subr.mxu0 0.0
    %4330 = vmatpush1.msra.mxu0 0.0
    %4331 = vmatprep.subr.mxu0 0.0
    %4332 = vmatpush1.msra.mxu0 0.0
    %4333 = vmatprep.subr.mxu0 0.0
    %4334 = vmatpush1.msra.mxu0 0.0
    %4335 = vmatprep.subr.mxu0 0.0
    %4336 = vmatpush1.msra.mxu0 0.0
    %4337 = vmatprep.subr.mxu0 0.0
    %4338 = vmatpush1.msra.mxu0 0.0
    %4339 = vmatprep.subr.mxu0 0.0
    %4340 = vmatpush1.msra.mxu0 0.0
    %4341 = vmatprep.subr.mxu0 0.0
    %4342 = vmatpush1.msra.mxu0 0.0
    %4343 = vmatprep.subr.mxu0 0.0
    %4344 = vmatpush1.msra.mxu0 0.0
    %4345 = vmatprep.subr.mxu0 0.0
    %4346 = vmatpush1.msra.mxu0 0.0
    %4347 = vmatprep.subr.mxu0 0.0
    %4348 = vmatpush1.msra.mxu0 0.0
    %4349 = vmatprep.subr.mxu0 0.0
    %4350 = vmatpush1.msra.mxu0 0.0
    %4351 = vmatprep.subr.mxu0 0.0
    %4352 = vmatpush1.msra.mxu0 0.0
    %4353 = vmatprep.subr.mxu0 0.0
    %4354 = vmatpush1.msra.mxu0 0.0
    %4355 = vmatprep.subr.mxu0 0.0
    %4356 = vmatpush1.msra.mxu0 0.0
    %4357 = vmatprep.subr.mxu0 0.0
    %4358 = vmatpush1.msra.mxu0 0.0
    %4359 = vmatprep.subr.mxu0 0.0
    %4360 = vmatpush1.msra.mxu0 0.0
    %4361 = vmatprep.subr.mxu0 0.0
    %4362 = vmatpush1.msra.mxu0 0.0
    %4363 = vmatprep.subr.mxu0 0.0
    %4364 = vmatpush1.msra.mxu0 0.0
    %4365 = vmatprep.subr.mxu0 0.0
    %4366 = vmatpush1.msra.mxu0 0.0
    %4367 = vmatprep.subr.mxu0 0.0
    %4368 = vmatpush1.msra.mxu0 0.0
    %4369 = vmatprep.subr.mxu0 0.0
    %4370 = vmatpush1.msra.mxu0 0.0
    %4371 = vmatprep.subr.mxu0 0.0
    %4372 = vmatpush1.msra.mxu0 0.0
    %4373 = vmatprep.subr.mxu0 0.0
    %4374 = vmatpush1.msra.mxu0 0.0
    %4375 = vmatprep.subr.mxu0 0.0
    %4376 = vmatpush1.msra.mxu0 0.0
    %4377 = vmatprep.subr.mxu0 0.0
    %4378 = vmatpush1.msra.mxu0 0.0
    %4379 = vmatprep.subr.mxu0 0.0
    %4380 = vmatpush1.msra.mxu0 0.0
    %4381 = vmatprep.subr.mxu0 0.0
    %4382 = vmatpush1.msra.mxu0 0.0
    %4383 = vmatprep.mubr.f32.mxu0 0.0
    %v4384 = vand.u32 %v4155, 4294901760
    %v4385 = vsub.f32 %v4155, %v4384
    %4386 = vmatmul.mubr.f32.gmra.mrb[0].mxu0 %v4385
    %v4387 = vpop.f32.mrb[0].mxu0
    %v4388 = vadd.f32 %v4312, %v4387
    %v4389 = vpop.f32.mrb[0].mxu0
    %4390 = vdwg.mxu0
    %4391 = vmatprep.subr.mxu0 0.0
    %v4392 = vand.u32 %v2027, 4294901760
    %4393 = vmatpush1.msra.mxu0 %v4392
    %4394 = vmatprep.subr.mxu0 0.0
    %v4395 = vand.u32 %v2028, 4294901760
    %4396 = vmatpush1.msra.mxu0 %v4395
    %4397 = vmatprep.subr.mxu0 0.0
    %4398 = vmatpush1.msra.mxu0 0.0
    %4399 = vmatprep.subr.mxu0 0.0
    %4400 = vmatpush1.msra.mxu0 0.0
    %4401 = vmatprep.subr.mxu0 0.0
    %4402 = vmatpush1.msra.mxu0 0.0
    %4403 = vmatprep.subr.mxu0 0.0
    %4404 = vmatpush1.msra.mxu0 0.0
    %4405 = vmatprep.subr.mxu0 0.0
    %4406 = vmatpush1.msra.mxu0 0.0
    %4407 = vmatprep.subr.mxu0 0.0
    %4408 = vmatpush1.msra.mxu0 0.0
    %4409 = vmatprep.subr.mxu0 0.0
    %4410 = vmatpush1.msra.mxu0 0.0
    %4411 = vmatprep.subr.mxu0 0.0
    %4412 = vmatpush1.msra.mxu0 0.0
    %4413 = vmatprep.subr.mxu0 0.0
    %4414 = vmatpush1.msra.mxu0 0.0
    %4415 = vmatprep.subr.mxu0 0.0
    %4416 = vmatpush1.msra.mxu0 0.0
    %4417 = vmatprep.subr.mxu0 0.0
    %4418 = vmatpush1.msra.mxu0 0.0
    %4419 = vmatprep.subr.mxu0 0.0
    %4420 = vmatpush1.msra.mxu0 0.0
    %4421 = vmatprep.subr.mxu0 0.0
    %4422 = vmatpush1.msra.mxu0 0.0
    %4423 = vmatprep.subr.mxu0 0.0
    %4424 = vmatpush1.msra.mxu0 0.0
    %4425 = vmatprep.subr.mxu0 0.0
    %4426 = vmatpush1.msra.mxu0 0.0
    %4427 = vmatprep.subr.mxu0 0.0
    %4428 = vmatpush1.msra.mxu0 0.0
    %4429 = vmatprep.subr.mxu0 0.0
    %4430 = vmatpush1.msra.mxu0 0.0
    %4431 = vmatprep.subr.mxu0 0.0
    %4432 = vmatpush1.msra.mxu0 0.0
    %4433 = vmatprep.subr.mxu0 0.0
    %4434 = vmatpush1.msra.mxu0 0.0
    %4435 = vmatprep.subr.mxu0 0.0
    %4436 = vmatpush1.msra.mxu0 0.0
    %4437 = vmatprep.subr.mxu0 0.0
    %4438 = vmatpush1.msra.mxu0 0.0
    %4439 = vmatprep.subr.mxu0 0.0
    %4440 = vmatpush1.msra.mxu0 0.0
    %4441 = vmatprep.subr.mxu0 0.0
    %4442 = vmatpush1.msra.mxu0 0.0
    %4443 = vmatprep.subr.mxu0 0.0
    %4444 = vmatpush1.msra.mxu0 0.0
    %4445 = vmatprep.subr.mxu0 0.0
    %4446 = vmatpush1.msra.mxu0 0.0
    %4447 = vmatprep.subr.mxu0 0.0
    %4448 = vmatpush1.msra.mxu0 0.0
    %4449 = vmatprep.subr.mxu0 0.0
    %4450 = vmatpush1.msra.mxu0 0.0
    %4451 = vmatprep.subr.mxu0 0.0
    %4452 = vmatpush1.msra.mxu0 0.0
    %4453 = vmatprep.subr.mxu0 0.0
    %4454 = vmatpush1.msra.mxu0 0.0
    %4455 = vmatprep.subr.mxu0 0.0
    %4456 = vmatpush1.msra.mxu0 0.0
    %4457 = vmatprep.mubr.f32.mxu0 0.0
    %v4458 = vand.u32 %v4155, 4294901760
    %v4459 = vsub.f32 %v4155, %v4458
    %v4460 = vand.u32 %v4459, 4294901760
    %4461 = vmatmul.mubr.f32.gmra.mrb[0].mxu0 %v4460
    %v4462 = vpop.f32.mrb[0].mxu0
    %v4463 = vadd.f32 %v4388, %v4462
    %v4464 = vpop.f32.mrb[0].mxu0
    %4465 = vdwg.mxu0
    %4466 = vmatprep.subr.mxu0 0.0
    %v4467 = vand.u32 %v2027, 4294901760
    %v4468 = vsub.f32 %v2027, %v4467
    %v4469 = vand.u32 %v4468, 4294901760
    %4470 = vmatpush1.msra.mxu0 %v4469
    %4471 = vmatprep.subr.mxu0 0.0
    %v4472 = vand.u32 %v2028, 4294901760
    %v4473 = vsub.f32 %v2028, %v4472
    %v4474 = vand.u32 %v4473, 4294901760
    %4475 = vmatpush1.msra.mxu0 %v4474
    %4476 = vmatprep.subr.mxu0 0.0
    %4477 = vmatpush1.msra.mxu0 0.0
    %4478 = vmatprep.subr.mxu0 0.0
    %4479 = vmatpush1.msra.mxu0 0.0
    %4480 = vmatprep.subr.mxu0 0.0
    %4481 = vmatpush1.msra.mxu0 0.0
    %4482 = vmatprep.subr.mxu0 0.0
    %4483 = vmatpush1.msra.mxu0 0.0
    %4484 = vmatprep.subr.mxu0 0.0
    %4485 = vmatpush1.msra.mxu0 0.0
    %4486 = vmatprep.subr.mxu0 0.0
    %4487 = vmatpush1.msra.mxu0 0.0
    %4488 = vmatprep.subr.mxu0 0.0
    %4489 = vmatpush1.msra.mxu0 0.0
    %4490 = vmatprep.subr.mxu0 0.0
    %4491 = vmatpush1.msra.mxu0 0.0
    %4492 = vmatprep.subr.mxu0 0.0
    %4493 = vmatpush1.msra.mxu0 0.0
    %4494 = vmatprep.subr.mxu0 0.0
    %4495 = vmatpush1.msra.mxu0 0.0
    %4496 = vmatprep.subr.mxu0 0.0
    %4497 = vmatpush1.msra.mxu0 0.0
    %4498 = vmatprep.subr.mxu0 0.0
    %4499 = vmatpush1.msra.mxu0 0.0
    %4500 = vmatprep.subr.mxu0 0.0
    %4501 = vmatpush1.msra.mxu0 0.0
    %4502 = vmatprep.subr.mxu0 0.0
    %4503 = vmatpush1.msra.mxu0 0.0
    %4504 = vmatprep.subr.mxu0 0.0
    %4505 = vmatpush1.msra.mxu0 0.0
    %4506 = vmatprep.subr.mxu0 0.0
    %4507 = vmatpush1.msra.mxu0 0.0
    %4508 = vmatprep.subr.mxu0 0.0
    %4509 = vmatpush1.msra.mxu0 0.0
    %4510 = vmatprep.subr.mxu0 0.0
    %4511 = vmatpush1.msra.mxu0 0.0
    %4512 = vmatprep.subr.mxu0 0.0
    %4513 = vmatpush1.msra.mxu0 0.0
    %4514 = vmatprep.subr.mxu0 0.0
    %4515 = vmatpush1.msra.mxu0 0.0
    %4516 = vmatprep.subr.mxu0 0.0
    %4517 = vmatpush1.msra.mxu0 0.0
    %4518 = vmatprep.subr.mxu0 0.0
    %4519 = vmatpush1.msra.mxu0 0.0
    %4520 = vmatprep.subr.mxu0 0.0
    %4521 = vmatpush1.msra.mxu0 0.0
    %4522 = vmatprep.subr.mxu0 0.0
    %4523 = vmatpush1.msra.mxu0 0.0
    %4524 = vmatprep.subr.mxu0 0.0
    %4525 = vmatpush1.msra.mxu0 0.0
    %4526 = vmatprep.subr.mxu0 0.0
    %4527 = vmatpush1.msra.mxu0 0.0
    %4528 = vmatprep.subr.mxu0 0.0
    %4529 = vmatpush1.msra.mxu0 0.0
    %4530 = vmatprep.subr.mxu0 0.0
    %4531 = vmatpush1.msra.mxu0 0.0
    %4532 = vmatprep.subr.mxu0 0.0
    %4533 = vmatpush1.msra.mxu0 0.0
    %4534 = vmatprep.subr.mxu0 0.0
    %4535 = vmatpush1.msra.mxu0 0.0
    %4536 = vmatprep.mubr.f32.mxu0 0.0
    %v4537 = vand.u32 %v4155, 4294901760
    %4538 = vmatmul.mubr.f32.gmra.mrb[0].mxu0 %v4537
    %v4539 = vpop.f32.mrb[0].mxu0
    %v4540 = vadd.f32 %v4463, %v4539
    %v4541 = vpop.f32.mrb[0].mxu0
    %4542 = vdwg.mxu0
    %4543 = vmatprep.subr.mxu0 0.0
    %v4544 = vand.u32 %v2027, 4294901760
    %4545 = vmatpush1.msra.mxu0 %v4544
    %4546 = vmatprep.subr.mxu0 0.0
    %v4547 = vand.u32 %v2028, 4294901760
    %4548 = vmatpush1.msra.mxu0 %v4547
    %4549 = vmatprep.subr.mxu0 0.0
    %4550 = vmatpush1.msra.mxu0 0.0
    %4551 = vmatprep.subr.mxu0 0.0
    %4552 = vmatpush1.msra.mxu0 0.0
    %4553 = vmatprep.subr.mxu0 0.0
    %4554 = vmatpush1.msra.mxu0 0.0
    %4555 = vmatprep.subr.mxu0 0.0
    %4556 = vmatpush1.msra.mxu0 0.0
    %4557 = vmatprep.subr.mxu0 0.0
    %4558 = vmatpush1.msra.mxu0 0.0
    %4559 = vmatprep.subr.mxu0 0.0
    %4560 = vmatpush1.msra.mxu0 0.0
    %4561 = vmatprep.subr.mxu0 0.0
    %4562 = vmatpush1.msra.mxu0 0.0
    %4563 = vmatprep.subr.mxu0 0.0
    %4564 = vmatpush1.msra.mxu0 0.0
    %4565 = vmatprep.subr.mxu0 0.0
    %4566 = vmatpush1.msra.mxu0 0.0
    %4567 = vmatprep.subr.mxu0 0.0
    %4568 = vmatpush1.msra.mxu0 0.0
    %4569 = vmatprep.subr.mxu0 0.0
    %4570 = vmatpush1.msra.mxu0 0.0
    %4571 = vmatprep.subr.mxu0 0.0
    %4572 = vmatpush1.msra.mxu0 0.0
    %4573 = vmatprep.subr.mxu0 0.0
    %4574 = vmatpush1.msra.mxu0 0.0
    %4575 = vmatprep.subr.mxu0 0.0
    %4576 = vmatpush1.msra.mxu0 0.0
    %4577 = vmatprep.subr.mxu0 0.0
    %4578 = vmatpush1.msra.mxu0 0.0
    %4579 = vmatprep.subr.mxu0 0.0
    %4580 = vmatpush1.msra.mxu0 0.0
    %4581 = vmatprep.subr.mxu0 0.0
    %4582 = vmatpush1.msra.mxu0 0.0
    %4583 = vmatprep.subr.mxu0 0.0
    %4584 = vmatpush1.msra.mxu0 0.0
    %4585 = vmatprep.subr.mxu0 0.0
    %4586 = vmatpush1.msra.mxu0 0.0
    %4587 = vmatprep.subr.mxu0 0.0
    %4588 = vmatpush1.msra.mxu0 0.0
    %4589 = vmatprep.subr.mxu0 0.0
    %4590 = vmatpush1.msra.mxu0 0.0
    %4591 = vmatprep.subr.mxu0 0.0
    %4592 = vmatpush1.msra.mxu0 0.0
    %4593 = vmatprep.subr.mxu0 0.0
    %4594 = vmatpush1.msra.mxu0 0.0
    %4595 = vmatprep.subr.mxu0 0.0
    %4596 = vmatpush1.msra.mxu0 0.0
    %4597 = vmatprep.subr.mxu0 0.0
    %4598 = vmatpush1.msra.mxu0 0.0
    %4599 = vmatprep.subr.mxu0 0.0
    %4600 = vmatpush1.msra.mxu0 0.0
    %4601 = vmatprep.subr.mxu0 0.0
    %4602 = vmatpush1.msra.mxu0 0.0
    %4603 = vmatprep.subr.mxu0 0.0
    %4604 = vmatpush1.msra.mxu0 0.0
    %4605 = vmatprep.subr.mxu0 0.0
    %4606 = vmatpush1.msra.mxu0 0.0
    %4607 = vmatprep.subr.mxu0 0.0
    %4608 = vmatpush1.msra.mxu0 0.0
    %4609 = vmatprep.mubr.f32.mxu0 0.0
    %v4610 = vand.u32 %v4155, 4294901760
    %4611 = vmatmul.mubr.f32.gmra.mrb[0].mxu0 %v4610
    %v4612 = vpop.f32.mrb[0].mxu0
    %v4613 = vadd.f32 %v4540, %v4612
    %v4614 = vpop.f32.mrb[0].mxu0
    %4615 = vdwg.mxu0
    %v4616 = vadd.f32 %v2018, %v4613
    %v4618 = vrot.slane %v4613, 2
    %v4620 = vadd.f32 %v2018, %v4618
    %v4622 = vrot.slane %v4620, 6
    %4623 = vrot.lane.b32.xlu0 %v4622, 64
    %v4624 = vpop.permute.xlu0 %4623
    %v4626 = vsel %vm2501, %v4616, %v4624
    %v4627 = vxor.u32 %v4626, 2147483648
    %v4628 = vmul.f32 %v4627, 1.442695
    %v4629 = vpow.pop %v4628
    %v4630 = vadd.f32 %v4629, 1.0
    %v4631 = vrcp.pop %v4630
    %v4632 = vmul.f32 1.0, %v4631
    %v4633 = vtanh.pop %v4626
    %v4634 = vmul.f32 %v4632, %v4119
    %4636 = vrot.lane.b32.xlu0 %v4633, 96
    %v4637 = vpop.permute.xlu0 %4636
    %v4639 = vmul.f32 %v4632, %v4637
    %4641 = vrot.lane.b32.xlu0 %v4639, 16
    %v4642 = vpop.permute.xlu0 %4641
    %v4644 = vadd.f32 %v4634, %v4642
    %v4645 = vtanh.pop %v4644
    %4647 = vrot.lane.b32.xlu0 %v4645, 32
    %v4648 = vpop.permute.xlu0 %4647
    %v4650 = vmul.f32 %v4632, %v4648
    %v4653 = vunpack.c.l.s4 1983009808
    %v4654 = vunpack.c.0.s8 %v4653
    %v4655 = vlaneseq
    %v4656 = vshrl.u32 %v4655, 7
    %v4657 = vsub.s32 %v4654, %v4656
    %v4658 = vrot.slane %v4650, %v4657
    %4659 = vrot.lane.b32.xlu0 %v4658, 80
    %v4660 = vpop.permute.xlu0 %4659
    %4662 = vst.msk [vmem:[#allocation3 + $0x4] sm:$0x1] %vm2538, %v4660
    %v4663 = vcombine.high %v4658, %v4658
    %4664 = vrot.lane.b32.xlu0 %v4663, 96
    %v4665 = vpop.permute.xlu0 %4664
    %4667 = vst.msk [vmem:[#allocation3 + $0x4] sm:$0x1] %vm2558, %v4665
    %v4668 = vrot.slane %v4658, 7
    %v4669 = vrot.slane %v4668, 2
    %4670 = vrot.lane.b32.xlu0 %v4669, 80
    %v4671 = vpop.permute.xlu0 %4670
    %4673 = vst.msk [vmem:[#allocation3 + $0x1] sm:$0x1] %vm2538, %v4671
    %v4674 = vrot.slane %v4663, 7
    %v4675 = vrot.slane %v4674, 2
    %4676 = vrot.lane.b32.xlu0 %v4675, 96
    %v4677 = vpop.permute.xlu0 %4676
    %4679 = vst.msk [vmem:[#allocation3 + $0x1] sm:$0x1] %vm2558, %v4677
    %4680 = vrot.lane.b32.xlu0 %v4650, 80
    %v4681 = vpop.permute.xlu0 %4680
    %v4682 = vsel %vm1472, %v4681, 0
    %4684 = vmatprep.subr.mxu0 0.0
    %v4685 = vand.u32 %v2027, 4294901760
    %4686 = vmatpush1.msra.mxu0 %v4685
    %4687 = vmatprep.subr.mxu0 0.0
    %v4688 = vand.u32 %v2028, 4294901760
    %4689 = vmatpush1.msra.mxu0 %v4688
    %4690 = vmatprep.subr.mxu0 0.0
    %4691 = vmatpush1.msra.mxu0 0.0
    %4692 = vmatprep.subr.mxu0 0.0
    %4693 = vmatpush1.msra.mxu0 0.0
    %4694 = vmatprep.subr.mxu0 0.0
    %4695 = vmatpush1.msra.mxu0 0.0
    %4696 = vmatprep.subr.mxu0 0.0
    %4697 = vmatpush1.msra.mxu0 0.0
    %4698 = vmatprep.subr.mxu0 0.0
    %4699 = vmatpush1.msra.mxu0 0.0
    %4700 = vmatprep.subr.mxu0 0.0
    %4701 = vmatpush1.msra.mxu0 0.0
    %4702 = vmatprep.subr.mxu0 0.0
    %4703 = vmatpush1.msra.mxu0 0.0
    %4704 = vmatprep.subr.mxu0 0.0
    %4705 = vmatpush1.msra.mxu0 0.0
    %4706 = vmatprep.subr.mxu0 0.0
    %4707 = vmatpush1.msra.mxu0 0.0
    %4708 = vmatprep.subr.mxu0 0.0
    %4709 = vmatpush1.msra.mxu0 0.0
    %4710 = vmatprep.subr.mxu0 0.0
    %4711 = vmatpush1.msra.mxu0 0.0
    %4712 = vmatprep.subr.mxu0 0.0
    %4713 = vmatpush1.msra.mxu0 0.0
    %4714 = vmatprep.subr.mxu0 0.0
    %4715 = vmatpush1.msra.mxu0 0.0
    %4716 = vmatprep.subr.mxu0 0.0
    %4717 = vmatpush1.msra.mxu0 0.0
    %4718 = vmatprep.subr.mxu0 0.0
    %4719 = vmatpush1.msra.mxu0 0.0
    %4720 = vmatprep.subr.mxu0 0.0
    %4721 = vmatpush1.msra.mxu0 0.0
    %4722 = vmatprep.subr.mxu0 0.0
    %4723 = vmatpush1.msra.mxu0 0.0
    %4724 = vmatprep.subr.mxu0 0.0
    %4725 = vmatpush1.msra.mxu0 0.0
    %4726 = vmatprep.subr.mxu0 0.0
    %4727 = vmatpush1.msra.mxu0 0.0
    %4728 = vmatprep.subr.mxu0 0.0
    %4729 = vmatpush1.msra.mxu0 0.0
    %4730 = vmatprep.subr.mxu0 0.0
    %4731 = vmatpush1.msra.mxu0 0.0
    %4732 = vmatprep.subr.mxu0 0.0
    %4733 = vmatpush1.msra.mxu0 0.0
    %4734 = vmatprep.subr.mxu0 0.0
    %4735 = vmatpush1.msra.mxu0 0.0
    %4736 = vmatprep.subr.mxu0 0.0
    %4737 = vmatpush1.msra.mxu0 0.0
    %4738 = vmatprep.subr.mxu0 0.0
    %4739 = vmatpush1.msra.mxu0 0.0
    %4740 = vmatprep.subr.mxu0 0.0
    %4741 = vmatpush1.msra.mxu0 0.0
    %4742 = vmatprep.subr.mxu0 0.0
    %4743 = vmatpush1.msra.mxu0 0.0
    %4744 = vmatprep.subr.mxu0 0.0
    %4745 = vmatpush1.msra.mxu0 0.0
    %4746 = vmatprep.subr.mxu0 0.0
    %4747 = vmatpush1.msra.mxu0 0.0
    %4748 = vmatprep.subr.mxu0 0.0
    %4749 = vmatpush1.msra.mxu0 0.0
    %4750 = vmatprep.mubr.f32.mxu0 0.0
    %v4751 = vand.u32 %v4682, 4294901760
    %v4752 = vsub.f32 %v4682, %v4751
    %v4753 = vand.u32 %v4752, 4294901760
    %v4754 = vsub.f32 %v4752, %v4753
    %v4755 = vand.u32 %v4754, 4294901760
    %4756 = vmatmul.mubr.f32.gmra.mrb[0].mxu0 %v4755
    %v4757 = vpop.f32.mrb[0].mxu0
    %v4758 = vadd.f32 0.0, %v4757
    %v4759 = vpop.f32.mrb[0].mxu0
    %4760 = vdwg.mxu0
    %4761 = vmatprep.subr.mxu0 0.0
    %v4762 = vand.u32 %v2027, 4294901760
    %v4763 = vsub.f32 %v2027, %v4762
    %v4764 = vand.u32 %v4763, 4294901760
    %v4765 = vsub.f32 %v4763, %v4764
    %v4766 = vand.u32 %v4765, 4294901760
    %4767 = vmatpush1.msra.mxu0 %v4766
    %4768 = vmatprep.subr.mxu0 0.0
    %v4769 = vand.u32 %v2028, 4294901760
    %v4770 = vsub.f32 %v2028, %v4769
    %v4771 = vand.u32 %v4770, 4294901760
    %v4772 = vsub.f32 %v4770, %v4771
    %v4773 = vand.u32 %v4772, 4294901760
    %4774 = vmatpush1.msra.mxu0 %v4773
    %4775 = vmatprep.subr.mxu0 0.0
    %4776 = vmatpush1.msra.mxu0 0.0
    %4777 = vmatprep.subr.mxu0 0.0
    %4778 = vmatpush1.msra.mxu0 0.0
    %4779 = vmatprep.subr.mxu0 0.0
    %4780 = vmatpush1.msra.mxu0 0.0
    %4781 = vmatprep.subr.mxu0 0.0
    %4782 = vmatpush1.msra.mxu0 0.0
    %4783 = vmatprep.subr.mxu0 0.0
    %4784 = vmatpush1.msra.mxu0 0.0
    %4785 = vmatprep.subr.mxu0 0.0
    %4786 = vmatpush1.msra.mxu0 0.0
    %4787 = vmatprep.subr.mxu0 0.0
    %4788 = vmatpush1.msra.mxu0 0.0
    %4789 = vmatprep.subr.mxu0 0.0
    %4790 = vmatpush1.msra.mxu0 0.0
    %4791 = vmatprep.subr.mxu0 0.0
    %4792 = vmatpush1.msra.mxu0 0.0
    %4793 = vmatprep.subr.mxu0 0.0
    %4794 = vmatpush1.msra.mxu0 0.0
    %4795 = vmatprep.subr.mxu0 0.0
    %4796 = vmatpush1.msra.mxu0 0.0
    %4797 = vmatprep.subr.mxu0 0.0
    %4798 = vmatpush1.msra.mxu0 0.0
    %4799 = vmatprep.subr.mxu0 0.0
    %4800 = vmatpush1.msra.mxu0 0.0
    %4801 = vmatprep.subr.mxu0 0.0
    %4802 = vmatpush1.msra.mxu0 0.0
    %4803 = vmatprep.subr.mxu0 0.0
    %4804 = vmatpush1.msra.mxu0 0.0
    %4805 = vmatprep.subr.mxu0 0.0
    %4806 = vmatpush1.msra.mxu0 0.0
    %4807 = vmatprep.subr.mxu0 0.0
    %4808 = vmatpush1.msra.mxu0 0.0
    %4809 = vmatprep.subr.mxu0 0.0
    %4810 = vmatpush1.msra.mxu0 0.0
    %4811 = vmatprep.subr.mxu0 0.0
    %4812 = vmatpush1.msra.mxu0 0.0
    %4813 = vmatprep.subr.mxu0 0.0
    %4814 = vmatpush1.msra.mxu0 0.0
    %4815 = vmatprep.subr.mxu0 0.0
    %4816 = vmatpush1.msra.mxu0 0.0
    %4817 = vmatprep.subr.mxu0 0.0
    %4818 = vmatpush1.msra.mxu0 0.0
    %4819 = vmatprep.subr.mxu0 0.0
    %4820 = vmatpush1.msra.mxu0 0.0
    %4821 = vmatprep.subr.mxu0 0.0
    %4822 = vmatpush1.msra.mxu0 0.0
    %4823 = vmatprep.subr.mxu0 0.0
    %4824 = vmatpush1.msra.mxu0 0.0
    %4825 = vmatprep.subr.mxu0 0.0
    %4826 = vmatpush1.msra.mxu0 0.0
    %4827 = vmatprep.subr.mxu0 0.0
    %4828 = vmatpush1.msra.mxu0 0.0
    %4829 = vmatprep.subr.mxu0 0.0
    %4830 = vmatpush1.msra.mxu0 0.0
    %4831 = vmatprep.subr.mxu0 0.0
    %4832 = vmatpush1.msra.mxu0 0.0
    %4833 = vmatprep.subr.mxu0 0.0
    %4834 = vmatpush1.msra.mxu0 0.0
    %4835 = vmatprep.mubr.f32.mxu0 0.0
    %v4836 = vand.u32 %v4682, 4294901760
    %4837 = vmatmul.mubr.f32.gmra.mrb[0].mxu0 %v4836
    %v4838 = vpop.f32.mrb[0].mxu0
    %v4839 = vadd.f32 %v4758, %v4838
    %v4840 = vpop.f32.mrb[0].mxu0
    %4841 = vdwg.mxu0
    %4842 = vmatprep.subr.mxu0 0.0
    %v4843 = vand.u32 %v2027, 4294901760
    %v4844 = vsub.f32 %v2027, %v4843
    %4845 = vmatpush1.msra.mxu0 %v4844
    %4846 = vmatprep.subr.mxu0 0.0
    %v4847 = vand.u32 %v2028, 4294901760
    %v4848 = vsub.f32 %v2028, %v4847
    %4849 = vmatpush1.msra.mxu0 %v4848
    %4850 = vmatprep.subr.mxu0 0.0
    %4851 = vmatpush1.msra.mxu0 0.0
    %4852 = vmatprep.subr.mxu0 0.0
    %4853 = vmatpush1.msra.mxu0 0.0
    %4854 = vmatprep.subr.mxu0 0.0
    %4855 = vmatpush1.msra.mxu0 0.0
    %4856 = vmatprep.subr.mxu0 0.0
    %4857 = vmatpush1.msra.mxu0 0.0
    %4858 = vmatprep.subr.mxu0 0.0
    %4859 = vmatpush1.msra.mxu0 0.0
    %4860 = vmatprep.subr.mxu0 0.0
    %4861 = vmatpush1.msra.mxu0 0.0
    %4862 = vmatprep.subr.mxu0 0.0
    %4863 = vmatpush1.msra.mxu0 0.0
    %4864 = vmatprep.subr.mxu0 0.0
    %4865 = vmatpush1.msra.mxu0 0.0
    %4866 = vmatprep.subr.mxu0 0.0
    %4867 = vmatpush1.msra.mxu0 0.0
    %4868 = vmatprep.subr.mxu0 0.0
    %4869 = vmatpush1.msra.mxu0 0.0
    %4870 = vmatprep.subr.mxu0 0.0
    %4871 = vmatpush1.msra.mxu0 0.0
    %4872 = vmatprep.subr.mxu0 0.0
    %4873 = vmatpush1.msra.mxu0 0.0
    %4874 = vmatprep.subr.mxu0 0.0
    %4875 = vmatpush1.msra.mxu0 0.0
    %4876 = vmatprep.subr.mxu0 0.0
    %4877 = vmatpush1.msra.mxu0 0.0
    %4878 = vmatprep.subr.mxu0 0.0
    %4879 = vmatpush1.msra.mxu0 0.0
    %4880 = vmatprep.subr.mxu0 0.0
    %4881 = vmatpush1.msra.mxu0 0.0
    %4882 = vmatprep.subr.mxu0 0.0
    %4883 = vmatpush1.msra.mxu0 0.0
    %4884 = vmatprep.subr.mxu0 0.0
    %4885 = vmatpush1.msra.mxu0 0.0
    %4886 = vmatprep.subr.mxu0 0.0
    %4887 = vmatpush1.msra.mxu0 0.0
    %4888 = vmatprep.subr.mxu0 0.0
    %4889 = vmatpush1.msra.mxu0 0.0
    %4890 = vmatprep.subr.mxu0 0.0
    %4891 = vmatpush1.msra.mxu0 0.0
    %4892 = vmatprep.subr.mxu0 0.0
    %4893 = vmatpush1.msra.mxu0 0.0
    %4894 = vmatprep.subr.mxu0 0.0
    %4895 = vmatpush1.msra.mxu0 0.0
    %4896 = vmatprep.subr.mxu0 0.0
    %4897 = vmatpush1.msra.mxu0 0.0
    %4898 = vmatprep.subr.mxu0 0.0
    %4899 = vmatpush1.msra.mxu0 0.0
    %4900 = vmatprep.subr.mxu0 0.0
    %4901 = vmatpush1.msra.mxu0 0.0
    %4902 = vmatprep.subr.mxu0 0.0
    %4903 = vmatpush1.msra.mxu0 0.0
    %4904 = vmatprep.subr.mxu0 0.0
    %4905 = vmatpush1.msra.mxu0 0.0
    %4906 = vmatprep.subr.mxu0 0.0
    %4907 = vmatpush1.msra.mxu0 0.0
    %4908 = vmatprep.subr.mxu0 0.0
    %4909 = vmatpush1.msra.mxu0 0.0
    %4910 = vmatprep.mubr.f32.mxu0 0.0
    %v4911 = vand.u32 %v4682, 4294901760
    %v4912 = vsub.f32 %v4682, %v4911
    %4913 = vmatmul.mubr.f32.gmra.mrb[0].mxu0 %v4912
    %v4914 = vpop.f32.mrb[0].mxu0
    %v4915 = vadd.f32 %v4839, %v4914
    %v4916 = vpop.f32.mrb[0].mxu0
    %4917 = vdwg.mxu0
    %4918 = vmatprep.subr.mxu0 0.0
    %v4919 = vand.u32 %v2027, 4294901760
    %4920 = vmatpush1.msra.mxu0 %v4919
    %4921 = vmatprep.subr.mxu0 0.0
    %v4922 = vand.u32 %v2028, 4294901760
    %4923 = vmatpush1.msra.mxu0 %v4922
    %4924 = vmatprep.subr.mxu0 0.0
    %4925 = vmatpush1.msra.mxu0 0.0
    %4926 = vmatprep.subr.mxu0 0.0
    %4927 = vmatpush1.msra.mxu0 0.0
    %4928 = vmatprep.subr.mxu0 0.0
    %4929 = vmatpush1.msra.mxu0 0.0
    %4930 = vmatprep.subr.mxu0 0.0
    %4931 = vmatpush1.msra.mxu0 0.0
    %4932 = vmatprep.subr.mxu0 0.0
    %4933 = vmatpush1.msra.mxu0 0.0
    %4934 = vmatprep.subr.mxu0 0.0
    %4935 = vmatpush1.msra.mxu0 0.0
    %4936 = vmatprep.subr.mxu0 0.0
    %4937 = vmatpush1.msra.mxu0 0.0
    %4938 = vmatprep.subr.mxu0 0.0
    %4939 = vmatpush1.msra.mxu0 0.0
    %4940 = vmatprep.subr.mxu0 0.0
    %4941 = vmatpush1.msra.mxu0 0.0
    %4942 = vmatprep.subr.mxu0 0.0
    %4943 = vmatpush1.msra.mxu0 0.0
    %4944 = vmatprep.subr.mxu0 0.0
    %4945 = vmatpush1.msra.mxu0 0.0
    %4946 = vmatprep.subr.mxu0 0.0
    %4947 = vmatpush1.msra.mxu0 0.0
    %4948 = vmatprep.subr.mxu0 0.0
    %4949 = vmatpush1.msra.mxu0 0.0
    %4950 = vmatprep.subr.mxu0 0.0
    %4951 = vmatpush1.msra.mxu0 0.0
    %4952 = vmatprep.subr.mxu0 0.0
    %4953 = vmatpush1.msra.mxu0 0.0
    %4954 = vmatprep.subr.mxu0 0.0
    %4955 = vmatpush1.msra.mxu0 0.0
    %4956 = vmatprep.subr.mxu0 0.0
    %4957 = vmatpush1.msra.mxu0 0.0
    %4958 = vmatprep.subr.mxu0 0.0
    %4959 = vmatpush1.msra.mxu0 0.0
    %4960 = vmatprep.subr.mxu0 0.0
    %4961 = vmatpush1.msra.mxu0 0.0
    %4962 = vmatprep.subr.mxu0 0.0
    %4963 = vmatpush1.msra.mxu0 0.0
    %4964 = vmatprep.subr.mxu0 0.0
    %4965 = vmatpush1.msra.mxu0 0.0
    %4966 = vmatprep.subr.mxu0 0.0
    %4967 = vmatpush1.msra.mxu0 0.0
    %4968 = vmatprep.subr.mxu0 0.0
    %4969 = vmatpush1.msra.mxu0 0.0
    %4970 = vmatprep.subr.mxu0 0.0
    %4971 = vmatpush1.msra.mxu0 0.0
    %4972 = vmatprep.subr.mxu0 0.0
    %4973 = vmatpush1.msra.mxu0 0.0
    %4974 = vmatprep.subr.mxu0 0.0
    %4975 = vmatpush1.msra.mxu0 0.0
    %4976 = vmatprep.subr.mxu0 0.0
    %4977 = vmatpush1.msra.mxu0 0.0
    %4978 = vmatprep.subr.mxu0 0.0
    %4979 = vmatpush1.msra.mxu0 0.0
    %4980 = vmatprep.subr.mxu0 0.0
    %4981 = vmatpush1.msra.mxu0 0.0
    %4982 = vmatprep.subr.mxu0 0.0
    %4983 = vmatpush1.msra.mxu0 0.0
    %4984 = vmatprep.mubr.f32.mxu0 0.0
    %v4985 = vand.u32 %v4682, 4294901760
    %v4986 = vsub.f32 %v4682, %v4985
    %v4987 = vand.u32 %v4986, 4294901760
    %4988 = vmatmul.mubr.f32.gmra.mrb[0].mxu0 %v4987
    %v4989 = vpop.f32.mrb[0].mxu0
    %v4990 = vadd.f32 %v4915, %v4989
    %v4991 = vpop.f32.mrb[0].mxu0
    %4992 = vdwg.mxu0
    %4993 = vmatprep.subr.mxu0 0.0
    %v4994 = vand.u32 %v2027, 4294901760
    %v4995 = vsub.f32 %v2027, %v4994
    %v4996 = vand.u32 %v4995, 4294901760
    %4997 = vmatpush1.msra.mxu0 %v4996
    %4998 = vmatprep.subr.mxu0 0.0
    %v4999 = vand.u32 %v2028, 4294901760
    %v5000 = vsub.f32 %v2028, %v4999
    %v5001 = vand.u32 %v5000, 4294901760
    %5002 = vmatpush1.msra.mxu0 %v5001
    %5003 = vmatprep.subr.mxu0 0.0
    %5004 = vmatpush1.msra.mxu0 0.0
    %5005 = vmatprep.subr.mxu0 0.0
    %5006 = vmatpush1.msra.mxu0 0.0
    %5007 = vmatprep.subr.mxu0 0.0
    %5008 = vmatpush1.msra.mxu0 0.0
    %5009 = vmatprep.subr.mxu0 0.0
    %5010 = vmatpush1.msra.mxu0 0.0
    %5011 = vmatprep.subr.mxu0 0.0
    %5012 = vmatpush1.msra.mxu0 0.0
    %5013 = vmatprep.subr.mxu0 0.0
    %5014 = vmatpush1.msra.mxu0 0.0
    %5015 = vmatprep.subr.mxu0 0.0
    %5016 = vmatpush1.msra.mxu0 0.0
    %5017 = vmatprep.subr.mxu0 0.0
    %5018 = vmatpush1.msra.mxu0 0.0
    %5019 = vmatprep.subr.mxu0 0.0
    %5020 = vmatpush1.msra.mxu0 0.0
    %5021 = vmatprep.subr.mxu0 0.0
    %5022 = vmatpush1.msra.mxu0 0.0
    %5023 = vmatprep.subr.mxu0 0.0
    %5024 = vmatpush1.msra.mxu0 0.0
    %5025 = vmatprep.subr.mxu0 0.0
    %5026 = vmatpush1.msra.mxu0 0.0
    %5027 = vmatprep.subr.mxu0 0.0
    %5028 = vmatpush1.msra.mxu0 0.0
    %5029 = vmatprep.subr.mxu0 0.0
    %5030 = vmatpush1.msra.mxu0 0.0
    %5031 = vmatprep.subr.mxu0 0.0
    %5032 = vmatpush1.msra.mxu0 0.0
    %5033 = vmatprep.subr.mxu0 0.0
    %5034 = vmatpush1.msra.mxu0 0.0
    %5035 = vmatprep.subr.mxu0 0.0
    %5036 = vmatpush1.msra.mxu0 0.0
    %5037 = vmatprep.subr.mxu0 0.0
    %5038 = vmatpush1.msra.mxu0 0.0
    %5039 = vmatprep.subr.mxu0 0.0
    %5040 = vmatpush1.msra.mxu0 0.0
    %5041 = vmatprep.subr.mxu0 0.0
    %5042 = vmatpush1.msra.mxu0 0.0
    %5043 = vmatprep.subr.mxu0 0.0
    %5044 = vmatpush1.msra.mxu0 0.0
    %5045 = vmatprep.subr.mxu0 0.0
    %5046 = vmatpush1.msra.mxu0 0.0
    %5047 = vmatprep.subr.mxu0 0.0
    %5048 = vmatpush1.msra.mxu0 0.0
    %5049 = vmatprep.subr.mxu0 0.0
    %5050 = vmatpush1.msra.mxu0 0.0
    %5051 = vmatprep.subr.mxu0 0.0
    %5052 = vmatpush1.msra.mxu0 0.0
    %5053 = vmatprep.subr.mxu0 0.0
    %5054 = vmatpush1.msra.mxu0 0.0
    %5055 = vmatprep.subr.mxu0 0.0
    %5056 = vmatpush1.msra.mxu0 0.0
    %5057 = vmatprep.subr.mxu0 0.0
    %5058 = vmatpush1.msra.mxu0 0.0
    %5059 = vmatprep.subr.mxu0 0.0
    %5060 = vmatpush1.msra.mxu0 0.0
    %5061 = vmatprep.subr.mxu0 0.0
    %5062 = vmatpush1.msra.mxu0 0.0
    %5063 = vmatprep.mubr.f32.mxu0 0.0
    %v5064 = vand.u32 %v4682, 4294901760
    %5065 = vmatmul.mubr.f32.gmra.mrb[0].mxu0 %v5064
    %v5066 = vpop.f32.mrb[0].mxu0
    %v5067 = vadd.f32 %v4990, %v5066
    %v5068 = vpop.f32.mrb[0].mxu0
    %5069 = vdwg.mxu0
    %5070 = vmatprep.subr.mxu0 0.0
    %v5071 = vand.u32 %v2027, 4294901760
    %5072 = vmatpush1.msra.mxu0 %v5071
    %5073 = vmatprep.subr.mxu0 0.0
    %v5074 = vand.u32 %v2028, 4294901760
    %5075 = vmatpush1.msra.mxu0 %v5074
    %5076 = vmatprep.subr.mxu0 0.0
    %5077 = vmatpush1.msra.mxu0 0.0
    %5078 = vmatprep.subr.mxu0 0.0
    %5079 = vmatpush1.msra.mxu0 0.0
    %5080 = vmatprep.subr.mxu0 0.0
    %5081 = vmatpush1.msra.mxu0 0.0
    %5082 = vmatprep.subr.mxu0 0.0
    %5083 = vmatpush1.msra.mxu0 0.0
    %5084 = vmatprep.subr.mxu0 0.0
    %5085 = vmatpush1.msra.mxu0 0.0
    %5086 = vmatprep.subr.mxu0 0.0
    %5087 = vmatpush1.msra.mxu0 0.0
    %5088 = vmatprep.subr.mxu0 0.0
    %5089 = vmatpush1.msra.mxu0 0.0
    %5090 = vmatprep.subr.mxu0 0.0
    %5091 = vmatpush1.msra.mxu0 0.0
    %5092 = vmatprep.subr.mxu0 0.0
    %5093 = vmatpush1.msra.mxu0 0.0
    %5094 = vmatprep.subr.mxu0 0.0
    %5095 = vmatpush1.msra.mxu0 0.0
    %5096 = vmatprep.subr.mxu0 0.0
    %5097 = vmatpush1.msra.mxu0 0.0
    %5098 = vmatprep.subr.mxu0 0.0
    %5099 = vmatpush1.msra.mxu0 0.0
    %5100 = vmatprep.subr.mxu0 0.0
    %5101 = vmatpush1.msra.mxu0 0.0
    %5102 = vmatprep.subr.mxu0 0.0
    %5103 = vmatpush1.msra.mxu0 0.0
    %5104 = vmatprep.subr.mxu0 0.0
    %5105 = vmatpush1.msra.mxu0 0.0
    %5106 = vmatprep.subr.mxu0 0.0
    %5107 = vmatpush1.msra.mxu0 0.0
    %5108 = vmatprep.subr.mxu0 0.0
    %5109 = vmatpush1.msra.mxu0 0.0
    %5110 = vmatprep.subr.mxu0 0.0
    %5111 = vmatpush1.msra.mxu0 0.0
    %5112 = vmatprep.subr.mxu0 0.0
    %5113 = vmatpush1.msra.mxu0 0.0
    %5114 = vmatprep.subr.mxu0 0.0
    %5115 = vmatpush1.msra.mxu0 0.0
    %5116 = vmatprep.subr.mxu0 0.0
    %5117 = vmatpush1.msra.mxu0 0.0
    %5118 = vmatprep.subr.mxu0 0.0
    %5119 = vmatpush1.msra.mxu0 0.0
    %5120 = vmatprep.subr.mxu0 0.0
    %5121 = vmatpush1.msra.mxu0 0.0
    %5122 = vmatprep.subr.mxu0 0.0
    %5123 = vmatpush1.msra.mxu0 0.0
    %5124 = vmatprep.subr.mxu0 0.0
    %5125 = vmatpush1.msra.mxu0 0.0
    %5126 = vmatprep.subr.mxu0 0.0
    %5127 = vmatpush1.msra.mxu0 0.0
    %5128 = vmatprep.subr.mxu0 0.0
    %5129 = vmatpush1.msra.mxu0 0.0
    %5130 = vmatprep.subr.mxu0 0.0
    %5131 = vmatpush1.msra.mxu0 0.0
    %5132 = vmatprep.subr.mxu0 0.0
    %5133 = vmatpush1.msra.mxu0 0.0
    %5134 = vmatprep.subr.mxu0 0.0
    %5135 = vmatpush1.msra.mxu0 0.0
    %5136 = vmatprep.mubr.f32.mxu0 0.0
    %v5137 = vand.u32 %v4682, 4294901760
    %5138 = vmatmul.mubr.f32.gmra.mrb[0].mxu0 %v5137
    %v5139 = vpop.f32.mrb[0].mxu0
    %v5140 = vadd.f32 %v5067, %v5139
    %v5141 = vpop.f32.mrb[0].mxu0
    %5142 = vdwg.mxu0
    %v5144 = vrot.slane %v5140, 6
    %v5146 = vadd.f32 %v2018, %v5144
    %v5147 = vrot.slane %v5140, 4
    %v5149 = vadd.f32 %v2012, %v5147
    %v5151 = vrot.slane %v5146, 2
    %v5154 = vrot.slane %v5149, 4
    %5155 = vrot.lane.b32.xlu0 %v5154, 64
    %v5156 = vpop.permute.xlu0 %5155
    %v5158 = vsel %vm2501, %v5151, %v5156
    %v5159 = vxor.u32 %v5158, 2147483648
    %v5160 = vmul.f32 %v5159, 1.442695
    %v5161 = vpow.pop %v5160
    %v5162 = vadd.f32 %v5161, 1.0
    %v5163 = vrcp.pop %v5162
    %v5164 = vmul.f32 1.0, %v5163
    %v5165 = vtanh.pop %v5158
    %v5166 = vmul.f32 %v5164, %v4644
    %5168 = vrot.lane.b32.xlu0 %v5165, 96
    %v5169 = vpop.permute.xlu0 %5168
    %v5171 = vmul.f32 %v5164, %v5169
    %5173 = vrot.lane.b32.xlu0 %v5171, 16
    %v5174 = vpop.permute.xlu0 %5173
    %v5176 = vadd.f32 %v5166, %v5174
    %v5177 = vtanh.pop %v5176
    %5179 = vrot.lane.b32.xlu0 %v5177, 32
    %v5180 = vpop.permute.xlu0 %5179
    %v5182 = vmul.f32 %v5164, %v5180
    %v5185 = vunpack.c.l.s4 1983009808
    %v5186 = vunpack.c.0.s8 %v5185
    %v5187 = vlaneseq
    %v5188 = vshrl.u32 %v5187, 7
    %v5189 = vsub.s32 %v5186, %v5188
    %v5190 = vrot.slane %v5182, %v5189
    %5191 = vrot.lane.b32.xlu0 %v5190, 112
    %v5192 = vpop.permute.xlu0 %5191
    %5194 = vst.msk [vmem:[#allocation3 + $0x1] sm:$0x1] %vm2551, %v5192
    %v5195 = vcombine.high %v5190, %v5190
    %5196 = vrot.lane.b32.xlu0 %v5195, 32
    %v5197 = vpop.permute.xlu0 %5196
    %5199 = vst.msk [vmem:[#allocation3 + $0x2] sm:$0x1] %vm3092, %v5197
    %v5200 = vrot.slane %v5190, 7
    %v5201 = vrot.slane %v5200, 2
    %5202 = vrot.lane.b32.xlu0 %v5201, 16
    %v5203 = vpop.permute.xlu0 %5202
    %5205 = vst.msk [vmem:[#allocation3 + $0x1] sm:$0x1] %vm3074, %v5203
    %v5206 = vrot.slane %v5195, 7
    %v5207 = vrot.slane %v5206, 2
    %5208 = vrot.lane.b32.xlu0 %v5207, 64
    %v5209 = vpop.permute.xlu0 %5208
    %5211 = vst.msk [vmem:[#allocation3 + $0x2] sm:$0x1] %vm2544, %v5209
    %5212 = vrot.lane.b32.xlu0 %v5182, 80
    %v5213 = vpop.permute.xlu0 %5212
    %v5214 = vsel %vm1472, %v5213, 0
    %5216 = vmatprep.subr.mxu0 0.0
    %v5217 = vand.u32 %v2027, 4294901760
    %5218 = vmatpush1.msra.mxu0 %v5217
    %5219 = vmatprep.subr.mxu0 0.0
    %v5220 = vand.u32 %v2028, 4294901760
    %5221 = vmatpush1.msra.mxu0 %v5220
    %5222 = vmatprep.subr.mxu0 0.0
    %5223 = vmatpush1.msra.mxu0 0.0
    %5224 = vmatprep.subr.mxu0 0.0
    %5225 = vmatpush1.msra.mxu0 0.0
    %5226 = vmatprep.subr.mxu0 0.0
    %5227 = vmatpush1.msra.mxu0 0.0
    %5228 = vmatprep.subr.mxu0 0.0
    %5229 = vmatpush1.msra.mxu0 0.0
    %5230 = vmatprep.subr.mxu0 0.0
    %5231 = vmatpush1.msra.mxu0 0.0
    %5232 = vmatprep.subr.mxu0 0.0
    %5233 = vmatpush1.msra.mxu0 0.0
    %5234 = vmatprep.subr.mxu0 0.0
    %5235 = vmatpush1.msra.mxu0 0.0
    %5236 = vmatprep.subr.mxu0 0.0
    %5237 = vmatpush1.msra.mxu0 0.0
    %5238 = vmatprep.subr.mxu0 0.0
    %5239 = vmatpush1.msra.mxu0 0.0
    %5240 = vmatprep.subr.mxu0 0.0
    %5241 = vmatpush1.msra.mxu0 0.0
    %5242 = vmatprep.subr.mxu0 0.0
    %5243 = vmatpush1.msra.mxu0 0.0
    %5244 = vmatprep.subr.mxu0 0.0
    %5245 = vmatpush1.msra.mxu0 0.0
    %5246 = vmatprep.subr.mxu0 0.0
    %5247 = vmatpush1.msra.mxu0 0.0
    %5248 = vmatprep.subr.mxu0 0.0
    %5249 = vmatpush1.msra.mxu0 0.0
    %5250 = vmatprep.subr.mxu0 0.0
    %5251 = vmatpush1.msra.mxu0 0.0
    %5252 = vmatprep.subr.mxu0 0.0
    %5253 = vmatpush1.msra.mxu0 0.0
    %5254 = vmatprep.subr.mxu0 0.0
    %5255 = vmatpush1.msra.mxu0 0.0
    %5256 = vmatprep.subr.mxu0 0.0
    %5257 = vmatpush1.msra.mxu0 0.0
    %5258 = vmatprep.subr.mxu0 0.0
    %5259 = vmatpush1.msra.mxu0 0.0
    %5260 = vmatprep.subr.mxu0 0.0
    %5261 = vmatpush1.msra.mxu0 0.0
    %5262 = vmatprep.subr.mxu0 0.0
    %5263 = vmatpush1.msra.mxu0 0.0
    %5264 = vmatprep.subr.mxu0 0.0
    %5265 = vmatpush1.msra.mxu0 0.0
    %5266 = vmatprep.subr.mxu0 0.0
    %5267 = vmatpush1.msra.mxu0 0.0
    %5268 = vmatprep.subr.mxu0 0.0
    %5269 = vmatpush1.msra.mxu0 0.0
    %5270 = vmatprep.subr.mxu0 0.0
    %5271 = vmatpush1.msra.mxu0 0.0
    %5272 = vmatprep.subr.mxu0 0.0
    %5273 = vmatpush1.msra.mxu0 0.0
    %5274 = vmatprep.subr.mxu0 0.0
    %5275 = vmatpush1.msra.mxu0 0.0
    %5276 = vmatprep.subr.mxu0 0.0
    %5277 = vmatpush1.msra.mxu0 0.0
    %5278 = vmatprep.subr.mxu0 0.0
    %5279 = vmatpush1.msra.mxu0 0.0
    %5280 = vmatprep.subr.mxu0 0.0
    %5281 = vmatpush1.msra.mxu0 0.0
    %5282 = vmatprep.mubr.f32.mxu0 0.0
    %v5283 = vand.u32 %v5214, 4294901760
    %v5284 = vsub.f32 %v5214, %v5283
    %v5285 = vand.u32 %v5284, 4294901760
    %v5286 = vsub.f32 %v5284, %v5285
    %v5287 = vand.u32 %v5286, 4294901760
    %5288 = vmatmul.mubr.f32.gmra.mrb[0].mxu0 %v5287
    %v5289 = vpop.f32.mrb[0].mxu0
    %v5290 = vadd.f32 0.0, %v5289
    %v5291 = vpop.f32.mrb[0].mxu0
    %5292 = vdwg.mxu0
    %5293 = vmatprep.subr.mxu0 0.0
    %v5294 = vand.u32 %v2027, 4294901760
    %v5295 = vsub.f32 %v2027, %v5294
    %v5296 = vand.u32 %v5295, 4294901760
    %v5297 = vsub.f32 %v5295, %v5296
    %v5298 = vand.u32 %v5297, 4294901760
    %5299 = vmatpush1.msra.mxu0 %v5298
    %5300 = vmatprep.subr.mxu0 0.0
    %v5301 = vand.u32 %v2028, 4294901760
    %v5302 = vsub.f32 %v2028, %v5301
    %v5303 = vand.u32 %v5302, 4294901760
    %v5304 = vsub.f32 %v5302, %v5303
    %v5305 = vand.u32 %v5304, 4294901760
    %5306 = vmatpush1.msra.mxu0 %v5305
    %5307 = vmatprep.subr.mxu0 0.0
    %5308 = vmatpush1.msra.mxu0 0.0
    %5309 = vmatprep.subr.mxu0 0.0
    %5310 = vmatpush1.msra.mxu0 0.0
    %5311 = vmatprep.subr.mxu0 0.0
    %5312 = vmatpush1.msra.mxu0 0.0
    %5313 = vmatprep.subr.mxu0 0.0
    %5314 = vmatpush1.msra.mxu0 0.0
    %5315 = vmatprep.subr.mxu0 0.0
    %5316 = vmatpush1.msra.mxu0 0.0
    %5317 = vmatprep.subr.mxu0 0.0
    %5318 = vmatpush1.msra.mxu0 0.0
    %5319 = vmatprep.subr.mxu0 0.0
    %5320 = vmatpush1.msra.mxu0 0.0
    %5321 = vmatprep.subr.mxu0 0.0
    %5322 = vmatpush1.msra.mxu0 0.0
    %5323 = vmatprep.subr.mxu0 0.0
    %5324 = vmatpush1.msra.mxu0 0.0
    %5325 = vmatprep.subr.mxu0 0.0
    %5326 = vmatpush1.msra.mxu0 0.0
    %5327 = vmatprep.subr.mxu0 0.0
    %5328 = vmatpush1.msra.mxu0 0.0
    %5329 = vmatprep.subr.mxu0 0.0
    %5330 = vmatpush1.msra.mxu0 0.0
    %5331 = vmatprep.subr.mxu0 0.0
    %5332 = vmatpush1.msra.mxu0 0.0
    %5333 = vmatprep.subr.mxu0 0.0
    %5334 = vmatpush1.msra.mxu0 0.0
    %5335 = vmatprep.subr.mxu0 0.0
    %5336 = vmatpush1.msra.mxu0 0.0
    %5337 = vmatprep.subr.mxu0 0.0
    %5338 = vmatpush1.msra.mxu0 0.0
    %5339 = vmatprep.subr.mxu0 0.0
    %5340 = vmatpush1.msra.mxu0 0.0
    %5341 = vmatprep.subr.mxu0 0.0
    %5342 = vmatpush1.msra.mxu0 0.0
    %5343 = vmatprep.subr.mxu0 0.0
    %5344 = vmatpush1.msra.mxu0 0.0
    %5345 = vmatprep.subr.mxu0 0.0
    %5346 = vmatpush1.msra.mxu0 0.0
    %5347 = vmatprep.subr.mxu0 0.0
    %5348 = vmatpush1.msra.mxu0 0.0
    %5349 = vmatprep.subr.mxu0 0.0
    %5350 = vmatpush1.msra.mxu0 0.0
    %5351 = vmatprep.subr.mxu0 0.0
    %5352 = vmatpush1.msra.mxu0 0.0
    %5353 = vmatprep.subr.mxu0 0.0
    %5354 = vmatpush1.msra.mxu0 0.0
    %5355 = vmatprep.subr.mxu0 0.0
    %5356 = vmatpush1.msra.mxu0 0.0
    %5357 = vmatprep.subr.mxu0 0.0
    %5358 = vmatpush1.msra.mxu0 0.0
    %5359 = vmatprep.subr.mxu0 0.0
    %5360 = vmatpush1.msra.mxu0 0.0
    %5361 = vmatprep.subr.mxu0 0.0
    %5362 = vmatpush1.msra.mxu0 0.0
    %5363 = vmatprep.subr.mxu0 0.0
    %5364 = vmatpush1.msra.mxu0 0.0
    %5365 = vmatprep.subr.mxu0 0.0
    %5366 = vmatpush1.msra.mxu0 0.0
    %5367 = vmatprep.mubr.f32.mxu0 0.0
    %v5368 = vand.u32 %v5214, 4294901760
    %5369 = vmatmul.mubr.f32.gmra.mrb[0].mxu0 %v5368
    %v5370 = vpop.f32.mrb[0].mxu0
    %v5371 = vadd.f32 %v5290, %v5370
    %v5372 = vpop.f32.mrb[0].mxu0
    %5373 = vdwg.mxu0
    %5374 = vmatprep.subr.mxu0 0.0
    %v5375 = vand.u32 %v2027, 4294901760
    %v5376 = vsub.f32 %v2027, %v5375
    %5377 = vmatpush1.msra.mxu0 %v5376
    %5378 = vmatprep.subr.mxu0 0.0
    %v5379 = vand.u32 %v2028, 4294901760
    %v5380 = vsub.f32 %v2028, %v5379
    %5381 = vmatpush1.msra.mxu0 %v5380
    %5382 = vmatprep.subr.mxu0 0.0
    %5383 = vmatpush1.msra.mxu0 0.0
    %5384 = vmatprep.subr.mxu0 0.0
    %5385 = vmatpush1.msra.mxu0 0.0
    %5386 = vmatprep.subr.mxu0 0.0
    %5387 = vmatpush1.msra.mxu0 0.0
    %5388 = vmatprep.subr.mxu0 0.0
    %5389 = vmatpush1.msra.mxu0 0.0
    %5390 = vmatprep.subr.mxu0 0.0
    %5391 = vmatpush1.msra.mxu0 0.0
    %5392 = vmatprep.subr.mxu0 0.0
    %5393 = vmatpush1.msra.mxu0 0.0
    %5394 = vmatprep.subr.mxu0 0.0
    %5395 = vmatpush1.msra.mxu0 0.0
    %5396 = vmatprep.subr.mxu0 0.0
    %5397 = vmatpush1.msra.mxu0 0.0
    %5398 = vmatprep.subr.mxu0 0.0
    %5399 = vmatpush1.msra.mxu0 0.0
    %5400 = vmatprep.subr.mxu0 0.0
    %5401 = vmatpush1.msra.mxu0 0.0
    %5402 = vmatprep.subr.mxu0 0.0
    %5403 = vmatpush1.msra.mxu0 0.0
    %5404 = vmatprep.subr.mxu0 0.0
    %5405 = vmatpush1.msra.mxu0 0.0
    %5406 = vmatprep.subr.mxu0 0.0
    %5407 = vmatpush1.msra.mxu0 0.0
    %5408 = vmatprep.subr.mxu0 0.0
    %5409 = vmatpush1.msra.mxu0 0.0
    %5410 = vmatprep.subr.mxu0 0.0
    %5411 = vmatpush1.msra.mxu0 0.0
    %5412 = vmatprep.subr.mxu0 0.0
    %5413 = vmatpush1.msra.mxu0 0.0
    %5414 = vmatprep.subr.mxu0 0.0
    %5415 = vmatpush1.msra.mxu0 0.0
    %5416 = vmatprep.subr.mxu0 0.0
    %5417 = vmatpush1.msra.mxu0 0.0
    %5418 = vmatprep.subr.mxu0 0.0
    %5419 = vmatpush1.msra.mxu0 0.0
    %5420 = vmatprep.subr.mxu0 0.0
    %5421 = vmatpush1.msra.mxu0 0.0
    %5422 = vmatprep.subr.mxu0 0.0
    %5423 = vmatpush1.msra.mxu0 0.0
    %5424 = vmatprep.subr.mxu0 0.0
    %5425 = vmatpush1.msra.mxu0 0.0
    %5426 = vmatprep.subr.mxu0 0.0
    %5427 = vmatpush1.msra.mxu0 0.0
    %5428 = vmatprep.subr.mxu0 0.0
    %5429 = vmatpush1.msra.mxu0 0.0
    %5430 = vmatprep.subr.mxu0 0.0
    %5431 = vmatpush1.msra.mxu0 0.0
    %5432 = vmatprep.subr.mxu0 0.0
    %5433 = vmatpush1.msra.mxu0 0.0
    %5434 = vmatprep.subr.mxu0 0.0
    %5435 = vmatpush1.msra.mxu0 0.0
    %5436 = vmatprep.subr.mxu0 0.0
    %5437 = vmatpush1.msra.mxu0 0.0
    %5438 = vmatprep.subr.mxu0 0.0
    %5439 = vmatpush1.msra.mxu0 0.0
    %5440 = vmatprep.subr.mxu0 0.0
    %5441 = vmatpush1.msra.mxu0 0.0
    %5442 = vmatprep.mubr.f32.mxu0 0.0
    %v5443 = vand.u32 %v5214, 4294901760
    %v5444 = vsub.f32 %v5214, %v5443
    %5445 = vmatmul.mubr.f32.gmra.mrb[0].mxu0 %v5444
    %v5446 = vpop.f32.mrb[0].mxu0
    %v5447 = vadd.f32 %v5371, %v5446
    %v5448 = vpop.f32.mrb[0].mxu0
    %5449 = vdwg.mxu0
    %5450 = vmatprep.subr.mxu0 0.0
    %v5451 = vand.u32 %v2027, 4294901760
    %5452 = vmatpush1.msra.mxu0 %v5451
    %5453 = vmatprep.subr.mxu0 0.0
    %v5454 = vand.u32 %v2028, 4294901760
    %5455 = vmatpush1.msra.mxu0 %v5454
    %5456 = vmatprep.subr.mxu0 0.0
    %5457 = vmatpush1.msra.mxu0 0.0
    %5458 = vmatprep.subr.mxu0 0.0
    %5459 = vmatpush1.msra.mxu0 0.0
    %5460 = vmatprep.subr.mxu0 0.0
    %5461 = vmatpush1.msra.mxu0 0.0
    %5462 = vmatprep.subr.mxu0 0.0
    %5463 = vmatpush1.msra.mxu0 0.0
    %5464 = vmatprep.subr.mxu0 0.0
    %5465 = vmatpush1.msra.mxu0 0.0
    %5466 = vmatprep.subr.mxu0 0.0
    %5467 = vmatpush1.msra.mxu0 0.0
    %5468 = vmatprep.subr.mxu0 0.0
    %5469 = vmatpush1.msra.mxu0 0.0
    %5470 = vmatprep.subr.mxu0 0.0
    %5471 = vmatpush1.msra.mxu0 0.0
    %5472 = vmatprep.subr.mxu0 0.0
    %5473 = vmatpush1.msra.mxu0 0.0
    %5474 = vmatprep.subr.mxu0 0.0
    %5475 = vmatpush1.msra.mxu0 0.0
    %5476 = vmatprep.subr.mxu0 0.0
    %5477 = vmatpush1.msra.mxu0 0.0
    %5478 = vmatprep.subr.mxu0 0.0
    %5479 = vmatpush1.msra.mxu0 0.0
    %5480 = vmatprep.subr.mxu0 0.0
    %5481 = vmatpush1.msra.mxu0 0.0
    %5482 = vmatprep.subr.mxu0 0.0
    %5483 = vmatpush1.msra.mxu0 0.0
    %5484 = vmatprep.subr.mxu0 0.0
    %5485 = vmatpush1.msra.mxu0 0.0
    %5486 = vmatprep.subr.mxu0 0.0
    %5487 = vmatpush1.msra.mxu0 0.0
    %5488 = vmatprep.subr.mxu0 0.0
    %5489 = vmatpush1.msra.mxu0 0.0
    %5490 = vmatprep.subr.mxu0 0.0
    %5491 = vmatpush1.msra.mxu0 0.0
    %5492 = vmatprep.subr.mxu0 0.0
    %5493 = vmatpush1.msra.mxu0 0.0
    %5494 = vmatprep.subr.mxu0 0.0
    %5495 = vmatpush1.msra.mxu0 0.0
    %5496 = vmatprep.subr.mxu0 0.0
    %5497 = vmatpush1.msra.mxu0 0.0
    %5498 = vmatprep.subr.mxu0 0.0
    %5499 = vmatpush1.msra.mxu0 0.0
    %5500 = vmatprep.subr.mxu0 0.0
    %5501 = vmatpush1.msra.mxu0 0.0
    %5502 = vmatprep.subr.mxu0 0.0
    %5503 = vmatpush1.msra.mxu0 0.0
    %5504 = vmatprep.subr.mxu0 0.0
    %5505 = vmatpush1.msra.mxu0 0.0
    %5506 = vmatprep.subr.mxu0 0.0
    %5507 = vmatpush1.msra.mxu0 0.0
    %5508 = vmatprep.subr.mxu0 0.0
    %5509 = vmatpush1.msra.mxu0 0.0
    %5510 = vmatprep.subr.mxu0 0.0
    %5511 = vmatpush1.msra.mxu0 0.0
    %5512 = vmatprep.subr.mxu0 0.0
    %5513 = vmatpush1.msra.mxu0 0.0
    %5514 = vmatprep.subr.mxu0 0.0
    %5515 = vmatpush1.msra.mxu0 0.0
    %5516 = vmatprep.mubr.f32.mxu0 0.0
    %v5517 = vand.u32 %v5214, 4294901760
    %v5518 = vsub.f32 %v5214, %v5517
    %v5519 = vand.u32 %v5518, 4294901760
    %5520 = vmatmul.mubr.f32.gmra.mrb[0].mxu0 %v5519
    %v5521 = vpop.f32.mrb[0].mxu0
    %v5522 = vadd.f32 %v5447, %v5521
    %v5523 = vpop.f32.mrb[0].mxu0
    %5524 = vdwg.mxu0
    %5525 = vmatprep.subr.mxu0 0.0
    %v5526 = vand.u32 %v2027, 4294901760
    %v5527 = vsub.f32 %v2027, %v5526
    %v5528 = vand.u32 %v5527, 4294901760
    %5529 = vmatpush1.msra.mxu0 %v5528
    %5530 = vmatprep.subr.mxu0 0.0
    %v5531 = vand.u32 %v2028, 4294901760
    %v5532 = vsub.f32 %v2028, %v5531
    %v5533 = vand.u32 %v5532, 4294901760
    %5534 = vmatpush1.msra.mxu0 %v5533
    %5535 = vmatprep.subr.mxu0 0.0
    %5536 = vmatpush1.msra.mxu0 0.0
    %5537 = vmatprep.subr.mxu0 0.0
    %5538 = vmatpush1.msra.mxu0 0.0
    %5539 = vmatprep.subr.mxu0 0.0
    %5540 = vmatpush1.msra.mxu0 0.0
    %5541 = vmatprep.subr.mxu0 0.0
    %5542 = vmatpush1.msra.mxu0 0.0
    %5543 = vmatprep.subr.mxu0 0.0
    %5544 = vmatpush1.msra.mxu0 0.0
    %5545 = vmatprep.subr.mxu0 0.0
    %5546 = vmatpush1.msra.mxu0 0.0
    %5547 = vmatprep.subr.mxu0 0.0
    %5548 = vmatpush1.msra.mxu0 0.0
    %5549 = vmatprep.subr.mxu0 0.0
    %5550 = vmatpush1.msra.mxu0 0.0
    %5551 = vmatprep.subr.mxu0 0.0
    %5552 = vmatpush1.msra.mxu0 0.0
    %5553 = vmatprep.subr.mxu0 0.0
    %5554 = vmatpush1.msra.mxu0 0.0
    %5555 = vmatprep.subr.mxu0 0.0
    %5556 = vmatpush1.msra.mxu0 0.0
    %5557 = vmatprep.subr.mxu0 0.0
    %5558 = vmatpush1.msra.mxu0 0.0
    %5559 = vmatprep.subr.mxu0 0.0
    %5560 = vmatpush1.msra.mxu0 0.0
    %5561 = vmatprep.subr.mxu0 0.0
    %5562 = vmatpush1.msra.mxu0 0.0
    %5563 = vmatprep.subr.mxu0 0.0
    %5564 = vmatpush1.msra.mxu0 0.0
    %5565 = vmatprep.subr.mxu0 0.0
    %5566 = vmatpush1.msra.mxu0 0.0
    %5567 = vmatprep.subr.mxu0 0.0
    %5568 = vmatpush1.msra.mxu0 0.0
    %5569 = vmatprep.subr.mxu0 0.0
    %5570 = vmatpush1.msra.mxu0 0.0
    %5571 = vmatprep.subr.mxu0 0.0
    %5572 = vmatpush1.msra.mxu0 0.0
    %5573 = vmatprep.subr.mxu0 0.0
    %5574 = vmatpush1.msra.mxu0 0.0
    %5575 = vmatprep.subr.mxu0 0.0
    %5576 = vmatpush1.msra.mxu0 0.0
    %5577 = vmatprep.subr.mxu0 0.0
    %5578 = vmatpush1.msra.mxu0 0.0
    %5579 = vmatprep.subr.mxu0 0.0
    %5580 = vmatpush1.msra.mxu0 0.0
    %5581 = vmatprep.subr.mxu0 0.0
    %5582 = vmatpush1.msra.mxu0 0.0
    %5583 = vmatprep.subr.mxu0 0.0
    %5584 = vmatpush1.msra.mxu0 0.0
    %5585 = vmatprep.subr.mxu0 0.0
    %5586 = vmatpush1.msra.mxu0 0.0
    %5587 = vmatprep.subr.mxu0 0.0
    %5588 = vmatpush1.msra.mxu0 0.0
    %5589 = vmatprep.subr.mxu0 0.0
    %5590 = vmatpush1.msra.mxu0 0.0
    %5591 = vmatprep.subr.mxu0 0.0
    %5592 = vmatpush1.msra.mxu0 0.0
    %5593 = vmatprep.subr.mxu0 0.0
    %5594 = vmatpush1.msra.mxu0 0.0
    %5595 = vmatprep.mubr.f32.mxu0 0.0
    %v5596 = vand.u32 %v5214, 4294901760
    %5597 = vmatmul.mubr.f32.gmra.mrb[0].mxu0 %v5596
    %v5598 = vpop.f32.mrb[0].mxu0
    %v5599 = vadd.f32 %v5522, %v5598
    %v5600 = vpop.f32.mrb[0].mxu0
    %5601 = vdwg.mxu0
    %5602 = vmatprep.subr.mxu0 0.0
    %v5603 = vand.u32 %v2027, 4294901760
    %5604 = vmatpush1.msra.mxu0 %v5603
    %5605 = vmatprep.subr.mxu0 0.0
    %v5606 = vand.u32 %v2028, 4294901760
    %5607 = vmatpush1.msra.mxu0 %v5606
    %5608 = vmatprep.subr.mxu0 0.0
    %5609 = vmatpush1.msra.mxu0 0.0
    %5610 = vmatprep.subr.mxu0 0.0
    %5611 = vmatpush1.msra.mxu0 0.0
    %5612 = vmatprep.subr.mxu0 0.0
    %5613 = vmatpush1.msra.mxu0 0.0
    %5614 = vmatprep.subr.mxu0 0.0
    %5615 = vmatpush1.msra.mxu0 0.0
    %5616 = vmatprep.subr.mxu0 0.0
    %5617 = vmatpush1.msra.mxu0 0.0
    %5618 = vmatprep.subr.mxu0 0.0
    %5619 = vmatpush1.msra.mxu0 0.0
    %5620 = vmatprep.subr.mxu0 0.0
    %5621 = vmatpush1.msra.mxu0 0.0
    %5622 = vmatprep.subr.mxu0 0.0
    %5623 = vmatpush1.msra.mxu0 0.0
    %5624 = vmatprep.subr.mxu0 0.0
    %5625 = vmatpush1.msra.mxu0 0.0
    %5626 = vmatprep.subr.mxu0 0.0
    %5627 = vmatpush1.msra.mxu0 0.0
    %5628 = vmatprep.subr.mxu0 0.0
    %5629 = vmatpush1.msra.mxu0 0.0
    %5630 = vmatprep.subr.mxu0 0.0
    %5631 = vmatpush1.msra.mxu0 0.0
    %5632 = vmatprep.subr.mxu0 0.0
    %5633 = vmatpush1.msra.mxu0 0.0
    %5634 = vmatprep.subr.mxu0 0.0
    %5635 = vmatpush1.msra.mxu0 0.0
    %5636 = vmatprep.subr.mxu0 0.0
    %5637 = vmatpush1.msra.mxu0 0.0
    %5638 = vmatprep.subr.mxu0 0.0
    %5639 = vmatpush1.msra.mxu0 0.0
    %5640 = vmatprep.subr.mxu0 0.0
    %5641 = vmatpush1.msra.mxu0 0.0
    %5642 = vmatprep.subr.mxu0 0.0
    %5643 = vmatpush1.msra.mxu0 0.0
    %5644 = vmatprep.subr.mxu0 0.0
    %5645 = vmatpush1.msra.mxu0 0.0
    %5646 = vmatprep.subr.mxu0 0.0
    %5647 = vmatpush1.msra.mxu0 0.0
    %5648 = vmatprep.subr.mxu0 0.0
    %5649 = vmatpush1.msra.mxu0 0.0
    %5650 = vmatprep.subr.mxu0 0.0
    %5651 = vmatpush1.msra.mxu0 0.0
    %5652 = vmatprep.subr.mxu0 0.0
    %5653 = vmatpush1.msra.mxu0 0.0
    %5654 = vmatprep.subr.mxu0 0.0
    %5655 = vmatpush1.msra.mxu0 0.0
    %5656 = vmatprep.subr.mxu0 0.0
    %5657 = vmatpush1.msra.mxu0 0.0
    %5658 = vmatprep.subr.mxu0 0.0
    %5659 = vmatpush1.msra.mxu0 0.0
    %5660 = vmatprep.subr.mxu0 0.0
    %5661 = vmatpush1.msra.mxu0 0.0
    %5662 = vmatprep.subr.mxu0 0.0
    %5663 = vmatpush1.msra.mxu0 0.0
    %5664 = vmatprep.subr.mxu0 0.0
    %5665 = vmatpush1.msra.mxu0 0.0
    %5666 = vmatprep.subr.mxu0 0.0
    %5667 = vmatpush1.msra.mxu0 0.0
    %5668 = vmatprep.mubr.f32.mxu0 0.0
    %v5669 = vand.u32 %v5214, 4294901760
    %5670 = vmatmul.mubr.f32.gmra.mrb[0].mxu0 %v5669
    %v5671 = vpop.f32.mrb[0].mxu0
    %v5672 = vadd.f32 %v5599, %v5671
    %v5673 = vpop.f32.mrb[0].mxu0
    %5674 = vdwg.mxu0
    %v5676 = vrot.slane %v5672, 4
    %v5678 = vadd.f32 %v2018, %v5676
    %v5679 = vrot.slane %v5672, 6
    %v5681 = vadd.f32 %v2012, %v5679
    %v5683 = vrot.slane %v5678, 4
    %v5686 = vrot.slane %v5681, 2
    %5687 = vrot.lane.b32.xlu0 %v5686, 64
    %v5688 = vpop.permute.xlu0 %5687
    %v5690 = vsel %vm2501, %v5683, %v5688
    %v5691 = vxor.u32 %v5690, 2147483648
    %v5692 = vmul.f32 %v5691, 1.442695
    %v5693 = vpow.pop %v5692
    %v5694 = vadd.f32 %v5693, 1.0
    %v5695 = vrcp.pop %v5694
    %v5696 = vmul.f32 1.0, %v5695
    %v5697 = vtanh.pop %v5690
    %v5698 = vmul.f32 %v5696, %v5176
    %5700 = vrot.lane.b32.xlu0 %v5697, 96
    %v5701 = vpop.permute.xlu0 %5700
    %v5703 = vmul.f32 %v5696, %v5701
    %5705 = vrot.lane.b32.xlu0 %v5703, 16
    %v5706 = vpop.permute.xlu0 %5705
    %v5708 = vadd.f32 %v5698, %v5706
    %v5709 = vtanh.pop %v5708
    %5711 = vrot.lane.b32.xlu0 %v5709, 32
    %v5712 = vpop.permute.xlu0 %5711
    %v5714 = vmul.f32 %v5696, %v5712
    %v5717 = vunpack.c.l.s4 1983009808
    %v5718 = vunpack.c.0.s8 %v5717
    %v5719 = vlaneseq
    %v5720 = vshrl.u32 %v5719, 7
    %v5721 = vsub.s32 %v5718, %v5720
    %v5722 = vrot.slane %v5714, %v5721
    %5723 = vrot.lane.b32.xlu0 %v5722, 48
    %v5724 = vpop.permute.xlu0 %5723
    %5726 = vst.msk [vmem:[#allocation3 + $0x1] sm:$0x1] %vm3085, %v5724
    %v5727 = vcombine.high %v5722, %v5722
    %5728 = vrot.lane.b32.xlu0 %v5727, 96
    %v5729 = vpop.permute.xlu0 %5728
    %5731 = vst.msk [vmem:[#allocation3 + $0x2] sm:$0x1] %vm2558, %v5729
    %v5732 = vrot.slane %v5722, 7
    %v5733 = vrot.slane %v5732, 2
    %5734 = vrot.lane.b32.xlu0 %v5733, 80
    %v5735 = vpop.permute.xlu0 %5734
    %5737 = vst.msk [vmem:[#allocation3 + $0x3] sm:$0x1] %vm2538, %v5735
    %v5738 = vrot.slane %v5727, 7
    %v5739 = vrot.slane %v5738, 2
    %5741 = vst.msk [vmem:[#allocation3 + $0x2] sm:$0x1] %vm3078, %v5739
    %5742 = vrot.lane.b32.xlu0 %v5714, 80
    %v5743 = vpop.permute.xlu0 %5742
    %v5744 = vsel %vm1472, %v5743, 0
    %5746 = vmatprep.subr.mxu0 0.0
    %v5747 = vand.u32 %v2027, 4294901760
    %5748 = vmatpush1.msra.mxu0 %v5747
    %5749 = vmatprep.subr.mxu0 0.0
    %v5750 = vand.u32 %v2028, 4294901760
    %5751 = vmatpush1.msra.mxu0 %v5750
    %5752 = vmatprep.subr.mxu0 0.0
    %5753 = vmatpush1.msra.mxu0 0.0
    %5754 = vmatprep.subr.mxu0 0.0
    %5755 = vmatpush1.msra.mxu0 0.0
    %5756 = vmatprep.subr.mxu0 0.0
    %5757 = vmatpush1.msra.mxu0 0.0
    %5758 = vmatprep.subr.mxu0 0.0
    %5759 = vmatpush1.msra.mxu0 0.0
    %5760 = vmatprep.subr.mxu0 0.0
    %5761 = vmatpush1.msra.mxu0 0.0
    %5762 = vmatprep.subr.mxu0 0.0
    %5763 = vmatpush1.msra.mxu0 0.0
    %5764 = vmatprep.subr.mxu0 0.0
    %5765 = vmatpush1.msra.mxu0 0.0
    %5766 = vmatprep.subr.mxu0 0.0
    %5767 = vmatpush1.msra.mxu0 0.0
    %5768 = vmatprep.subr.mxu0 0.0
    %5769 = vmatpush1.msra.mxu0 0.0
    %5770 = vmatprep.subr.mxu0 0.0
    %5771 = vmatpush1.msra.mxu0 0.0
    %5772 = vmatprep.subr.mxu0 0.0
    %5773 = vmatpush1.msra.mxu0 0.0
    %5774 = vmatprep.subr.mxu0 0.0
    %5775 = vmatpush1.msra.mxu0 0.0
    %5776 = vmatprep.subr.mxu0 0.0
    %5777 = vmatpush1.msra.mxu0 0.0
    %5778 = vmatprep.subr.mxu0 0.0
    %5779 = vmatpush1.msra.mxu0 0.0
    %5780 = vmatprep.subr.mxu0 0.0
    %5781 = vmatpush1.msra.mxu0 0.0
    %5782 = vmatprep.subr.mxu0 0.0
    %5783 = vmatpush1.msra.mxu0 0.0
    %5784 = vmatprep.subr.mxu0 0.0
    %5785 = vmatpush1.msra.mxu0 0.0
    %5786 = vmatprep.subr.mxu0 0.0
    %5787 = vmatpush1.msra.mxu0 0.0
    %5788 = vmatprep.subr.mxu0 0.0
    %5789 = vmatpush1.msra.mxu0 0.0
    %5790 = vmatprep.subr.mxu0 0.0
    %5791 = vmatpush1.msra.mxu0 0.0
    %5792 = vmatprep.subr.mxu0 0.0
    %5793 = vmatpush1.msra.mxu0 0.0
    %5794 = vmatprep.subr.mxu0 0.0
    %5795 = vmatpush1.msra.mxu0 0.0
    %5796 = vmatprep.subr.mxu0 0.0
    %5797 = vmatpush1.msra.mxu0 0.0
    %5798 = vmatprep.subr.mxu0 0.0
    %5799 = vmatpush1.msra.mxu0 0.0
    %5800 = vmatprep.subr.mxu0 0.0
    %5801 = vmatpush1.msra.mxu0 0.0
    %5802 = vmatprep.subr.mxu0 0.0
    %5803 = vmatpush1.msra.mxu0 0.0
    %5804 = vmatprep.subr.mxu0 0.0
    %5805 = vmatpush1.msra.mxu0 0.0
    %5806 = vmatprep.subr.mxu0 0.0
    %5807 = vmatpush1.msra.mxu0 0.0
    %5808 = vmatprep.subr.mxu0 0.0
    %5809 = vmatpush1.msra.mxu0 0.0
    %5810 = vmatprep.subr.mxu0 0.0
    %5811 = vmatpush1.msra.mxu0 0.0
    %5812 = vmatprep.mubr.f32.mxu0 0.0
    %v5813 = vand.u32 %v5744, 4294901760
    %v5814 = vsub.f32 %v5744, %v5813
    %v5815 = vand.u32 %v5814, 4294901760
    %v5816 = vsub.f32 %v5814, %v5815
    %v5817 = vand.u32 %v5816, 4294901760
    %5818 = vmatmul.mubr.f32.gmra.mrb[0].mxu0 %v5817
    %v5819 = vpop.f32.mrb[0].mxu0
    %v5820 = vadd.f32 0.0, %v5819
    %v5821 = vpop.f32.mrb[0].mxu0
    %5822 = vdwg.mxu0
    %5823 = vmatprep.subr.mxu0 0.0
    %v5824 = vand.u32 %v2027, 4294901760
    %v5825 = vsub.f32 %v2027, %v5824
    %v5826 = vand.u32 %v5825, 4294901760
    %v5827 = vsub.f32 %v5825, %v5826
    %v5828 = vand.u32 %v5827, 4294901760
    %5829 = vmatpush1.msra.mxu0 %v5828
    %5830 = vmatprep.subr.mxu0 0.0
    %v5831 = vand.u32 %v2028, 4294901760
    %v5832 = vsub.f32 %v2028, %v5831
    %v5833 = vand.u32 %v5832, 4294901760
    %v5834 = vsub.f32 %v5832, %v5833
    %v5835 = vand.u32 %v5834, 4294901760
    %5836 = vmatpush1.msra.mxu0 %v5835
    %5837 = vmatprep.subr.mxu0 0.0
    %5838 = vmatpush1.msra.mxu0 0.0
    %5839 = vmatprep.subr.mxu0 0.0
    %5840 = vmatpush1.msra.mxu0 0.0
    %5841 = vmatprep.subr.mxu0 0.0
    %5842 = vmatpush1.msra.mxu0 0.0
    %5843 = vmatprep.subr.mxu0 0.0
    %5844 = vmatpush1.msra.mxu0 0.0
    %5845 = vmatprep.subr.mxu0 0.0
    %5846 = vmatpush1.msra.mxu0 0.0
    %5847 = vmatprep.subr.mxu0 0.0
    %5848 = vmatpush1.msra.mxu0 0.0
    %5849 = vmatprep.subr.mxu0 0.0
    %5850 = vmatpush1.msra.mxu0 0.0
    %5851 = vmatprep.subr.mxu0 0.0
    %5852 = vmatpush1.msra.mxu0 0.0
    %5853 = vmatprep.subr.mxu0 0.0
    %5854 = vmatpush1.msra.mxu0 0.0
    %5855 = vmatprep.subr.mxu0 0.0
    %5856 = vmatpush1.msra.mxu0 0.0
    %5857 = vmatprep.subr.mxu0 0.0
    %5858 = vmatpush1.msra.mxu0 0.0
    %5859 = vmatprep.subr.mxu0 0.0
    %5860 = vmatpush1.msra.mxu0 0.0
    %5861 = vmatprep.subr.mxu0 0.0
    %5862 = vmatpush1.msra.mxu0 0.0
    %5863 = vmatprep.subr.mxu0 0.0
    %5864 = vmatpush1.msra.mxu0 0.0
    %5865 = vmatprep.subr.mxu0 0.0
    %5866 = vmatpush1.msra.mxu0 0.0
    %5867 = vmatprep.subr.mxu0 0.0
    %5868 = vmatpush1.msra.mxu0 0.0
    %5869 = vmatprep.subr.mxu0 0.0
    %5870 = vmatpush1.msra.mxu0 0.0
    %5871 = vmatprep.subr.mxu0 0.0
    %5872 = vmatpush1.msra.mxu0 0.0
    %5873 = vmatprep.subr.mxu0 0.0
    %5874 = vmatpush1.msra.mxu0 0.0
    %5875 = vmatprep.subr.mxu0 0.0
    %5876 = vmatpush1.msra.mxu0 0.0
    %5877 = vmatprep.subr.mxu0 0.0
    %5878 = vmatpush1.msra.mxu0 0.0
    %5879 = vmatprep.subr.mxu0 0.0
    %5880 = vmatpush1.msra.mxu0 0.0
    %5881 = vmatprep.subr.mxu0 0.0
    %5882 = vmatpush1.msra.mxu0 0.0
    %5883 = vmatprep.subr.mxu0 0.0
    %5884 = vmatpush1.msra.mxu0 0.0
    %5885 = vmatprep.subr.mxu0 0.0
    %5886 = vmatpush1.msra.mxu0 0.0
    %5887 = vmatprep.subr.mxu0 0.0
    %5888 = vmatpush1.msra.mxu0 0.0
    %5889 = vmatprep.subr.mxu0 0.0
    %5890 = vmatpush1.msra.mxu0 0.0
    %5891 = vmatprep.subr.mxu0 0.0
    %5892 = vmatpush1.msra.mxu0 0.0
    %5893 = vmatprep.subr.mxu0 0.0
    %5894 = vmatpush1.msra.mxu0 0.0
    %5895 = vmatprep.subr.mxu0 0.0
    %5896 = vmatpush1.msra.mxu0 0.0
    %5897 = vmatprep.mubr.f32.mxu0 0.0
    %v5898 = vand.u32 %v5744, 4294901760
    %5899 = vmatmul.mubr.f32.gmra.mrb[0].mxu0 %v5898
    %v5900 = vpop.f32.mrb[0].mxu0
    %v5901 = vadd.f32 %v5820, %v5900
    %v5902 = vpop.f32.mrb[0].mxu0
    %5903 = vdwg.mxu0
    %5904 = vmatprep.subr.mxu0 0.0
    %v5905 = vand.u32 %v2027, 4294901760
    %v5906 = vsub.f32 %v2027, %v5905
    %5907 = vmatpush1.msra.mxu0 %v5906
    %5908 = vmatprep.subr.mxu0 0.0
    %v5909 = vand.u32 %v2028, 4294901760
    %v5910 = vsub.f32 %v2028, %v5909
    %5911 = vmatpush1.msra.mxu0 %v5910
    %5912 = vmatprep.subr.mxu0 0.0
    %5913 = vmatpush1.msra.mxu0 0.0
    %5914 = vmatprep.subr.mxu0 0.0
    %5915 = vmatpush1.msra.mxu0 0.0
    %5916 = vmatprep.subr.mxu0 0.0
    %5917 = vmatpush1.msra.mxu0 0.0
    %5918 = vmatprep.subr.mxu0 0.0
    %5919 = vmatpush1.msra.mxu0 0.0
    %5920 = vmatprep.subr.mxu0 0.0
    %5921 = vmatpush1.msra.mxu0 0.0
    %5922 = vmatprep.subr.mxu0 0.0
    %5923 = vmatpush1.msra.mxu0 0.0
    %5924 = vmatprep.subr.mxu0 0.0
    %5925 = vmatpush1.msra.mxu0 0.0
    %5926 = vmatprep.subr.mxu0 0.0
    %5927 = vmatpush1.msra.mxu0 0.0
    %5928 = vmatprep.subr.mxu0 0.0
    %5929 = vmatpush1.msra.mxu0 0.0
    %5930 = vmatprep.subr.mxu0 0.0
    %5931 = vmatpush1.msra.mxu0 0.0
    %5932 = vmatprep.subr.mxu0 0.0
    %5933 = vmatpush1.msra.mxu0 0.0
    %5934 = vmatprep.subr.mxu0 0.0
    %5935 = vmatpush1.msra.mxu0 0.0
    %5936 = vmatprep.subr.mxu0 0.0
    %5937 = vmatpush1.msra.mxu0 0.0
    %5938 = vmatprep.subr.mxu0 0.0
    %5939 = vmatpush1.msra.mxu0 0.0
    %5940 = vmatprep.subr.mxu0 0.0
    %5941 = vmatpush1.msra.mxu0 0.0
    %5942 = vmatprep.subr.mxu0 0.0
    %5943 = vmatpush1.msra.mxu0 0.0
    %5944 = vmatprep.subr.mxu0 0.0
    %5945 = vmatpush1.msra.mxu0 0.0
    %5946 = vmatprep.subr.mxu0 0.0
    %5947 = vmatpush1.msra.mxu0 0.0
    %5948 = vmatprep.subr.mxu0 0.0
    %5949 = vmatpush1.msra.mxu0 0.0
    %5950 = vmatprep.subr.mxu0 0.0
    %5951 = vmatpush1.msra.mxu0 0.0
    %5952 = vmatprep.subr.mxu0 0.0
    %5953 = vmatpush1.msra.mxu0 0.0
    %5954 = vmatprep.subr.mxu0 0.0
    %5955 = vmatpush1.msra.mxu0 0.0
    %5956 = vmatprep.subr.mxu0 0.0
    %5957 = vmatpush1.msra.mxu0 0.0
    %5958 = vmatprep.subr.mxu0 0.0
    %5959 = vmatpush1.msra.mxu0 0.0
    %5960 = vmatprep.subr.mxu0 0.0
    %5961 = vmatpush1.msra.mxu0 0.0
    %5962 = vmatprep.subr.mxu0 0.0
    %5963 = vmatpush1.msra.mxu0 0.0
    %5964 = vmatprep.subr.mxu0 0.0
    %5965 = vmatpush1.msra.mxu0 0.0
    %5966 = vmatprep.subr.mxu0 0.0
    %5967 = vmatpush1.msra.mxu0 0.0
    %5968 = vmatprep.subr.mxu0 0.0
    %5969 = vmatpush1.msra.mxu0 0.0
    %5970 = vmatprep.subr.mxu0 0.0
    %5971 = vmatpush1.msra.mxu0 0.0
    %5972 = vmatprep.mubr.f32.mxu0 0.0
    %v5973 = vand.u32 %v5744, 4294901760
    %v5974 = vsub.f32 %v5744, %v5973
    %5975 = vmatmul.mubr.f32.gmra.mrb[0].mxu0 %v5974
    %v5976 = vpop.f32.mrb[0].mxu0
    %v5977 = vadd.f32 %v5901, %v5976
    %v5978 = vpop.f32.mrb[0].mxu0
    %5979 = vdwg.mxu0
    %5980 = vmatprep.subr.mxu0 0.0
    %v5981 = vand.u32 %v2027, 4294901760
    %5982 = vmatpush1.msra.mxu0 %v5981
    %5983 = vmatprep.subr.mxu0 0.0
    %v5984 = vand.u32 %v2028, 4294901760
    %5985 = vmatpush1.msra.mxu0 %v5984
    %5986 = vmatprep.subr.mxu0 0.0
    %5987 = vmatpush1.msra.mxu0 0.0
    %5988 = vmatprep.subr.mxu0 0.0
    %5989 = vmatpush1.msra.mxu0 0.0
    %5990 = vmatprep.subr.mxu0 0.0
    %5991 = vmatpush1.msra.mxu0 0.0
    %5992 = vmatprep.subr.mxu0 0.0
    %5993 = vmatpush1.msra.mxu0 0.0
    %5994 = vmatprep.subr.mxu0 0.0
    %5995 = vmatpush1.msra.mxu0 0.0
    %5996 = vmatprep.subr.mxu0 0.0
    %5997 = vmatpush1.msra.mxu0 0.0
    %5998 = vmatprep.subr.mxu0 0.0
    %5999 = vmatpush1.msra.mxu0 0.0
    %6000 = vmatprep.subr.mxu0 0.0
    %6001 = vmatpush1.msra.mxu0 0.0
    %6002 = vmatprep.subr.mxu0 0.0
    %6003 = vmatpush1.msra.mxu0 0.0
    %6004 = vmatprep.subr.mxu0 0.0
    %6005 = vmatpush1.msra.mxu0 0.0
    %6006 = vmatprep.subr.mxu0 0.0
    %6007 = vmatpush1.msra.mxu0 0.0
    %6008 = vmatprep.subr.mxu0 0.0
    %6009 = vmatpush1.msra.mxu0 0.0
    %6010 = vmatprep.subr.mxu0 0.0
    %6011 = vmatpush1.msra.mxu0 0.0
    %6012 = vmatprep.subr.mxu0 0.0
    %6013 = vmatpush1.msra.mxu0 0.0
    %6014 = vmatprep.subr.mxu0 0.0
    %6015 = vmatpush1.msra.mxu0 0.0
    %6016 = vmatprep.subr.mxu0 0.0
    %6017 = vmatpush1.msra.mxu0 0.0
    %6018 = vmatprep.subr.mxu0 0.0
    %6019 = vmatpush1.msra.mxu0 0.0
    %6020 = vmatprep.subr.mxu0 0.0
    %6021 = vmatpush1.msra.mxu0 0.0
    %6022 = vmatprep.subr.mxu0 0.0
    %6023 = vmatpush1.msra.mxu0 0.0
    %6024 = vmatprep.subr.mxu0 0.0
    %6025 = vmatpush1.msra.mxu0 0.0
    %6026 = vmatprep.subr.mxu0 0.0
    %6027 = vmatpush1.msra.mxu0 0.0
    %6028 = vmatprep.subr.mxu0 0.0
    %6029 = vmatpush1.msra.mxu0 0.0
    %6030 = vmatprep.subr.mxu0 0.0
    %6031 = vmatpush1.msra.mxu0 0.0
    %6032 = vmatprep.subr.mxu0 0.0
    %6033 = vmatpush1.msra.mxu0 0.0
    %6034 = vmatprep.subr.mxu0 0.0
    %6035 = vmatpush1.msra.mxu0 0.0
    %6036 = vmatprep.subr.mxu0 0.0
    %6037 = vmatpush1.msra.mxu0 0.0
    %6038 = vmatprep.subr.mxu0 0.0
    %6039 = vmatpush1.msra.mxu0 0.0
    %6040 = vmatprep.subr.mxu0 0.0
    %6041 = vmatpush1.msra.mxu0 0.0
    %6042 = vmatprep.subr.mxu0 0.0
    %6043 = vmatpush1.msra.mxu0 0.0
    %6044 = vmatprep.subr.mxu0 0.0
    %6045 = vmatpush1.msra.mxu0 0.0
    %6046 = vmatprep.mubr.f32.mxu0 0.0
    %v6047 = vand.u32 %v5744, 4294901760
    %v6048 = vsub.f32 %v5744, %v6047
    %v6049 = vand.u32 %v6048, 4294901760
    %6050 = vmatmul.mubr.f32.gmra.mrb[0].mxu0 %v6049
    %v6051 = vpop.f32.mrb[0].mxu0
    %v6052 = vadd.f32 %v5977, %v6051
    %v6053 = vpop.f32.mrb[0].mxu0
    %6054 = vdwg.mxu0
    %6055 = vmatprep.subr.mxu0 0.0
    %v6056 = vand.u32 %v2027, 4294901760
    %v6057 = vsub.f32 %v2027, %v6056
    %v6058 = vand.u32 %v6057, 4294901760
    %6059 = vmatpush1.msra.mxu0 %v6058
    %6060 = vmatprep.subr.mxu0 0.0
    %v6061 = vand.u32 %v2028, 4294901760
    %v6062 = vsub.f32 %v2028, %v6061
    %v6063 = vand.u32 %v6062, 4294901760
    %6064 = vmatpush1.msra.mxu0 %v6063
    %6065 = vmatprep.subr.mxu0 0.0
    %6066 = vmatpush1.msra.mxu0 0.0
    %6067 = vmatprep.subr.mxu0 0.0
    %6068 = vmatpush1.msra.mxu0 0.0
    %6069 = vmatprep.subr.mxu0 0.0
    %6070 = vmatpush1.msra.mxu0 0.0
    %6071 = vmatprep.subr.mxu0 0.0
    %6072 = vmatpush1.msra.mxu0 0.0
    %6073 = vmatprep.subr.mxu0 0.0
    %6074 = vmatpush1.msra.mxu0 0.0
    %6075 = vmatprep.subr.mxu0 0.0
    %6076 = vmatpush1.msra.mxu0 0.0
    %6077 = vmatprep.subr.mxu0 0.0
    %6078 = vmatpush1.msra.mxu0 0.0
    %6079 = vmatprep.subr.mxu0 0.0
    %6080 = vmatpush1.msra.mxu0 0.0
    %6081 = vmatprep.subr.mxu0 0.0
    %6082 = vmatpush1.msra.mxu0 0.0
    %6083 = vmatprep.subr.mxu0 0.0
    %6084 = vmatpush1.msra.mxu0 0.0
    %6085 = vmatprep.subr.mxu0 0.0
    %6086 = vmatpush1.msra.mxu0 0.0
    %6087 = vmatprep.subr.mxu0 0.0
    %6088 = vmatpush1.msra.mxu0 0.0
    %6089 = vmatprep.subr.mxu0 0.0
    %6090 = vmatpush1.msra.mxu0 0.0
    %6091 = vmatprep.subr.mxu0 0.0
    %6092 = vmatpush1.msra.mxu0 0.0
    %6093 = vmatprep.subr.mxu0 0.0
    %6094 = vmatpush1.msra.mxu0 0.0
    %6095 = vmatprep.subr.mxu0 0.0
    %6096 = vmatpush1.msra.mxu0 0.0
    %6097 = vmatprep.subr.mxu0 0.0
    %6098 = vmatpush1.msra.mxu0 0.0
    %6099 = vmatprep.subr.mxu0 0.0
    %6100 = vmatpush1.msra.mxu0 0.0
    %6101 = vmatprep.subr.mxu0 0.0
    %6102 = vmatpush1.msra.mxu0 0.0
    %6103 = vmatprep.subr.mxu0 0.0
    %6104 = vmatpush1.msra.mxu0 0.0
    %6105 = vmatprep.subr.mxu0 0.0
    %6106 = vmatpush1.msra.mxu0 0.0
    %6107 = vmatprep.subr.mxu0 0.0
    %6108 = vmatpush1.msra.mxu0 0.0
    %6109 = vmatprep.subr.mxu0 0.0
    %6110 = vmatpush1.msra.mxu0 0.0
    %6111 = vmatprep.subr.mxu0 0.0
    %6112 = vmatpush1.msra.mxu0 0.0
    %6113 = vmatprep.subr.mxu0 0.0
    %6114 = vmatpush1.msra.mxu0 0.0
    %6115 = vmatprep.subr.mxu0 0.0
    %6116 = vmatpush1.msra.mxu0 0.0
    %6117 = vmatprep.subr.mxu0 0.0
    %6118 = vmatpush1.msra.mxu0 0.0
    %6119 = vmatprep.subr.mxu0 0.0
    %6120 = vmatpush1.msra.mxu0 0.0
    %6121 = vmatprep.subr.mxu0 0.0
    %6122 = vmatpush1.msra.mxu0 0.0
    %6123 = vmatprep.subr.mxu0 0.0
    %6124 = vmatpush1.msra.mxu0 0.0
    %6125 = vmatprep.mubr.f32.mxu0 0.0
    %v6126 = vand.u32 %v5744, 4294901760
    %6127 = vmatmul.mubr.f32.gmra.mrb[0].mxu0 %v6126
    %v6128 = vpop.f32.mrb[0].mxu0
    %v6129 = vadd.f32 %v6052, %v6128
    %v6130 = vpop.f32.mrb[0].mxu0
    %6131 = vdwg.mxu0
    %6132 = vmatprep.subr.mxu0 0.0
    %v6133 = vand.u32 %v2027, 4294901760
    %6134 = vmatpush1.msra.mxu0 %v6133
    %6135 = vmatprep.subr.mxu0 0.0
    %v6136 = vand.u32 %v2028, 4294901760
    %6137 = vmatpush1.msra.mxu0 %v6136
    %6138 = vmatprep.subr.mxu0 0.0
    %6139 = vmatpush1.msra.mxu0 0.0
    %6140 = vmatprep.subr.mxu0 0.0
    %6141 = vmatpush1.msra.mxu0 0.0
    %6142 = vmatprep.subr.mxu0 0.0
    %6143 = vmatpush1.msra.mxu0 0.0
    %6144 = vmatprep.subr.mxu0 0.0
    %6145 = vmatpush1.msra.mxu0 0.0
    %6146 = vmatprep.subr.mxu0 0.0
    %6147 = vmatpush1.msra.mxu0 0.0
    %6148 = vmatprep.subr.mxu0 0.0
    %6149 = vmatpush1.msra.mxu0 0.0
    %6150 = vmatprep.subr.mxu0 0.0
    %6151 = vmatpush1.msra.mxu0 0.0
    %6152 = vmatprep.subr.mxu0 0.0
    %6153 = vmatpush1.msra.mxu0 0.0
    %6154 = vmatprep.subr.mxu0 0.0
    %6155 = vmatpush1.msra.mxu0 0.0
    %6156 = vmatprep.subr.mxu0 0.0
    %6157 = vmatpush1.msra.mxu0 0.0
    %6158 = vmatprep.subr.mxu0 0.0
    %6159 = vmatpush1.msra.mxu0 0.0
    %6160 = vmatprep.subr.mxu0 0.0
    %6161 = vmatpush1.msra.mxu0 0.0
    %6162 = vmatprep.subr.mxu0 0.0
    %6163 = vmatpush1.msra.mxu0 0.0
    %6164 = vmatprep.subr.mxu0 0.0
    %6165 = vmatpush1.msra.mxu0 0.0
    %6166 = vmatprep.subr.mxu0 0.0
    %6167 = vmatpush1.msra.mxu0 0.0
    %6168 = vmatprep.subr.mxu0 0.0
    %6169 = vmatpush1.msra.mxu0 0.0
    %6170 = vmatprep.subr.mxu0 0.0
    %6171 = vmatpush1.msra.mxu0 0.0
    %6172 = vmatprep.subr.mxu0 0.0
    %6173 = vmatpush1.msra.mxu0 0.0
    %6174 = vmatprep.subr.mxu0 0.0
    %6175 = vmatpush1.msra.mxu0 0.0
    %6176 = vmatprep.subr.mxu0 0.0
    %6177 = vmatpush1.msra.mxu0 0.0
    %6178 = vmatprep.subr.mxu0 0.0
    %6179 = vmatpush1.msra.mxu0 0.0
    %6180 = vmatprep.subr.mxu0 0.0
    %6181 = vmatpush1.msra.mxu0 0.0
    %6182 = vmatprep.subr.mxu0 0.0
    %6183 = vmatpush1.msra.mxu0 0.0
    %6184 = vmatprep.subr.mxu0 0.0
    %6185 = vmatpush1.msra.mxu0 0.0
    %6186 = vmatprep.subr.mxu0 0.0
    %6187 = vmatpush1.msra.mxu0 0.0
    %6188 = vmatprep.subr.mxu0 0.0
    %6189 = vmatpush1.msra.mxu0 0.0
    %6190 = vmatprep.subr.mxu0 0.0
    %6191 = vmatpush1.msra.mxu0 0.0
    %6192 = vmatprep.subr.mxu0 0.0
    %6193 = vmatpush1.msra.mxu0 0.0
    %6194 = vmatprep.subr.mxu0 0.0
    %6195 = vmatpush1.msra.mxu0 0.0
    %6196 = vmatprep.subr.mxu0 0.0
    %6197 = vmatpush1.msra.mxu0 0.0
    %6198 = vmatprep.mubr.f32.mxu0 0.0
    %v6199 = vand.u32 %v5744, 4294901760
    %6200 = vmatmul.mubr.f32.gmra.mrb[0].mxu0 %v6199
    %v6201 = vpop.f32.mrb[0].mxu0
    %v6202 = vadd.f32 %v6129, %v6201
    %v6203 = vpop.f32.mrb[0].mxu0
    %6204 = vdwg.mxu0
    %v6206 = vrot.slane %v6202, 2
    %v6208 = vadd.f32 %v2018, %v6206
    %v6209 = vadd.f32 %v2012, %v6202
    %v6211 = vrot.slane %v6208, 6
    %6214 = vrot.lane.b32.xlu0 %v6209, 64
    %v6215 = vpop.permute.xlu0 %6214
    %v6217 = vsel %vm2501, %v6211, %v6215
    %v6218 = vxor.u32 %v6217, 2147483648
    %v6219 = vmul.f32 %v6218, 1.442695
    %v6220 = vpow.pop %v6219
    %v6221 = vadd.f32 %v6220, 1.0
    %v6222 = vrcp.pop %v6221
    %v6223 = vmul.f32 1.0, %v6222
    %v6224 = vtanh.pop %v6217
    %v6225 = vmul.f32 %v6223, %v5708
    %6227 = vrot.lane.b32.xlu0 %v6224, 96
    %v6228 = vpop.permute.xlu0 %6227
    %v6230 = vmul.f32 %v6223, %v6228
    %6232 = vrot.lane.b32.xlu0 %v6230, 16
    %v6233 = vpop.permute.xlu0 %6232
    %v6235 = vadd.f32 %v6225, %v6233
    %v6236 = vtanh.pop %v6235
    %6238 = vrot.lane.b32.xlu0 %v6236, 32
    %v6239 = vpop.permute.xlu0 %6238
    %v6241 = vmul.f32 %v6223, %v6239
    %v6244 = vunpack.c.l.s4 1983009808
    %v6245 = vunpack.c.0.s8 %v6244
    %v6246 = vlaneseq
    %v6247 = vshrl.u32 %v6246, 7
    %v6248 = vsub.s32 %v6245, %v6247
    %v6249 = vrot.slane %v6241, %v6248
    %6250 = vrot.lane.b32.xlu0 %v6249, 112
    %v6251 = vpop.permute.xlu0 %6250
    %6253 = vst.msk [vmem:[#allocation3 + $0x3] sm:$0x1] %vm2551, %v6251
    %v6254 = vcombine.high %v6249, %v6249
    %6255 = vrot.lane.b32.xlu0 %v6254, 32
    %v6256 = vpop.permute.xlu0 %6255
    %6258 = vst.msk [vmem:[#allocation3] sm:$0x1] %vm3092, %v6256
    %v6259 = vrot.slane %v6249, 7
    %v6260 = vrot.slane %v6259, 2
    %6261 = vrot.lane.b32.xlu0 %v6260, 16
    %v6262 = vpop.permute.xlu0 %6261
    %6264 = vst.msk [vmem:[#allocation3 + $0x3] sm:$0x1] %vm3074, %v6262
    %v6265 = vrot.slane %v6254, 7
    %v6266 = vrot.slane %v6265, 2
    %6267 = vrot.lane.b32.xlu0 %v6266, 64
    %v6268 = vpop.permute.xlu0 %6267
    %6270 = vst.msk [vmem:[#allocation3] sm:$0x1] %vm2544, %v6268
    %6271 = vrot.lane.b32.xlu0 %v6241, 80
    %v6272 = vpop.permute.xlu0 %6271
    %v6273 = vsel %vm1472, %v6272, 0
    %6275 = vmatprep.subr.mxu0 0.0
    %v6276 = vand.u32 %v2027, 4294901760
    %6277 = vmatpush1.msra.mxu0 %v6276
    %6278 = vmatprep.subr.mxu0 0.0
    %v6279 = vand.u32 %v2028, 4294901760
    %6280 = vmatpush1.msra.mxu0 %v6279
    %6281 = vmatprep.subr.mxu0 0.0
    %6282 = vmatpush1.msra.mxu0 0.0
    %6283 = vmatprep.subr.mxu0 0.0
    %6284 = vmatpush1.msra.mxu0 0.0
    %6285 = vmatprep.subr.mxu0 0.0
    %6286 = vmatpush1.msra.mxu0 0.0
    %6287 = vmatprep.subr.mxu0 0.0
    %6288 = vmatpush1.msra.mxu0 0.0
    %6289 = vmatprep.subr.mxu0 0.0
    %6290 = vmatpush1.msra.mxu0 0.0
    %6291 = vmatprep.subr.mxu0 0.0
    %6292 = vmatpush1.msra.mxu0 0.0
    %6293 = vmatprep.subr.mxu0 0.0
    %6294 = vmatpush1.msra.mxu0 0.0
    %6295 = vmatprep.subr.mxu0 0.0
    %6296 = vmatpush1.msra.mxu0 0.0
    %6297 = vmatprep.subr.mxu0 0.0
    %6298 = vmatpush1.msra.mxu0 0.0
    %6299 = vmatprep.subr.mxu0 0.0
    %6300 = vmatpush1.msra.mxu0 0.0
    %6301 = vmatprep.subr.mxu0 0.0
    %6302 = vmatpush1.msra.mxu0 0.0
    %6303 = vmatprep.subr.mxu0 0.0
    %6304 = vmatpush1.msra.mxu0 0.0
    %6305 = vmatprep.subr.mxu0 0.0
    %6306 = vmatpush1.msra.mxu0 0.0
    %6307 = vmatprep.subr.mxu0 0.0
    %6308 = vmatpush1.msra.mxu0 0.0
    %6309 = vmatprep.subr.mxu0 0.0
    %6310 = vmatpush1.msra.mxu0 0.0
    %6311 = vmatprep.subr.mxu0 0.0
    %6312 = vmatpush1.msra.mxu0 0.0
    %6313 = vmatprep.subr.mxu0 0.0
    %6314 = vmatpush1.msra.mxu0 0.0
    %6315 = vmatprep.subr.mxu0 0.0
    %6316 = vmatpush1.msra.mxu0 0.0
    %6317 = vmatprep.subr.mxu0 0.0
    %6318 = vmatpush1.msra.mxu0 0.0
    %6319 = vmatprep.subr.mxu0 0.0
    %6320 = vmatpush1.msra.mxu0 0.0
    %6321 = vmatprep.subr.mxu0 0.0
    %6322 = vmatpush1.msra.mxu0 0.0
    %6323 = vmatprep.subr.mxu0 0.0
    %6324 = vmatpush1.msra.mxu0 0.0
    %6325 = vmatprep.subr.mxu0 0.0
    %6326 = vmatpush1.msra.mxu0 0.0
    %6327 = vmatprep.subr.mxu0 0.0
    %6328 = vmatpush1.msra.mxu0 0.0
    %6329 = vmatprep.subr.mxu0 0.0
    %6330 = vmatpush1.msra.mxu0 0.0
    %6331 = vmatprep.subr.mxu0 0.0
    %6332 = vmatpush1.msra.mxu0 0.0
    %6333 = vmatprep.subr.mxu0 0.0
    %6334 = vmatpush1.msra.mxu0 0.0
    %6335 = vmatprep.subr.mxu0 0.0
    %6336 = vmatpush1.msra.mxu0 0.0
    %6337 = vmatprep.subr.mxu0 0.0
    %6338 = vmatpush1.msra.mxu0 0.0
    %6339 = vmatprep.subr.mxu0 0.0
    %6340 = vmatpush1.msra.mxu0 0.0
    %6341 = vmatprep.mubr.f32.mxu0 0.0
    %v6342 = vand.u32 %v6273, 4294901760
    %v6343 = vsub.f32 %v6273, %v6342
    %v6344 = vand.u32 %v6343, 4294901760
    %v6345 = vsub.f32 %v6343, %v6344
    %v6346 = vand.u32 %v6345, 4294901760
    %6347 = vmatmul.mubr.f32.gmra.mrb[0].mxu0 %v6346
    %v6348 = vpop.f32.mrb[0].mxu0
    %v6349 = vadd.f32 0.0, %v6348
    %v6350 = vpop.f32.mrb[0].mxu0
    %6351 = vdwg.mxu0
    %6352 = vmatprep.subr.mxu0 0.0
    %v6353 = vand.u32 %v2027, 4294901760
    %v6354 = vsub.f32 %v2027, %v6353
    %v6355 = vand.u32 %v6354, 4294901760
    %v6356 = vsub.f32 %v6354, %v6355
    %v6357 = vand.u32 %v6356, 4294901760
    %6358 = vmatpush1.msra.mxu0 %v6357
    %6359 = vmatprep.subr.mxu0 0.0
    %v6360 = vand.u32 %v2028, 4294901760
    %v6361 = vsub.f32 %v2028, %v6360
    %v6362 = vand.u32 %v6361, 4294901760
    %v6363 = vsub.f32 %v6361, %v6362
    %v6364 = vand.u32 %v6363, 4294901760
    %6365 = vmatpush1.msra.mxu0 %v6364
    %6366 = vmatprep.subr.mxu0 0.0
    %6367 = vmatpush1.msra.mxu0 0.0
    %6368 = vmatprep.subr.mxu0 0.0
    %6369 = vmatpush1.msra.mxu0 0.0
    %6370 = vmatprep.subr.mxu0 0.0
    %6371 = vmatpush1.msra.mxu0 0.0
    %6372 = vmatprep.subr.mxu0 0.0
    %6373 = vmatpush1.msra.mxu0 0.0
    %6374 = vmatprep.subr.mxu0 0.0
    %6375 = vmatpush1.msra.mxu0 0.0
    %6376 = vmatprep.subr.mxu0 0.0
    %6377 = vmatpush1.msra.mxu0 0.0
    %6378 = vmatprep.subr.mxu0 0.0
    %6379 = vmatpush1.msra.mxu0 0.0
    %6380 = vmatprep.subr.mxu0 0.0
    %6381 = vmatpush1.msra.mxu0 0.0
    %6382 = vmatprep.subr.mxu0 0.0
    %6383 = vmatpush1.msra.mxu0 0.0
    %6384 = vmatprep.subr.mxu0 0.0
    %6385 = vmatpush1.msra.mxu0 0.0
    %6386 = vmatprep.subr.mxu0 0.0
    %6387 = vmatpush1.msra.mxu0 0.0
    %6388 = vmatprep.subr.mxu0 0.0
    %6389 = vmatpush1.msra.mxu0 0.0
    %6390 = vmatprep.subr.mxu0 0.0
    %6391 = vmatpush1.msra.mxu0 0.0
    %6392 = vmatprep.subr.mxu0 0.0
    %6393 = vmatpush1.msra.mxu0 0.0
    %6394 = vmatprep.subr.mxu0 0.0
    %6395 = vmatpush1.msra.mxu0 0.0
    %6396 = vmatprep.subr.mxu0 0.0
    %6397 = vmatpush1.msra.mxu0 0.0
    %6398 = vmatprep.subr.mxu0 0.0
    %6399 = vmatpush1.msra.mxu0 0.0
    %6400 = vmatprep.subr.mxu0 0.0
    %6401 = vmatpush1.msra.mxu0 0.0
    %6402 = vmatprep.subr.mxu0 0.0
    %6403 = vmatpush1.msra.mxu0 0.0
    %6404 = vmatprep.subr.mxu0 0.0
    %6405 = vmatpush1.msra.mxu0 0.0
    %6406 = vmatprep.subr.mxu0 0.0
    %6407 = vmatpush1.msra.mxu0 0.0
    %6408 = vmatprep.subr.mxu0 0.0
    %6409 = vmatpush1.msra.mxu0 0.0
    %6410 = vmatprep.subr.mxu0 0.0
    %6411 = vmatpush1.msra.mxu0 0.0
    %6412 = vmatprep.subr.mxu0 0.0
    %6413 = vmatpush1.msra.mxu0 0.0
    %6414 = vmatprep.subr.mxu0 0.0
    %6415 = vmatpush1.msra.mxu0 0.0
    %6416 = vmatprep.subr.mxu0 0.0
    %6417 = vmatpush1.msra.mxu0 0.0
    %6418 = vmatprep.subr.mxu0 0.0
    %6419 = vmatpush1.msra.mxu0 0.0
    %6420 = vmatprep.subr.mxu0 0.0
    %6421 = vmatpush1.msra.mxu0 0.0
    %6422 = vmatprep.subr.mxu0 0.0
    %6423 = vmatpush1.msra.mxu0 0.0
    %6424 = vmatprep.subr.mxu0 0.0
    %6425 = vmatpush1.msra.mxu0 0.0
    %6426 = vmatprep.mubr.f32.mxu0 0.0
    %v6427 = vand.u32 %v6273, 4294901760
    %6428 = vmatmul.mubr.f32.gmra.mrb[0].mxu0 %v6427
    %v6429 = vpop.f32.mrb[0].mxu0
    %v6430 = vadd.f32 %v6349, %v6429
    %v6431 = vpop.f32.mrb[0].mxu0
    %6432 = vdwg.mxu0
    %6433 = vmatprep.subr.mxu0 0.0
    %v6434 = vand.u32 %v2027, 4294901760
    %v6435 = vsub.f32 %v2027, %v6434
    %6436 = vmatpush1.msra.mxu0 %v6435
    %6437 = vmatprep.subr.mxu0 0.0
    %v6438 = vand.u32 %v2028, 4294901760
    %v6439 = vsub.f32 %v2028, %v6438
    %6440 = vmatpush1.msra.mxu0 %v6439
    %6441 = vmatprep.subr.mxu0 0.0
    %6442 = vmatpush1.msra.mxu0 0.0
    %6443 = vmatprep.subr.mxu0 0.0
    %6444 = vmatpush1.msra.mxu0 0.0
    %6445 = vmatprep.subr.mxu0 0.0
    %6446 = vmatpush1.msra.mxu0 0.0
    %6447 = vmatprep.subr.mxu0 0.0
    %6448 = vmatpush1.msra.mxu0 0.0
    %6449 = vmatprep.subr.mxu0 0.0
    %6450 = vmatpush1.msra.mxu0 0.0
    %6451 = vmatprep.subr.mxu0 0.0
    %6452 = vmatpush1.msra.mxu0 0.0
    %6453 = vmatprep.subr.mxu0 0.0
    %6454 = vmatpush1.msra.mxu0 0.0
    %6455 = vmatprep.subr.mxu0 0.0
    %6456 = vmatpush1.msra.mxu0 0.0
    %6457 = vmatprep.subr.mxu0 0.0
    %6458 = vmatpush1.msra.mxu0 0.0
    %6459 = vmatprep.subr.mxu0 0.0
    %6460 = vmatpush1.msra.mxu0 0.0
    %6461 = vmatprep.subr.mxu0 0.0
    %6462 = vmatpush1.msra.mxu0 0.0
    %6463 = vmatprep.subr.mxu0 0.0
    %6464 = vmatpush1.msra.mxu0 0.0
    %6465 = vmatprep.subr.mxu0 0.0
    %6466 = vmatpush1.msra.mxu0 0.0
    %6467 = vmatprep.subr.mxu0 0.0
    %6468 = vmatpush1.msra.mxu0 0.0
    %6469 = vmatprep.subr.mxu0 0.0
    %6470 = vmatpush1.msra.mxu0 0.0
    %6471 = vmatprep.subr.mxu0 0.0
    %6472 = vmatpush1.msra.mxu0 0.0
    %6473 = vmatprep.subr.mxu0 0.0
    %6474 = vmatpush1.msra.mxu0 0.0
    %6475 = vmatprep.subr.mxu0 0.0
    %6476 = vmatpush1.msra.mxu0 0.0
    %6477 = vmatprep.subr.mxu0 0.0
    %6478 = vmatpush1.msra.mxu0 0.0
    %6479 = vmatprep.subr.mxu0 0.0
    %6480 = vmatpush1.msra.mxu0 0.0
    %6481 = vmatprep.subr.mxu0 0.0
    %6482 = vmatpush1.msra.mxu0 0.0
    %6483 = vmatprep.subr.mxu0 0.0
    %6484 = vmatpush1.msra.mxu0 0.0
    %6485 = vmatprep.subr.mxu0 0.0
    %6486 = vmatpush1.msra.mxu0 0.0
    %6487 = vmatprep.subr.mxu0 0.0
    %6488 = vmatpush1.msra.mxu0 0.0
    %6489 = vmatprep.subr.mxu0 0.0
    %6490 = vmatpush1.msra.mxu0 0.0
    %6491 = vmatprep.subr.mxu0 0.0
    %6492 = vmatpush1.msra.mxu0 0.0
    %6493 = vmatprep.subr.mxu0 0.0
    %6494 = vmatpush1.msra.mxu0 0.0
    %6495 = vmatprep.subr.mxu0 0.0
    %6496 = vmatpush1.msra.mxu0 0.0
    %6497 = vmatprep.subr.mxu0 0.0
    %6498 = vmatpush1.msra.mxu0 0.0
    %6499 = vmatprep.subr.mxu0 0.0
    %6500 = vmatpush1.msra.mxu0 0.0
    %6501 = vmatprep.mubr.f32.mxu0 0.0
    %v6502 = vand.u32 %v6273, 4294901760
    %v6503 = vsub.f32 %v6273, %v6502
    %6504 = vmatmul.mubr.f32.gmra.mrb[0].mxu0 %v6503
    %v6505 = vpop.f32.mrb[0].mxu0
    %v6506 = vadd.f32 %v6430, %v6505
    %v6507 = vpop.f32.mrb[0].mxu0
    %6508 = vdwg.mxu0
    %6509 = vmatprep.subr.mxu0 0.0
    %v6510 = vand.u32 %v2027, 4294901760
    %6511 = vmatpush1.msra.mxu0 %v6510
    %6512 = vmatprep.subr.mxu0 0.0
    %v6513 = vand.u32 %v2028, 4294901760
    %6514 = vmatpush1.msra.mxu0 %v6513
    %6515 = vmatprep.subr.mxu0 0.0
    %6516 = vmatpush1.msra.mxu0 0.0
    %6517 = vmatprep.subr.mxu0 0.0
    %6518 = vmatpush1.msra.mxu0 0.0
    %6519 = vmatprep.subr.mxu0 0.0
    %6520 = vmatpush1.msra.mxu0 0.0
    %6521 = vmatprep.subr.mxu0 0.0
    %6522 = vmatpush1.msra.mxu0 0.0
    %6523 = vmatprep.subr.mxu0 0.0
    %6524 = vmatpush1.msra.mxu0 0.0
    %6525 = vmatprep.subr.mxu0 0.0
    %6526 = vmatpush1.msra.mxu0 0.0
    %6527 = vmatprep.subr.mxu0 0.0
    %6528 = vmatpush1.msra.mxu0 0.0
    %6529 = vmatprep.subr.mxu0 0.0
    %6530 = vmatpush1.msra.mxu0 0.0
    %6531 = vmatprep.subr.mxu0 0.0
    %6532 = vmatpush1.msra.mxu0 0.0
    %6533 = vmatprep.subr.mxu0 0.0
    %6534 = vmatpush1.msra.mxu0 0.0
    %6535 = vmatprep.subr.mxu0 0.0
    %6536 = vmatpush1.msra.mxu0 0.0
    %6537 = vmatprep.subr.mxu0 0.0
    %6538 = vmatpush1.msra.mxu0 0.0
    %6539 = vmatprep.subr.mxu0 0.0
    %6540 = vmatpush1.msra.mxu0 0.0
    %6541 = vmatprep.subr.mxu0 0.0
    %6542 = vmatpush1.msra.mxu0 0.0
    %6543 = vmatprep.subr.mxu0 0.0
    %6544 = vmatpush1.msra.mxu0 0.0
    %6545 = vmatprep.subr.mxu0 0.0
    %6546 = vmatpush1.msra.mxu0 0.0
    %6547 = vmatprep.subr.mxu0 0.0
    %6548 = vmatpush1.msra.mxu0 0.0
    %6549 = vmatprep.subr.mxu0 0.0
    %6550 = vmatpush1.msra.mxu0 0.0
    %6551 = vmatprep.subr.mxu0 0.0
    %6552 = vmatpush1.msra.mxu0 0.0
    %6553 = vmatprep.subr.mxu0 0.0
    %6554 = vmatpush1.msra.mxu0 0.0
    %6555 = vmatprep.subr.mxu0 0.0
    %6556 = vmatpush1.msra.mxu0 0.0
    %6557 = vmatprep.subr.mxu0 0.0
    %6558 = vmatpush1.msra.mxu0 0.0
    %6559 = vmatprep.subr.mxu0 0.0
    %6560 = vmatpush1.msra.mxu0 0.0
    %6561 = vmatprep.subr.mxu0 0.0
    %6562 = vmatpush1.msra.mxu0 0.0
    %6563 = vmatprep.subr.mxu0 0.0
    %6564 = vmatpush1.msra.mxu0 0.0
    %6565 = vmatprep.subr.mxu0 0.0
    %6566 = vmatpush1.msra.mxu0 0.0
    %6567 = vmatprep.subr.mxu0 0.0
    %6568 = vmatpush1.msra.mxu0 0.0
    %6569 = vmatprep.subr.mxu0 0.0
    %6570 = vmatpush1.msra.mxu0 0.0
    %6571 = vmatprep.subr.mxu0 0.0
    %6572 = vmatpush1.msra.mxu0 0.0
    %6573 = vmatprep.subr.mxu0 0.0
    %6574 = vmatpush1.msra.mxu0 0.0
    %6575 = vmatprep.mubr.f32.mxu0 0.0
    %v6576 = vand.u32 %v6273, 4294901760
    %v6577 = vsub.f32 %v6273, %v6576
    %v6578 = vand.u32 %v6577, 4294901760
    %6579 = vmatmul.mubr.f32.gmra.mrb[0].mxu0 %v6578
    %v6580 = vpop.f32.mrb[0].mxu0
    %v6581 = vadd.f32 %v6506, %v6580
    %v6582 = vpop.f32.mrb[0].mxu0
    %6583 = vdwg.mxu0
    %6584 = vmatprep.subr.mxu0 0.0
    %v6585 = vand.u32 %v2027, 4294901760
    %v6586 = vsub.f32 %v2027, %v6585
    %v6587 = vand.u32 %v6586, 4294901760
    %6588 = vmatpush1.msra.mxu0 %v6587
    %6589 = vmatprep.subr.mxu0 0.0
    %v6590 = vand.u32 %v2028, 4294901760
    %v6591 = vsub.f32 %v2028, %v6590
    %v6592 = vand.u32 %v6591, 4294901760
    %6593 = vmatpush1.msra.mxu0 %v6592
    %6594 = vmatprep.subr.mxu0 0.0
    %6595 = vmatpush1.msra.mxu0 0.0
    %6596 = vmatprep.subr.mxu0 0.0
    %6597 = vmatpush1.msra.mxu0 0.0
    %6598 = vmatprep.subr.mxu0 0.0
    %6599 = vmatpush1.msra.mxu0 0.0
    %6600 = vmatprep.subr.mxu0 0.0
    %6601 = vmatpush1.msra.mxu0 0.0
    %6602 = vmatprep.subr.mxu0 0.0
    %6603 = vmatpush1.msra.mxu0 0.0
    %6604 = vmatprep.subr.mxu0 0.0
    %6605 = vmatpush1.msra.mxu0 0.0
    %6606 = vmatprep.subr.mxu0 0.0
    %6607 = vmatpush1.msra.mxu0 0.0
    %6608 = vmatprep.subr.mxu0 0.0
    %6609 = vmatpush1.msra.mxu0 0.0
    %6610 = vmatprep.subr.mxu0 0.0
    %6611 = vmatpush1.msra.mxu0 0.0
    %6612 = vmatprep.subr.mxu0 0.0
    %6613 = vmatpush1.msra.mxu0 0.0
    %6614 = vmatprep.subr.mxu0 0.0
    %6615 = vmatpush1.msra.mxu0 0.0
    %6616 = vmatprep.subr.mxu0 0.0
    %6617 = vmatpush1.msra.mxu0 0.0
    %6618 = vmatprep.subr.mxu0 0.0
    %6619 = vmatpush1.msra.mxu0 0.0
    %6620 = vmatprep.subr.mxu0 0.0
    %6621 = vmatpush1.msra.mxu0 0.0
    %6622 = vmatprep.subr.mxu0 0.0
    %6623 = vmatpush1.msra.mxu0 0.0
    %6624 = vmatprep.subr.mxu0 0.0
    %6625 = vmatpush1.msra.mxu0 0.0
    %6626 = vmatprep.subr.mxu0 0.0
    %6627 = vmatpush1.msra.mxu0 0.0
    %6628 = vmatprep.subr.mxu0 0.0
    %6629 = vmatpush1.msra.mxu0 0.0
    %6630 = vmatprep.subr.mxu0 0.0
    %6631 = vmatpush1.msra.mxu0 0.0
    %6632 = vmatprep.subr.mxu0 0.0
    %6633 = vmatpush1.msra.mxu0 0.0
    %6634 = vmatprep.subr.mxu0 0.0
    %6635 = vmatpush1.msra.mxu0 0.0
    %6636 = vmatprep.subr.mxu0 0.0
    %6637 = vmatpush1.msra.mxu0 0.0
    %6638 = vmatprep.subr.mxu0 0.0
    %6639 = vmatpush1.msra.mxu0 0.0
    %6640 = vmatprep.subr.mxu0 0.0
    %6641 = vmatpush1.msra.mxu0 0.0
    %6642 = vmatprep.subr.mxu0 0.0
    %6643 = vmatpush1.msra.mxu0 0.0
    %6644 = vmatprep.subr.mxu0 0.0
    %6645 = vmatpush1.msra.mxu0 0.0
    %6646 = vmatprep.subr.mxu0 0.0
    %6647 = vmatpush1.msra.mxu0 0.0
    %6648 = vmatprep.subr.mxu0 0.0
    %6649 = vmatpush1.msra.mxu0 0.0
    %6650 = vmatprep.subr.mxu0 0.0
    %6651 = vmatpush1.msra.mxu0 0.0
    %6652 = vmatprep.subr.mxu0 0.0
    %6653 = vmatpush1.msra.mxu0 0.0
    %6654 = vmatprep.mubr.f32.mxu0 0.0
    %v6655 = vand.u32 %v6273, 4294901760
    %6656 = vmatmul.mubr.f32.gmra.mrb[0].mxu0 %v6655
    %v6657 = vpop.f32.mrb[0].mxu0
    %v6658 = vadd.f32 %v6581, %v6657
    %v6659 = vpop.f32.mrb[0].mxu0
    %6660 = vdwg.mxu0
    %6661 = vmatprep.subr.mxu0 0.0
    %v6662 = vand.u32 %v2027, 4294901760
    %6663 = vmatpush1.msra.mxu0 %v6662
    %6664 = vmatprep.subr.mxu0 0.0
    %v6665 = vand.u32 %v2028, 4294901760
    %6666 = vmatpush1.msra.mxu0 %v6665
    %6667 = vmatprep.subr.mxu0 0.0
    %6668 = vmatpush1.msra.mxu0 0.0
    %6669 = vmatprep.subr.mxu0 0.0
    %6670 = vmatpush1.msra.mxu0 0.0
    %6671 = vmatprep.subr.mxu0 0.0
    %6672 = vmatpush1.msra.mxu0 0.0
    %6673 = vmatprep.subr.mxu0 0.0
    %6674 = vmatpush1.msra.mxu0 0.0
    %6675 = vmatprep.subr.mxu0 0.0
    %6676 = vmatpush1.msra.mxu0 0.0
    %6677 = vmatprep.subr.mxu0 0.0
    %6678 = vmatpush1.msra.mxu0 0.0
    %6679 = vmatprep.subr.mxu0 0.0
    %6680 = vmatpush1.msra.mxu0 0.0
    %6681 = vmatprep.subr.mxu0 0.0
    %6682 = vmatpush1.msra.mxu0 0.0
    %6683 = vmatprep.subr.mxu0 0.0
    %6684 = vmatpush1.msra.mxu0 0.0
    %6685 = vmatprep.subr.mxu0 0.0
    %6686 = vmatpush1.msra.mxu0 0.0
    %6687 = vmatprep.subr.mxu0 0.0
    %6688 = vmatpush1.msra.mxu0 0.0
    %6689 = vmatprep.subr.mxu0 0.0
    %6690 = vmatpush1.msra.mxu0 0.0
    %6691 = vmatprep.subr.mxu0 0.0
    %6692 = vmatpush1.msra.mxu0 0.0
    %6693 = vmatprep.subr.mxu0 0.0
    %6694 = vmatpush1.msra.mxu0 0.0
    %6695 = vmatprep.subr.mxu0 0.0
    %6696 = vmatpush1.msra.mxu0 0.0
    %6697 = vmatprep.subr.mxu0 0.0
    %6698 = vmatpush1.msra.mxu0 0.0
    %6699 = vmatprep.subr.mxu0 0.0
    %6700 = vmatpush1.msra.mxu0 0.0
    %6701 = vmatprep.subr.mxu0 0.0
    %6702 = vmatpush1.msra.mxu0 0.0
    %6703 = vmatprep.subr.mxu0 0.0
    %6704 = vmatpush1.msra.mxu0 0.0
    %6705 = vmatprep.subr.mxu0 0.0
    %6706 = vmatpush1.msra.mxu0 0.0
    %6707 = vmatprep.subr.mxu0 0.0
    %6708 = vmatpush1.msra.mxu0 0.0
    %6709 = vmatprep.subr.mxu0 0.0
    %6710 = vmatpush1.msra.mxu0 0.0
    %6711 = vmatprep.subr.mxu0 0.0
    %6712 = vmatpush1.msra.mxu0 0.0
    %6713 = vmatprep.subr.mxu0 0.0
    %6714 = vmatpush1.msra.mxu0 0.0
    %6715 = vmatprep.subr.mxu0 0.0
    %6716 = vmatpush1.msra.mxu0 0.0
    %6717 = vmatprep.subr.mxu0 0.0
    %6718 = vmatpush1.msra.mxu0 0.0
    %6719 = vmatprep.subr.mxu0 0.0
    %6720 = vmatpush1.msra.mxu0 0.0
    %6721 = vmatprep.subr.mxu0 0.0
    %6722 = vmatpush1.msra.mxu0 0.0
    %6723 = vmatprep.subr.mxu0 0.0
    %6724 = vmatpush1.msra.mxu0 0.0
    %6725 = vmatprep.subr.mxu0 0.0
    %6726 = vmatpush1.msra.mxu0 0.0
    %6727 = vmatprep.mubr.f32.mxu0 0.0
    %v6728 = vand.u32 %v6273, 4294901760
    %6729 = vmatmul.mubr.f32.gmra.mrb[0].mxu0 %v6728
    %v6730 = vpop.f32.mrb[0].mxu0
    %v6731 = vadd.f32 %v6658, %v6730
    %v6732 = vpop.f32.mrb[0].mxu0
    %6733 = vdwg.mxu0
    %v6734 = vadd.f32 %v2024, %v6731
    %v6736 = vrot.slane %v6731, 2
    %v6738 = vadd.f32 %v2012, %v6736
    %v6740 = vrot.slane %v6738, 6
    %6741 = vrot.lane.b32.xlu0 %v6740, 64
    %v6742 = vpop.permute.xlu0 %6741
    %v6744 = vsel %vm2501, %v6734, %v6742
    %v6745 = vxor.u32 %v6744, 2147483648
    %v6746 = vmul.f32 %v6745, 1.442695
    %v6747 = vpow.pop %v6746
    %v6748 = vadd.f32 %v6747, 1.0
    %v6749 = vrcp.pop %v6748
    %v6750 = vmul.f32 1.0, %v6749
    %v6751 = vtanh.pop %v6744
    %v6752 = vmul.f32 %v6750, %v6235
    %6754 = vrot.lane.b32.xlu0 %v6751, 96
    %v6755 = vpop.permute.xlu0 %6754
    %v6757 = vmul.f32 %v6750, %v6755
    %6759 = vrot.lane.b32.xlu0 %v6757, 16
    %v6760 = vpop.permute.xlu0 %6759
    %v6762 = vadd.f32 %v6752, %v6760
    %v6763 = vtanh.pop %v6762
    %6765 = vrot.lane.b32.xlu0 %v6763, 32
    %v6766 = vpop.permute.xlu0 %6765
    %v6768 = vmul.f32 %v6750, %v6766
    %v6771 = vunpack.c.l.s4 1983009808
    %v6772 = vunpack.c.0.s8 %v6771
    %v6773 = vlaneseq
    %v6774 = vshrl.u32 %v6773, 7
    %v6775 = vsub.s32 %v6772, %v6774
    %v6776 = vrot.slane %v6768, %v6775
    %6777 = vrot.lane.b32.xlu0 %v6776, 48
    %v6778 = vpop.permute.xlu0 %6777
    %6780 = vst.msk [vmem:[#allocation3 + $0x3] sm:$0x1] %vm3085, %v6778
    %v6781 = vcombine.high %v6776, %v6776
    %6782 = vrot.lane.b32.xlu0 %v6781, 96
    %v6783 = vpop.permute.xlu0 %6782
    %6785 = vst.msk [vmem:[#allocation3] sm:$0x1] %vm2558, %v6783
    %v6786 = vrot.slane %v6776, 7
    %v6787 = vrot.slane %v6786, 2
    %6788 = vrot.lane.b32.xlu0 %v6787, 80
    %v6789 = vpop.permute.xlu0 %6788
    %6791 = vst.msk [vmem:[#allocation3 + $0x5] sm:$0x1] %vm2538, %v6789
    %v6792 = vrot.slane %v6781, 7
    %v6793 = vrot.slane %v6792, 2
    %6795 = vst.msk [vmem:[#allocation3] sm:$0x1] %vm3078, %v6793
    %v6796 = vld [vmem:[#allocation3] sm:$0x3f]
    %v6797 = vld [vmem:[#allocation7] sm:$0xff]
    %v6798 = vld [vmem:[#allocation7 + $0x8] sm:$0xff]
    %v6799 = vld [vmem:[#allocation7 + $0x10] sm:$0xff]
    %v6800 = vld [vmem:[#allocation7 + $0x18] sm:$0xff]
    %v6801 = vld [vmem:[#allocation7 + $0x20] sm:$0xff]
    %v6802 = vld [vmem:[#allocation7 + $0x28] sm:$0xff]
    %v6803 = vld [vmem:[#allocation7 + $0x30] sm:$0xff]
    %v6804 = vld [vmem:[#allocation7 + $0x38] sm:$0xff]
    %v6805 = vld [vmem:[#allocation7 + $0x40] sm:$0xff]
    %v6806 = vld [vmem:[#allocation7 + $0x48] sm:$0xff]
    %v6807 = vld [vmem:[#allocation7 + $0x50] sm:$0xff]
    %v6808 = vld [vmem:[#allocation7 + $0x58] sm:$0xff]
    %v6809 = vld [vmem:[#allocation7 + $0x60] sm:$0xff]
    %v6810 = vld [vmem:[#allocation7 + $0x68] sm:$0xff]
    %v6811 = vld [vmem:[#allocation7 + $0x70] sm:$0xff]
    %v6812 = vld [vmem:[#allocation7 + $0x78] sm:$0xff]
    %v6813 = vld [vmem:[#allocation7 + $0x80] sm:$0xff]
    %v6814 = vld [vmem:[#allocation7 + $0x88] sm:$0xff]
    %v6815 = vld [vmem:[#allocation7 + $0x90] sm:$0xff]
    %v6816 = vld [vmem:[#allocation7 + $0x98] sm:$0xff]
    %v6817 = vld [vmem:[#allocation7 + $0xa0] sm:$0xff]
    %v6818 = vld [vmem:[#allocation7 + $0xa8] sm:$0xff]
    %v6819 = vld [vmem:[#allocation7 + $0xb0] sm:$0xff]
    %v6820 = vld [vmem:[#allocation7 + $0xb8] sm:$0xff]
    %v6821 = vld [vmem:[#allocation7 + $0xc0] sm:$0xff]
    %v6822 = vld [vmem:[#allocation7 + $0xc8] sm:$0xff]
    %v6823 = vld [vmem:[#allocation7 + $0xd0] sm:$0xff]
    %v6824 = vld [vmem:[#allocation7 + $0xd8] sm:$0xff]
    %v6825 = vld [vmem:[#allocation7 + $0xe0] sm:$0xff]
    %v6826 = vld [vmem:[#allocation7 + $0xe8] sm:$0xff]
    %v6827 = vld [vmem:[#allocation7 + $0xf0] sm:$0xff]
    %v6828 = vld [vmem:[#allocation7 + $0xf8] sm:$0xff]
    %v6829 = vld [vmem:[#allocation7 + $0x100] sm:$0xff]
    %v6830 = vld [vmem:[#allocation7 + $0x108] sm:$0xff]
    %v6831 = vld [vmem:[#allocation7 + $0x110] sm:$0xff]
    %v6832 = vld [vmem:[#allocation7 + $0x118] sm:$0xff]
    %v6833 = vld [vmem:[%s9] sm:$0x1]
    %v6835 = vlaneseq
    %v6836 = vshrl.u32 %v6835, 7
    %v6837 = vsub.s32 0, %v6836
    %v6838 = vrot.slane %v6833, %v6837
    %v6841 = vcombine.high %v6796, %v6796
    %v6843 = vunpack.c.l.s4 1983009808
    %v6844 = vunpack.c.0.s8 %v6843
    %v6845 = vlaneseq
    %v6846 = vshrl.u32 %v6845, 7
    %v6847 = vsub.s32 %v6844, %v6846
    %v6848 = vrot.slane %v6796, %v6847
    %v6850 = vunpack.c.l.s4 1983009808
    %v6851 = vunpack.c.0.s8 %v6850
    %v6852 = vlaneseq
    %v6853 = vshrl.u32 %v6852, 7
    %v6854 = vsub.s32 %v6851, %v6853
    %v6855 = vrot.slane %v6841, %v6854
    %v6856 = vcombine.high %v6848, %v6848
    %vm6859 = vcmask 261120
    %v6860 = vsel %vm6859, %v6855, 0
    %6862 = vmatprep.subr.mxu0 0.0
    %v6863 = vand.u32 %v6797, 4294901760
    %6864 = vmatpush1.msra.mxu0 %v6863
    %6865 = vmatprep.subr.mxu0 0.0
    %v6866 = vand.u32 %v6798, 4294901760
    %6867 = vmatpush1.msra.mxu0 %v6866
    %6868 = vmatprep.subr.mxu0 0.0
    %v6869 = vand.u32 %v6799, 4294901760
    %6870 = vmatpush1.msra.mxu0 %v6869
    %6871 = vmatprep.subr.mxu0 0.0
    %v6872 = vand.u32 %v6800, 4294901760
    %6873 = vmatpush1.msra.mxu0 %v6872
    %6874 = vmatprep.subr.mxu0 0.0
    %v6875 = vand.u32 %v6801, 4294901760
    %6876 = vmatpush1.msra.mxu0 %v6875
    %6877 = vmatprep.subr.mxu0 0.0
    %v6878 = vand.u32 %v6802, 4294901760
    %6879 = vmatpush1.msra.mxu0 %v6878
    %6880 = vmatprep.subr.mxu0 0.0
    %v6881 = vand.u32 %v6803, 4294901760
    %6882 = vmatpush1.msra.mxu0 %v6881
    %6883 = vmatprep.subr.mxu0 0.0
    %v6884 = vand.u32 %v6804, 4294901760
    %6885 = vmatpush1.msra.mxu0 %v6884
    %6886 = vmatprep.subr.mxu0 0.0
    %v6887 = vand.u32 %v6805, 4294901760
    %6888 = vmatpush1.msra.mxu0 %v6887
    %6889 = vmatprep.subr.mxu0 0.0
    %v6890 = vand.u32 %v6806, 4294901760
    %6891 = vmatpush1.msra.mxu0 %v6890
    %6892 = vmatprep.subr.mxu0 0.0
    %v6893 = vand.u32 %v6807, 4294901760
    %6894 = vmatpush1.msra.mxu0 %v6893
    %6895 = vmatprep.subr.mxu0 0.0
    %v6896 = vand.u32 %v6808, 4294901760
    %6897 = vmatpush1.msra.mxu0 %v6896
    %6898 = vmatprep.subr.mxu0 0.0
    %v6899 = vand.u32 %v6809, 4294901760
    %6900 = vmatpush1.msra.mxu0 %v6899
    %6901 = vmatprep.subr.mxu0 0.0
    %v6902 = vand.u32 %v6810, 4294901760
    %6903 = vmatpush1.msra.mxu0 %v6902
    %6904 = vmatprep.subr.mxu0 0.0
    %v6905 = vand.u32 %v6811, 4294901760
    %6906 = vmatpush1.msra.mxu0 %v6905
    %6907 = vmatprep.subr.mxu0 0.0
    %v6908 = vand.u32 %v6812, 4294901760
    %6909 = vmatpush1.msra.mxu0 %v6908
    %6910 = vmatprep.subr.mxu0 0.0
    %v6911 = vand.u32 %v6813, 4294901760
    %6912 = vmatpush1.msra.mxu0 %v6911
    %6913 = vmatprep.subr.mxu0 0.0
    %v6914 = vand.u32 %v6814, 4294901760
    %6915 = vmatpush1.msra.mxu0 %v6914
    %6916 = vmatprep.subr.mxu0 0.0
    %v6917 = vand.u32 %v6815, 4294901760
    %6918 = vmatpush1.msra.mxu0 %v6917
    %6919 = vmatprep.subr.mxu0 0.0
    %v6920 = vand.u32 %v6816, 4294901760
    %6921 = vmatpush1.msra.mxu0 %v6920
    %6922 = vmatprep.subr.mxu0 0.0
    %v6923 = vand.u32 %v6817, 4294901760
    %6924 = vmatpush1.msra.mxu0 %v6923
    %6925 = vmatprep.subr.mxu0 0.0
    %v6926 = vand.u32 %v6818, 4294901760
    %6927 = vmatpush1.msra.mxu0 %v6926
    %6928 = vmatprep.subr.mxu0 0.0
    %v6929 = vand.u32 %v6819, 4294901760
    %6930 = vmatpush1.msra.mxu0 %v6929
    %6931 = vmatprep.subr.mxu0 0.0
    %v6932 = vand.u32 %v6820, 4294901760
    %6933 = vmatpush1.msra.mxu0 %v6932
    %6934 = vmatprep.subr.mxu0 0.0
    %v6935 = vand.u32 %v6821, 4294901760
    %6936 = vmatpush1.msra.mxu0 %v6935
    %6937 = vmatprep.subr.mxu0 0.0
    %v6938 = vand.u32 %v6822, 4294901760
    %6939 = vmatpush1.msra.mxu0 %v6938
    %6940 = vmatprep.subr.mxu0 0.0
    %v6941 = vand.u32 %v6823, 4294901760
    %6942 = vmatpush1.msra.mxu0 %v6941
    %6943 = vmatprep.subr.mxu0 0.0
    %v6944 = vand.u32 %v6824, 4294901760
    %6945 = vmatpush1.msra.mxu0 %v6944
    %6946 = vmatprep.subr.mxu0 0.0
    %v6947 = vand.u32 %v6825, 4294901760
    %6948 = vmatpush1.msra.mxu0 %v6947
    %6949 = vmatprep.subr.mxu0 0.0
    %v6950 = vand.u32 %v6826, 4294901760
    %6951 = vmatpush1.msra.mxu0 %v6950
    %6952 = vmatprep.subr.mxu0 0.0
    %v6953 = vand.u32 %v6827, 4294901760
    %6954 = vmatpush1.msra.mxu0 %v6953
    %6955 = vmatprep.subr.mxu0 0.0
    %v6956 = vand.u32 %v6828, 4294901760
    %6957 = vmatpush1.msra.mxu0 %v6956
    %v6958 = vand.u32 %v6856, 4294901760
    %v6959 = vsub.f32 %v6856, %v6958
    %v6960 = vand.u32 %v6959, 4294901760
    %v6961 = vsub.f32 %v6959, %v6960
    %v6962 = vand.u32 %v6961, 4294901760
    %6963 = vmatprep.mubr.f32.mxu0 %v6962
    %v6964 = vand.u32 %v6848, 4294901760
    %v6965 = vsub.f32 %v6848, %v6964
    %v6966 = vand.u32 %v6965, 4294901760
    %v6967 = vsub.f32 %v6965, %v6966
    %v6968 = vand.u32 %v6967, 4294901760
    %6969 = vmatmul.mubr.f32.gmra.mrb[0].mxu0 %v6968
    %v6970 = vpop.f32.mrb[0].mxu0
    %v6971 = vadd.f32 %v6838, %v6970
    %v6972 = vpop.f32.mrb[0].mxu0
    %6973 = vdwg.mxu0
    %6974 = vmatprep.subr.mxu0 0.0
    %v6975 = vand.u32 %v6797, 4294901760
    %v6976 = vsub.f32 %v6797, %v6975
    %v6977 = vand.u32 %v6976, 4294901760
    %v6978 = vsub.f32 %v6976, %v6977
    %v6979 = vand.u32 %v6978, 4294901760
    %6980 = vmatpush1.msra.mxu0 %v6979
    %6981 = vmatprep.subr.mxu0 0.0
    %v6982 = vand.u32 %v6798, 4294901760
    %v6983 = vsub.f32 %v6798, %v6982
    %v6984 = vand.u32 %v6983, 4294901760
    %v6985 = vsub.f32 %v6983, %v6984
    %v6986 = vand.u32 %v6985, 4294901760
    %6987 = vmatpush1.msra.mxu0 %v6986
    %6988 = vmatprep.subr.mxu0 0.0
    %v6989 = vand.u32 %v6799, 4294901760
    %v6990 = vsub.f32 %v6799, %v6989
    %v6991 = vand.u32 %v6990, 4294901760
    %v6992 = vsub.f32 %v6990, %v6991
    %v6993 = vand.u32 %v6992, 4294901760
    %6994 = vmatpush1.msra.mxu0 %v6993
    %6995 = vmatprep.subr.mxu0 0.0
    %v6996 = vand.u32 %v6800, 4294901760
    %v6997 = vsub.f32 %v6800, %v6996
    %v6998 = vand.u32 %v6997, 4294901760
    %v6999 = vsub.f32 %v6997, %v6998
    %v7000 = vand.u32 %v6999, 4294901760
    %7001 = vmatpush1.msra.mxu0 %v7000
    %7002 = vmatprep.subr.mxu0 0.0
    %v7003 = vand.u32 %v6801, 4294901760
    %v7004 = vsub.f32 %v6801, %v7003
    %v7005 = vand.u32 %v7004, 4294901760
    %v7006 = vsub.f32 %v7004, %v7005
    %v7007 = vand.u32 %v7006, 4294901760
    %7008 = vmatpush1.msra.mxu0 %v7007
    %7009 = vmatprep.subr.mxu0 0.0
    %v7010 = vand.u32 %v6802, 4294901760
    %v7011 = vsub.f32 %v6802, %v7010
    %v7012 = vand.u32 %v7011, 4294901760
    %v7013 = vsub.f32 %v7011, %v7012
    %v7014 = vand.u32 %v7013, 4294901760
    %7015 = vmatpush1.msra.mxu0 %v7014
    %7016 = vmatprep.subr.mxu0 0.0
    %v7017 = vand.u32 %v6803, 4294901760
    %v7018 = vsub.f32 %v6803, %v7017
    %v7019 = vand.u32 %v7018, 4294901760
    %v7020 = vsub.f32 %v7018, %v7019
    %v7021 = vand.u32 %v7020, 4294901760
    %7022 = vmatpush1.msra.mxu0 %v7021
    %7023 = vmatprep.subr.mxu0 0.0
    %v7024 = vand.u32 %v6804, 4294901760
    %v7025 = vsub.f32 %v6804, %v7024
    %v7026 = vand.u32 %v7025, 4294901760
    %v7027 = vsub.f32 %v7025, %v7026
    %v7028 = vand.u32 %v7027, 4294901760
    %7029 = vmatpush1.msra.mxu0 %v7028
    %7030 = vmatprep.subr.mxu0 0.0
    %v7031 = vand.u32 %v6805, 4294901760
    %v7032 = vsub.f32 %v6805, %v7031
    %v7033 = vand.u32 %v7032, 4294901760
    %v7034 = vsub.f32 %v7032, %v7033
    %v7035 = vand.u32 %v7034, 4294901760
    %7036 = vmatpush1.msra.mxu0 %v7035
    %7037 = vmatprep.subr.mxu0 0.0
    %v7038 = vand.u32 %v6806, 4294901760
    %v7039 = vsub.f32 %v6806, %v7038
    %v7040 = vand.u32 %v7039, 4294901760
    %v7041 = vsub.f32 %v7039, %v7040
    %v7042 = vand.u32 %v7041, 4294901760
    %7043 = vmatpush1.msra.mxu0 %v7042
    %7044 = vmatprep.subr.mxu0 0.0
    %v7045 = vand.u32 %v6807, 4294901760
    %v7046 = vsub.f32 %v6807, %v7045
    %v7047 = vand.u32 %v7046, 4294901760
    %v7048 = vsub.f32 %v7046, %v7047
    %v7049 = vand.u32 %v7048, 4294901760
    %7050 = vmatpush1.msra.mxu0 %v7049
    %7051 = vmatprep.subr.mxu0 0.0
    %v7052 = vand.u32 %v6808, 4294901760
    %v7053 = vsub.f32 %v6808, %v7052
    %v7054 = vand.u32 %v7053, 4294901760
    %v7055 = vsub.f32 %v7053, %v7054
    %v7056 = vand.u32 %v7055, 4294901760
    %7057 = vmatpush1.msra.mxu0 %v7056
    %7058 = vmatprep.subr.mxu0 0.0
    %v7059 = vand.u32 %v6809, 4294901760
    %v7060 = vsub.f32 %v6809, %v7059
    %v7061 = vand.u32 %v7060, 4294901760
    %v7062 = vsub.f32 %v7060, %v7061
    %v7063 = vand.u32 %v7062, 4294901760
    %7064 = vmatpush1.msra.mxu0 %v7063
    %7065 = vmatprep.subr.mxu0 0.0
    %v7066 = vand.u32 %v6810, 4294901760
    %v7067 = vsub.f32 %v6810, %v7066
    %v7068 = vand.u32 %v7067, 4294901760
    %v7069 = vsub.f32 %v7067, %v7068
    %v7070 = vand.u32 %v7069, 4294901760
    %7071 = vmatpush1.msra.mxu0 %v7070
    %7072 = vmatprep.subr.mxu0 0.0
    %v7073 = vand.u32 %v6811, 4294901760
    %v7074 = vsub.f32 %v6811, %v7073
    %v7075 = vand.u32 %v7074, 4294901760
    %v7076 = vsub.f32 %v7074, %v7075
    %v7077 = vand.u32 %v7076, 4294901760
    %7078 = vmatpush1.msra.mxu0 %v7077
    %7079 = vmatprep.subr.mxu0 0.0
    %v7080 = vand.u32 %v6812, 4294901760
    %v7081 = vsub.f32 %v6812, %v7080
    %v7082 = vand.u32 %v7081, 4294901760
    %v7083 = vsub.f32 %v7081, %v7082
    %v7084 = vand.u32 %v7083, 4294901760
    %7085 = vmatpush1.msra.mxu0 %v7084
    %7086 = vmatprep.subr.mxu0 0.0
    %v7087 = vand.u32 %v6813, 4294901760
    %v7088 = vsub.f32 %v6813, %v7087
    %v7089 = vand.u32 %v7088, 4294901760
    %v7090 = vsub.f32 %v7088, %v7089
    %v7091 = vand.u32 %v7090, 4294901760
    %7092 = vmatpush1.msra.mxu0 %v7091
    %7093 = vmatprep.subr.mxu0 0.0
    %v7094 = vand.u32 %v6814, 4294901760
    %v7095 = vsub.f32 %v6814, %v7094
    %v7096 = vand.u32 %v7095, 4294901760
    %v7097 = vsub.f32 %v7095, %v7096
    %v7098 = vand.u32 %v7097, 4294901760
    %7099 = vmatpush1.msra.mxu0 %v7098
    %7100 = vmatprep.subr.mxu0 0.0
    %v7101 = vand.u32 %v6815, 4294901760
    %v7102 = vsub.f32 %v6815, %v7101
    %v7103 = vand.u32 %v7102, 4294901760
    %v7104 = vsub.f32 %v7102, %v7103
    %v7105 = vand.u32 %v7104, 4294901760
    %7106 = vmatpush1.msra.mxu0 %v7105
    %7107 = vmatprep.subr.mxu0 0.0
    %v7108 = vand.u32 %v6816, 4294901760
    %v7109 = vsub.f32 %v6816, %v7108
    %v7110 = vand.u32 %v7109, 4294901760
    %v7111 = vsub.f32 %v7109, %v7110
    %v7112 = vand.u32 %v7111, 4294901760
    %7113 = vmatpush1.msra.mxu0 %v7112
    %7114 = vmatprep.subr.mxu0 0.0
    %v7115 = vand.u32 %v6817, 4294901760
    %v7116 = vsub.f32 %v6817, %v7115
    %v7117 = vand.u32 %v7116, 4294901760
    %v7118 = vsub.f32 %v7116, %v7117
    %v7119 = vand.u32 %v7118, 4294901760
    %7120 = vmatpush1.msra.mxu0 %v7119
    %7121 = vmatprep.subr.mxu0 0.0
    %v7122 = vand.u32 %v6818, 4294901760
    %v7123 = vsub.f32 %v6818, %v7122
    %v7124 = vand.u32 %v7123, 4294901760
    %v7125 = vsub.f32 %v7123, %v7124
    %v7126 = vand.u32 %v7125, 4294901760
    %7127 = vmatpush1.msra.mxu0 %v7126
    %7128 = vmatprep.subr.mxu0 0.0
    %v7129 = vand.u32 %v6819, 4294901760
    %v7130 = vsub.f32 %v6819, %v7129
    %v7131 = vand.u32 %v7130, 4294901760
    %v7132 = vsub.f32 %v7130, %v7131
    %v7133 = vand.u32 %v7132, 4294901760
    %7134 = vmatpush1.msra.mxu0 %v7133
    %7135 = vmatprep.subr.mxu0 0.0
    %v7136 = vand.u32 %v6820, 4294901760
    %v7137 = vsub.f32 %v6820, %v7136
    %v7138 = vand.u32 %v7137, 4294901760
    %v7139 = vsub.f32 %v7137, %v7138
    %v7140 = vand.u32 %v7139, 4294901760
    %7141 = vmatpush1.msra.mxu0 %v7140
    %7142 = vmatprep.subr.mxu0 0.0
    %v7143 = vand.u32 %v6821, 4294901760
    %v7144 = vsub.f32 %v6821, %v7143
    %v7145 = vand.u32 %v7144, 4294901760
    %v7146 = vsub.f32 %v7144, %v7145
    %v7147 = vand.u32 %v7146, 4294901760
    %7148 = vmatpush1.msra.mxu0 %v7147
    %7149 = vmatprep.subr.mxu0 0.0
    %v7150 = vand.u32 %v6822, 4294901760
    %v7151 = vsub.f32 %v6822, %v7150
    %v7152 = vand.u32 %v7151, 4294901760
    %v7153 = vsub.f32 %v7151, %v7152
    %v7154 = vand.u32 %v7153, 4294901760
    %7155 = vmatpush1.msra.mxu0 %v7154
    %7156 = vmatprep.subr.mxu0 0.0
    %v7157 = vand.u32 %v6823, 4294901760
    %v7158 = vsub.f32 %v6823, %v7157
    %v7159 = vand.u32 %v7158, 4294901760
    %v7160 = vsub.f32 %v7158, %v7159
    %v7161 = vand.u32 %v7160, 4294901760
    %7162 = vmatpush1.msra.mxu0 %v7161
    %7163 = vmatprep.subr.mxu0 0.0
    %v7164 = vand.u32 %v6824, 4294901760
    %v7165 = vsub.f32 %v6824, %v7164
    %v7166 = vand.u32 %v7165, 4294901760
    %v7167 = vsub.f32 %v7165, %v7166
    %v7168 = vand.u32 %v7167, 4294901760
    %7169 = vmatpush1.msra.mxu0 %v7168
    %7170 = vmatprep.subr.mxu0 0.0
    %v7171 = vand.u32 %v6825, 4294901760
    %v7172 = vsub.f32 %v6825, %v7171
    %v7173 = vand.u32 %v7172, 4294901760
    %v7174 = vsub.f32 %v7172, %v7173
    %v7175 = vand.u32 %v7174, 4294901760
    %7176 = vmatpush1.msra.mxu0 %v7175
    %7177 = vmatprep.subr.mxu0 0.0
    %v7178 = vand.u32 %v6826, 4294901760
    %v7179 = vsub.f32 %v6826, %v7178
    %v7180 = vand.u32 %v7179, 4294901760
    %v7181 = vsub.f32 %v7179, %v7180
    %v7182 = vand.u32 %v7181, 4294901760
    %7183 = vmatpush1.msra.mxu0 %v7182
    %7184 = vmatprep.subr.mxu0 0.0
    %v7185 = vand.u32 %v6827, 4294901760
    %v7186 = vsub.f32 %v6827, %v7185
    %v7187 = vand.u32 %v7186, 4294901760
    %v7188 = vsub.f32 %v7186, %v7187
    %v7189 = vand.u32 %v7188, 4294901760
    %7190 = vmatpush1.msra.mxu0 %v7189
    %7191 = vmatprep.subr.mxu0 0.0
    %v7192 = vand.u32 %v6828, 4294901760
    %v7193 = vsub.f32 %v6828, %v7192
    %v7194 = vand.u32 %v7193, 4294901760
    %v7195 = vsub.f32 %v7193, %v7194
    %v7196 = vand.u32 %v7195, 4294901760
    %7197 = vmatpush1.msra.mxu0 %v7196
    %v7198 = vand.u32 %v6856, 4294901760
    %7199 = vmatprep.mubr.f32.mxu0 %v7198
    %v7200 = vand.u32 %v6848, 4294901760
    %7201 = vmatmul.mubr.f32.gmra.mrb[0].mxu0 %v7200
    %v7202 = vpop.f32.mrb[0].mxu0
    %v7203 = vadd.f32 %v6971, %v7202
    %v7204 = vpop.f32.mrb[0].mxu0
    %7205 = vdwg.mxu0
    %7206 = vmatprep.subr.mxu0 0.0
    %v7207 = vand.u32 %v6797, 4294901760
    %v7208 = vsub.f32 %v6797, %v7207
    %7209 = vmatpush1.msra.mxu0 %v7208
    %7210 = vmatprep.subr.mxu0 0.0
    %v7211 = vand.u32 %v6798, 4294901760
    %v7212 = vsub.f32 %v6798, %v7211
    %7213 = vmatpush1.msra.mxu0 %v7212
    %7214 = vmatprep.subr.mxu0 0.0
    %v7215 = vand.u32 %v6799, 4294901760
    %v7216 = vsub.f32 %v6799, %v7215
    %7217 = vmatpush1.msra.mxu0 %v7216
    %7218 = vmatprep.subr.mxu0 0.0
    %v7219 = vand.u32 %v6800, 4294901760
    %v7220 = vsub.f32 %v6800, %v7219
    %7221 = vmatpush1.msra.mxu0 %v7220
    %7222 = vmatprep.subr.mxu0 0.0
    %v7223 = vand.u32 %v6801, 4294901760
    %v7224 = vsub.f32 %v6801, %v7223
    %7225 = vmatpush1.msra.mxu0 %v7224
    %7226 = vmatprep.subr.mxu0 0.0
    %v7227 = vand.u32 %v6802, 4294901760
    %v7228 = vsub.f32 %v6802, %v7227
    %7229 = vmatpush1.msra.mxu0 %v7228
    %7230 = vmatprep.subr.mxu0 0.0
    %v7231 = vand.u32 %v6803, 4294901760
    %v7232 = vsub.f32 %v6803, %v7231
    %7233 = vmatpush1.msra.mxu0 %v7232
    %7234 = vmatprep.subr.mxu0 0.0
    %v7235 = vand.u32 %v6804, 4294901760
    %v7236 = vsub.f32 %v6804, %v7235
    %7237 = vmatpush1.msra.mxu0 %v7236
    %7238 = vmatprep.subr.mxu0 0.0
    %v7239 = vand.u32 %v6805, 4294901760
    %v7240 = vsub.f32 %v6805, %v7239
    %7241 = vmatpush1.msra.mxu0 %v7240
    %7242 = vmatprep.subr.mxu0 0.0
    %v7243 = vand.u32 %v6806, 4294901760
    %v7244 = vsub.f32 %v6806, %v7243
    %7245 = vmatpush1.msra.mxu0 %v7244
    %7246 = vmatprep.subr.mxu0 0.0
    %v7247 = vand.u32 %v6807, 4294901760
    %v7248 = vsub.f32 %v6807, %v7247
    %7249 = vmatpush1.msra.mxu0 %v7248
    %7250 = vmatprep.subr.mxu0 0.0
    %v7251 = vand.u32 %v6808, 4294901760
    %v7252 = vsub.f32 %v6808, %v7251
    %7253 = vmatpush1.msra.mxu0 %v7252
    %7254 = vmatprep.subr.mxu0 0.0
    %v7255 = vand.u32 %v6809, 4294901760
    %v7256 = vsub.f32 %v6809, %v7255
    %7257 = vmatpush1.msra.mxu0 %v7256
    %7258 = vmatprep.subr.mxu0 0.0
    %v7259 = vand.u32 %v6810, 4294901760
    %v7260 = vsub.f32 %v6810, %v7259
    %7261 = vmatpush1.msra.mxu0 %v7260
    %7262 = vmatprep.subr.mxu0 0.0
    %v7263 = vand.u32 %v6811, 4294901760
    %v7264 = vsub.f32 %v6811, %v7263
    %7265 = vmatpush1.msra.mxu0 %v7264
    %7266 = vmatprep.subr.mxu0 0.0
    %v7267 = vand.u32 %v6812, 4294901760
    %v7268 = vsub.f32 %v6812, %v7267
    %7269 = vmatpush1.msra.mxu0 %v7268
    %7270 = vmatprep.subr.mxu0 0.0
    %v7271 = vand.u32 %v6813, 4294901760
    %v7272 = vsub.f32 %v6813, %v7271
    %7273 = vmatpush1.msra.mxu0 %v7272
    %7274 = vmatprep.subr.mxu0 0.0
    %v7275 = vand.u32 %v6814, 4294901760
    %v7276 = vsub.f32 %v6814, %v7275
    %7277 = vmatpush1.msra.mxu0 %v7276
    %7278 = vmatprep.subr.mxu0 0.0
    %v7279 = vand.u32 %v6815, 4294901760
    %v7280 = vsub.f32 %v6815, %v7279
    %7281 = vmatpush1.msra.mxu0 %v7280
    %7282 = vmatprep.subr.mxu0 0.0
    %v7283 = vand.u32 %v6816, 4294901760
    %v7284 = vsub.f32 %v6816, %v7283
    %7285 = vmatpush1.msra.mxu0 %v7284
    %7286 = vmatprep.subr.mxu0 0.0
    %v7287 = vand.u32 %v6817, 4294901760
    %v7288 = vsub.f32 %v6817, %v7287
    %7289 = vmatpush1.msra.mxu0 %v7288
    %7290 = vmatprep.subr.mxu0 0.0
    %v7291 = vand.u32 %v6818, 4294901760
    %v7292 = vsub.f32 %v6818, %v7291
    %7293 = vmatpush1.msra.mxu0 %v7292
    %7294 = vmatprep.subr.mxu0 0.0
    %v7295 = vand.u32 %v6819, 4294901760
    %v7296 = vsub.f32 %v6819, %v7295
    %7297 = vmatpush1.msra.mxu0 %v7296
    %7298 = vmatprep.subr.mxu0 0.0
    %v7299 = vand.u32 %v6820, 4294901760
    %v7300 = vsub.f32 %v6820, %v7299
    %7301 = vmatpush1.msra.mxu0 %v7300
    %7302 = vmatprep.subr.mxu0 0.0
    %v7303 = vand.u32 %v6821, 4294901760
    %v7304 = vsub.f32 %v6821, %v7303
    %7305 = vmatpush1.msra.mxu0 %v7304
    %7306 = vmatprep.subr.mxu0 0.0
    %v7307 = vand.u32 %v6822, 4294901760
    %v7308 = vsub.f32 %v6822, %v7307
    %7309 = vmatpush1.msra.mxu0 %v7308
    %7310 = vmatprep.subr.mxu0 0.0
    %v7311 = vand.u32 %v6823, 4294901760
    %v7312 = vsub.f32 %v6823, %v7311
    %7313 = vmatpush1.msra.mxu0 %v7312
    %7314 = vmatprep.subr.mxu0 0.0
    %v7315 = vand.u32 %v6824, 4294901760
    %v7316 = vsub.f32 %v6824, %v7315
    %7317 = vmatpush1.msra.mxu0 %v7316
    %7318 = vmatprep.subr.mxu0 0.0
    %v7319 = vand.u32 %v6825, 4294901760
    %v7320 = vsub.f32 %v6825, %v7319
    %7321 = vmatpush1.msra.mxu0 %v7320
    %7322 = vmatprep.subr.mxu0 0.0
    %v7323 = vand.u32 %v6826, 4294901760
    %v7324 = vsub.f32 %v6826, %v7323
    %7325 = vmatpush1.msra.mxu0 %v7324
    %7326 = vmatprep.subr.mxu0 0.0
    %v7327 = vand.u32 %v6827, 4294901760
    %v7328 = vsub.f32 %v6827, %v7327
    %7329 = vmatpush1.msra.mxu0 %v7328
    %7330 = vmatprep.subr.mxu0 0.0
    %v7331 = vand.u32 %v6828, 4294901760
    %v7332 = vsub.f32 %v6828, %v7331
    %7333 = vmatpush1.msra.mxu0 %v7332
    %v7334 = vand.u32 %v6856, 4294901760
    %v7335 = vsub.f32 %v6856, %v7334
    %7336 = vmatprep.mubr.f32.mxu0 %v7335
    %v7337 = vand.u32 %v6848, 4294901760
    %v7338 = vsub.f32 %v6848, %v7337
    %7339 = vmatmul.mubr.f32.gmra.mrb[0].mxu0 %v7338
    %v7340 = vpop.f32.mrb[0].mxu0
    %v7341 = vadd.f32 %v7203, %v7340
    %v7342 = vpop.f32.mrb[0].mxu0
    %7343 = vdwg.mxu0
    %7344 = vmatprep.subr.mxu0 0.0
    %v7345 = vand.u32 %v6797, 4294901760
    %7346 = vmatpush1.msra.mxu0 %v7345
    %7347 = vmatprep.subr.mxu0 0.0
    %v7348 = vand.u32 %v6798, 4294901760
    %7349 = vmatpush1.msra.mxu0 %v7348
    %7350 = vmatprep.subr.mxu0 0.0
    %v7351 = vand.u32 %v6799, 4294901760
    %7352 = vmatpush1.msra.mxu0 %v7351
    %7353 = vmatprep.subr.mxu0 0.0
    %v7354 = vand.u32 %v6800, 4294901760
    %7355 = vmatpush1.msra.mxu0 %v7354
    %7356 = vmatprep.subr.mxu0 0.0
    %v7357 = vand.u32 %v6801, 4294901760
    %7358 = vmatpush1.msra.mxu0 %v7357
    %7359 = vmatprep.subr.mxu0 0.0
    %v7360 = vand.u32 %v6802, 4294901760
    %7361 = vmatpush1.msra.mxu0 %v7360
    %7362 = vmatprep.subr.mxu0 0.0
    %v7363 = vand.u32 %v6803, 4294901760
    %7364 = vmatpush1.msra.mxu0 %v7363
    %7365 = vmatprep.subr.mxu0 0.0
    %v7366 = vand.u32 %v6804, 4294901760
    %7367 = vmatpush1.msra.mxu0 %v7366
    %7368 = vmatprep.subr.mxu0 0.0
    %v7369 = vand.u32 %v6805, 4294901760
    %7370 = vmatpush1.msra.mxu0 %v7369
    %7371 = vmatprep.subr.mxu0 0.0
    %v7372 = vand.u32 %v6806, 4294901760
    %7373 = vmatpush1.msra.mxu0 %v7372
    %7374 = vmatprep.subr.mxu0 0.0
    %v7375 = vand.u32 %v6807, 4294901760
    %7376 = vmatpush1.msra.mxu0 %v7375
    %7377 = vmatprep.subr.mxu0 0.0
    %v7378 = vand.u32 %v6808, 4294901760
    %7379 = vmatpush1.msra.mxu0 %v7378
    %7380 = vmatprep.subr.mxu0 0.0
    %v7381 = vand.u32 %v6809, 4294901760
    %7382 = vmatpush1.msra.mxu0 %v7381
    %7383 = vmatprep.subr.mxu0 0.0
    %v7384 = vand.u32 %v6810, 4294901760
    %7385 = vmatpush1.msra.mxu0 %v7384
    %7386 = vmatprep.subr.mxu0 0.0
    %v7387 = vand.u32 %v6811, 4294901760
    %7388 = vmatpush1.msra.mxu0 %v7387
    %7389 = vmatprep.subr.mxu0 0.0
    %v7390 = vand.u32 %v6812, 4294901760
    %7391 = vmatpush1.msra.mxu0 %v7390
    %7392 = vmatprep.subr.mxu0 0.0
    %v7393 = vand.u32 %v6813, 4294901760
    %7394 = vmatpush1.msra.mxu0 %v7393
    %7395 = vmatprep.subr.mxu0 0.0
    %v7396 = vand.u32 %v6814, 4294901760
    %7397 = vmatpush1.msra.mxu0 %v7396
    %7398 = vmatprep.subr.mxu0 0.0
    %v7399 = vand.u32 %v6815, 4294901760
    %7400 = vmatpush1.msra.mxu0 %v7399
    %7401 = vmatprep.subr.mxu0 0.0
    %v7402 = vand.u32 %v6816, 4294901760
    %7403 = vmatpush1.msra.mxu0 %v7402
    %7404 = vmatprep.subr.mxu0 0.0
    %v7405 = vand.u32 %v6817, 4294901760
    %7406 = vmatpush1.msra.mxu0 %v7405
    %7407 = vmatprep.subr.mxu0 0.0
    %v7408 = vand.u32 %v6818, 4294901760
    %7409 = vmatpush1.msra.mxu0 %v7408
    %7410 = vmatprep.subr.mxu0 0.0
    %v7411 = vand.u32 %v6819, 4294901760
    %7412 = vmatpush1.msra.mxu0 %v7411
    %7413 = vmatprep.subr.mxu0 0.0
    %v7414 = vand.u32 %v6820, 4294901760
    %7415 = vmatpush1.msra.mxu0 %v7414
    %7416 = vmatprep.subr.mxu0 0.0
    %v7417 = vand.u32 %v6821, 4294901760
    %7418 = vmatpush1.msra.mxu0 %v7417
    %7419 = vmatprep.subr.mxu0 0.0
    %v7420 = vand.u32 %v6822, 4294901760
    %7421 = vmatpush1.msra.mxu0 %v7420
    %7422 = vmatprep.subr.mxu0 0.0
    %v7423 = vand.u32 %v6823, 4294901760
    %7424 = vmatpush1.msra.mxu0 %v7423
    %7425 = vmatprep.subr.mxu0 0.0
    %v7426 = vand.u32 %v6824, 4294901760
    %7427 = vmatpush1.msra.mxu0 %v7426
    %7428 = vmatprep.subr.mxu0 0.0
    %v7429 = vand.u32 %v6825, 4294901760
    %7430 = vmatpush1.msra.mxu0 %v7429
    %7431 = vmatprep.subr.mxu0 0.0
    %v7432 = vand.u32 %v6826, 4294901760
    %7433 = vmatpush1.msra.mxu0 %v7432
    %7434 = vmatprep.subr.mxu0 0.0
    %v7435 = vand.u32 %v6827, 4294901760
    %7436 = vmatpush1.msra.mxu0 %v7435
    %7437 = vmatprep.subr.mxu0 0.0
    %v7438 = vand.u32 %v6828, 4294901760
    %7439 = vmatpush1.msra.mxu0 %v7438
    %v7440 = vand.u32 %v6856, 4294901760
    %v7441 = vsub.f32 %v6856, %v7440
    %v7442 = vand.u32 %v7441, 4294901760
    %7443 = vmatprep.mubr.f32.mxu0 %v7442
    %v7444 = vand.u32 %v6848, 4294901760
    %v7445 = vsub.f32 %v6848, %v7444
    %v7446 = vand.u32 %v7445, 4294901760
    %7447 = vmatmul.mubr.f32.gmra.mrb[0].mxu0 %v7446
    %v7448 = vpop.f32.mrb[0].mxu0
    %v7449 = vadd.f32 %v7341, %v7448
    %v7450 = vpop.f32.mrb[0].mxu0
    %7451 = vdwg.mxu0
    %7452 = vmatprep.subr.mxu0 0.0
    %v7453 = vand.u32 %v6797, 4294901760
    %v7454 = vsub.f32 %v6797, %v7453
    %v7455 = vand.u32 %v7454, 4294901760
    %7456 = vmatpush1.msra.mxu0 %v7455
    %7457 = vmatprep.subr.mxu0 0.0
    %v7458 = vand.u32 %v6798, 4294901760
    %v7459 = vsub.f32 %v6798, %v7458
    %v7460 = vand.u32 %v7459, 4294901760
    %7461 = vmatpush1.msra.mxu0 %v7460
    %7462 = vmatprep.subr.mxu0 0.0
    %v7463 = vand.u32 %v6799, 4294901760
    %v7464 = vsub.f32 %v6799, %v7463
    %v7465 = vand.u32 %v7464, 4294901760
    %7466 = vmatpush1.msra.mxu0 %v7465
    %7467 = vmatprep.subr.mxu0 0.0
    %v7468 = vand.u32 %v6800, 4294901760
    %v7469 = vsub.f32 %v6800, %v7468
    %v7470 = vand.u32 %v7469, 4294901760
    %7471 = vmatpush1.msra.mxu0 %v7470
    %7472 = vmatprep.subr.mxu0 0.0
    %v7473 = vand.u32 %v6801, 4294901760
    %v7474 = vsub.f32 %v6801, %v7473
    %v7475 = vand.u32 %v7474, 4294901760
    %7476 = vmatpush1.msra.mxu0 %v7475
    %7477 = vmatprep.subr.mxu0 0.0
    %v7478 = vand.u32 %v6802, 4294901760
    %v7479 = vsub.f32 %v6802, %v7478
    %v7480 = vand.u32 %v7479, 4294901760
    %7481 = vmatpush1.msra.mxu0 %v7480
    %7482 = vmatprep.subr.mxu0 0.0
    %v7483 = vand.u32 %v6803, 4294901760
    %v7484 = vsub.f32 %v6803, %v7483
    %v7485 = vand.u32 %v7484, 4294901760
    %7486 = vmatpush1.msra.mxu0 %v7485
    %7487 = vmatprep.subr.mxu0 0.0
    %v7488 = vand.u32 %v6804, 4294901760
    %v7489 = vsub.f32 %v6804, %v7488
    %v7490 = vand.u32 %v7489, 4294901760
    %7491 = vmatpush1.msra.mxu0 %v7490
    %7492 = vmatprep.subr.mxu0 0.0
    %v7493 = vand.u32 %v6805, 4294901760
    %v7494 = vsub.f32 %v6805, %v7493
    %v7495 = vand.u32 %v7494, 4294901760
    %7496 = vmatpush1.msra.mxu0 %v7495
    %7497 = vmatprep.subr.mxu0 0.0
    %v7498 = vand.u32 %v6806, 4294901760
    %v7499 = vsub.f32 %v6806, %v7498
    %v7500 = vand.u32 %v7499, 4294901760
    %7501 = vmatpush1.msra.mxu0 %v7500
    %7502 = vmatprep.subr.mxu0 0.0
    %v7503 = vand.u32 %v6807, 4294901760
    %v7504 = vsub.f32 %v6807, %v7503
    %v7505 = vand.u32 %v7504, 4294901760
    %7506 = vmatpush1.msra.mxu0 %v7505
    %7507 = vmatprep.subr.mxu0 0.0
    %v7508 = vand.u32 %v6808, 4294901760
    %v7509 = vsub.f32 %v6808, %v7508
    %v7510 = vand.u32 %v7509, 4294901760
    %7511 = vmatpush1.msra.mxu0 %v7510
    %7512 = vmatprep.subr.mxu0 0.0
    %v7513 = vand.u32 %v6809, 4294901760
    %v7514 = vsub.f32 %v6809, %v7513
    %v7515 = vand.u32 %v7514, 4294901760
    %7516 = vmatpush1.msra.mxu0 %v7515
    %7517 = vmatprep.subr.mxu0 0.0
    %v7518 = vand.u32 %v6810, 4294901760
    %v7519 = vsub.f32 %v6810, %v7518
    %v7520 = vand.u32 %v7519, 4294901760
    %7521 = vmatpush1.msra.mxu0 %v7520
    %7522 = vmatprep.subr.mxu0 0.0
    %v7523 = vand.u32 %v6811, 4294901760
    %v7524 = vsub.f32 %v6811, %v7523
    %v7525 = vand.u32 %v7524, 4294901760
    %7526 = vmatpush1.msra.mxu0 %v7525
    %7527 = vmatprep.subr.mxu0 0.0
    %v7528 = vand.u32 %v6812, 4294901760
    %v7529 = vsub.f32 %v6812, %v7528
    %v7530 = vand.u32 %v7529, 4294901760
    %7531 = vmatpush1.msra.mxu0 %v7530
    %7532 = vmatprep.subr.mxu0 0.0
    %v7533 = vand.u32 %v6813, 4294901760
    %v7534 = vsub.f32 %v6813, %v7533
    %v7535 = vand.u32 %v7534, 4294901760
    %7536 = vmatpush1.msra.mxu0 %v7535
    %7537 = vmatprep.subr.mxu0 0.0
    %v7538 = vand.u32 %v6814, 4294901760
    %v7539 = vsub.f32 %v6814, %v7538
    %v7540 = vand.u32 %v7539, 4294901760
    %7541 = vmatpush1.msra.mxu0 %v7540
    %7542 = vmatprep.subr.mxu0 0.0
    %v7543 = vand.u32 %v6815, 4294901760
    %v7544 = vsub.f32 %v6815, %v7543
    %v7545 = vand.u32 %v7544, 4294901760
    %7546 = vmatpush1.msra.mxu0 %v7545
    %7547 = vmatprep.subr.mxu0 0.0
    %v7548 = vand.u32 %v6816, 4294901760
    %v7549 = vsub.f32 %v6816, %v7548
    %v7550 = vand.u32 %v7549, 4294901760
    %7551 = vmatpush1.msra.mxu0 %v7550
    %7552 = vmatprep.subr.mxu0 0.0
    %v7553 = vand.u32 %v6817, 4294901760
    %v7554 = vsub.f32 %v6817, %v7553
    %v7555 = vand.u32 %v7554, 4294901760
    %7556 = vmatpush1.msra.mxu0 %v7555
    %7557 = vmatprep.subr.mxu0 0.0
    %v7558 = vand.u32 %v6818, 4294901760
    %v7559 = vsub.f32 %v6818, %v7558
    %v7560 = vand.u32 %v7559, 4294901760
    %7561 = vmatpush1.msra.mxu0 %v7560
    %7562 = vmatprep.subr.mxu0 0.0
    %v7563 = vand.u32 %v6819, 4294901760
    %v7564 = vsub.f32 %v6819, %v7563
    %v7565 = vand.u32 %v7564, 4294901760
    %7566 = vmatpush1.msra.mxu0 %v7565
    %7567 = vmatprep.subr.mxu0 0.0
    %v7568 = vand.u32 %v6820, 4294901760
    %v7569 = vsub.f32 %v6820, %v7568
    %v7570 = vand.u32 %v7569, 4294901760
    %7571 = vmatpush1.msra.mxu0 %v7570
    %7572 = vmatprep.subr.mxu0 0.0
    %v7573 = vand.u32 %v6821, 4294901760
    %v7574 = vsub.f32 %v6821, %v7573
    %v7575 = vand.u32 %v7574, 4294901760
    %7576 = vmatpush1.msra.mxu0 %v7575
    %7577 = vmatprep.subr.mxu0 0.0
    %v7578 = vand.u32 %v6822, 4294901760
    %v7579 = vsub.f32 %v6822, %v7578
    %v7580 = vand.u32 %v7579, 4294901760
    %7581 = vmatpush1.msra.mxu0 %v7580
    %7582 = vmatprep.subr.mxu0 0.0
    %v7583 = vand.u32 %v6823, 4294901760
    %v7584 = vsub.f32 %v6823, %v7583
    %v7585 = vand.u32 %v7584, 4294901760
    %7586 = vmatpush1.msra.mxu0 %v7585
    %7587 = vmatprep.subr.mxu0 0.0
    %v7588 = vand.u32 %v6824, 4294901760
    %v7589 = vsub.f32 %v6824, %v7588
    %v7590 = vand.u32 %v7589, 4294901760
    %7591 = vmatpush1.msra.mxu0 %v7590
    %7592 = vmatprep.subr.mxu0 0.0
    %v7593 = vand.u32 %v6825, 4294901760
    %v7594 = vsub.f32 %v6825, %v7593
    %v7595 = vand.u32 %v7594, 4294901760
    %7596 = vmatpush1.msra.mxu0 %v7595
    %7597 = vmatprep.subr.mxu0 0.0
    %v7598 = vand.u32 %v6826, 4294901760
    %v7599 = vsub.f32 %v6826, %v7598
    %v7600 = vand.u32 %v7599, 4294901760
    %7601 = vmatpush1.msra.mxu0 %v7600
    %7602 = vmatprep.subr.mxu0 0.0
    %v7603 = vand.u32 %v6827, 4294901760
    %v7604 = vsub.f32 %v6827, %v7603
    %v7605 = vand.u32 %v7604, 4294901760
    %7606 = vmatpush1.msra.mxu0 %v7605
    %7607 = vmatprep.subr.mxu0 0.0
    %v7608 = vand.u32 %v6828, 4294901760
    %v7609 = vsub.f32 %v6828, %v7608
    %v7610 = vand.u32 %v7609, 4294901760
    %7611 = vmatpush1.msra.mxu0 %v7610
    %v7612 = vand.u32 %v6856, 4294901760
    %7613 = vmatprep.mubr.f32.mxu0 %v7612
    %v7614 = vand.u32 %v6848, 4294901760
    %7615 = vmatmul.mubr.f32.gmra.mrb[0].mxu0 %v7614
    %v7616 = vpop.f32.mrb[0].mxu0
    %v7617 = vadd.f32 %v7449, %v7616
    %v7618 = vpop.f32.mrb[0].mxu0
    %7619 = vdwg.mxu0
    %7620 = vmatprep.subr.mxu0 0.0
    %v7621 = vand.u32 %v6797, 4294901760
    %7622 = vmatpush1.msra.mxu0 %v7621
    %7623 = vmatprep.subr.mxu0 0.0
    %v7624 = vand.u32 %v6798, 4294901760
    %7625 = vmatpush1.msra.mxu0 %v7624
    %7626 = vmatprep.subr.mxu0 0.0
    %v7627 = vand.u32 %v6799, 4294901760
    %7628 = vmatpush1.msra.mxu0 %v7627
    %7629 = vmatprep.subr.mxu0 0.0
    %v7630 = vand.u32 %v6800, 4294901760
    %7631 = vmatpush1.msra.mxu0 %v7630
    %7632 = vmatprep.subr.mxu0 0.0
    %v7633 = vand.u32 %v6801, 4294901760
    %7634 = vmatpush1.msra.mxu0 %v7633
    %7635 = vmatprep.subr.mxu0 0.0
    %v7636 = vand.u32 %v6802, 4294901760
    %7637 = vmatpush1.msra.mxu0 %v7636
    %7638 = vmatprep.subr.mxu0 0.0
    %v7639 = vand.u32 %v6803, 4294901760
    %7640 = vmatpush1.msra.mxu0 %v7639
    %7641 = vmatprep.subr.mxu0 0.0
    %v7642 = vand.u32 %v6804, 4294901760
    %7643 = vmatpush1.msra.mxu0 %v7642
    %7644 = vmatprep.subr.mxu0 0.0
    %v7645 = vand.u32 %v6805, 4294901760
    %7646 = vmatpush1.msra.mxu0 %v7645
    %7647 = vmatprep.subr.mxu0 0.0
    %v7648 = vand.u32 %v6806, 4294901760
    %7649 = vmatpush1.msra.mxu0 %v7648
    %7650 = vmatprep.subr.mxu0 0.0
    %v7651 = vand.u32 %v6807, 4294901760
    %7652 = vmatpush1.msra.mxu0 %v7651
    %7653 = vmatprep.subr.mxu0 0.0
    %v7654 = vand.u32 %v6808, 4294901760
    %7655 = vmatpush1.msra.mxu0 %v7654
    %7656 = vmatprep.subr.mxu0 0.0
    %v7657 = vand.u32 %v6809, 4294901760
    %7658 = vmatpush1.msra.mxu0 %v7657
    %7659 = vmatprep.subr.mxu0 0.0
    %v7660 = vand.u32 %v6810, 4294901760
    %7661 = vmatpush1.msra.mxu0 %v7660
    %7662 = vmatprep.subr.mxu0 0.0
    %v7663 = vand.u32 %v6811, 4294901760
    %7664 = vmatpush1.msra.mxu0 %v7663
    %7665 = vmatprep.subr.mxu0 0.0
    %v7666 = vand.u32 %v6812, 4294901760
    %7667 = vmatpush1.msra.mxu0 %v7666
    %7668 = vmatprep.subr.mxu0 0.0
    %v7669 = vand.u32 %v6813, 4294901760
    %7670 = vmatpush1.msra.mxu0 %v7669
    %7671 = vmatprep.subr.mxu0 0.0
    %v7672 = vand.u32 %v6814, 4294901760
    %7673 = vmatpush1.msra.mxu0 %v7672
    %7674 = vmatprep.subr.mxu0 0.0
    %v7675 = vand.u32 %v6815, 4294901760
    %7676 = vmatpush1.msra.mxu0 %v7675
    %7677 = vmatprep.subr.mxu0 0.0
    %v7678 = vand.u32 %v6816, 4294901760
    %7679 = vmatpush1.msra.mxu0 %v7678
    %7680 = vmatprep.subr.mxu0 0.0
    %v7681 = vand.u32 %v6817, 4294901760
    %7682 = vmatpush1.msra.mxu0 %v7681
    %7683 = vmatprep.subr.mxu0 0.0
    %v7684 = vand.u32 %v6818, 4294901760
    %7685 = vmatpush1.msra.mxu0 %v7684
    %7686 = vmatprep.subr.mxu0 0.0
    %v7687 = vand.u32 %v6819, 4294901760
    %7688 = vmatpush1.msra.mxu0 %v7687
    %7689 = vmatprep.subr.mxu0 0.0
    %v7690 = vand.u32 %v6820, 4294901760
    %7691 = vmatpush1.msra.mxu0 %v7690
    %7692 = vmatprep.subr.mxu0 0.0
    %v7693 = vand.u32 %v6821, 4294901760
    %7694 = vmatpush1.msra.mxu0 %v7693
    %7695 = vmatprep.subr.mxu0 0.0
    %v7696 = vand.u32 %v6822, 4294901760
    %7697 = vmatpush1.msra.mxu0 %v7696
    %7698 = vmatprep.subr.mxu0 0.0
    %v7699 = vand.u32 %v6823, 4294901760
    %7700 = vmatpush1.msra.mxu0 %v7699
    %7701 = vmatprep.subr.mxu0 0.0
    %v7702 = vand.u32 %v6824, 4294901760
    %7703 = vmatpush1.msra.mxu0 %v7702
    %7704 = vmatprep.subr.mxu0 0.0
    %v7705 = vand.u32 %v6825, 4294901760
    %7706 = vmatpush1.msra.mxu0 %v7705
    %7707 = vmatprep.subr.mxu0 0.0
    %v7708 = vand.u32 %v6826, 4294901760
    %7709 = vmatpush1.msra.mxu0 %v7708
    %7710 = vmatprep.subr.mxu0 0.0
    %v7711 = vand.u32 %v6827, 4294901760
    %7712 = vmatpush1.msra.mxu0 %v7711
    %7713 = vmatprep.subr.mxu0 0.0
    %v7714 = vand.u32 %v6828, 4294901760
    %7715 = vmatpush1.msra.mxu0 %v7714
    %v7716 = vand.u32 %v6856, 4294901760
    %7717 = vmatprep.mubr.f32.mxu0 %v7716
    %v7718 = vand.u32 %v6848, 4294901760
    %7719 = vmatmul.mubr.f32.gmra.mrb[0].mxu0 %v7718
    %v7720 = vpop.f32.mrb[0].mxu0
    %v7721 = vadd.f32 %v7617, %v7720
    %v7722 = vpop.f32.mrb[0].mxu0
    %7723 = vdwg.mxu0
    %7724 = vmatprep.subr.mxu0 0.0
    %v7725 = vand.u32 %v6829, 4294901760
    %7726 = vmatpush1.msra.mxu0 %v7725
    %7727 = vmatprep.subr.mxu0 0.0
    %v7728 = vand.u32 %v6830, 4294901760
    %7729 = vmatpush1.msra.mxu0 %v7728
    %7730 = vmatprep.subr.mxu0 0.0
    %v7731 = vand.u32 %v6831, 4294901760
    %7732 = vmatpush1.msra.mxu0 %v7731
    %7733 = vmatprep.subr.mxu0 0.0
    %v7734 = vand.u32 %v6832, 4294901760
    %7735 = vmatpush1.msra.mxu0 %v7734
    %7736 = vmatprep.subr.mxu0 0.0
    %7737 = vmatpush1.msra.mxu0 0.0
    %7738 = vmatprep.subr.mxu0 0.0
    %7739 = vmatpush1.msra.mxu0 0.0
    %7740 = vmatprep.subr.mxu0 0.0
    %7741 = vmatpush1.msra.mxu0 0.0
    %7742 = vmatprep.subr.mxu0 0.0
    %7743 = vmatpush1.msra.mxu0 0.0
    %7744 = vmatprep.subr.mxu0 0.0
    %7745 = vmatpush1.msra.mxu0 0.0
    %7746 = vmatprep.subr.mxu0 0.0
    %7747 = vmatpush1.msra.mxu0 0.0
    %7748 = vmatprep.subr.mxu0 0.0
    %7749 = vmatpush1.msra.mxu0 0.0
    %7750 = vmatprep.subr.mxu0 0.0
    %7751 = vmatpush1.msra.mxu0 0.0
    %7752 = vmatprep.subr.mxu0 0.0
    %7753 = vmatpush1.msra.mxu0 0.0
    %7754 = vmatprep.subr.mxu0 0.0
    %7755 = vmatpush1.msra.mxu0 0.0
    %7756 = vmatprep.subr.mxu0 0.0
    %7757 = vmatpush1.msra.mxu0 0.0
    %7758 = vmatprep.subr.mxu0 0.0
    %7759 = vmatpush1.msra.mxu0 0.0
    %7760 = vmatprep.subr.mxu0 0.0
    %7761 = vmatpush1.msra.mxu0 0.0
    %7762 = vmatprep.subr.mxu0 0.0
    %7763 = vmatpush1.msra.mxu0 0.0
    %7764 = vmatprep.subr.mxu0 0.0
    %7765 = vmatpush1.msra.mxu0 0.0
    %7766 = vmatprep.subr.mxu0 0.0
    %7767 = vmatpush1.msra.mxu0 0.0
    %7768 = vmatprep.subr.mxu0 0.0
    %7769 = vmatpush1.msra.mxu0 0.0
    %7770 = vmatprep.subr.mxu0 0.0
    %7771 = vmatpush1.msra.mxu0 0.0
    %7772 = vmatprep.subr.mxu0 0.0
    %7773 = vmatpush1.msra.mxu0 0.0
    %7774 = vmatprep.subr.mxu0 0.0
    %7775 = vmatpush1.msra.mxu0 0.0
    %7776 = vmatprep.subr.mxu0 0.0
    %7777 = vmatpush1.msra.mxu0 0.0
    %7778 = vmatprep.subr.mxu0 0.0
    %7779 = vmatpush1.msra.mxu0 0.0
    %7780 = vmatprep.subr.mxu0 0.0
    %7781 = vmatpush1.msra.mxu0 0.0
    %7782 = vmatprep.subr.mxu0 0.0
    %7783 = vmatpush1.msra.mxu0 0.0
    %7784 = vmatprep.subr.mxu0 0.0
    %7785 = vmatpush1.msra.mxu0 0.0
    %7786 = vmatprep.subr.mxu0 0.0
    %7787 = vmatpush1.msra.mxu0 0.0
    %7788 = vmatprep.subr.mxu0 0.0
    %7789 = vmatpush1.msra.mxu0 0.0
    %7790 = vmatprep.subr.mxu0 0.0
    %7791 = vmatpush1.msra.mxu0 0.0
    %7792 = vmatprep.mubr.f32.mxu0 0.0
    %v7793 = vand.u32 %v6860, 4294901760
    %v7794 = vsub.f32 %v6860, %v7793
    %v7795 = vand.u32 %v7794, 4294901760
    %v7796 = vsub.f32 %v7794, %v7795
    %v7797 = vand.u32 %v7796, 4294901760
    %7798 = vmatmul.mubr.f32.gmra.mrb[0].mxu0 %v7797
    %v7799 = vpop.f32.mrb[0].mxu0
    %v7800 = vadd.f32 %v7721, %v7799
    %v7801 = vpop.f32.mrb[0].mxu0
    %7802 = vdwg.mxu0
    %7803 = vmatprep.subr.mxu0 0.0
    %v7804 = vand.u32 %v6829, 4294901760
    %v7805 = vsub.f32 %v6829, %v7804
    %v7806 = vand.u32 %v7805, 4294901760
    %v7807 = vsub.f32 %v7805, %v7806
    %v7808 = vand.u32 %v7807, 4294901760
    %7809 = vmatpush1.msra.mxu0 %v7808
    %7810 = vmatprep.subr.mxu0 0.0
    %v7811 = vand.u32 %v6830, 4294901760
    %v7812 = vsub.f32 %v6830, %v7811
    %v7813 = vand.u32 %v7812, 4294901760
    %v7814 = vsub.f32 %v7812, %v7813
    %v7815 = vand.u32 %v7814, 4294901760
    %7816 = vmatpush1.msra.mxu0 %v7815
    %7817 = vmatprep.subr.mxu0 0.0
    %v7818 = vand.u32 %v6831, 4294901760
    %v7819 = vsub.f32 %v6831, %v7818
    %v7820 = vand.u32 %v7819, 4294901760
    %v7821 = vsub.f32 %v7819, %v7820
    %v7822 = vand.u32 %v7821, 4294901760
    %7823 = vmatpush1.msra.mxu0 %v7822
    %7824 = vmatprep.subr.mxu0 0.0
    %v7825 = vand.u32 %v6832, 4294901760
    %v7826 = vsub.f32 %v6832, %v7825
    %v7827 = vand.u32 %v7826, 4294901760
    %v7828 = vsub.f32 %v7826, %v7827
    %v7829 = vand.u32 %v7828, 4294901760
    %7830 = vmatpush1.msra.mxu0 %v7829
    %7831 = vmatprep.subr.mxu0 0.0
    %7832 = vmatpush1.msra.mxu0 0.0
    %7833 = vmatprep.subr.mxu0 0.0
    %7834 = vmatpush1.msra.mxu0 0.0
    %7835 = vmatprep.subr.mxu0 0.0
    %7836 = vmatpush1.msra.mxu0 0.0
    %7837 = vmatprep.subr.mxu0 0.0
    %7838 = vmatpush1.msra.mxu0 0.0
    %7839 = vmatprep.subr.mxu0 0.0
    %7840 = vmatpush1.msra.mxu0 0.0
    %7841 = vmatprep.subr.mxu0 0.0
    %7842 = vmatpush1.msra.mxu0 0.0
    %7843 = vmatprep.subr.mxu0 0.0
    %7844 = vmatpush1.msra.mxu0 0.0
    %7845 = vmatprep.subr.mxu0 0.0
    %7846 = vmatpush1.msra.mxu0 0.0
    %7847 = vmatprep.subr.mxu0 0.0
    %7848 = vmatpush1.msra.mxu0 0.0
    %7849 = vmatprep.subr.mxu0 0.0
    %7850 = vmatpush1.msra.mxu0 0.0
    %7851 = vmatprep.subr.mxu0 0.0
    %7852 = vmatpush1.msra.mxu0 0.0
    %7853 = vmatprep.subr.mxu0 0.0
    %7854 = vmatpush1.msra.mxu0 0.0
    %7855 = vmatprep.subr.mxu0 0.0
    %7856 = vmatpush1.msra.mxu0 0.0
    %7857 = vmatprep.subr.mxu0 0.0
    %7858 = vmatpush1.msra.mxu0 0.0
    %7859 = vmatprep.subr.mxu0 0.0
    %7860 = vmatpush1.msra.mxu0 0.0
    %7861 = vmatprep.subr.mxu0 0.0
    %7862 = vmatpush1.msra.mxu0 0.0
    %7863 = vmatprep.subr.mxu0 0.0
    %7864 = vmatpush1.msra.mxu0 0.0
    %7865 = vmatprep.subr.mxu0 0.0
    %7866 = vmatpush1.msra.mxu0 0.0
    %7867 = vmatprep.subr.mxu0 0.0
    %7868 = vmatpush1.msra.mxu0 0.0
    %7869 = vmatprep.subr.mxu0 0.0
    %7870 = vmatpush1.msra.mxu0 0.0
    %7871 = vmatprep.subr.mxu0 0.0
    %7872 = vmatpush1.msra.mxu0 0.0
    %7873 = vmatprep.subr.mxu0 0.0
    %7874 = vmatpush1.msra.mxu0 0.0
    %7875 = vmatprep.subr.mxu0 0.0
    %7876 = vmatpush1.msra.mxu0 0.0
    %7877 = vmatprep.subr.mxu0 0.0
    %7878 = vmatpush1.msra.mxu0 0.0
    %7879 = vmatprep.subr.mxu0 0.0
    %7880 = vmatpush1.msra.mxu0 0.0
    %7881 = vmatprep.subr.mxu0 0.0
    %7882 = vmatpush1.msra.mxu0 0.0
    %7883 = vmatprep.subr.mxu0 0.0
    %7884 = vmatpush1.msra.mxu0 0.0
    %7885 = vmatprep.subr.mxu0 0.0
    %7886 = vmatpush1.msra.mxu0 0.0
    %7887 = vmatprep.mubr.f32.mxu0 0.0
    %v7888 = vand.u32 %v6860, 4294901760
    %7889 = vmatmul.mubr.f32.gmra.mrb[0].mxu0 %v7888
    %v7890 = vpop.f32.mrb[0].mxu0
    %v7891 = vadd.f32 %v7800, %v7890
    %v7892 = vpop.f32.mrb[0].mxu0
    %7893 = vdwg.mxu0
    %7894 = vmatprep.subr.mxu0 0.0
    %v7895 = vand.u32 %v6829, 4294901760
    %v7896 = vsub.f32 %v6829, %v7895
    %7897 = vmatpush1.msra.mxu0 %v7896
    %7898 = vmatprep.subr.mxu0 0.0
    %v7899 = vand.u32 %v6830, 4294901760
    %v7900 = vsub.f32 %v6830, %v7899
    %7901 = vmatpush1.msra.mxu0 %v7900
    %7902 = vmatprep.subr.mxu0 0.0
    %v7903 = vand.u32 %v6831, 4294901760
    %v7904 = vsub.f32 %v6831, %v7903
    %7905 = vmatpush1.msra.mxu0 %v7904
    %7906 = vmatprep.subr.mxu0 0.0
    %v7907 = vand.u32 %v6832, 4294901760
    %v7908 = vsub.f32 %v6832, %v7907
    %7909 = vmatpush1.msra.mxu0 %v7908
    %7910 = vmatprep.subr.mxu0 0.0
    %7911 = vmatpush1.msra.mxu0 0.0
    %7912 = vmatprep.subr.mxu0 0.0
    %7913 = vmatpush1.msra.mxu0 0.0
    %7914 = vmatprep.subr.mxu0 0.0
    %7915 = vmatpush1.msra.mxu0 0.0
    %7916 = vmatprep.subr.mxu0 0.0
    %7917 = vmatpush1.msra.mxu0 0.0
    %7918 = vmatprep.subr.mxu0 0.0
    %7919 = vmatpush1.msra.mxu0 0.0
    %7920 = vmatprep.subr.mxu0 0.0
    %7921 = vmatpush1.msra.mxu0 0.0
    %7922 = vmatprep.subr.mxu0 0.0
    %7923 = vmatpush1.msra.mxu0 0.0
    %7924 = vmatprep.subr.mxu0 0.0
    %7925 = vmatpush1.msra.mxu0 0.0
    %7926 = vmatprep.subr.mxu0 0.0
    %7927 = vmatpush1.msra.mxu0 0.0
    %7928 = vmatprep.subr.mxu0 0.0
    %7929 = vmatpush1.msra.mxu0 0.0
    %7930 = vmatprep.subr.mxu0 0.0
    %7931 = vmatpush1.msra.mxu0 0.0
    %7932 = vmatprep.subr.mxu0 0.0
    %7933 = vmatpush1.msra.mxu0 0.0
    %7934 = vmatprep.subr.mxu0 0.0
    %7935 = vmatpush1.msra.mxu0 0.0
    %7936 = vmatprep.subr.mxu0 0.0
    %7937 = vmatpush1.msra.mxu0 0.0
    %7938 = vmatprep.subr.mxu0 0.0
    %7939 = vmatpush1.msra.mxu0 0.0
    %7940 = vmatprep.subr.mxu0 0.0
    %7941 = vmatpush1.msra.mxu0 0.0
    %7942 = vmatprep.subr.mxu0 0.0
    %7943 = vmatpush1.msra.mxu0 0.0
    %7944 = vmatprep.subr.mxu0 0.0
    %7945 = vmatpush1.msra.mxu0 0.0
    %7946 = vmatprep.subr.mxu0 0.0
    %7947 = vmatpush1.msra.mxu0 0.0
    %7948 = vmatprep.subr.mxu0 0.0
    %7949 = vmatpush1.msra.mxu0 0.0
    %7950 = vmatprep.subr.mxu0 0.0
    %7951 = vmatpush1.msra.mxu0 0.0
    %7952 = vmatprep.subr.mxu0 0.0
    %7953 = vmatpush1.msra.mxu0 0.0
    %7954 = vmatprep.subr.mxu0 0.0
    %7955 = vmatpush1.msra.mxu0 0.0
    %7956 = vmatprep.subr.mxu0 0.0
    %7957 = vmatpush1.msra.mxu0 0.0
    %7958 = vmatprep.subr.mxu0 0.0
    %7959 = vmatpush1.msra.mxu0 0.0
    %7960 = vmatprep.subr.mxu0 0.0
    %7961 = vmatpush1.msra.mxu0 0.0
    %7962 = vmatprep.subr.mxu0 0.0
    %7963 = vmatpush1.msra.mxu0 0.0
    %7964 = vmatprep.subr.mxu0 0.0
    %7965 = vmatpush1.msra.mxu0 0.0
    %7966 = vmatprep.mubr.f32.mxu0 0.0
    %v7967 = vand.u32 %v6860, 4294901760
    %v7968 = vsub.f32 %v6860, %v7967
    %7969 = vmatmul.mubr.f32.gmra.mrb[0].mxu0 %v7968
    %v7970 = vpop.f32.mrb[0].mxu0
    %v7971 = vadd.f32 %v7891, %v7970
    %v7972 = vpop.f32.mrb[0].mxu0
    %7973 = vdwg.mxu0
    %7974 = vmatprep.subr.mxu0 0.0
    %v7975 = vand.u32 %v6829, 4294901760
    %7976 = vmatpush1.msra.mxu0 %v7975
    %7977 = vmatprep.subr.mxu0 0.0
    %v7978 = vand.u32 %v6830, 4294901760
    %7979 = vmatpush1.msra.mxu0 %v7978
    %7980 = vmatprep.subr.mxu0 0.0
    %v7981 = vand.u32 %v6831, 4294901760
    %7982 = vmatpush1.msra.mxu0 %v7981
    %7983 = vmatprep.subr.mxu0 0.0
    %v7984 = vand.u32 %v6832, 4294901760
    %7985 = vmatpush1.msra.mxu0 %v7984
    %7986 = vmatprep.subr.mxu0 0.0
    %7987 = vmatpush1.msra.mxu0 0.0
    %7988 = vmatprep.subr.mxu0 0.0
    %7989 = vmatpush1.msra.mxu0 0.0
    %7990 = vmatprep.subr.mxu0 0.0
    %7991 = vmatpush1.msra.mxu0 0.0
    %7992 = vmatprep.subr.mxu0 0.0
    %7993 = vmatpush1.msra.mxu0 0.0
    %7994 = vmatprep.subr.mxu0 0.0
    %7995 = vmatpush1.msra.mxu0 0.0
    %7996 = vmatprep.subr.mxu0 0.0
    %7997 = vmatpush1.msra.mxu0 0.0
    %7998 = vmatprep.subr.mxu0 0.0
    %7999 = vmatpush1.msra.mxu0 0.0
    %8000 = vmatprep.subr.mxu0 0.0
    %8001 = vmatpush1.msra.mxu0 0.0
    %8002 = vmatprep.subr.mxu0 0.0
    %8003 = vmatpush1.msra.mxu0 0.0
    %8004 = vmatprep.subr.mxu0 0.0
    %8005 = vmatpush1.msra.mxu0 0.0
    %8006 = vmatprep.subr.mxu0 0.0
    %8007 = vmatpush1.msra.mxu0 0.0
    %8008 = vmatprep.subr.mxu0 0.0
    %8009 = vmatpush1.msra.mxu0 0.0
    %8010 = vmatprep.subr.mxu0 0.0
    %8011 = vmatpush1.msra.mxu0 0.0
    %8012 = vmatprep.subr.mxu0 0.0
    %8013 = vmatpush1.msra.mxu0 0.0
    %8014 = vmatprep.subr.mxu0 0.0
    %8015 = vmatpush1.msra.mxu0 0.0
    %8016 = vmatprep.subr.mxu0 0.0
    %8017 = vmatpush1.msra.mxu0 0.0
    %8018 = vmatprep.subr.mxu0 0.0
    %8019 = vmatpush1.msra.mxu0 0.0
    %8020 = vmatprep.subr.mxu0 0.0
    %8021 = vmatpush1.msra.mxu0 0.0
    %8022 = vmatprep.subr.mxu0 0.0
    %8023 = vmatpush1.msra.mxu0 0.0
    %8024 = vmatprep.subr.mxu0 0.0
    %8025 = vmatpush1.msra.mxu0 0.0
    %8026 = vmatprep.subr.mxu0 0.0
    %8027 = vmatpush1.msra.mxu0 0.0
    %8028 = vmatprep.subr.mxu0 0.0
    %8029 = vmatpush1.msra.mxu0 0.0
    %8030 = vmatprep.subr.mxu0 0.0
    %8031 = vmatpush1.msra.mxu0 0.0
    %8032 = vmatprep.subr.mxu0 0.0
    %8033 = vmatpush1.msra.mxu0 0.0
    %8034 = vmatprep.subr.mxu0 0.0
    %8035 = vmatpush1.msra.mxu0 0.0
    %8036 = vmatprep.subr.mxu0 0.0
    %8037 = vmatpush1.msra.mxu0 0.0
    %8038 = vmatprep.subr.mxu0 0.0
    %8039 = vmatpush1.msra.mxu0 0.0
    %8040 = vmatprep.subr.mxu0 0.0
    %8041 = vmatpush1.msra.mxu0 0.0
    %8042 = vmatprep.mubr.f32.mxu0 0.0
    %v8043 = vand.u32 %v6860, 4294901760
    %v8044 = vsub.f32 %v6860, %v8043
    %v8045 = vand.u32 %v8044, 4294901760
    %8046 = vmatmul.mubr.f32.gmra.mrb[0].mxu0 %v8045
    %v8047 = vpop.f32.mrb[0].mxu0
    %v8048 = vadd.f32 %v7971, %v8047
    %v8049 = vpop.f32.mrb[0].mxu0
    %8050 = vdwg.mxu0
    %8051 = vmatprep.subr.mxu0 0.0
    %v8052 = vand.u32 %v6829, 4294901760
    %v8053 = vsub.f32 %v6829, %v8052
    %v8054 = vand.u32 %v8053, 4294901760
    %8055 = vmatpush1.msra.mxu0 %v8054
    %8056 = vmatprep.subr.mxu0 0.0
    %v8057 = vand.u32 %v6830, 4294901760
    %v8058 = vsub.f32 %v6830, %v8057
    %v8059 = vand.u32 %v8058, 4294901760
    %8060 = vmatpush1.msra.mxu0 %v8059
    %8061 = vmatprep.subr.mxu0 0.0
    %v8062 = vand.u32 %v6831, 4294901760
    %v8063 = vsub.f32 %v6831, %v8062
    %v8064 = vand.u32 %v8063, 4294901760
    %8065 = vmatpush1.msra.mxu0 %v8064
    %8066 = vmatprep.subr.mxu0 0.0
    %v8067 = vand.u32 %v6832, 4294901760
    %v8068 = vsub.f32 %v6832, %v8067
    %v8069 = vand.u32 %v8068, 4294901760
    %8070 = vmatpush1.msra.mxu0 %v8069
    %8071 = vmatprep.subr.mxu0 0.0
    %8072 = vmatpush1.msra.mxu0 0.0
    %8073 = vmatprep.subr.mxu0 0.0
    %8074 = vmatpush1.msra.mxu0 0.0
    %8075 = vmatprep.subr.mxu0 0.0
    %8076 = vmatpush1.msra.mxu0 0.0
    %8077 = vmatprep.subr.mxu0 0.0
    %8078 = vmatpush1.msra.mxu0 0.0
    %8079 = vmatprep.subr.mxu0 0.0
    %8080 = vmatpush1.msra.mxu0 0.0
    %8081 = vmatprep.subr.mxu0 0.0
    %8082 = vmatpush1.msra.mxu0 0.0
    %8083 = vmatprep.subr.mxu0 0.0
    %8084 = vmatpush1.msra.mxu0 0.0
    %8085 = vmatprep.subr.mxu0 0.0
    %8086 = vmatpush1.msra.mxu0 0.0
    %8087 = vmatprep.subr.mxu0 0.0
    %8088 = vmatpush1.msra.mxu0 0.0
    %8089 = vmatprep.subr.mxu0 0.0
    %8090 = vmatpush1.msra.mxu0 0.0
    %8091 = vmatprep.subr.mxu0 0.0
    %8092 = vmatpush1.msra.mxu0 0.0
    %8093 = vmatprep.subr.mxu0 0.0
    %8094 = vmatpush1.msra.mxu0 0.0
    %8095 = vmatprep.subr.mxu0 0.0
    %8096 = vmatpush1.msra.mxu0 0.0
    %8097 = vmatprep.subr.mxu0 0.0
    %8098 = vmatpush1.msra.mxu0 0.0
    %8099 = vmatprep.subr.mxu0 0.0
    %8100 = vmatpush1.msra.mxu0 0.0
    %8101 = vmatprep.subr.mxu0 0.0
    %8102 = vmatpush1.msra.mxu0 0.0
    %8103 = vmatprep.subr.mxu0 0.0
    %8104 = vmatpush1.msra.mxu0 0.0
    %8105 = vmatprep.subr.mxu0 0.0
    %8106 = vmatpush1.msra.mxu0 0.0
    %8107 = vmatprep.subr.mxu0 0.0
    %8108 = vmatpush1.msra.mxu0 0.0
    %8109 = vmatprep.subr.mxu0 0.0
    %8110 = vmatpush1.msra.mxu0 0.0
    %8111 = vmatprep.subr.mxu0 0.0
    %8112 = vmatpush1.msra.mxu0 0.0
    %8113 = vmatprep.subr.mxu0 0.0
    %8114 = vmatpush1.msra.mxu0 0.0
    %8115 = vmatprep.subr.mxu0 0.0
    %8116 = vmatpush1.msra.mxu0 0.0
    %8117 = vmatprep.subr.mxu0 0.0
    %8118 = vmatpush1.msra.mxu0 0.0
    %8119 = vmatprep.subr.mxu0 0.0
    %8120 = vmatpush1.msra.mxu0 0.0
    %8121 = vmatprep.subr.mxu0 0.0
    %8122 = vmatpush1.msra.mxu0 0.0
    %8123 = vmatprep.subr.mxu0 0.0
    %8124 = vmatpush1.msra.mxu0 0.0
    %8125 = vmatprep.subr.mxu0 0.0
    %8126 = vmatpush1.msra.mxu0 0.0
    %8127 = vmatprep.mubr.f32.mxu0 0.0
    %v8128 = vand.u32 %v6860, 4294901760
    %8129 = vmatmul.mubr.f32.gmra.mrb[0].mxu0 %v8128
    %v8130 = vpop.f32.mrb[0].mxu0
    %v8131 = vadd.f32 %v8048, %v8130
    %v8132 = vpop.f32.mrb[0].mxu0
    %8133 = vdwg.mxu0
    %8134 = vmatprep.subr.mxu0 0.0
    %v8135 = vand.u32 %v6829, 4294901760
    %8136 = vmatpush1.msra.mxu0 %v8135
    %8137 = vmatprep.subr.mxu0 0.0
    %v8138 = vand.u32 %v6830, 4294901760
    %8139 = vmatpush1.msra.mxu0 %v8138
    %8140 = vmatprep.subr.mxu0 0.0
    %v8141 = vand.u32 %v6831, 4294901760
    %8142 = vmatpush1.msra.mxu0 %v8141
    %8143 = vmatprep.subr.mxu0 0.0
    %v8144 = vand.u32 %v6832, 4294901760
    %8145 = vmatpush1.msra.mxu0 %v8144
    %8146 = vmatprep.subr.mxu0 0.0
    %8147 = vmatpush1.msra.mxu0 0.0
    %8148 = vmatprep.subr.mxu0 0.0
    %8149 = vmatpush1.msra.mxu0 0.0
    %8150 = vmatprep.subr.mxu0 0.0
    %8151 = vmatpush1.msra.mxu0 0.0
    %8152 = vmatprep.subr.mxu0 0.0
    %8153 = vmatpush1.msra.mxu0 0.0
    %8154 = vmatprep.subr.mxu0 0.0
    %8155 = vmatpush1.msra.mxu0 0.0
    %8156 = vmatprep.subr.mxu0 0.0
    %8157 = vmatpush1.msra.mxu0 0.0
    %8158 = vmatprep.subr.mxu0 0.0
    %8159 = vmatpush1.msra.mxu0 0.0
    %8160 = vmatprep.subr.mxu0 0.0
    %8161 = vmatpush1.msra.mxu0 0.0
    %8162 = vmatprep.subr.mxu0 0.0
    %8163 = vmatpush1.msra.mxu0 0.0
    %8164 = vmatprep.subr.mxu0 0.0
    %8165 = vmatpush1.msra.mxu0 0.0
    %8166 = vmatprep.subr.mxu0 0.0
    %8167 = vmatpush1.msra.mxu0 0.0
    %8168 = vmatprep.subr.mxu0 0.0
    %8169 = vmatpush1.msra.mxu0 0.0
    %8170 = vmatprep.subr.mxu0 0.0
    %8171 = vmatpush1.msra.mxu0 0.0
    %8172 = vmatprep.subr.mxu0 0.0
    %8173 = vmatpush1.msra.mxu0 0.0
    %8174 = vmatprep.subr.mxu0 0.0
    %8175 = vmatpush1.msra.mxu0 0.0
    %8176 = vmatprep.subr.mxu0 0.0
    %8177 = vmatpush1.msra.mxu0 0.0
    %8178 = vmatprep.subr.mxu0 0.0
    %8179 = vmatpush1.msra.mxu0 0.0
    %8180 = vmatprep.subr.mxu0 0.0
    %8181 = vmatpush1.msra.mxu0 0.0
    %8182 = vmatprep.subr.mxu0 0.0
    %8183 = vmatpush1.msra.mxu0 0.0
    %8184 = vmatprep.subr.mxu0 0.0
    %8185 = vmatpush1.msra.mxu0 0.0
    %8186 = vmatprep.subr.mxu0 0.0
    %8187 = vmatpush1.msra.mxu0 0.0
    %8188 = vmatprep.subr.mxu0 0.0
    %8189 = vmatpush1.msra.mxu0 0.0
    %8190 = vmatprep.subr.mxu0 0.0
    %8191 = vmatpush1.msra.mxu0 0.0
    %8192 = vmatprep.subr.mxu0 0.0
    %8193 = vmatpush1.msra.mxu0 0.0
    %8194 = vmatprep.subr.mxu0 0.0
    %8195 = vmatpush1.msra.mxu0 0.0
    %8196 = vmatprep.subr.mxu0 0.0
    %8197 = vmatpush1.msra.mxu0 0.0
    %8198 = vmatprep.subr.mxu0 0.0
    %8199 = vmatpush1.msra.mxu0 0.0
    %8200 = vmatprep.subr.mxu0 0.0
    %8201 = vmatpush1.msra.mxu0 0.0
    %8202 = vmatprep.mubr.f32.mxu0 0.0
    %v8203 = vand.u32 %v6860, 4294901760
    %8204 = vmatmul.mubr.f32.gmra.mrb[0].mxu0 %v8203
    %v8205 = vpop.f32.mrb[0].mxu0
    %v8206 = vadd.f32 %v8131, %v8205
    %v8207 = vpop.f32.mrb[0].mxu0
    %8208 = vdwg.mxu0
    %vm8209 = vcmp.gt.f32.partialorder %v8206, 0.0
    %v8210 = vmul.f32 %v8206, 0.25
    %v8211 = vsel %vm8209, %v8206, %v8210
    %v8212 = vld [vmem:[%s10] sm:$0xff]
    %v8213 = vld [vmem:[%s10 + $0x8] sm:$0xff]
    %v8214 = vld [vmem:[%s10 + $0x10] sm:$0xff]
    %v8215 = vld [vmem:[%s10 + $0x18] sm:$0xf]
    %v8216 = vld [vmem:[%s11] sm:$0x1]
    %v8218 = vlaneseq
    %v8219 = vshrl.u32 %v8218, 7
    %v8220 = vsub.s32 0, %v8219
    %v8221 = vrot.slane %v8216, %v8220
    %vm8223 = vcmask 228352
    %v8225 = vsel %vm8223, %v8211, 0
    %vm8227 = vcmask 1043456
    %v8229 = vsel %vm8227, %v8215, 0
    %8231 = vmatprep.subr.mxu0 0.0
    %v8232 = vand.u32 %v8212, 4294901760
    %8233 = vmatpush1.msra.mxu0 %v8232
    %8234 = vmatprep.subr.mxu0 0.0
    %v8235 = vand.u32 %v8213, 4294901760
    %8236 = vmatpush1.msra.mxu0 %v8235
    %8237 = vmatprep.subr.mxu0 0.0
    %v8238 = vand.u32 %v8214, 4294901760
    %8239 = vmatpush1.msra.mxu0 %v8238
    %8240 = vmatprep.subr.mxu0 0.0
    %v8241 = vand.u32 %v8229, 4294901760
    %8242 = vmatpush1.msra.mxu0 %v8241
    %8243 = vmatprep.subr.mxu0 0.0
    %8244 = vmatpush1.msra.mxu0 0.0
    %8245 = vmatprep.subr.mxu0 0.0
    %8246 = vmatpush1.msra.mxu0 0.0
    %8247 = vmatprep.subr.mxu0 0.0
    %8248 = vmatpush1.msra.mxu0 0.0
    %8249 = vmatprep.subr.mxu0 0.0
    %8250 = vmatpush1.msra.mxu0 0.0
    %8251 = vmatprep.subr.mxu0 0.0
    %8252 = vmatpush1.msra.mxu0 0.0
    %8253 = vmatprep.subr.mxu0 0.0
    %8254 = vmatpush1.msra.mxu0 0.0
    %8255 = vmatprep.subr.mxu0 0.0
    %8256 = vmatpush1.msra.mxu0 0.0
    %8257 = vmatprep.subr.mxu0 0.0
    %8258 = vmatpush1.msra.mxu0 0.0
    %8259 = vmatprep.subr.mxu0 0.0
    %8260 = vmatpush1.msra.mxu0 0.0
    %8261 = vmatprep.subr.mxu0 0.0
    %8262 = vmatpush1.msra.mxu0 0.0
    %8263 = vmatprep.subr.mxu0 0.0
    %8264 = vmatpush1.msra.mxu0 0.0
    %8265 = vmatprep.subr.mxu0 0.0
    %8266 = vmatpush1.msra.mxu0 0.0
    %8267 = vmatprep.subr.mxu0 0.0
    %8268 = vmatpush1.msra.mxu0 0.0
    %8269 = vmatprep.subr.mxu0 0.0
    %8270 = vmatpush1.msra.mxu0 0.0
    %8271 = vmatprep.subr.mxu0 0.0
    %8272 = vmatpush1.msra.mxu0 0.0
    %8273 = vmatprep.subr.mxu0 0.0
    %8274 = vmatpush1.msra.mxu0 0.0
    %8275 = vmatprep.subr.mxu0 0.0
    %8276 = vmatpush1.msra.mxu0 0.0
    %8277 = vmatprep.subr.mxu0 0.0
    %8278 = vmatpush1.msra.mxu0 0.0
    %8279 = vmatprep.subr.mxu0 0.0
    %8280 = vmatpush1.msra.mxu0 0.0
    %8281 = vmatprep.subr.mxu0 0.0
    %8282 = vmatpush1.msra.mxu0 0.0
    %8283 = vmatprep.subr.mxu0 0.0
    %8284 = vmatpush1.msra.mxu0 0.0
    %8285 = vmatprep.subr.mxu0 0.0
    %8286 = vmatpush1.msra.mxu0 0.0
    %8287 = vmatprep.subr.mxu0 0.0
    %8288 = vmatpush1.msra.mxu0 0.0
    %8289 = vmatprep.subr.mxu0 0.0
    %8290 = vmatpush1.msra.mxu0 0.0
    %8291 = vmatprep.subr.mxu0 0.0
    %8292 = vmatpush1.msra.mxu0 0.0
    %8293 = vmatprep.subr.mxu0 0.0
    %8294 = vmatpush1.msra.mxu0 0.0
    %8295 = vmatprep.subr.mxu0 0.0
    %8296 = vmatpush1.msra.mxu0 0.0
    %8297 = vmatprep.subr.mxu0 0.0
    %8298 = vmatpush1.msra.mxu0 0.0
    %8299 = vmatprep.mubr.f32.mxu0 0.0
    %v8300 = vand.u32 %v8225, 4294901760
    %v8301 = vsub.f32 %v8225, %v8300
    %v8302 = vand.u32 %v8301, 4294901760
    %v8303 = vsub.f32 %v8301, %v8302
    %v8304 = vand.u32 %v8303, 4294901760
    %8305 = vmatmul.mubr.f32.gmra.mrb[0].mxu0 %v8304
    %v8306 = vpop.f32.mrb[0].mxu0
    %v8307 = vadd.f32 %v8221, %v8306
    %v8308 = vpop.f32.mrb[0].mxu0
    %8309 = vdwg.mxu0
    %8310 = vmatprep.subr.mxu0 0.0
    %v8311 = vand.u32 %v8212, 4294901760
    %v8312 = vsub.f32 %v8212, %v8311
    %v8313 = vand.u32 %v8312, 4294901760
    %v8314 = vsub.f32 %v8312, %v8313
    %v8315 = vand.u32 %v8314, 4294901760
    %8316 = vmatpush1.msra.mxu0 %v8315
    %8317 = vmatprep.subr.mxu0 0.0
    %v8318 = vand.u32 %v8213, 4294901760
    %v8319 = vsub.f32 %v8213, %v8318
    %v8320 = vand.u32 %v8319, 4294901760
    %v8321 = vsub.f32 %v8319, %v8320
    %v8322 = vand.u32 %v8321, 4294901760
    %8323 = vmatpush1.msra.mxu0 %v8322
    %8324 = vmatprep.subr.mxu0 0.0
    %v8325 = vand.u32 %v8214, 4294901760
    %v8326 = vsub.f32 %v8214, %v8325
    %v8327 = vand.u32 %v8326, 4294901760
    %v8328 = vsub.f32 %v8326, %v8327
    %v8329 = vand.u32 %v8328, 4294901760
    %8330 = vmatpush1.msra.mxu0 %v8329
    %8331 = vmatprep.subr.mxu0 0.0
    %v8332 = vand.u32 %v8229, 4294901760
    %v8333 = vsub.f32 %v8229, %v8332
    %v8334 = vand.u32 %v8333, 4294901760
    %v8335 = vsub.f32 %v8333, %v8334
    %v8336 = vand.u32 %v8335, 4294901760
    %8337 = vmatpush1.msra.mxu0 %v8336
    %8338 = vmatprep.subr.mxu0 0.0
    %8339 = vmatpush1.msra.mxu0 0.0
    %8340 = vmatprep.subr.mxu0 0.0
    %8341 = vmatpush1.msra.mxu0 0.0
    %8342 = vmatprep.subr.mxu0 0.0
    %8343 = vmatpush1.msra.mxu0 0.0
    %8344 = vmatprep.subr.mxu0 0.0
    %8345 = vmatpush1.msra.mxu0 0.0
    %8346 = vmatprep.subr.mxu0 0.0
    %8347 = vmatpush1.msra.mxu0 0.0
    %8348 = vmatprep.subr.mxu0 0.0
    %8349 = vmatpush1.msra.mxu0 0.0
    %8350 = vmatprep.subr.mxu0 0.0
    %8351 = vmatpush1.msra.mxu0 0.0
    %8352 = vmatprep.subr.mxu0 0.0
    %8353 = vmatpush1.msra.mxu0 0.0
    %8354 = vmatprep.subr.mxu0 0.0
    %8355 = vmatpush1.msra.mxu0 0.0
    %8356 = vmatprep.subr.mxu0 0.0
    %8357 = vmatpush1.msra.mxu0 0.0
    %8358 = vmatprep.subr.mxu0 0.0
    %8359 = vmatpush1.msra.mxu0 0.0
    %8360 = vmatprep.subr.mxu0 0.0
    %8361 = vmatpush1.msra.mxu0 0.0
    %8362 = vmatprep.subr.mxu0 0.0
    %8363 = vmatpush1.msra.mxu0 0.0
    %8364 = vmatprep.subr.mxu0 0.0
    %8365 = vmatpush1.msra.mxu0 0.0
    %8366 = vmatprep.subr.mxu0 0.0
    %8367 = vmatpush1.msra.mxu0 0.0
    %8368 = vmatprep.subr.mxu0 0.0
    %8369 = vmatpush1.msra.mxu0 0.0
    %8370 = vmatprep.subr.mxu0 0.0
    %8371 = vmatpush1.msra.mxu0 0.0
    %8372 = vmatprep.subr.mxu0 0.0
    %8373 = vmatpush1.msra.mxu0 0.0
    %8374 = vmatprep.subr.mxu0 0.0
    %8375 = vmatpush1.msra.mxu0 0.0
    %8376 = vmatprep.subr.mxu0 0.0
    %8377 = vmatpush1.msra.mxu0 0.0
    %8378 = vmatprep.subr.mxu0 0.0
    %8379 = vmatpush1.msra.mxu0 0.0
    %8380 = vmatprep.subr.mxu0 0.0
    %8381 = vmatpush1.msra.mxu0 0.0
    %8382 = vmatprep.subr.mxu0 0.0
    %8383 = vmatpush1.msra.mxu0 0.0
    %8384 = vmatprep.subr.mxu0 0.0
    %8385 = vmatpush1.msra.mxu0 0.0
    %8386 = vmatprep.subr.mxu0 0.0
    %8387 = vmatpush1.msra.mxu0 0.0
    %8388 = vmatprep.subr.mxu0 0.0
    %8389 = vmatpush1.msra.mxu0 0.0
    %8390 = vmatprep.subr.mxu0 0.0
    %8391 = vmatpush1.msra.mxu0 0.0
    %8392 = vmatprep.subr.mxu0 0.0
    %8393 = vmatpush1.msra.mxu0 0.0
    %8394 = vmatprep.mubr.f32.mxu0 0.0
    %v8395 = vand.u32 %v8225, 4294901760
    %8396 = vmatmul.mubr.f32.gmra.mrb[0].mxu0 %v8395
    %v8397 = vpop.f32.mrb[0].mxu0
    %v8398 = vadd.f32 %v8307, %v8397
    %v8399 = vpop.f32.mrb[0].mxu0
    %8400 = vdwg.mxu0
    %8401 = vmatprep.subr.mxu0 0.0
    %v8402 = vand.u32 %v8212, 4294901760
    %v8403 = vsub.f32 %v8212, %v8402
    %8404 = vmatpush1.msra.mxu0 %v8403
    %8405 = vmatprep.subr.mxu0 0.0
    %v8406 = vand.u32 %v8213, 4294901760
    %v8407 = vsub.f32 %v8213, %v8406
    %8408 = vmatpush1.msra.mxu0 %v8407
    %8409 = vmatprep.subr.mxu0 0.0
    %v8410 = vand.u32 %v8214, 4294901760
    %v8411 = vsub.f32 %v8214, %v8410
    %8412 = vmatpush1.msra.mxu0 %v8411
    %8413 = vmatprep.subr.mxu0 0.0
    %v8414 = vand.u32 %v8229, 4294901760
    %v8415 = vsub.f32 %v8229, %v8414
    %8416 = vmatpush1.msra.mxu0 %v8415
    %8417 = vmatprep.subr.mxu0 0.0
    %8418 = vmatpush1.msra.mxu0 0.0
    %8419 = vmatprep.subr.mxu0 0.0
    %8420 = vmatpush1.msra.mxu0 0.0
    %8421 = vmatprep.subr.mxu0 0.0
    %8422 = vmatpush1.msra.mxu0 0.0
    %8423 = vmatprep.subr.mxu0 0.0
    %8424 = vmatpush1.msra.mxu0 0.0
    %8425 = vmatprep.subr.mxu0 0.0
    %8426 = vmatpush1.msra.mxu0 0.0
    %8427 = vmatprep.subr.mxu0 0.0
    %8428 = vmatpush1.msra.mxu0 0.0
    %8429 = vmatprep.subr.mxu0 0.0
    %8430 = vmatpush1.msra.mxu0 0.0
    %8431 = vmatprep.subr.mxu0 0.0
    %8432 = vmatpush1.msra.mxu0 0.0
    %8433 = vmatprep.subr.mxu0 0.0
    %8434 = vmatpush1.msra.mxu0 0.0
    %8435 = vmatprep.subr.mxu0 0.0
    %8436 = vmatpush1.msra.mxu0 0.0
    %8437 = vmatprep.subr.mxu0 0.0
    %8438 = vmatpush1.msra.mxu0 0.0
    %8439 = vmatprep.subr.mxu0 0.0
    %8440 = vmatpush1.msra.mxu0 0.0
    %8441 = vmatprep.subr.mxu0 0.0
    %8442 = vmatpush1.msra.mxu0 0.0
    %8443 = vmatprep.subr.mxu0 0.0
    %8444 = vmatpush1.msra.mxu0 0.0
    %8445 = vmatprep.subr.mxu0 0.0
    %8446 = vmatpush1.msra.mxu0 0.0
    %8447 = vmatprep.subr.mxu0 0.0
    %8448 = vmatpush1.msra.mxu0 0.0
    %8449 = vmatprep.subr.mxu0 0.0
    %8450 = vmatpush1.msra.mxu0 0.0
    %8451 = vmatprep.subr.mxu0 0.0
    %8452 = vmatpush1.msra.mxu0 0.0
    %8453 = vmatprep.subr.mxu0 0.0
    %8454 = vmatpush1.msra.mxu0 0.0
    %8455 = vmatprep.subr.mxu0 0.0
    %8456 = vmatpush1.msra.mxu0 0.0
    %8457 = vmatprep.subr.mxu0 0.0
    %8458 = vmatpush1.msra.mxu0 0.0
    %8459 = vmatprep.subr.mxu0 0.0
    %8460 = vmatpush1.msra.mxu0 0.0
    %8461 = vmatprep.subr.mxu0 0.0
    %8462 = vmatpush1.msra.mxu0 0.0
    %8463 = vmatprep.subr.mxu0 0.0
    %8464 = vmatpush1.msra.mxu0 0.0
    %8465 = vmatprep.subr.mxu0 0.0
    %8466 = vmatpush1.msra.mxu0 0.0
    %8467 = vmatprep.subr.mxu0 0.0
    %8468 = vmatpush1.msra.mxu0 0.0
    %8469 = vmatprep.subr.mxu0 0.0
    %8470 = vmatpush1.msra.mxu0 0.0
    %8471 = vmatprep.subr.mxu0 0.0
    %8472 = vmatpush1.msra.mxu0 0.0
    %8473 = vmatprep.mubr.f32.mxu0 0.0
    %v8474 = vand.u32 %v8225, 4294901760
    %v8475 = vsub.f32 %v8225, %v8474
    %8476 = vmatmul.mubr.f32.gmra.mrb[0].mxu0 %v8475
    %v8477 = vpop.f32.mrb[0].mxu0
    %v8478 = vadd.f32 %v8398, %v8477
    %v8479 = vpop.f32.mrb[0].mxu0
    %8480 = vdwg.mxu0
    %8481 = vmatprep.subr.mxu0 0.0
    %v8482 = vand.u32 %v8212, 4294901760
    %8483 = vmatpush1.msra.mxu0 %v8482
    %8484 = vmatprep.subr.mxu0 0.0
    %v8485 = vand.u32 %v8213, 4294901760
    %8486 = vmatpush1.msra.mxu0 %v8485
    %8487 = vmatprep.subr.mxu0 0.0
    %v8488 = vand.u32 %v8214, 4294901760
    %8489 = vmatpush1.msra.mxu0 %v8488
    %8490 = vmatprep.subr.mxu0 0.0
    %v8491 = vand.u32 %v8229, 4294901760
    %8492 = vmatpush1.msra.mxu0 %v8491
    %8493 = vmatprep.subr.mxu0 0.0
    %8494 = vmatpush1.msra.mxu0 0.0
    %8495 = vmatprep.subr.mxu0 0.0
    %8496 = vmatpush1.msra.mxu0 0.0
    %8497 = vmatprep.subr.mxu0 0.0
    %8498 = vmatpush1.msra.mxu0 0.0
    %8499 = vmatprep.subr.mxu0 0.0
    %8500 = vmatpush1.msra.mxu0 0.0
    %8501 = vmatprep.subr.mxu0 0.0
    %8502 = vmatpush1.msra.mxu0 0.0
    %8503 = vmatprep.subr.mxu0 0.0
    %8504 = vmatpush1.msra.mxu0 0.0
    %8505 = vmatprep.subr.mxu0 0.0
    %8506 = vmatpush1.msra.mxu0 0.0
    %8507 = vmatprep.subr.mxu0 0.0
    %8508 = vmatpush1.msra.mxu0 0.0
    %8509 = vmatprep.subr.mxu0 0.0
    %8510 = vmatpush1.msra.mxu0 0.0
    %8511 = vmatprep.subr.mxu0 0.0
    %8512 = vmatpush1.msra.mxu0 0.0
    %8513 = vmatprep.subr.mxu0 0.0
    %8514 = vmatpush1.msra.mxu0 0.0
    %8515 = vmatprep.subr.mxu0 0.0
    %8516 = vmatpush1.msra.mxu0 0.0
    %8517 = vmatprep.subr.mxu0 0.0
    %8518 = vmatpush1.msra.mxu0 0.0
    %8519 = vmatprep.subr.mxu0 0.0
    %8520 = vmatpush1.msra.mxu0 0.0
    %8521 = vmatprep.subr.mxu0 0.0
    %8522 = vmatpush1.msra.mxu0 0.0
    %8523 = vmatprep.subr.mxu0 0.0
    %8524 = vmatpush1.msra.mxu0 0.0
    %8525 = vmatprep.subr.mxu0 0.0
    %8526 = vmatpush1.msra.mxu0 0.0
    %8527 = vmatprep.subr.mxu0 0.0
    %8528 = vmatpush1.msra.mxu0 0.0
    %8529 = vmatprep.subr.mxu0 0.0
    %8530 = vmatpush1.msra.mxu0 0.0
    %8531 = vmatprep.subr.mxu0 0.0
    %8532 = vmatpush1.msra.mxu0 0.0
    %8533 = vmatprep.subr.mxu0 0.0
    %8534 = vmatpush1.msra.mxu0 0.0
    %8535 = vmatprep.subr.mxu0 0.0
    %8536 = vmatpush1.msra.mxu0 0.0
    %8537 = vmatprep.subr.mxu0 0.0
    %8538 = vmatpush1.msra.mxu0 0.0
    %8539 = vmatprep.subr.mxu0 0.0
    %8540 = vmatpush1.msra.mxu0 0.0
    %8541 = vmatprep.subr.mxu0 0.0
    %8542 = vmatpush1.msra.mxu0 0.0
    %8543 = vmatprep.subr.mxu0 0.0
    %8544 = vmatpush1.msra.mxu0 0.0
    %8545 = vmatprep.subr.mxu0 0.0
    %8546 = vmatpush1.msra.mxu0 0.0
    %8547 = vmatprep.subr.mxu0 0.0
    %8548 = vmatpush1.msra.mxu0 0.0
    %8549 = vmatprep.mubr.f32.mxu0 0.0
    %v8550 = vand.u32 %v8225, 4294901760
    %v8551 = vsub.f32 %v8225, %v8550
    %v8552 = vand.u32 %v8551, 4294901760
    %8553 = vmatmul.mubr.f32.gmra.mrb[0].mxu0 %v8552
    %v8554 = vpop.f32.mrb[0].mxu0
    %v8555 = vadd.f32 %v8478, %v8554
    %v8556 = vpop.f32.mrb[0].mxu0
    %8557 = vdwg.mxu0
    %8558 = vmatprep.subr.mxu0 0.0
    %v8559 = vand.u32 %v8212, 4294901760
    %v8560 = vsub.f32 %v8212, %v8559
    %v8561 = vand.u32 %v8560, 4294901760
    %8562 = vmatpush1.msra.mxu0 %v8561
    %8563 = vmatprep.subr.mxu0 0.0
    %v8564 = vand.u32 %v8213, 4294901760
    %v8565 = vsub.f32 %v8213, %v8564
    %v8566 = vand.u32 %v8565, 4294901760
    %8567 = vmatpush1.msra.mxu0 %v8566
    %8568 = vmatprep.subr.mxu0 0.0
    %v8569 = vand.u32 %v8214, 4294901760
    %v8570 = vsub.f32 %v8214, %v8569
    %v8571 = vand.u32 %v8570, 4294901760
    %8572 = vmatpush1.msra.mxu0 %v8571
    %8573 = vmatprep.subr.mxu0 0.0
    %v8574 = vand.u32 %v8229, 4294901760
    %v8575 = vsub.f32 %v8229, %v8574
    %v8576 = vand.u32 %v8575, 4294901760
    %8577 = vmatpush1.msra.mxu0 %v8576
    %8578 = vmatprep.subr.mxu0 0.0
    %8579 = vmatpush1.msra.mxu0 0.0
    %8580 = vmatprep.subr.mxu0 0.0
    %8581 = vmatpush1.msra.mxu0 0.0
    %8582 = vmatprep.subr.mxu0 0.0
    %8583 = vmatpush1.msra.mxu0 0.0
    %8584 = vmatprep.subr.mxu0 0.0
    %8585 = vmatpush1.msra.mxu0 0.0
    %8586 = vmatprep.subr.mxu0 0.0
    %8587 = vmatpush1.msra.mxu0 0.0
    %8588 = vmatprep.subr.mxu0 0.0
    %8589 = vmatpush1.msra.mxu0 0.0
    %8590 = vmatprep.subr.mxu0 0.0
    %8591 = vmatpush1.msra.mxu0 0.0
    %8592 = vmatprep.subr.mxu0 0.0
    %8593 = vmatpush1.msra.mxu0 0.0
    %8594 = vmatprep.subr.mxu0 0.0
    %8595 = vmatpush1.msra.mxu0 0.0
    %8596 = vmatprep.subr.mxu0 0.0
    %8597 = vmatpush1.msra.mxu0 0.0
    %8598 = vmatprep.subr.mxu0 0.0
    %8599 = vmatpush1.msra.mxu0 0.0
    %8600 = vmatprep.subr.mxu0 0.0
    %8601 = vmatpush1.msra.mxu0 0.0
    %8602 = vmatprep.subr.mxu0 0.0
    %8603 = vmatpush1.msra.mxu0 0.0
    %8604 = vmatprep.subr.mxu0 0.0
    %8605 = vmatpush1.msra.mxu0 0.0
    %8606 = vmatprep.subr.mxu0 0.0
    %8607 = vmatpush1.msra.mxu0 0.0
    %8608 = vmatprep.subr.mxu0 0.0
    %8609 = vmatpush1.msra.mxu0 0.0
    %8610 = vmatprep.subr.mxu0 0.0
    %8611 = vmatpush1.msra.mxu0 0.0
    %8612 = vmatprep.subr.mxu0 0.0
    %8613 = vmatpush1.msra.mxu0 0.0
    %8614 = vmatprep.subr.mxu0 0.0
    %8615 = vmatpush1.msra.mxu0 0.0
    %8616 = vmatprep.subr.mxu0 0.0
    %8617 = vmatpush1.msra.mxu0 0.0
    %8618 = vmatprep.subr.mxu0 0.0
    %8619 = vmatpush1.msra.mxu0 0.0
    %8620 = vmatprep.subr.mxu0 0.0
    %8621 = vmatpush1.msra.mxu0 0.0
    %8622 = vmatprep.subr.mxu0 0.0
    %8623 = vmatpush1.msra.mxu0 0.0
    %8624 = vmatprep.subr.mxu0 0.0
    %8625 = vmatpush1.msra.mxu0 0.0
    %8626 = vmatprep.subr.mxu0 0.0
    %8627 = vmatpush1.msra.mxu0 0.0
    %8628 = vmatprep.subr.mxu0 0.0
    %8629 = vmatpush1.msra.mxu0 0.0
    %8630 = vmatprep.subr.mxu0 0.0
    %8631 = vmatpush1.msra.mxu0 0.0
    %8632 = vmatprep.subr.mxu0 0.0
    %8633 = vmatpush1.msra.mxu0 0.0
    %8634 = vmatprep.mubr.f32.mxu0 0.0
    %v8635 = vand.u32 %v8225, 4294901760
    %8636 = vmatmul.mubr.f32.gmra.mrb[0].mxu0 %v8635
    %v8637 = vpop.f32.mrb[0].mxu0
    %v8638 = vadd.f32 %v8555, %v8637
    %v8639 = vpop.f32.mrb[0].mxu0
    %8640 = vdwg.mxu0
    %8641 = vmatprep.subr.mxu0 0.0
    %v8642 = vand.u32 %v8212, 4294901760
    %8643 = vmatpush1.msra.mxu0 %v8642
    %8644 = vmatprep.subr.mxu0 0.0
    %v8645 = vand.u32 %v8213, 4294901760
    %8646 = vmatpush1.msra.mxu0 %v8645
    %8647 = vmatprep.subr.mxu0 0.0
    %v8648 = vand.u32 %v8214, 4294901760
    %8649 = vmatpush1.msra.mxu0 %v8648
    %8650 = vmatprep.subr.mxu0 0.0
    %v8651 = vand.u32 %v8229, 4294901760
    %8652 = vmatpush1.msra.mxu0 %v8651
    %8653 = vmatprep.subr.mxu0 0.0
    %8654 = vmatpush1.msra.mxu0 0.0
    %8655 = vmatprep.subr.mxu0 0.0
    %8656 = vmatpush1.msra.mxu0 0.0
    %8657 = vmatprep.subr.mxu0 0.0
    %8658 = vmatpush1.msra.mxu0 0.0
    %8659 = vmatprep.subr.mxu0 0.0
    %8660 = vmatpush1.msra.mxu0 0.0
    %8661 = vmatprep.subr.mxu0 0.0
    %8662 = vmatpush1.msra.mxu0 0.0
    %8663 = vmatprep.subr.mxu0 0.0
    %8664 = vmatpush1.msra.mxu0 0.0
    %8665 = vmatprep.subr.mxu0 0.0
    %8666 = vmatpush1.msra.mxu0 0.0
    %8667 = vmatprep.subr.mxu0 0.0
    %8668 = vmatpush1.msra.mxu0 0.0
    %8669 = vmatprep.subr.mxu0 0.0
    %8670 = vmatpush1.msra.mxu0 0.0
    %8671 = vmatprep.subr.mxu0 0.0
    %8672 = vmatpush1.msra.mxu0 0.0
    %8673 = vmatprep.subr.mxu0 0.0
    %8674 = vmatpush1.msra.mxu0 0.0
    %8675 = vmatprep.subr.mxu0 0.0
    %8676 = vmatpush1.msra.mxu0 0.0
    %8677 = vmatprep.subr.mxu0 0.0
    %8678 = vmatpush1.msra.mxu0 0.0
    %8679 = vmatprep.subr.mxu0 0.0
    %8680 = vmatpush1.msra.mxu0 0.0
    %8681 = vmatprep.subr.mxu0 0.0
    %8682 = vmatpush1.msra.mxu0 0.0
    %8683 = vmatprep.subr.mxu0 0.0
    %8684 = vmatpush1.msra.mxu0 0.0
    %8685 = vmatprep.subr.mxu0 0.0
    %8686 = vmatpush1.msra.mxu0 0.0
    %8687 = vmatprep.subr.mxu0 0.0
    %8688 = vmatpush1.msra.mxu0 0.0
    %8689 = vmatprep.subr.mxu0 0.0
    %8690 = vmatpush1.msra.mxu0 0.0
    %8691 = vmatprep.subr.mxu0 0.0
    %8692 = vmatpush1.msra.mxu0 0.0
    %8693 = vmatprep.subr.mxu0 0.0
    %8694 = vmatpush1.msra.mxu0 0.0
    %8695 = vmatprep.subr.mxu0 0.0
    %8696 = vmatpush1.msra.mxu0 0.0
    %8697 = vmatprep.subr.mxu0 0.0
    %8698 = vmatpush1.msra.mxu0 0.0
    %8699 = vmatprep.subr.mxu0 0.0
    %8700 = vmatpush1.msra.mxu0 0.0
    %8701 = vmatprep.subr.mxu0 0.0
    %8702 = vmatpush1.msra.mxu0 0.0
    %8703 = vmatprep.subr.mxu0 0.0
    %8704 = vmatpush1.msra.mxu0 0.0
    %8705 = vmatprep.subr.mxu0 0.0
    %8706 = vmatpush1.msra.mxu0 0.0
    %8707 = vmatprep.subr.mxu0 0.0
    %8708 = vmatpush1.msra.mxu0 0.0
    %8709 = vmatprep.mubr.f32.mxu0 0.0
    %v8710 = vand.u32 %v8225, 4294901760
    %8711 = vmatmul.mubr.f32.gmra.mrb[0].mxu0 %v8710
    %v8712 = vpop.f32.mrb[0].mxu0
    %v8713 = vadd.f32 %v8638, %v8712
    %v8714 = vpop.f32.mrb[0].mxu0
    %8715 = vdwg.mxu0
    %vm8716 = vcmp.gt.f32.partialorder %v8713, 0.0
    %v8717 = vmul.f32 %v8713, 0.25
    %v8718 = vsel %vm8716, %v8713, %v8717
    %v8719 = vld [vmem:[%s12] sm:$0x1f]
    %v8720 = vld [vmem:[%s13] sm:$0x1]
    %v8722 = vlaneseq
    %v8723 = vshrl.u32 %v8722, 7
    %v8724 = vsub.s32 0, %v8723
    %v8725 = vrot.slane %v8720, %v8724
    %vm8727 = vcmask 39936
    %v8729 = vsel %vm8727, %v8718, 0
    %vm8731 = vcmask 1044480
    %v8733 = vsel %vm8731, %v8719, 0
    %8735 = vmatprep.subr.mxu0 0.0
    %v8736 = vand.u32 %v8733, 4294901760
    %8737 = vmatpush1.msra.mxu0 %v8736
    %8738 = vmatprep.subr.mxu0 0.0
    %8739 = vmatpush1.msra.mxu0 0.0
    %8740 = vmatprep.subr.mxu0 0.0
    %8741 = vmatpush1.msra.mxu0 0.0
    %8742 = vmatprep.subr.mxu0 0.0
    %8743 = vmatpush1.msra.mxu0 0.0
    %8744 = vmatprep.subr.mxu0 0.0
    %8745 = vmatpush1.msra.mxu0 0.0
    %8746 = vmatprep.subr.mxu0 0.0
    %8747 = vmatpush1.msra.mxu0 0.0
    %8748 = vmatprep.subr.mxu0 0.0
    %8749 = vmatpush1.msra.mxu0 0.0
    %8750 = vmatprep.subr.mxu0 0.0
    %8751 = vmatpush1.msra.mxu0 0.0
    %8752 = vmatprep.subr.mxu0 0.0
    %8753 = vmatpush1.msra.mxu0 0.0
    %8754 = vmatprep.subr.mxu0 0.0
    %8755 = vmatpush1.msra.mxu0 0.0
    %8756 = vmatprep.subr.mxu0 0.0
    %8757 = vmatpush1.msra.mxu0 0.0
    %8758 = vmatprep.subr.mxu0 0.0
    %8759 = vmatpush1.msra.mxu0 0.0
    %8760 = vmatprep.subr.mxu0 0.0
    %8761 = vmatpush1.msra.mxu0 0.0
    %8762 = vmatprep.subr.mxu0 0.0
    %8763 = vmatpush1.msra.mxu0 0.0
    %8764 = vmatprep.subr.mxu0 0.0
    %8765 = vmatpush1.msra.mxu0 0.0
    %8766 = vmatprep.subr.mxu0 0.0
    %8767 = vmatpush1.msra.mxu0 0.0
    %8768 = vmatprep.subr.mxu0 0.0
    %8769 = vmatpush1.msra.mxu0 0.0
    %8770 = vmatprep.subr.mxu0 0.0
    %8771 = vmatpush1.msra.mxu0 0.0
    %8772 = vmatprep.subr.mxu0 0.0
    %8773 = vmatpush1.msra.mxu0 0.0
    %8774 = vmatprep.subr.mxu0 0.0
    %8775 = vmatpush1.msra.mxu0 0.0
    %8776 = vmatprep.subr.mxu0 0.0
    %8777 = vmatpush1.msra.mxu0 0.0
    %8778 = vmatprep.subr.mxu0 0.0
    %8779 = vmatpush1.msra.mxu0 0.0
    %8780 = vmatprep.subr.mxu0 0.0
    %8781 = vmatpush1.msra.mxu0 0.0
    %8782 = vmatprep.subr.mxu0 0.0
    %8783 = vmatpush1.msra.mxu0 0.0
    %8784 = vmatprep.subr.mxu0 0.0
    %8785 = vmatpush1.msra.mxu0 0.0
    %8786 = vmatprep.subr.mxu0 0.0
    %8787 = vmatpush1.msra.mxu0 0.0
    %8788 = vmatprep.subr.mxu0 0.0
    %8789 = vmatpush1.msra.mxu0 0.0
    %8790 = vmatprep.subr.mxu0 0.0
    %8791 = vmatpush1.msra.mxu0 0.0
    %8792 = vmatprep.subr.mxu0 0.0
    %8793 = vmatpush1.msra.mxu0 0.0
    %8794 = vmatprep.subr.mxu0 0.0
    %8795 = vmatpush1.msra.mxu0 0.0
    %8796 = vmatprep.subr.mxu0 0.0
    %8797 = vmatpush1.msra.mxu0 0.0
    %8798 = vmatprep.subr.mxu0 0.0
    %8799 = vmatpush1.msra.mxu0 0.0
    %8800 = vmatprep.mubr.f32.mxu0 0.0
    %v8801 = vand.u32 %v8729, 4294901760
    %v8802 = vsub.f32 %v8729, %v8801
    %v8803 = vand.u32 %v8802, 4294901760
    %v8804 = vsub.f32 %v8802, %v8803
    %v8805 = vand.u32 %v8804, 4294901760
    %8806 = vmatmul.mubr.f32.gmra.mrb[0].mxu0 %v8805
    %v8807 = vpop.f32.mrb[0].mxu0
    %v8808 = vadd.f32 %v8725, %v8807
    %v8809 = vpop.f32.mrb[0].mxu0
    %8810 = vdwg.mxu0
    %8811 = vmatprep.subr.mxu0 0.0
    %v8812 = vand.u32 %v8733, 4294901760
    %v8813 = vsub.f32 %v8733, %v8812
    %v8814 = vand.u32 %v8813, 4294901760
    %v8815 = vsub.f32 %v8813, %v8814
    %v8816 = vand.u32 %v8815, 4294901760
    %8817 = vmatpush1.msra.mxu0 %v8816
    %8818 = vmatprep.subr.mxu0 0.0
    %8819 = vmatpush1.msra.mxu0 0.0
    %8820 = vmatprep.subr.mxu0 0.0
    %8821 = vmatpush1.msra.mxu0 0.0
    %8822 = vmatprep.subr.mxu0 0.0
    %8823 = vmatpush1.msra.mxu0 0.0
    %8824 = vmatprep.subr.mxu0 0.0
    %8825 = vmatpush1.msra.mxu0 0.0
    %8826 = vmatprep.subr.mxu0 0.0
    %8827 = vmatpush1.msra.mxu0 0.0
    %8828 = vmatprep.subr.mxu0 0.0
    %8829 = vmatpush1.msra.mxu0 0.0
    %8830 = vmatprep.subr.mxu0 0.0
    %8831 = vmatpush1.msra.mxu0 0.0
    %8832 = vmatprep.subr.mxu0 0.0
    %8833 = vmatpush1.msra.mxu0 0.0
    %8834 = vmatprep.subr.mxu0 0.0
    %8835 = vmatpush1.msra.mxu0 0.0
    %8836 = vmatprep.subr.mxu0 0.0
    %8837 = vmatpush1.msra.mxu0 0.0
    %8838 = vmatprep.subr.mxu0 0.0
    %8839 = vmatpush1.msra.mxu0 0.0
    %8840 = vmatprep.subr.mxu0 0.0
    %8841 = vmatpush1.msra.mxu0 0.0
    %8842 = vmatprep.subr.mxu0 0.0
    %8843 = vmatpush1.msra.mxu0 0.0
    %8844 = vmatprep.subr.mxu0 0.0
    %8845 = vmatpush1.msra.mxu0 0.0
    %8846 = vmatprep.subr.mxu0 0.0
    %8847 = vmatpush1.msra.mxu0 0.0
    %8848 = vmatprep.subr.mxu0 0.0
    %8849 = vmatpush1.msra.mxu0 0.0
    %8850 = vmatprep.subr.mxu0 0.0
    %8851 = vmatpush1.msra.mxu0 0.0
    %8852 = vmatprep.subr.mxu0 0.0
    %8853 = vmatpush1.msra.mxu0 0.0
    %8854 = vmatprep.subr.mxu0 0.0
    %8855 = vmatpush1.msra.mxu0 0.0
    %8856 = vmatprep.subr.mxu0 0.0
    %8857 = vmatpush1.msra.mxu0 0.0
    %8858 = vmatprep.subr.mxu0 0.0
    %8859 = vmatpush1.msra.mxu0 0.0
    %8860 = vmatprep.subr.mxu0 0.0
    %8861 = vmatpush1.msra.mxu0 0.0
    %8862 = vmatprep.subr.mxu0 0.0
    %8863 = vmatpush1.msra.mxu0 0.0
    %8864 = vmatprep.subr.mxu0 0.0
    %8865 = vmatpush1.msra.mxu0 0.0
    %8866 = vmatprep.subr.mxu0 0.0
    %8867 = vmatpush1.msra.mxu0 0.0
    %8868 = vmatprep.subr.mxu0 0.0
    %8869 = vmatpush1.msra.mxu0 0.0
    %8870 = vmatprep.subr.mxu0 0.0
    %8871 = vmatpush1.msra.mxu0 0.0
    %8872 = vmatprep.subr.mxu0 0.0
    %8873 = vmatpush1.msra.mxu0 0.0
    %8874 = vmatprep.subr.mxu0 0.0
    %8875 = vmatpush1.msra.mxu0 0.0
    %8876 = vmatprep.subr.mxu0 0.0
    %8877 = vmatpush1.msra.mxu0 0.0
    %8878 = vmatprep.subr.mxu0 0.0
    %8879 = vmatpush1.msra.mxu0 0.0
    %8880 = vmatprep.mubr.f32.mxu0 0.0
    %v8881 = vand.u32 %v8729, 4294901760
    %8882 = vmatmul.mubr.f32.gmra.mrb[0].mxu0 %v8881
    %v8883 = vpop.f32.mrb[0].mxu0
    %v8884 = vadd.f32 %v8808, %v8883
    %v8885 = vpop.f32.mrb[0].mxu0
    %8886 = vdwg.mxu0
    %8887 = vmatprep.subr.mxu0 0.0
    %v8888 = vand.u32 %v8733, 4294901760
    %v8889 = vsub.f32 %v8733, %v8888
    %8890 = vmatpush1.msra.mxu0 %v8889
    %8891 = vmatprep.subr.mxu0 0.0
    %8892 = vmatpush1.msra.mxu0 0.0
    %8893 = vmatprep.subr.mxu0 0.0
    %8894 = vmatpush1.msra.mxu0 0.0
    %8895 = vmatprep.subr.mxu0 0.0
    %8896 = vmatpush1.msra.mxu0 0.0
    %8897 = vmatprep.subr.mxu0 0.0
    %8898 = vmatpush1.msra.mxu0 0.0
    %8899 = vmatprep.subr.mxu0 0.0
    %8900 = vmatpush1.msra.mxu0 0.0
    %8901 = vmatprep.subr.mxu0 0.0
    %8902 = vmatpush1.msra.mxu0 0.0
    %8903 = vmatprep.subr.mxu0 0.0
    %8904 = vmatpush1.msra.mxu0 0.0
    %8905 = vmatprep.subr.mxu0 0.0
    %8906 = vmatpush1.msra.mxu0 0.0
    %8907 = vmatprep.subr.mxu0 0.0
    %8908 = vmatpush1.msra.mxu0 0.0
    %8909 = vmatprep.subr.mxu0 0.0
    %8910 = vmatpush1.msra.mxu0 0.0
    %8911 = vmatprep.subr.mxu0 0.0
    %8912 = vmatpush1.msra.mxu0 0.0
    %8913 = vmatprep.subr.mxu0 0.0
    %8914 = vmatpush1.msra.mxu0 0.0
    %8915 = vmatprep.subr.mxu0 0.0
    %8916 = vmatpush1.msra.mxu0 0.0
    %8917 = vmatprep.subr.mxu0 0.0
    %8918 = vmatpush1.msra.mxu0 0.0
    %8919 = vmatprep.subr.mxu0 0.0
    %8920 = vmatpush1.msra.mxu0 0.0
    %8921 = vmatprep.subr.mxu0 0.0
    %8922 = vmatpush1.msra.mxu0 0.0
    %8923 = vmatprep.subr.mxu0 0.0
    %8924 = vmatpush1.msra.mxu0 0.0
    %8925 = vmatprep.subr.mxu0 0.0
    %8926 = vmatpush1.msra.mxu0 0.0
    %8927 = vmatprep.subr.mxu0 0.0
    %8928 = vmatpush1.msra.mxu0 0.0
    %8929 = vmatprep.subr.mxu0 0.0
    %8930 = vmatpush1.msra.mxu0 0.0
    %8931 = vmatprep.subr.mxu0 0.0
    %8932 = vmatpush1.msra.mxu0 0.0
    %8933 = vmatprep.subr.mxu0 0.0
    %8934 = vmatpush1.msra.mxu0 0.0
    %8935 = vmatprep.subr.mxu0 0.0
    %8936 = vmatpush1.msra.mxu0 0.0
    %8937 = vmatprep.subr.mxu0 0.0
    %8938 = vmatpush1.msra.mxu0 0.0
    %8939 = vmatprep.subr.mxu0 0.0
    %8940 = vmatpush1.msra.mxu0 0.0
    %8941 = vmatprep.subr.mxu0 0.0
    %8942 = vmatpush1.msra.mxu0 0.0
    %8943 = vmatprep.subr.mxu0 0.0
    %8944 = vmatpush1.msra.mxu0 0.0
    %8945 = vmatprep.subr.mxu0 0.0
    %8946 = vmatpush1.msra.mxu0 0.0
    %8947 = vmatprep.subr.mxu0 0.0
    %8948 = vmatpush1.msra.mxu0 0.0
    %8949 = vmatprep.subr.mxu0 0.0
    %8950 = vmatpush1.msra.mxu0 0.0
    %8951 = vmatprep.subr.mxu0 0.0
    %8952 = vmatpush1.msra.mxu0 0.0
    %8953 = vmatprep.mubr.f32.mxu0 0.0
    %v8954 = vand.u32 %v8729, 4294901760
    %v8955 = vsub.f32 %v8729, %v8954
    %8956 = vmatmul.mubr.f32.gmra.mrb[0].mxu0 %v8955
    %v8957 = vpop.f32.mrb[0].mxu0
    %v8958 = vadd.f32 %v8884, %v8957
    %v8959 = vpop.f32.mrb[0].mxu0
    %8960 = vdwg.mxu0
    %8961 = vmatprep.subr.mxu0 0.0
    %v8962 = vand.u32 %v8733, 4294901760
    %8963 = vmatpush1.msra.mxu0 %v8962
    %8964 = vmatprep.subr.mxu0 0.0
    %8965 = vmatpush1.msra.mxu0 0.0
    %8966 = vmatprep.subr.mxu0 0.0
    %8967 = vmatpush1.msra.mxu0 0.0
    %8968 = vmatprep.subr.mxu0 0.0
    %8969 = vmatpush1.msra.mxu0 0.0
    %8970 = vmatprep.subr.mxu0 0.0
    %8971 = vmatpush1.msra.mxu0 0.0
    %8972 = vmatprep.subr.mxu0 0.0
    %8973 = vmatpush1.msra.mxu0 0.0
    %8974 = vmatprep.subr.mxu0 0.0
    %8975 = vmatpush1.msra.mxu0 0.0
    %8976 = vmatprep.subr.mxu0 0.0
    %8977 = vmatpush1.msra.mxu0 0.0
    %8978 = vmatprep.subr.mxu0 0.0
    %8979 = vmatpush1.msra.mxu0 0.0
    %8980 = vmatprep.subr.mxu0 0.0
    %8981 = vmatpush1.msra.mxu0 0.0
    %8982 = vmatprep.subr.mxu0 0.0
    %8983 = vmatpush1.msra.mxu0 0.0
    %8984 = vmatprep.subr.mxu0 0.0
    %8985 = vmatpush1.msra.mxu0 0.0
    %8986 = vmatprep.subr.mxu0 0.0
    %8987 = vmatpush1.msra.mxu0 0.0
    %8988 = vmatprep.subr.mxu0 0.0
    %8989 = vmatpush1.msra.mxu0 0.0
    %8990 = vmatprep.subr.mxu0 0.0
    %8991 = vmatpush1.msra.mxu0 0.0
    %8992 = vmatprep.subr.mxu0 0.0
    %8993 = vmatpush1.msra.mxu0 0.0
    %8994 = vmatprep.subr.mxu0 0.0
    %8995 = vmatpush1.msra.mxu0 0.0
    %8996 = vmatprep.subr.mxu0 0.0
    %8997 = vmatpush1.msra.mxu0 0.0
    %8998 = vmatprep.subr.mxu0 0.0
    %8999 = vmatpush1.msra.mxu0 0.0
    %9000 = vmatprep.subr.mxu0 0.0
    %9001 = vmatpush1.msra.mxu0 0.0
    %9002 = vmatprep.subr.mxu0 0.0
    %9003 = vmatpush1.msra.mxu0 0.0
    %9004 = vmatprep.subr.mxu0 0.0
    %9005 = vmatpush1.msra.mxu0 0.0
    %9006 = vmatprep.subr.mxu0 0.0
    %9007 = vmatpush1.msra.mxu0 0.0
    %9008 = vmatprep.subr.mxu0 0.0
    %9009 = vmatpush1.msra.mxu0 0.0
    %9010 = vmatprep.subr.mxu0 0.0
    %9011 = vmatpush1.msra.mxu0 0.0
    %9012 = vmatprep.subr.mxu0 0.0
    %9013 = vmatpush1.msra.mxu0 0.0
    %9014 = vmatprep.subr.mxu0 0.0
    %9015 = vmatpush1.msra.mxu0 0.0
    %9016 = vmatprep.subr.mxu0 0.0
    %9017 = vmatpush1.msra.mxu0 0.0
    %9018 = vmatprep.subr.mxu0 0.0
    %9019 = vmatpush1.msra.mxu0 0.0
    %9020 = vmatprep.subr.mxu0 0.0
    %9021 = vmatpush1.msra.mxu0 0.0
    %9022 = vmatprep.subr.mxu0 0.0
    %9023 = vmatpush1.msra.mxu0 0.0
    %9024 = vmatprep.subr.mxu0 0.0
    %9025 = vmatpush1.msra.mxu0 0.0
    %9026 = vmatprep.mubr.f32.mxu0 0.0
    %v9027 = vand.u32 %v8729, 4294901760
    %v9028 = vsub.f32 %v8729, %v9027
    %v9029 = vand.u32 %v9028, 4294901760
    %9030 = vmatmul.mubr.f32.gmra.mrb[0].mxu0 %v9029
    %v9031 = vpop.f32.mrb[0].mxu0
    %v9032 = vadd.f32 %v8958, %v9031
    %v9033 = vpop.f32.mrb[0].mxu0
    %9034 = vdwg.mxu0
    %9035 = vmatprep.subr.mxu0 0.0
    %v9036 = vand.u32 %v8733, 4294901760
    %v9037 = vsub.f32 %v8733, %v9036
    %v9038 = vand.u32 %v9037, 4294901760
    %9039 = vmatpush1.msra.mxu0 %v9038
    %9040 = vmatprep.subr.mxu0 0.0
    %9041 = vmatpush1.msra.mxu0 0.0
    %9042 = vmatprep.subr.mxu0 0.0
    %9043 = vmatpush1.msra.mxu0 0.0
    %9044 = vmatprep.subr.mxu0 0.0
    %9045 = vmatpush1.msra.mxu0 0.0
    %9046 = vmatprep.subr.mxu0 0.0
    %9047 = vmatpush1.msra.mxu0 0.0
    %9048 = vmatprep.subr.mxu0 0.0
    %9049 = vmatpush1.msra.mxu0 0.0
    %9050 = vmatprep.subr.mxu0 0.0
    %9051 = vmatpush1.msra.mxu0 0.0
    %9052 = vmatprep.subr.mxu0 0.0
    %9053 = vmatpush1.msra.mxu0 0.0
    %9054 = vmatprep.subr.mxu0 0.0
    %9055 = vmatpush1.msra.mxu0 0.0
    %9056 = vmatprep.subr.mxu0 0.0
    %9057 = vmatpush1.msra.mxu0 0.0
    %9058 = vmatprep.subr.mxu0 0.0
    %9059 = vmatpush1.msra.mxu0 0.0
    %9060 = vmatprep.subr.mxu0 0.0
    %9061 = vmatpush1.msra.mxu0 0.0
    %9062 = vmatprep.subr.mxu0 0.0
    %9063 = vmatpush1.msra.mxu0 0.0
    %9064 = vmatprep.subr.mxu0 0.0
    %9065 = vmatpush1.msra.mxu0 0.0
    %9066 = vmatprep.subr.mxu0 0.0
    %9067 = vmatpush1.msra.mxu0 0.0
    %9068 = vmatprep.subr.mxu0 0.0
    %9069 = vmatpush1.msra.mxu0 0.0
    %9070 = vmatprep.subr.mxu0 0.0
    %9071 = vmatpush1.msra.mxu0 0.0
    %9072 = vmatprep.subr.mxu0 0.0
    %9073 = vmatpush1.msra.mxu0 0.0
    %9074 = vmatprep.subr.mxu0 0.0
    %9075 = vmatpush1.msra.mxu0 0.0
    %9076 = vmatprep.subr.mxu0 0.0
    %9077 = vmatpush1.msra.mxu0 0.0
    %9078 = vmatprep.subr.mxu0 0.0
    %9079 = vmatpush1.msra.mxu0 0.0
    %9080 = vmatprep.subr.mxu0 0.0
    %9081 = vmatpush1.msra.mxu0 0.0
    %9082 = vmatprep.subr.mxu0 0.0
    %9083 = vmatpush1.msra.mxu0 0.0
    %9084 = vmatprep.subr.mxu0 0.0
    %9085 = vmatpush1.msra.mxu0 0.0
    %9086 = vmatprep.subr.mxu0 0.0
    %9087 = vmatpush1.msra.mxu0 0.0
    %9088 = vmatprep.subr.mxu0 0.0
    %9089 = vmatpush1.msra.mxu0 0.0
    %9090 = vmatprep.subr.mxu0 0.0
    %9091 = vmatpush1.msra.mxu0 0.0
    %9092 = vmatprep.subr.mxu0 0.0
    %9093 = vmatpush1.msra.mxu0 0.0
    %9094 = vmatprep.subr.mxu0 0.0
    %9095 = vmatpush1.msra.mxu0 0.0
    %9096 = vmatprep.subr.mxu0 0.0
    %9097 = vmatpush1.msra.mxu0 0.0
    %9098 = vmatprep.subr.mxu0 0.0
    %9099 = vmatpush1.msra.mxu0 0.0
    %9100 = vmatprep.subr.mxu0 0.0
    %9101 = vmatpush1.msra.mxu0 0.0
    %9102 = vmatprep.mubr.f32.mxu0 0.0
    %v9103 = vand.u32 %v8729, 4294901760
    %9104 = vmatmul.mubr.f32.gmra.mrb[0].mxu0 %v9103
    %v9105 = vpop.f32.mrb[0].mxu0
    %v9106 = vadd.f32 %v9032, %v9105
    %v9107 = vpop.f32.mrb[0].mxu0
    %9108 = vdwg.mxu0
    %9109 = vmatprep.subr.mxu0 0.0
    %v9110 = vand.u32 %v8733, 4294901760
    %9111 = vmatpush1.msra.mxu0 %v9110
    %9112 = vmatprep.subr.mxu0 0.0
    %9113 = vmatpush1.msra.mxu0 0.0
    %9114 = vmatprep.subr.mxu0 0.0
    %9115 = vmatpush1.msra.mxu0 0.0
    %9116 = vmatprep.subr.mxu0 0.0
    %9117 = vmatpush1.msra.mxu0 0.0
    %9118 = vmatprep.subr.mxu0 0.0
    %9119 = vmatpush1.msra.mxu0 0.0
    %9120 = vmatprep.subr.mxu0 0.0
    %9121 = vmatpush1.msra.mxu0 0.0
    %9122 = vmatprep.subr.mxu0 0.0
    %9123 = vmatpush1.msra.mxu0 0.0
    %9124 = vmatprep.subr.mxu0 0.0
    %9125 = vmatpush1.msra.mxu0 0.0
    %9126 = vmatprep.subr.mxu0 0.0
    %9127 = vmatpush1.msra.mxu0 0.0
    %9128 = vmatprep.subr.mxu0 0.0
    %9129 = vmatpush1.msra.mxu0 0.0
    %9130 = vmatprep.subr.mxu0 0.0
    %9131 = vmatpush1.msra.mxu0 0.0
    %9132 = vmatprep.subr.mxu0 0.0
    %9133 = vmatpush1.msra.mxu0 0.0
    %9134 = vmatprep.subr.mxu0 0.0
    %9135 = vmatpush1.msra.mxu0 0.0
    %9136 = vmatprep.subr.mxu0 0.0
    %9137 = vmatpush1.msra.mxu0 0.0
    %9138 = vmatprep.subr.mxu0 0.0
    %9139 = vmatpush1.msra.mxu0 0.0
    %9140 = vmatprep.subr.mxu0 0.0
    %9141 = vmatpush1.msra.mxu0 0.0
    %9142 = vmatprep.subr.mxu0 0.0
    %9143 = vmatpush1.msra.mxu0 0.0
    %9144 = vmatprep.subr.mxu0 0.0
    %9145 = vmatpush1.msra.mxu0 0.0
    %9146 = vmatprep.subr.mxu0 0.0
    %9147 = vmatpush1.msra.mxu0 0.0
    %9148 = vmatprep.subr.mxu0 0.0
    %9149 = vmatpush1.msra.mxu0 0.0
    %9150 = vmatprep.subr.mxu0 0.0
    %9151 = vmatpush1.msra.mxu0 0.0
    %9152 = vmatprep.subr.mxu0 0.0
    %9153 = vmatpush1.msra.mxu0 0.0
    %9154 = vmatprep.subr.mxu0 0.0
    %9155 = vmatpush1.msra.mxu0 0.0
    %9156 = vmatprep.subr.mxu0 0.0
    %9157 = vmatpush1.msra.mxu0 0.0
    %9158 = vmatprep.subr.mxu0 0.0
    %9159 = vmatpush1.msra.mxu0 0.0
    %9160 = vmatprep.subr.mxu0 0.0
    %9161 = vmatpush1.msra.mxu0 0.0
    %9162 = vmatprep.subr.mxu0 0.0
    %9163 = vmatpush1.msra.mxu0 0.0
    %9164 = vmatprep.subr.mxu0 0.0
    %9165 = vmatpush1.msra.mxu0 0.0
    %9166 = vmatprep.subr.mxu0 0.0
    %9167 = vmatpush1.msra.mxu0 0.0
    %9168 = vmatprep.subr.mxu0 0.0
    %9169 = vmatpush1.msra.mxu0 0.0
    %9170 = vmatprep.subr.mxu0 0.0
    %9171 = vmatpush1.msra.mxu0 0.0
    %9172 = vmatprep.subr.mxu0 0.0
    %9173 = vmatpush1.msra.mxu0 0.0
    %9174 = vmatprep.mubr.f32.mxu0 0.0
    %v9175 = vand.u32 %v8729, 4294901760
    %9176 = vmatmul.mubr.f32.gmra.mrb[0].mxu0 %v9175
    %v9177 = vpop.f32.mrb[0].mxu0
    %v9178 = vadd.f32 %v9106, %v9177
    %v9179 = vpop.f32.mrb[0].mxu0
    %9180 = vdwg.mxu0
    %vm9181 = vcmask 17408
    %9182 = vst.msk [vmem:[#allocation9] sm:$0x3] %vm9181, %v9178
    // Predicated region
    $region66: #{_lambda_.1} parent=1 // pred_check
      _
    $region67: #{_lambda_.1} parent=1 // pred_check_branch
      %9184 = sbr.rel (0) target = $region69
    $region68: #{_lambda_.1} parent=1 // pred_region
      %s9186 = ssub.s32 32, 32
      %9187 = vsyncadd [#allocation6], %s9186
      %s9189 = sshll.u32 [#allocation9], 4
      %s9190 = int_to_ptr.vmem [resolvable:$true] %s9189
      %9192 = dma.vmem_to_hbm [thread:$0]  %s9190, 32, %s14, [#allocation6]
    $region69: #{_lambda_.1} parent=1 // pred_fallthru
      _
    // Predicated region
    $region70: #{_lambda_.1} parent=1 // pred_check
      _
    $region71: #{_lambda_.1} parent=1 // pred_check_branch
      %9194 = sbr.rel (0) target = $region73
    $region72: #{_lambda_.1} parent=1 // pred_region
      %9195 = dma.done [#allocation6], 32
    $region73: #{_lambda_.1} parent=1 // pred_fallthru
      _
    %9196 = vsyncpa [#allocation5], 1
    %9197 = vsyncpa [#allocation8], 1
    %9198 = vsyncpa [#allocation6], 1

</llo_original>
